<compile_context>
chip_gen: v7x
topology: tpu7x:2x2x1
jax: 0.10.0
libtpu: 0.0.40
codegen_flags: <defaults>
</compile_context>

<pallas_src>
import functools
import math

import jax
import jax.numpy as jnp
from jax.experimental import pallas as pl
from jax.experimental.pallas import tpu as pltpu

NEG = -1e9          # additive mask value (stands in for float('-inf'))
DP = 128            # lane-padded width of HBM-visible activation slabs


# ----------------------------- in-kernel helpers -----------------------------

def _bf16(x):
    return x.astype(jnp.bfloat16)


def _linear(x, w_ref, b_ref):
    """x:[M,K] f32 @ w_ref:[K,N] + b_ref:[1,N]; bf16 MXU inputs, f32 accumulate."""
    return jnp.dot(_bf16(x), _bf16(w_ref[...]),
                   preferred_element_type=jnp.float32) + b_ref[...]


def _ln(x, g, b, eps=1e-5):
    mean = jnp.mean(x, axis=-1, keepdims=True)
    xc = x - mean
    var = jnp.mean(xc * xc, axis=-1, keepdims=True)
    return xc * jax.lax.rsqrt(var + eps) * g + b


def _mha(q2d, k2d, v2d, bias, wo_ref, bo_ref, *, B, Lq, Lk, H, Dh):
    """Multi-head attention + output projection, entirely in VMEM.

    q2d:[B*Lq, H*Dh]  k2d/v2d:[B*Lk, H*Dh]  bias: additive [B,(1|Lq),Lk] or None.
    The output projection is folded into the per-head loop (block matmul), which
    avoids an in-kernel head concatenation.
    """
    scale = 1.0 / math.sqrt(Dh)
    out = None
    for h in range(H):
        sl = slice(h * Dh, (h + 1) * Dh)
        qh = (q2d[:, sl] * scale).reshape(B, Lq, Dh)
        kh = k2d[:, sl].reshape(B, Lk, Dh)
        vh = v2d[:, sl].reshape(B, Lk, Dh)
        s = jnp.einsum('bqd,bkd->bqk', _bf16(qh), _bf16(kh),
                       preferred_element_type=jnp.float32)
        if bias is not None:
            s = s + bias
        s = s - jnp.max(s, axis=-1, keepdims=True)
        p = jnp.exp(s)                                      # f32 softmax
        p = p * pl.reciprocal(jnp.sum(p, axis=-1, keepdims=True), approx=True)
        oh = jnp.einsum('bqk,bkd->bqd', _bf16(p), _bf16(vh),
                        preferred_element_type=jnp.float32).reshape(B * Lq, Dh)
        c = jnp.dot(_bf16(oh), _bf16(wo_ref[sl, :]),
                    preferred_element_type=jnp.float32)
        out = c if out is None else out + c
    return out + bo_ref[...]


def _pad_lanes(x, width):
    m, d = x.shape
    return jnp.concatenate([x, jnp.zeros((m, width - d), jnp.float32)], axis=-1)


# ------------------------------ fused kernels --------------------------------

def _enc_layer_kernel(*refs, D, H, B, L, apply_final):
    if apply_final:
        (x_ref, kpm_ref, wqkv, bqkv, wo, bo, g1, be1,
         w1, fb1, w2, fb2, g2, be2, gf, bf, o_ref) = refs
    else:
        (x_ref, kpm_ref, wqkv, bqkv, wo, bo, g1, be1,
         w1, fb1, w2, fb2, g2, be2, o_ref) = refs
        gf = bf = None

    x = x_ref[:, :D]                                   # [B*L, D] f32
    bias = kpm_ref[...][:, None, :]                    # [B, 1, L] additive key-pad
    qkv = _linear(x, wqkv, bqkv)                       # fused Q|K|V projection
    attn = _mha(qkv[:, 0:D], qkv[:, D:2 * D], qkv[:, 2 * D:3 * D],
                bias, wo, bo, B=B, Lq=L, Lk=L, H=H, Dh=D // H)
    x1 = _ln(x + attn, g1[...], be1[...])              # residual + LN fused
    hid = jnp.maximum(_linear(x1, w1, fb1), 0.0)
    x2 = _ln(x1 + _linear(hid, w2, fb2), g2[...], be2[...])
    if apply_final:                                    # fused final encoder LayerNorm
        x2 = _ln(x2, gf[...], bf[...])
    o_ref[...] = _pad_lanes(x2, o_ref.shape[-1])       # lane-dense [M, 128] store


def _dec_layer_kernel(*refs, D, H, B, T, L):
    (y_ref, mem_ref, kpm_ref,
     wqkv, bqkv, wo1, bo1, g1, be1,
     wq2, bq2, wkv2, bkv2, wo2, bo2, g2, be2,
     w1, fb1, w2, fb2, g3, be3, o_ref) = refs

    y = y_ref[:, :D]                                   # [B*T, D]
    mem = mem_ref[:, :D]                               # [B*L, D]
    Dh = D // H

    # masked self-attention: causal + tgt key-padding masks built in-kernel
    row = jax.lax.broadcasted_iota(jnp.int32, (T, T), 0)
    col = jax.lax.broadcasted_iota(jnp.int32, (T, T), 1)
    causal = jnp.where(col > row, NEG, 0.0).astype(jnp.float32)
    bias = causal[None, :, :] + kpm_ref[...][:, None, :]      # [B, T, T]
    qkv = _linear(y, wqkv, bqkv)
    sa = _mha(qkv[:, 0:D], qkv[:, D:2 * D], qkv[:, 2 * D:3 * D],
              bias, wo1, bo1, B=B, Lq=T, Lk=T, H=H, Dh=Dh)
    y1 = _ln(y + sa, g1[...], be1[...])

    # cross-attention (reference passes memory_key_padding_mask=None -> no mask)
    q = _linear(y1, wq2, bq2)                          # [B*T, D]
    kv = _linear(mem, wkv2, bkv2)                      # fused K|V projection of memory
    ca = _mha(q, kv[:, 0:D], kv[:, D:2 * D],
              None, wo2, bo2, B=B, Lq=T, Lk=L, H=H, Dh=Dh)
    y2 = _ln(y1 + ca, g2[...], be2[...])

    # feed-forward
    hid = jnp.maximum(_linear(y2, w1, fb1), 0.0)
    y3 = _ln(y2 + _linear(hid, w2, fb2), g3[...], be3[...])
    o_ref[...] = _pad_lanes(y3, o_ref.shape[-1])


def _final_kernel(y_ref, g_ref, b_ref, emb_ref, o_ref, *, D):
    # fused: final decoder LayerNorm + tied logits projection (y @ embedding.T),
    # contracting the D axis of the [V, D] embedding in-kernel (no emb.T copy).
    y = _ln(y_ref[:, :D], g_ref[...], b_ref[...])
    o_ref[...] = jax.lax.dot_general(
        _bf16(y), _bf16(emb_ref[...]),
        dimension_numbers=(((1,), (1,)), ((), ())),
        preferred_element_type=jnp.float32)


# ------------------------------ pallas wrappers -------------------------------

def _row(v):
    return v.reshape(1, -1)


def _fs(shape):
    n = len(shape)
    return pl.BlockSpec(shape, lambda i, _n=n: (0,) * _n)


_CP = pltpu.CompilerParams(dimension_semantics=("arbitrary",))


def encoder_layer(x_p, kpm_add, p, final_ln, *, D, H, B, L):
    sa = p['self_attn']
    args = [x_p, kpm_add,
            sa['w_qkv'], _row(sa['b_qkv']), sa['w_o'], _row(sa['b_o']),
            _row(p['ln1']['g']), _row(p['ln1']['b']),
            p['w1'], _row(p['b1']), p['w2'], _row(p['b2']),
            _row(p['ln2']['g']), _row(p['ln2']['b'])]
    if final_ln is not None:
        args += [_row(final_ln['g']), _row(final_ln['b'])]
    M = B * L
    return pl.pallas_call(
        functools.partial(_enc_layer_kernel, D=D, H=H, B=B, L=L,
                          apply_final=final_ln is not None),
        grid=(1,),
        in_specs=[_fs(a.shape) for a in args],
        out_specs=_fs((M, DP)),
        out_shape=jax.ShapeDtypeStruct((M, DP), jnp.float32),
        compiler_params=_CP,
    )(*args)


def decoder_layer(y_p, mem_p, kpm_add, p, *, D, H, B, T, L):
    sa, ca = p['self_attn'], p['cross_attn']
    args = [y_p, mem_p, kpm_add,
            sa['w_qkv'], _row(sa['b_qkv']), sa['w_o'], _row(sa['b_o']),
            _row(p['ln1']['g']), _row(p['ln1']['b']),
            ca['w_q'], _row(ca['b_q']), ca['w_kv'], _row(ca['b_kv']),
            ca['w_o'], _row(ca['b_o']),
            _row(p['ln2']['g']), _row(p['ln2']['b']),
            p['w1'], _row(p['b1']), p['w2'], _row(p['b2']),
            _row(p['ln3']['g']), _row(p['ln3']['b'])]
    M = B * T
    return pl.pallas_call(
        functools.partial(_dec_layer_kernel, D=D, H=H, B=B, T=T, L=L),
        grid=(1,),
        in_specs=[_fs(a.shape) for a in args],
        out_specs=_fs((M, DP)),
        out_shape=jax.ShapeDtypeStruct((M, DP), jnp.float32),
        compiler_params=_CP,
    )(*args)


def final_logits(y_p, norm, emb, *, D):
    # NOTE: at real vocab sizes this call should get a grid over V (128/256-tiles)
    # and a vmem_limit_bytes headroom for v7x; at V=100 a single block is optimal.
    M = y_p.shape[0]
    V = emb.shape[0]
    args = [y_p, _row(norm['g']), _row(norm['b']), emb]
    return pl.pallas_call(
        functools.partial(_final_kernel, D=D),
        grid=(1,),
        in_specs=[_fs(a.shape) for a in args],
        out_specs=_fs((M, V)),
        out_shape=jax.ShapeDtypeStruct((M, V), jnp.float32),
        compiler_params=_CP,
    )(*args)


# -------------------------------- model pieces --------------------------------

def positional_encoding(max_len, d_model):
    pos = jnp.arange(max_len, dtype=jnp.float32)[:, None]
    div = jnp.exp(jnp.arange(0, d_model, 2, dtype=jnp.float32)
                  * (-math.log(10000.0) / d_model))
    pe = jnp.zeros((max_len, d_model), jnp.float32)
    pe = pe.at[:, 0::2].set(jnp.sin(pos * div))
    pe = pe.at[:, 1::2].set(jnp.cos(pos * div))
    return pe                                          # [max_len, d_model]


def transformer_forward(params, src_tok_ids, tgt_tok_ids, *, d_model, n_head, pad_id):
    B, L = src_tok_ids.shape
    T = tgt_tok_ids.shape[1]
    D = d_model
    emb = params['embedding']                          # [V, D] (tied with output proj)
    pe = positional_encoding(max(L, T), D)
    scale = math.sqrt(D)

    # ---------------- encoder (memory = self.encoder(src_tok_ids)) ----------
    # TODO(synk): dropout layers are eval-mode identity.
    x = jnp.take(emb, src_tok_ids, axis=0) * scale + pe[None, :L, :]   # [B, L, D]
    x = jnp.pad(x.reshape(B * L, D), ((0, 0), (0, DP - D)))            # lane-dense slab
    src_kpm = jnp.where(src_tok_ids == pad_id, NEG, 0.0).astype(jnp.float32)  # [B, L]
    n_enc = len(params['enc_layers'])
    for i, lp in enumerate(params['enc_layers']):
        fin = params['enc_norm'] if i == n_enc - 1 else None           # fuse final LN
        x = encoder_layer(x, src_kpm, lp, fin, D=D, H=n_head, B=B, L=L)
    memory = x                                                          # [B*L, 128]

    # ------------------------------- decoder --------------------------------
    y = jnp.take(emb, tgt_tok_ids, axis=0) * scale + pe[None, :T, :]
    y = jnp.pad(y.reshape(B * T, D), ((0, 0), (0, DP - D)))
    tgt_kpm = jnp.where(tgt_tok_ids == pad_id, NEG, 0.0).astype(jnp.float32)
    for lp in params['dec_layers']:
        y = decoder_layer(y, memory, tgt_kpm, lp, D=D, H=n_head, B=B, T=T, L=L)

    # final decoder LayerNorm + tied logits projection (single fused call)
    logits = final_logits(y, params['dec_norm'], emb, D=D)              # [B*T, V]
    return logits.reshape(B, T, -1)                                     # [B, T, V]


# ------------------------------ parameter init --------------------------------

def init_params(key, n_tokens, d_model, d_ff, n_enc, n_dec):
    keys = iter(jax.random.split(key, 4096))

    def dense(shape, scale=0.02):
        return scale * jax.random.normal(next(keys), shape, jnp.float32)

    def ln():
        return dict(g=jnp.ones((d_model,), jnp.float32),
                    b=jnp.zeros((d_model,), jnp.float32))

    def self_attn():
        return dict(w_qkv=dense((d_model, 3 * d_model)), b_qkv=jnp.zeros((3 * d_model,)),
                    w_o=dense((d_model, d_model)), b_o=jnp.zeros((d_model,)))

    def cross_attn():
        return dict(w_q=dense((d_model, d_model)), b_q=jnp.zeros((d_model,)),
                    w_kv=dense((d_model, 2 * d_model)), b_kv=jnp.zeros((2 * d_model,)),
                    w_o=dense((d_model, d_model)), b_o=jnp.zeros((d_model,)))

    def enc_layer():
        return dict(self_attn=self_attn(),
                    w1=dense((d_model, d_ff)), b1=jnp.zeros((d_ff,)),
                    w2=dense((d_ff, d_model)), b2=jnp.zeros((d_model,)),
                    ln1=ln(), ln2=ln())

    def dec_layer():
        return dict(self_attn=self_attn(), cross_attn=cross_attn(),
                    w1=dense((d_model, d_ff)), b1=jnp.zeros((d_ff,)),
                    w2=dense((d_ff, d_model)), b2=jnp.zeros((d_model,)),
                    ln1=ln(), ln2=ln(), ln3=ln())

    return dict(embedding=dense((n_tokens, d_model), scale=1.0),
                enc_layers=[enc_layer() for _ in range(n_enc)],
                enc_norm=ln(),
                dec_layers=[dec_layer() for _ in range(n_dec)],
                dec_norm=ln())


# ----------------------------------- main --------------------------------------

if __name__ == "__main__":
    n_tokens, d_model, n_head, d_ff = 100, 32, 4, 64
    n_encoder_layers, n_decoder_layers, pad_id = 2, 2, 0
    B, L, T = 2, 8, 8

    root = jax.random.PRNGKey(0)
    pkey, skey, tkey = jax.random.split(root, 3)
    params = init_params(pkey, n_tokens, d_model, d_ff,
                         n_encoder_layers, n_decoder_layers)

    src_tok_ids = jax.random.randint(skey, (B, L), 1, n_tokens, dtype=jnp.int32)
    tgt_tok_ids = jax.random.randint(tkey, (B, T), 1, n_tokens, dtype=jnp.int32)
    # trailing padding (pad_id=0); leading positions stay non-pad so no all-masked rows
    src_tok_ids = src_tok_ids.at[:, -2:].set(pad_id)
    tgt_tok_ids = tgt_tok_ids.at[:, -2:].set(pad_id)

    fwd = jax.jit(functools.partial(transformer_forward,
                                    d_model=d_model, n_head=n_head, pad_id=pad_id))

    logits = fwd(params, src_tok_ids, tgt_tok_ids)
    jax.block_until_ready(logits)

    assert logits.shape == (B, T, n_tokens), logits.shape
    assert bool(jnp.all(jnp.isfinite(logits)))
    print("KERNEL_OK")
</pallas_src>

<mosaic_0001>
module attributes {stable_mosaic.version = 11 : i64} {
  func.func @_enc_layer_kernel(%arg0: i32, %arg1: memref<16x128xf32, #tpu.memory_space<vmem>>, %arg2: memref<2x8xf32, #tpu.memory_space<vmem>>, %arg3: memref<32x96xf32, #tpu.memory_space<vmem>>, %arg4: memref<1x96xf32, #tpu.memory_space<vmem>>, %arg5: memref<32x32xf32, #tpu.memory_space<vmem>>, %arg6: memref<1x32xf32, #tpu.memory_space<vmem>>, %arg7: memref<1x32xf32, #tpu.memory_space<vmem>>, %arg8: memref<1x32xf32, #tpu.memory_space<vmem>>, %arg9: memref<32x64xf32, #tpu.memory_space<vmem>>, %arg10: memref<1x64xf32, #tpu.memory_space<vmem>>, %arg11: memref<64x32xf32, #tpu.memory_space<vmem>>, %arg12: memref<1x32xf32, #tpu.memory_space<vmem>>, %arg13: memref<1x32xf32, #tpu.memory_space<vmem>>, %arg14: memref<1x32xf32, #tpu.memory_space<vmem>>, %arg15: memref<16x128xf32, #tpu.memory_space<vmem>>) attributes {dimension_semantics = [#tpu.dimension_semantics<arbitrary>], iteration_bounds = array<i64: 1>, scalar_prefetch = 0 : i64, scratch_operands = 0 : i64, tpu.core_type = #tpu.core_type<tc>, window_params = [{pipeline_mode = #tpu.pipeline_mode<synchronous>, transform_indices = @transform_0, window_bounds = array<i64: 16, 128>}, {pipeline_mode = #tpu.pipeline_mode<synchronous>, transform_indices = @transform_1, window_bounds = array<i64: 2, 8>}, {pipeline_mode = #tpu.pipeline_mode<synchronous>, transform_indices = @transform_2, window_bounds = array<i64: 32, 96>}, {pipeline_mode = #tpu.pipeline_mode<synchronous>, transform_indices = @transform_3, window_bounds = array<i64: 1, 96>}, {pipeline_mode = #tpu.pipeline_mode<synchronous>, transform_indices = @transform_4, window_bounds = array<i64: 32, 32>}, {pipeline_mode = #tpu.pipeline_mode<synchronous>, transform_indices = @transform_5, window_bounds = array<i64: 1, 32>}, {pipeline_mode = #tpu.pipeline_mode<synchronous>, transform_indices = @transform_6, window_bounds = array<i64: 1, 32>}, {pipeline_mode = #tpu.pipeline_mode<synchronous>, transform_indices = @transform_7, window_bounds = array<i64: 1, 32>}, {pipeline_mode = #tpu.pipeline_mode<synchronous>, transform_indices = @transform_8, window_bounds = array<i64: 32, 64>}, {pipeline_mode = #tpu.pipeline_mode<synchronous>, transform_indices = @transform_9, window_bounds = array<i64: 1, 64>}, {pipeline_mode = #tpu.pipeline_mode<synchronous>, transform_indices = @transform_10, window_bounds = array<i64: 64, 32>}, {pipeline_mode = #tpu.pipeline_mode<synchronous>, transform_indices = @transform_11, window_bounds = array<i64: 1, 32>}, {pipeline_mode = #tpu.pipeline_mode<synchronous>, transform_indices = @transform_12, window_bounds = array<i64: 1, 32>}, {pipeline_mode = #tpu.pipeline_mode<synchronous>, transform_indices = @transform_13, window_bounds = array<i64: 1, 32>}, {pipeline_mode = #tpu.pipeline_mode<synchronous>, transform_indices = @transform_14, window_bounds = array<i64: 16, 128>}]} {
    %c0 = arith.constant 0 : index
    %c0_0 = arith.constant 0 : index
    %0 = vector.load %arg1[%c0, %c0_0] : memref<16x128xf32, #tpu.memory_space<vmem>>, vector<16x32xf32>
    %c0_1 = arith.constant 0 : index
    %c0_2 = arith.constant 0 : index
    %1 = vector.load %arg2[%c0_1, %c0_2] : memref<2x8xf32, #tpu.memory_space<vmem>>, vector<2x8xf32>
    %2 = vector.shape_cast %1 : vector<2x8xf32> to vector<2x1x8xf32>
    %3 = arith.truncf %0 : vector<16x32xf32> to vector<16x32xbf16>
    %c0_3 = arith.constant 0 : index
    %c0_4 = arith.constant 0 : index
    %4 = vector.load %arg3[%c0_3, %c0_4] : memref<32x96xf32, #tpu.memory_space<vmem>>, vector<32x96xf32>
    %5 = arith.truncf %4 : vector<32x96xf32> to vector<32x96xbf16>
    %cst = arith.constant dense<0.000000e+00> : vector<16x96xf32>
    %6 = tpu.matmul %3, %5, %cst {dimension_numbers = #tpu.dot_dimension_numbers<[1], [0], [0], [1], [0, 0, 1, 1], [], []>} : vector<16x32xbf16>, vector<32x96xbf16>, vector<16x96xf32> -> vector<16x96xf32>
    %c0_5 = arith.constant 0 : index
    %c0_6 = arith.constant 0 : index
    %7 = vector.load %arg4[%c0_5, %c0_6] : memref<1x96xf32, #tpu.memory_space<vmem>>, vector<1x96xf32>
    %8 = vector.broadcast %7 : vector<1x96xf32> to vector<16x96xf32>
    %9 = arith.addf %6, %8 : vector<16x96xf32>
    %10 = vector.extract_strided_slice %9 {offsets = [0, 0], sizes = [16, 32], strides = [1, 1]} : vector<16x96xf32> to vector<16x32xf32>
    %11 = vector.extract_strided_slice %9 {offsets = [0, 32], sizes = [16, 32], strides = [1, 1]} : vector<16x96xf32> to vector<16x32xf32>
    %12 = vector.extract_strided_slice %9 {offsets = [0, 64], sizes = [16, 32], strides = [1, 1]} : vector<16x96xf32> to vector<16x32xf32>
    %13 = vector.extract_strided_slice %10 {offsets = [0, 0], sizes = [16, 8], strides = [1, 1]} : vector<16x32xf32> to vector<16x8xf32>
    %cst_7 = arith.constant 0.353553385 : f32
    %14 = vector.broadcast %cst_7 : f32 to vector<16x8xf32>
    %15 = arith.mulf %13, %14 : vector<16x8xf32>
    %16 = vector.shape_cast %15 : vector<16x8xf32> to vector<2x8x8xf32>
    %17 = vector.extract_strided_slice %11 {offsets = [0, 0], sizes = [16, 8], strides = [1, 1]} : vector<16x32xf32> to vector<16x8xf32>
    %18 = vector.shape_cast %17 : vector<16x8xf32> to vector<2x8x8xf32>
    %19 = vector.extract_strided_slice %12 {offsets = [0, 0], sizes = [16, 8], strides = [1, 1]} : vector<16x32xf32> to vector<16x8xf32>
    %20 = vector.shape_cast %19 : vector<16x8xf32> to vector<2x8x8xf32>
    %21 = arith.truncf %16 : vector<2x8x8xf32> to vector<2x8x8xbf16>
    %22 = arith.truncf %18 : vector<2x8x8xf32> to vector<2x8x8xbf16>
    "tpu.trace_start"() <{level = 10 : i32, message = "bqd,bkd->bqk"}> : () -> ()
    %cst_8 = arith.constant dense<0.000000e+00> : vector<2x8x8xf32>
    %23 = tpu.matmul %21, %22, %cst_8 {dimension_numbers = #tpu.dot_dimension_numbers<[2], [2], [1], [1], [0, 0, 0, 1, 1, 1], [0], [0]>} : vector<2x8x8xbf16>, vector<2x8x8xbf16>, vector<2x8x8xf32> -> vector<2x8x8xf32>
    "tpu.trace_stop"() : () -> ()
    %24 = vector.broadcast %2 : vector<2x1x8xf32> to vector<2x8x8xf32>
    %25 = arith.addf %23, %24 : vector<2x8x8xf32>
    %cst_9 = arith.constant dense<0xFF800000> : vector<2x8xf32>
    %26 = vector.multi_reduction <maximumf>, %25, %cst_9 [2] : vector<2x8x8xf32> to vector<2x8xf32>
    %27 = vector.shape_cast %26 : vector<2x8xf32> to vector<2x8x1xf32>
    %28 = vector.broadcast %27 : vector<2x8x1xf32> to vector<2x8x8xf32>
    %29 = arith.subf %25, %28 : vector<2x8x8xf32>
    %30 = math.exp %29 : vector<2x8x8xf32>
    %cst_10 = arith.constant dense<0.000000e+00> : vector<2x8xf32>
    %31 = vector.multi_reduction <add>, %30, %cst_10 [2] : vector<2x8x8xf32> to vector<2x8xf32>
    %32 = vector.shape_cast %31 : vector<2x8xf32> to vector<2x8x1xf32>
    %33 = tpu.reciprocal %32 {approx = true} : vector<2x8x1xf32> -> vector<2x8x1xf32>
    %34 = vector.broadcast %33 : vector<2x8x1xf32> to vector<2x8x8xf32>
    %35 = arith.mulf %30, %34 : vector<2x8x8xf32>
    %36 = arith.truncf %35 : vector<2x8x8xf32> to vector<2x8x8xbf16>
    %37 = arith.truncf %20 : vector<2x8x8xf32> to vector<2x8x8xbf16>
    "tpu.trace_start"() <{level = 10 : i32, message = "bqk,bkd->bqd"}> : () -> ()
    %cst_11 = arith.constant dense<0.000000e+00> : vector<2x8x8xf32>
    %38 = tpu.matmul %36, %37, %cst_11 {dimension_numbers = #tpu.dot_dimension_numbers<[2], [1], [1], [2], [0, 0, 0, 1, 1, 2], [0], [0]>} : vector<2x8x8xbf16>, vector<2x8x8xbf16>, vector<2x8x8xf32> -> vector<2x8x8xf32>
    "tpu.trace_stop"() : () -> ()
    %39 = vector.shape_cast %38 : vector<2x8x8xf32> to vector<16x8xf32>
    %40 = arith.truncf %39 : vector<16x8xf32> to vector<16x8xbf16>
    %c0_12 = arith.constant 0 : index
    %c0_13 = arith.constant 0 : index
    %41 = vector.load %arg5[%c0_12, %c0_13] : memref<32x32xf32, #tpu.memory_space<vmem>>, vector<8x32xf32>
    %42 = arith.truncf %41 : vector<8x32xf32> to vector<8x32xbf16>
    %cst_14 = arith.constant dense<0.000000e+00> : vector<16x32xf32>
    %43 = tpu.matmul %40, %42, %cst_14 {dimension_numbers = #tpu.dot_dimension_numbers<[1], [0], [0], [1], [0, 0, 1, 1], [], []>} : vector<16x8xbf16>, vector<8x32xbf16>, vector<16x32xf32> -> vector<16x32xf32>
    %44 = vector.extract_strided_slice %10 {offsets = [0, 8], sizes = [16, 8], strides = [1, 1]} : vector<16x32xf32> to vector<16x8xf32>
    %cst_15 = arith.constant 0.353553385 : f32
    %45 = vector.broadcast %cst_15 : f32 to vector<16x8xf32>
    %46 = arith.mulf %44, %45 : vector<16x8xf32>
    %47 = vector.shape_cast %46 : vector<16x8xf32> to vector<2x8x8xf32>
    %48 = vector.extract_strided_slice %11 {offsets = [0, 8], sizes = [16, 8], strides = [1, 1]} : vector<16x32xf32> to vector<16x8xf32>
    %49 = vector.shape_cast %48 : vector<16x8xf32> to vector<2x8x8xf32>
    %50 = vector.extract_strided_slice %12 {offsets = [0, 8], sizes = [16, 8], strides = [1, 1]} : vector<16x32xf32> to vector<16x8xf32>
    %51 = vector.shape_cast %50 : vector<16x8xf32> to vector<2x8x8xf32>
    %52 = arith.truncf %47 : vector<2x8x8xf32> to vector<2x8x8xbf16>
    %53 = arith.truncf %49 : vector<2x8x8xf32> to vector<2x8x8xbf16>
    "tpu.trace_start"() <{level = 10 : i32, message = "bqd,bkd->bqk"}> : () -> ()
    %cst_16 = arith.constant dense<0.000000e+00> : vector<2x8x8xf32>
    %54 = tpu.matmul %52, %53, %cst_16 {dimension_numbers = #tpu.dot_dimension_numbers<[2], [2], [1], [1], [0, 0, 0, 1, 1, 1], [0], [0]>} : vector<2x8x8xbf16>, vector<2x8x8xbf16>, vector<2x8x8xf32> -> vector<2x8x8xf32>
    "tpu.trace_stop"() : () -> ()
    %55 = vector.broadcast %2 : vector<2x1x8xf32> to vector<2x8x8xf32>
    %56 = arith.addf %54, %55 : vector<2x8x8xf32>
    %cst_17 = arith.constant dense<0xFF800000> : vector<2x8xf32>
    %57 = vector.multi_reduction <maximumf>, %56, %cst_17 [2] : vector<2x8x8xf32> to vector<2x8xf32>
    %58 = vector.shape_cast %57 : vector<2x8xf32> to vector<2x8x1xf32>
    %59 = vector.broadcast %58 : vector<2x8x1xf32> to vector<2x8x8xf32>
    %60 = arith.subf %56, %59 : vector<2x8x8xf32>
    %61 = math.exp %60 : vector<2x8x8xf32>
    %cst_18 = arith.constant dense<0.000000e+00> : vector<2x8xf32>
    %62 = vector.multi_reduction <add>, %61, %cst_18 [2] : vector<2x8x8xf32> to vector<2x8xf32>
    %63 = vector.shape_cast %62 : vector<2x8xf32> to vector<2x8x1xf32>
    %64 = tpu.reciprocal %63 {approx = true} : vector<2x8x1xf32> -> vector<2x8x1xf32>
    %65 = vector.broadcast %64 : vector<2x8x1xf32> to vector<2x8x8xf32>
    %66 = arith.mulf %61, %65 : vector<2x8x8xf32>
    %67 = arith.truncf %66 : vector<2x8x8xf32> to vector<2x8x8xbf16>
    %68 = arith.truncf %51 : vector<2x8x8xf32> to vector<2x8x8xbf16>
    "tpu.trace_start"() <{level = 10 : i32, message = "bqk,bkd->bqd"}> : () -> ()
    %cst_19 = arith.constant dense<0.000000e+00> : vector<2x8x8xf32>
    %69 = tpu.matmul %67, %68, %cst_19 {dimension_numbers = #tpu.dot_dimension_numbers<[2], [1], [1], [2], [0, 0, 0, 1, 1, 2], [0], [0]>} : vector<2x8x8xbf16>, vector<2x8x8xbf16>, vector<2x8x8xf32> -> vector<2x8x8xf32>
    "tpu.trace_stop"() : () -> ()
    %70 = vector.shape_cast %69 : vector<2x8x8xf32> to vector<16x8xf32>
    %71 = arith.truncf %70 : vector<16x8xf32> to vector<16x8xbf16>
    %c8 = arith.constant 8 : index
    %c0_20 = arith.constant 0 : index
    %72 = vector.load %arg5[%c8, %c0_20] : memref<32x32xf32, #tpu.memory_space<vmem>>, vector<8x32xf32>
    %73 = arith.truncf %72 : vector<8x32xf32> to vector<8x32xbf16>
    %cst_21 = arith.constant dense<0.000000e+00> : vector<16x32xf32>
    %74 = tpu.matmul %71, %73, %cst_21 {dimension_numbers = #tpu.dot_dimension_numbers<[1], [0], [0], [1], [0, 0, 1, 1], [], []>} : vector<16x8xbf16>, vector<8x32xbf16>, vector<16x32xf32> -> vector<16x32xf32>
    %75 = arith.addf %43, %74 : vector<16x32xf32>
    %76 = vector.extract_strided_slice %10 {offsets = [0, 16], sizes = [16, 8], strides = [1, 1]} : vector<16x32xf32> to vector<16x8xf32>
    %cst_22 = arith.constant 0.353553385 : f32
    %77 = vector.broadcast %cst_22 : f32 to vector<16x8xf32>
    %78 = arith.mulf %76, %77 : vector<16x8xf32>
    %79 = vector.shape_cast %78 : vector<16x8xf32> to vector<2x8x8xf32>
    %80 = vector.extract_strided_slice %11 {offsets = [0, 16], sizes = [16, 8], strides = [1, 1]} : vector<16x32xf32> to vector<16x8xf32>
    %81 = vector.shape_cast %80 : vector<16x8xf32> to vector<2x8x8xf32>
    %82 = vector.extract_strided_slice %12 {offsets = [0, 16], sizes = [16, 8], strides = [1, 1]} : vector<16x32xf32> to vector<16x8xf32>
    %83 = vector.shape_cast %82 : vector<16x8xf32> to vector<2x8x8xf32>
    %84 = arith.truncf %79 : vector<2x8x8xf32> to vector<2x8x8xbf16>
    %85 = arith.truncf %81 : vector<2x8x8xf32> to vector<2x8x8xbf16>
    "tpu.trace_start"() <{level = 10 : i32, message = "bqd,bkd->bqk"}> : () -> ()
    %cst_23 = arith.constant dense<0.000000e+00> : vector<2x8x8xf32>
    %86 = tpu.matmul %84, %85, %cst_23 {dimension_numbers = #tpu.dot_dimension_numbers<[2], [2], [1], [1], [0, 0, 0, 1, 1, 1], [0], [0]>} : vector<2x8x8xbf16>, vector<2x8x8xbf16>, vector<2x8x8xf32> -> vector<2x8x8xf32>
    "tpu.trace_stop"() : () -> ()
    %87 = vector.broadcast %2 : vector<2x1x8xf32> to vector<2x8x8xf32>
    %88 = arith.addf %86, %87 : vector<2x8x8xf32>
    %cst_24 = arith.constant dense<0xFF800000> : vector<2x8xf32>
    %89 = vector.multi_reduction <maximumf>, %88, %cst_24 [2] : vector<2x8x8xf32> to vector<2x8xf32>
    %90 = vector.shape_cast %89 : vector<2x8xf32> to vector<2x8x1xf32>
    %91 = vector.broadcast %90 : vector<2x8x1xf32> to vector<2x8x8xf32>
    %92 = arith.subf %88, %91 : vector<2x8x8xf32>
    %93 = math.exp %92 : vector<2x8x8xf32>
    %cst_25 = arith.constant dense<0.000000e+00> : vector<2x8xf32>
    %94 = vector.multi_reduction <add>, %93, %cst_25 [2] : vector<2x8x8xf32> to vector<2x8xf32>
    %95 = vector.shape_cast %94 : vector<2x8xf32> to vector<2x8x1xf32>
    %96 = tpu.reciprocal %95 {approx = true} : vector<2x8x1xf32> -> vector<2x8x1xf32>
    %97 = vector.broadcast %96 : vector<2x8x1xf32> to vector<2x8x8xf32>
    %98 = arith.mulf %93, %97 : vector<2x8x8xf32>
    %99 = arith.truncf %98 : vector<2x8x8xf32> to vector<2x8x8xbf16>
    %100 = arith.truncf %83 : vector<2x8x8xf32> to vector<2x8x8xbf16>
    "tpu.trace_start"() <{level = 10 : i32, message = "bqk,bkd->bqd"}> : () -> ()
    %cst_26 = arith.constant dense<0.000000e+00> : vector<2x8x8xf32>
    %101 = tpu.matmul %99, %100, %cst_26 {dimension_numbers = #tpu.dot_dimension_numbers<[2], [1], [1], [2], [0, 0, 0, 1, 1, 2], [0], [0]>} : vector<2x8x8xbf16>, vector<2x8x8xbf16>, vector<2x8x8xf32> -> vector<2x8x8xf32>
    "tpu.trace_stop"() : () -> ()
    %102 = vector.shape_cast %101 : vector<2x8x8xf32> to vector<16x8xf32>
    %103 = arith.truncf %102 : vector<16x8xf32> to vector<16x8xbf16>
    %c16 = arith.constant 16 : index
    %c0_27 = arith.constant 0 : index
    %104 = vector.load %arg5[%c16, %c0_27] : memref<32x32xf32, #tpu.memory_space<vmem>>, vector<8x32xf32>
    %105 = arith.truncf %104 : vector<8x32xf32> to vector<8x32xbf16>
    %cst_28 = arith.constant dense<0.000000e+00> : vector<16x32xf32>
    %106 = tpu.matmul %103, %105, %cst_28 {dimension_numbers = #tpu.dot_dimension_numbers<[1], [0], [0], [1], [0, 0, 1, 1], [], []>} : vector<16x8xbf16>, vector<8x32xbf16>, vector<16x32xf32> -> vector<16x32xf32>
    %107 = arith.addf %75, %106 : vector<16x32xf32>
    %108 = vector.extract_strided_slice %10 {offsets = [0, 24], sizes = [16, 8], strides = [1, 1]} : vector<16x32xf32> to vector<16x8xf32>
    %cst_29 = arith.constant 0.353553385 : f32
    %109 = vector.broadcast %cst_29 : f32 to vector<16x8xf32>
    %110 = arith.mulf %108, %109 : vector<16x8xf32>
    %111 = vector.shape_cast %110 : vector<16x8xf32> to vector<2x8x8xf32>
    %112 = vector.extract_strided_slice %11 {offsets = [0, 24], sizes = [16, 8], strides = [1, 1]} : vector<16x32xf32> to vector<16x8xf32>
    %113 = vector.shape_cast %112 : vector<16x8xf32> to vector<2x8x8xf32>
    %114 = vector.extract_strided_slice %12 {offsets = [0, 24], sizes = [16, 8], strides = [1, 1]} : vector<16x32xf32> to vector<16x8xf32>
    %115 = vector.shape_cast %114 : vector<16x8xf32> to vector<2x8x8xf32>
    %116 = arith.truncf %111 : vector<2x8x8xf32> to vector<2x8x8xbf16>
    %117 = arith.truncf %113 : vector<2x8x8xf32> to vector<2x8x8xbf16>
    "tpu.trace_start"() <{level = 10 : i32, message = "bqd,bkd->bqk"}> : () -> ()
    %cst_30 = arith.constant dense<0.000000e+00> : vector<2x8x8xf32>
    %118 = tpu.matmul %116, %117, %cst_30 {dimension_numbers = #tpu.dot_dimension_numbers<[2], [2], [1], [1], [0, 0, 0, 1, 1, 1], [0], [0]>} : vector<2x8x8xbf16>, vector<2x8x8xbf16>, vector<2x8x8xf32> -> vector<2x8x8xf32>
    "tpu.trace_stop"() : () -> ()
    %119 = vector.broadcast %2 : vector<2x1x8xf32> to vector<2x8x8xf32>
    %120 = arith.addf %118, %119 : vector<2x8x8xf32>
    %cst_31 = arith.constant dense<0xFF800000> : vector<2x8xf32>
    %121 = vector.multi_reduction <maximumf>, %120, %cst_31 [2] : vector<2x8x8xf32> to vector<2x8xf32>
    %122 = vector.shape_cast %121 : vector<2x8xf32> to vector<2x8x1xf32>
    %123 = vector.broadcast %122 : vector<2x8x1xf32> to vector<2x8x8xf32>
    %124 = arith.subf %120, %123 : vector<2x8x8xf32>
    %125 = math.exp %124 : vector<2x8x8xf32>
    %cst_32 = arith.constant dense<0.000000e+00> : vector<2x8xf32>
    %126 = vector.multi_reduction <add>, %125, %cst_32 [2] : vector<2x8x8xf32> to vector<2x8xf32>
    %127 = vector.shape_cast %126 : vector<2x8xf32> to vector<2x8x1xf32>
    %128 = tpu.reciprocal %127 {approx = true} : vector<2x8x1xf32> -> vector<2x8x1xf32>
    %129 = vector.broadcast %128 : vector<2x8x1xf32> to vector<2x8x8xf32>
    %130 = arith.mulf %125, %129 : vector<2x8x8xf32>
    %131 = arith.truncf %130 : vector<2x8x8xf32> to vector<2x8x8xbf16>
    %132 = arith.truncf %115 : vector<2x8x8xf32> to vector<2x8x8xbf16>
    "tpu.trace_start"() <{level = 10 : i32, message = "bqk,bkd->bqd"}> : () -> ()
    %cst_33 = arith.constant dense<0.000000e+00> : vector<2x8x8xf32>
    %133 = tpu.matmul %131, %132, %cst_33 {dimension_numbers = #tpu.dot_dimension_numbers<[2], [1], [1], [2], [0, 0, 0, 1, 1, 2], [0], [0]>} : vector<2x8x8xbf16>, vector<2x8x8xbf16>, vector<2x8x8xf32> -> vector<2x8x8xf32>
    "tpu.trace_stop"() : () -> ()
    %134 = vector.shape_cast %133 : vector<2x8x8xf32> to vector<16x8xf32>
    %135 = arith.truncf %134 : vector<16x8xf32> to vector<16x8xbf16>
    %c24 = arith.constant 24 : index
    %c0_34 = arith.constant 0 : index
    %136 = vector.load %arg5[%c24, %c0_34] : memref<32x32xf32, #tpu.memory_space<vmem>>, vector<8x32xf32>
    %137 = arith.truncf %136 : vector<8x32xf32> to vector<8x32xbf16>
    %cst_35 = arith.constant dense<0.000000e+00> : vector<16x32xf32>
    %138 = tpu.matmul %135, %137, %cst_35 {dimension_numbers = #tpu.dot_dimension_numbers<[1], [0], [0], [1], [0, 0, 1, 1], [], []>} : vector<16x8xbf16>, vector<8x32xbf16>, vector<16x32xf32> -> vector<16x32xf32>
    %139 = arith.addf %107, %138 : vector<16x32xf32>
    %c0_36 = arith.constant 0 : index
    %c0_37 = arith.constant 0 : index
    %140 = vector.load %arg6[%c0_36, %c0_37] : memref<1x32xf32, #tpu.memory_space<vmem>>, vector<1x32xf32>
    %141 = vector.broadcast %140 : vector<1x32xf32> to vector<16x32xf32>
    %142 = arith.addf %139, %141 : vector<16x32xf32>
    %143 = arith.addf %0, %142 : vector<16x32xf32>
    %c0_38 = arith.constant 0 : index
    %c0_39 = arith.constant 0 : index
    %144 = vector.load %arg7[%c0_38, %c0_39] : memref<1x32xf32, #tpu.memory_space<vmem>>, vector<1x32xf32>
    %c0_40 = arith.constant 0 : index
    %c0_41 = arith.constant 0 : index
    %145 = vector.load %arg8[%c0_40, %c0_41] : memref<1x32xf32, #tpu.memory_space<vmem>>, vector<1x32xf32>
    %cst_42 = arith.constant dense<0.000000e+00> : vector<16xf32>
    %146 = vector.multi_reduction <add>, %143, %cst_42 [1] : vector<16x32xf32> to vector<16xf32>
    %147 = vector.shape_cast %146 : vector<16xf32> to vector<16x1xf32>
    %cst_43 = arith.constant 3.200000e+01 : f32
    %148 = vector.broadcast %cst_43 : f32 to vector<16x1xf32>
    %149 = arith.divf %147, %148 : vector<16x1xf32>
    %150 = vector.broadcast %149 : vector<16x1xf32> to vector<16x32xf32>
    %151 = arith.subf %143, %150 : vector<16x32xf32>
    %152 = arith.mulf %151, %151 : vector<16x32xf32>
    %cst_44 = arith.constant dense<0.000000e+00> : vector<16xf32>
    %153 = vector.multi_reduction <add>, %152, %cst_44 [1] : vector<16x32xf32> to vector<16xf32>
    %154 = vector.shape_cast %153 : vector<16xf32> to vector<16x1xf32>
    %cst_45 = arith.constant 3.200000e+01 : f32
    %155 = vector.broadcast %cst_45 : f32 to vector<16x1xf32>
    %156 = arith.divf %154, %155 : vector<16x1xf32>
    %cst_46 = arith.constant 9.99999974E-6 : f32
    %157 = vector.broadcast %cst_46 : f32 to vector<16x1xf32>
    %158 = arith.addf %156, %157 : vector<16x1xf32>
    %159 = math.rsqrt %158 : vector<16x1xf32>
    %160 = vector.broadcast %159 : vector<16x1xf32> to vector<16x32xf32>
    %161 = arith.mulf %151, %160 : vector<16x32xf32>
    %162 = vector.broadcast %144 : vector<1x32xf32> to vector<16x32xf32>
    %163 = arith.mulf %161, %162 : vector<16x32xf32>
    %164 = vector.broadcast %145 : vector<1x32xf32> to vector<16x32xf32>
    %165 = arith.addf %163, %164 : vector<16x32xf32>
    %166 = arith.truncf %165 : vector<16x32xf32> to vector<16x32xbf16>
    %c0_47 = arith.constant 0 : index
    %c0_48 = arith.constant 0 : index
    %167 = vector.load %arg9[%c0_47, %c0_48] : memref<32x64xf32, #tpu.memory_space<vmem>>, vector<32x64xf32>
    %168 = arith.truncf %167 : vector<32x64xf32> to vector<32x64xbf16>
    %cst_49 = arith.constant dense<0.000000e+00> : vector<16x64xf32>
    %169 = tpu.matmul %166, %168, %cst_49 {dimension_numbers = #tpu.dot_dimension_numbers<[1], [0], [0], [1], [0, 0, 1, 1], [], []>} : vector<16x32xbf16>, vector<32x64xbf16>, vector<16x64xf32> -> vector<16x64xf32>
    %c0_50 = arith.constant 0 : index
    %c0_51 = arith.constant 0 : index
    %170 = vector.load %arg10[%c0_50, %c0_51] : memref<1x64xf32, #tpu.memory_space<vmem>>, vector<1x64xf32>
    %171 = vector.broadcast %170 : vector<1x64xf32> to vector<16x64xf32>
    %172 = arith.addf %169, %171 : vector<16x64xf32>
    %cst_52 = arith.constant 0.000000e+00 : f32
    %173 = vector.broadcast %cst_52 : f32 to vector<16x64xf32>
    %174 = arith.maximumf %172, %173 : vector<16x64xf32>
    %175 = arith.truncf %174 : vector<16x64xf32> to vector<16x64xbf16>
    %c0_53 = arith.constant 0 : index
    %c0_54 = arith.constant 0 : index
    %176 = vector.load %arg11[%c0_53, %c0_54] : memref<64x32xf32, #tpu.memory_space<vmem>>, vector<64x32xf32>
    %177 = arith.truncf %176 : vector<64x32xf32> to vector<64x32xbf16>
    %cst_55 = arith.constant dense<0.000000e+00> : vector<16x32xf32>
    %178 = tpu.matmul %175, %177, %cst_55 {dimension_numbers = #tpu.dot_dimension_numbers<[1], [0], [0], [1], [0, 0, 1, 1], [], []>} : vector<16x64xbf16>, vector<64x32xbf16>, vector<16x32xf32> -> vector<16x32xf32>
    %c0_56 = arith.constant 0 : index
    %c0_57 = arith.constant 0 : index
    %179 = vector.load %arg12[%c0_56, %c0_57] : memref<1x32xf32, #tpu.memory_space<vmem>>, vector<1x32xf32>
    %180 = vector.broadcast %179 : vector<1x32xf32> to vector<16x32xf32>
    %181 = arith.addf %178, %180 : vector<16x32xf32>
    %182 = arith.addf %165, %181 : vector<16x32xf32>
    %c0_58 = arith.constant 0 : index
    %c0_59 = arith.constant 0 : index
    %183 = vector.load %arg13[%c0_58, %c0_59] : memref<1x32xf32, #tpu.memory_space<vmem>>, vector<1x32xf32>
    %c0_60 = arith.constant 0 : index
    %c0_61 = arith.constant 0 : index
    %184 = vector.load %arg14[%c0_60, %c0_61] : memref<1x32xf32, #tpu.memory_space<vmem>>, vector<1x32xf32>
    %cst_62 = arith.constant dense<0.000000e+00> : vector<16xf32>
    %185 = vector.multi_reduction <add>, %182, %cst_62 [1] : vector<16x32xf32> to vector<16xf32>
    %186 = vector.shape_cast %185 : vector<16xf32> to vector<16x1xf32>
    %cst_63 = arith.constant 3.200000e+01 : f32
    %187 = vector.broadcast %cst_63 : f32 to vector<16x1xf32>
    %188 = arith.divf %186, %187 : vector<16x1xf32>
    %189 = vector.broadcast %188 : vector<16x1xf32> to vector<16x32xf32>
    %190 = arith.subf %182, %189 : vector<16x32xf32>
    %191 = arith.mulf %190, %190 : vector<16x32xf32>
    %cst_64 = arith.constant dense<0.000000e+00> : vector<16xf32>
    %192 = vector.multi_reduction <add>, %191, %cst_64 [1] : vector<16x32xf32> to vector<16xf32>
    %193 = vector.shape_cast %192 : vector<16xf32> to vector<16x1xf32>
    %cst_65 = arith.constant 3.200000e+01 : f32
    %194 = vector.broadcast %cst_65 : f32 to vector<16x1xf32>
    %195 = arith.divf %193, %194 : vector<16x1xf32>
    %cst_66 = arith.constant 9.99999974E-6 : f32
    %196 = vector.broadcast %cst_66 : f32 to vector<16x1xf32>
    %197 = arith.addf %195, %196 : vector<16x1xf32>
    %198 = math.rsqrt %197 : vector<16x1xf32>
    %199 = vector.broadcast %198 : vector<16x1xf32> to vector<16x32xf32>
    %200 = arith.mulf %190, %199 : vector<16x32xf32>
    %201 = vector.broadcast %183 : vector<1x32xf32> to vector<16x32xf32>
    %202 = arith.mulf %200, %201 : vector<16x32xf32>
    %203 = vector.broadcast %184 : vector<1x32xf32> to vector<16x32xf32>
    %204 = arith.addf %202, %203 : vector<16x32xf32>
    %cst_67 = arith.constant 0.000000e+00 : f32
    %205 = vector.broadcast %cst_67 : f32 to vector<16x96xf32>
    %206 = tpu.concatenate %204, %205 in 1 : vector<16x32xf32>, vector<16x96xf32> -> vector<16x128xf32>
    %c0_68 = arith.constant 0 : index
    %c0_69 = arith.constant 0 : index
    %207 = vector.load %arg15[%c0_68, %c0_69] : memref<16x128xf32, #tpu.memory_space<vmem>>, vector<16x128xf32>
    tpu.vector_store %arg15[%c0_68, %c0_69], %206 {strides = array<i32>} : memref<16x128xf32, #tpu.memory_space<vmem>>, vector<16x128xf32>,
    return
  }
  func.func @transform_0(%arg0: i32) -> (i32, i32) {
    %c0_i32 = arith.constant 0 : i32
    %c0_i32_0 = arith.constant 0 : i32
    %c0_i32_1 = arith.constant 0 : i32
    return %c0_i32, %c0_i32_0 : i32, i32
  }
  func.func @transform_1(%arg0: i32) -> (i32, i32) {
    %c0_i32 = arith.constant 0 : i32
    %c0_i32_0 = arith.constant 0 : i32
    %c0_i32_1 = arith.constant 0 : i32
    return %c0_i32, %c0_i32_0 : i32, i32
  }
  func.func @transform_2(%arg0: i32) -> (i32, i32) {
    %c0_i32 = arith.constant 0 : i32
    %c0_i32_0 = arith.constant 0 : i32
    %c0_i32_1 = arith.constant 0 : i32
    return %c0_i32, %c0_i32_0 : i32, i32
  }
  func.func @transform_3(%arg0: i32) -> (i32, i32) {
    %c0_i32 = arith.constant 0 : i32
    %c0_i32_0 = arith.constant 0 : i32
    %c0_i32_1 = arith.constant 0 : i32
    return %c0_i32, %c0_i32_0 : i32, i32
  }
  func.func @transform_4(%arg0: i32) -> (i32, i32) {
    %c0_i32 = arith.constant 0 : i32
    %c0_i32_0 = arith.constant 0 : i32
    %c0_i32_1 = arith.constant 0 : i32
    return %c0_i32, %c0_i32_0 : i32, i32
  }
  func.func @transform_5(%arg0: i32) -> (i32, i32) {
    %c0_i32 = arith.constant 0 : i32
    %c0_i32_0 = arith.constant 0 : i32
    %c0_i32_1 = arith.constant 0 : i32
    return %c0_i32, %c0_i32_0 : i32, i32
  }
  func.func @transform_6(%arg0: i32) -> (i32, i32) {
    %c0_i32 = arith.constant 0 : i32
    %c0_i32_0 = arith.constant 0 : i32
    %c0_i32_1 = arith.constant 0 : i32
    return %c0_i32, %c0_i32_0 : i32, i32
  }
  func.func @transform_7(%arg0: i32) -> (i32, i32) {
    %c0_i32 = arith.constant 0 : i32
    %c0_i32_0 = arith.constant 0 : i32
    %c0_i32_1 = arith.constant 0 : i32
    return %c0_i32, %c0_i32_0 : i32, i32
  }
  func.func @transform_8(%arg0: i32) -> (i32, i32) {
    %c0_i32 = arith.constant 0 : i32
    %c0_i32_0 = arith.constant 0 : i32
    %c0_i32_1 = arith.constant 0 : i32
    return %c0_i32, %c0_i32_0 : i32, i32
  }
  func.func @transform_9(%arg0: i32) -> (i32, i32) {
    %c0_i32 = arith.constant 0 : i32
    %c0_i32_0 = arith.constant 0 : i32
    %c0_i32_1 = arith.constant 0 : i32
    return %c0_i32, %c0_i32_0 : i32, i32
  }
  func.func @transform_10(%arg0: i32) -> (i32, i32) {
    %c0_i32 = arith.constant 0 : i32
    %c0_i32_0 = arith.constant 0 : i32
    %c0_i32_1 = arith.constant 0 : i32
    return %c0_i32, %c0_i32_0 : i32, i32
  }
  func.func @transform_11(%arg0: i32) -> (i32, i32) {
    %c0_i32 = arith.constant 0 : i32
    %c0_i32_0 = arith.constant 0 : i32
    %c0_i32_1 = arith.constant 0 : i32
    return %c0_i32, %c0_i32_0 : i32, i32
  }
  func.func @transform_12(%arg0: i32) -> (i32, i32) {
    %c0_i32 = arith.constant 0 : i32
    %c0_i32_0 = arith.constant 0 : i32
    %c0_i32_1 = arith.constant 0 : i32
    return %c0_i32, %c0_i32_0 : i32, i32
  }
  func.func @transform_13(%arg0: i32) -> (i32, i32) {
    %c0_i32 = arith.constant 0 : i32
    %c0_i32_0 = arith.constant 0 : i32
    %c0_i32_1 = arith.constant 0 : i32
    return %c0_i32, %c0_i32_0 : i32, i32
  }
  func.func @transform_14(%arg0: i32) -> (i32, i32) {
    %c0_i32 = arith.constant 0 : i32
    %c0_i32_0 = arith.constant 0 : i32
    %c0_i32_1 = arith.constant 0 : i32
    return %c0_i32, %c0_i32_0 : i32, i32
  }
}

module attributes {stable_mosaic.version = 11 : i64} {
  func.func @_final_kernel(%arg0: i32, %arg1: memref<16x128xf32, #tpu.memory_space<vmem>>, %arg2: memref<1x32xf32, #tpu.memory_space<vmem>>, %arg3: memref<1x32xf32, #tpu.memory_space<vmem>>, %arg4: memref<100x32xf32, #tpu.memory_space<vmem>>, %arg5: memref<16x100xf32, #tpu.memory_space<vmem>>) attributes {dimension_semantics = [#tpu.dimension_semantics<arbitrary>], iteration_bounds = array<i64: 1>, scalar_prefetch = 0 : i64, scratch_operands = 0 : i64, tpu.core_type = #tpu.core_type<tc>, window_params = [{pipeline_mode = #tpu.pipeline_mode<synchronous>, transform_indices = @transform_0, window_bounds = array<i64: 16, 128>}, {pipeline_mode = #tpu.pipeline_mode<synchronous>, transform_indices = @transform_1, window_bounds = array<i64: 1, 32>}, {pipeline_mode = #tpu.pipeline_mode<synchronous>, transform_indices = @transform_2, window_bounds = array<i64: 1, 32>}, {pipeline_mode = #tpu.pipeline_mode<synchronous>, transform_indices = @transform_3, window_bounds = array<i64: 100, 32>}, {pipeline_mode = #tpu.pipeline_mode<synchronous>, transform_indices = @transform_4, window_bounds = array<i64: 16, 100>}]} {
    %c0 = arith.constant 0 : index
    %c0_0 = arith.constant 0 : index
    %0 = vector.load %arg1[%c0, %c0_0] : memref<16x128xf32, #tpu.memory_space<vmem>>, vector<16x32xf32>
    %c0_1 = arith.constant 0 : index
    %c0_2 = arith.constant 0 : index
    %1 = vector.load %arg2[%c0_1, %c0_2] : memref<1x32xf32, #tpu.memory_space<vmem>>, vector<1x32xf32>
    %c0_3 = arith.constant 0 : index
    %c0_4 = arith.constant 0 : index
    %2 = vector.load %arg3[%c0_3, %c0_4] : memref<1x32xf32, #tpu.memory_space<vmem>>, vector<1x32xf32>
    %cst = arith.constant dense<0.000000e+00> : vector<16xf32>
    %3 = vector.multi_reduction <add>, %0, %cst [1] : vector<16x32xf32> to vector<16xf32>
    %4 = vector.shape_cast %3 : vector<16xf32> to vector<16x1xf32>
    %cst_5 = arith.constant 3.200000e+01 : f32
    %5 = vector.broadcast %cst_5 : f32 to vector<16x1xf32>
    %6 = arith.divf %4, %5 : vector<16x1xf32>
    %7 = vector.broadcast %6 : vector<16x1xf32> to vector<16x32xf32>
    %8 = arith.subf %0, %7 : vector<16x32xf32>
    %9 = arith.mulf %8, %8 : vector<16x32xf32>
    %cst_6 = arith.constant dense<0.000000e+00> : vector<16xf32>
    %10 = vector.multi_reduction <add>, %9, %cst_6 [1] : vector<16x32xf32> to vector<16xf32>
    %11 = vector.shape_cast %10 : vector<16xf32> to vector<16x1xf32>
    %cst_7 = arith.constant 3.200000e+01 : f32
    %12 = vector.broadcast %cst_7 : f32 to vector<16x1xf32>
    %13 = arith.divf %11, %12 : vector<16x1xf32>
    %cst_8 = arith.constant 9.99999974E-6 : f32
    %14 = vector.broadcast %cst_8 : f32 to vector<16x1xf32>
    %15 = arith.addf %13, %14 : vector<16x1xf32>
    %16 = math.rsqrt %15 : vector<16x1xf32>
    %17 = vector.broadcast %16 : vector<16x1xf32> to vector<16x32xf32>
    %18 = arith.mulf %8, %17 : vector<16x32xf32>
    %19 = vector.broadcast %1 : vector<1x32xf32> to vector<16x32xf32>
    %20 = arith.mulf %18, %19 : vector<16x32xf32>
    %21 = vector.broadcast %2 : vector<1x32xf32> to vector<16x32xf32>
    %22 = arith.addf %20, %21 : vector<16x32xf32>
    %23 = arith.truncf %22 : vector<16x32xf32> to vector<16x32xbf16>
    %c0_9 = arith.constant 0 : index
    %c0_10 = arith.constant 0 : index
    %24 = vector.load %arg4[%c0_9, %c0_10] : memref<100x32xf32, #tpu.memory_space<vmem>>, vector<100x32xf32>
    %25 = arith.truncf %24 : vector<100x32xf32> to vector<100x32xbf16>
    %cst_11 = arith.constant dense<0.000000e+00> : vector<16x100xf32>
    %26 = tpu.matmul %23, %25, %cst_11 {dimension_numbers = #tpu.dot_dimension_numbers<[1], [1], [0], [0], [0, 0, 1, 0], [], []>} : vector<16x32xbf16>, vector<100x32xbf16>, vector<16x100xf32> -> vector<16x100xf32>
    %c0_12 = arith.constant 0 : index
    %c0_13 = arith.constant 0 : index
    %27 = vector.load %arg5[%c0_12, %c0_13] : memref<16x100xf32, #tpu.memory_space<vmem>>, vector<16x100xf32>
    tpu.vector_store %arg5[%c0_12, %c0_13], %26 {strides = array<i32>} : memref<16x100xf32, #tpu.memory_space<vmem>>, vector<16x100xf32>,
    return
  }
  func.func @transform_0(%arg0: i32) -> (i32, i32) {
    %c0_i32 = arith.constant 0 : i32
    %c0_i32_0 = arith.constant 0 : i32
    %c0_i32_1 = arith.constant 0 : i32
    return %c0_i32, %c0_i32_0 : i32, i32
  }
  func.func @transform_1(%arg0: i32) -> (i32, i32) {
    %c0_i32 = arith.constant 0 : i32
    %c0_i32_0 = arith.constant 0 : i32
    %c0_i32_1 = arith.constant 0 : i32
    return %c0_i32, %c0_i32_0 : i32, i32
  }
  func.func @transform_2(%arg0: i32) -> (i32, i32) {
    %c0_i32 = arith.constant 0 : i32
    %c0_i32_0 = arith.constant 0 : i32
    %c0_i32_1 = arith.constant 0 : i32
    return %c0_i32, %c0_i32_0 : i32, i32
  }
  func.func @transform_3(%arg0: i32) -> (i32, i32) {
    %c0_i32 = arith.constant 0 : i32
    %c0_i32_0 = arith.constant 0 : i32
    %c0_i32_1 = arith.constant 0 : i32
    return %c0_i32, %c0_i32_0 : i32, i32
  }
  func.func @transform_4(%arg0: i32) -> (i32, i32) {
    %c0_i32 = arith.constant 0 : i32
    %c0_i32_0 = arith.constant 0 : i32
    %c0_i32_1 = arith.constant 0 : i32
    return %c0_i32, %c0_i32_0 : i32, i32
  }
}

module attributes {stable_mosaic.version = 11 : i64} {
  func.func @_enc_layer_kernel(%arg0: i32, %arg1: memref<16x128xf32, #tpu.memory_space<vmem>>, %arg2: memref<2x8xf32, #tpu.memory_space<vmem>>, %arg3: memref<32x96xf32, #tpu.memory_space<vmem>>, %arg4: memref<1x96xf32, #tpu.memory_space<vmem>>, %arg5: memref<32x32xf32, #tpu.memory_space<vmem>>, %arg6: memref<1x32xf32, #tpu.memory_space<vmem>>, %arg7: memref<1x32xf32, #tpu.memory_space<vmem>>, %arg8: memref<1x32xf32, #tpu.memory_space<vmem>>, %arg9: memref<32x64xf32, #tpu.memory_space<vmem>>, %arg10: memref<1x64xf32, #tpu.memory_space<vmem>>, %arg11: memref<64x32xf32, #tpu.memory_space<vmem>>, %arg12: memref<1x32xf32, #tpu.memory_space<vmem>>, %arg13: memref<1x32xf32, #tpu.memory_space<vmem>>, %arg14: memref<1x32xf32, #tpu.memory_space<vmem>>, %arg15: memref<1x32xf32, #tpu.memory_space<vmem>>, %arg16: memref<1x32xf32, #tpu.memory_space<vmem>>, %arg17: memref<16x128xf32, #tpu.memory_space<vmem>>) attributes {dimension_semantics = [#tpu.dimension_semantics<arbitrary>], iteration_bounds = array<i64: 1>, scalar_prefetch = 0 : i64, scratch_operands = 0 : i64, tpu.core_type = #tpu.core_type<tc>, window_params = [{pipeline_mode = #tpu.pipeline_mode<synchronous>, transform_indices = @transform_0, window_bounds = array<i64: 16, 128>}, {pipeline_mode = #tpu.pipeline_mode<synchronous>, transform_indices = @transform_1, window_bounds = array<i64: 2, 8>}, {pipeline_mode = #tpu.pipeline_mode<synchronous>, transform_indices = @transform_2, window_bounds = array<i64: 32, 96>}, {pipeline_mode = #tpu.pipeline_mode<synchronous>, transform_indices = @transform_3, window_bounds = array<i64: 1, 96>}, {pipeline_mode = #tpu.pipeline_mode<synchronous>, transform_indices = @transform_4, window_bounds = array<i64: 32, 32>}, {pipeline_mode = #tpu.pipeline_mode<synchronous>, transform_indices = @transform_5, window_bounds = array<i64: 1, 32>}, {pipeline_mode = #tpu.pipeline_mode<synchronous>, transform_indices = @transform_6, window_bounds = array<i64: 1, 32>}, {pipeline_mode = #tpu.pipeline_mode<synchronous>, transform_indices = @transform_7, window_bounds = array<i64: 1, 32>}, {pipeline_mode = #tpu.pipeline_mode<synchronous>, transform_indices = @transform_8, window_bounds = array<i64: 32, 64>}, {pipeline_mode = #tpu.pipeline_mode<synchronous>, transform_indices = @transform_9, window_bounds = array<i64: 1, 64>}, {pipeline_mode = #tpu.pipeline_mode<synchronous>, transform_indices = @transform_10, window_bounds = array<i64: 64, 32>}, {pipeline_mode = #tpu.pipeline_mode<synchronous>, transform_indices = @transform_11, window_bounds = array<i64: 1, 32>}, {pipeline_mode = #tpu.pipeline_mode<synchronous>, transform_indices = @transform_12, window_bounds = array<i64: 1, 32>}, {pipeline_mode = #tpu.pipeline_mode<synchronous>, transform_indices = @transform_13, window_bounds = array<i64: 1, 32>}, {pipeline_mode = #tpu.pipeline_mode<synchronous>, transform_indices = @transform_14, window_bounds = array<i64: 1, 32>}, {pipeline_mode = #tpu.pipeline_mode<synchronous>, transform_indices = @transform_15, window_bounds = array<i64: 1, 32>}, {pipeline_mode = #tpu.pipeline_mode<synchronous>, transform_indices = @transform_16, window_bounds = array<i64: 16, 128>}]} {
    %c0 = arith.constant 0 : index
    %c0_0 = arith.constant 0 : index
    %0 = vector.load %arg1[%c0, %c0_0] : memref<16x128xf32, #tpu.memory_space<vmem>>, vector<16x32xf32>
    %c0_1 = arith.constant 0 : index
    %c0_2 = arith.constant 0 : index
    %1 = vector.load %arg2[%c0_1, %c0_2] : memref<2x8xf32, #tpu.memory_space<vmem>>, vector<2x8xf32>
    %2 = vector.shape_cast %1 : vector<2x8xf32> to vector<2x1x8xf32>
    %3 = arith.truncf %0 : vector<16x32xf32> to vector<16x32xbf16>
    %c0_3 = arith.constant 0 : index
    %c0_4 = arith.constant 0 : index
    %4 = vector.load %arg3[%c0_3, %c0_4] : memref<32x96xf32, #tpu.memory_space<vmem>>, vector<32x96xf32>
    %5 = arith.truncf %4 : vector<32x96xf32> to vector<32x96xbf16>
    %cst = arith.constant dense<0.000000e+00> : vector<16x96xf32>
    %6 = tpu.matmul %3, %5, %cst {dimension_numbers = #tpu.dot_dimension_numbers<[1], [0], [0], [1], [0, 0, 1, 1], [], []>} : vector<16x32xbf16>, vector<32x96xbf16>, vector<16x96xf32> -> vector<16x96xf32>
    %c0_5 = arith.constant 0 : index
    %c0_6 = arith.constant 0 : index
    %7 = vector.load %arg4[%c0_5, %c0_6] : memref<1x96xf32, #tpu.memory_space<vmem>>, vector<1x96xf32>
    %8 = vector.broadcast %7 : vector<1x96xf32> to vector<16x96xf32>
    %9 = arith.addf %6, %8 : vector<16x96xf32>
    %10 = vector.extract_strided_slice %9 {offsets = [0, 0], sizes = [16, 32], strides = [1, 1]} : vector<16x96xf32> to vector<16x32xf32>
    %11 = vector.extract_strided_slice %9 {offsets = [0, 32], sizes = [16, 32], strides = [1, 1]} : vector<16x96xf32> to vector<16x32xf32>
    %12 = vector.extract_strided_slice %9 {offsets = [0, 64], sizes = [16, 32], strides = [1, 1]} : vector<16x96xf32> to vector<16x32xf32>
    %13 = vector.extract_strided_slice %10 {offsets = [0, 0], sizes = [16, 8], strides = [1, 1]} : vector<16x32xf32> to vector<16x8xf32>
    %cst_7 = arith.constant 0.353553385 : f32
    %14 = vector.broadcast %cst_7 : f32 to vector<16x8xf32>
    %15 = arith.mulf %13, %14 : vector<16x8xf32>
    %16 = vector.shape_cast %15 : vector<16x8xf32> to vector<2x8x8xf32>
    %17 = vector.extract_strided_slice %11 {offsets = [0, 0], sizes = [16, 8], strides = [1, 1]} : vector<16x32xf32> to vector<16x8xf32>
    %18 = vector.shape_cast %17 : vector<16x8xf32> to vector<2x8x8xf32>
    %19 = vector.extract_strided_slice %12 {offsets = [0, 0], sizes = [16, 8], strides = [1, 1]} : vector<16x32xf32> to vector<16x8xf32>
    %20 = vector.shape_cast %19 : vector<16x8xf32> to vector<2x8x8xf32>
    %21 = arith.truncf %16 : vector<2x8x8xf32> to vector<2x8x8xbf16>
    %22 = arith.truncf %18 : vector<2x8x8xf32> to vector<2x8x8xbf16>
    "tpu.trace_start"() <{level = 10 : i32, message = "bqd,bkd->bqk"}> : () -> ()
    %cst_8 = arith.constant dense<0.000000e+00> : vector<2x8x8xf32>
    %23 = tpu.matmul %21, %22, %cst_8 {dimension_numbers = #tpu.dot_dimension_numbers<[2], [2], [1], [1], [0, 0, 0, 1, 1, 1], [0], [0]>} : vector<2x8x8xbf16>, vector<2x8x8xbf16>, vector<2x8x8xf32> -> vector<2x8x8xf32>
    "tpu.trace_stop"() : () -> ()
    %24 = vector.broadcast %2 : vector<2x1x8xf32> to vector<2x8x8xf32>
    %25 = arith.addf %23, %24 : vector<2x8x8xf32>
    %cst_9 = arith.constant dense<0xFF800000> : vector<2x8xf32>
    %26 = vector.multi_reduction <maximumf>, %25, %cst_9 [2] : vector<2x8x8xf32> to vector<2x8xf32>
    %27 = vector.shape_cast %26 : vector<2x8xf32> to vector<2x8x1xf32>
    %28 = vector.broadcast %27 : vector<2x8x1xf32> to vector<2x8x8xf32>
    %29 = arith.subf %25, %28 : vector<2x8x8xf32>
    %30 = math.exp %29 : vector<2x8x8xf32>
    %cst_10 = arith.constant dense<0.000000e+00> : vector<2x8xf32>
    %31 = vector.multi_reduction <add>, %30, %cst_10 [2] : vector<2x8x8xf32> to vector<2x8xf32>
    %32 = vector.shape_cast %31 : vector<2x8xf32> to vector<2x8x1xf32>
    %33 = tpu.reciprocal %32 {approx = true} : vector<2x8x1xf32> -> vector<2x8x1xf32>
    %34 = vector.broadcast %33 : vector<2x8x1xf32> to vector<2x8x8xf32>
    %35 = arith.mulf %30, %34 : vector<2x8x8xf32>
    %36 = arith.truncf %35 : vector<2x8x8xf32> to vector<2x8x8xbf16>
    %37 = arith.truncf %20 : vector<2x8x8xf32> to vector<2x8x8xbf16>
    "tpu.trace_start"() <{level = 10 : i32, message = "bqk,bkd->bqd"}> : () -> ()
    %cst_11 = arith.constant dense<0.000000e+00> : vector<2x8x8xf32>
    %38 = tpu.matmul %36, %37, %cst_11 {dimension_numbers = #tpu.dot_dimension_numbers<[2], [1], [1], [2], [0, 0, 0, 1, 1, 2], [0], [0]>} : vector<2x8x8xbf16>, vector<2x8x8xbf16>, vector<2x8x8xf32> -> vector<2x8x8xf32>
    "tpu.trace_stop"() : () -> ()
    %39 = vector.shape_cast %38 : vector<2x8x8xf32> to vector<16x8xf32>
    %40 = arith.truncf %39 : vector<16x8xf32> to vector<16x8xbf16>
    %c0_12 = arith.constant 0 : index
    %c0_13 = arith.constant 0 : index
    %41 = vector.load %arg5[%c0_12, %c0_13] : memref<32x32xf32, #tpu.memory_space<vmem>>, vector<8x32xf32>
    %42 = arith.truncf %41 : vector<8x32xf32> to vector<8x32xbf16>
    %cst_14 = arith.constant dense<0.000000e+00> : vector<16x32xf32>
    %43 = tpu.matmul %40, %42, %cst_14 {dimension_numbers = #tpu.dot_dimension_numbers<[1], [0], [0], [1], [0, 0, 1, 1], [], []>} : vector<16x8xbf16>, vector<8x32xbf16>, vector<16x32xf32> -> vector<16x32xf32>
    %44 = vector.extract_strided_slice %10 {offsets = [0, 8], sizes = [16, 8], strides = [1, 1]} : vector<16x32xf32> to vector<16x8xf32>
    %cst_15 = arith.constant 0.353553385 : f32
    %45 = vector.broadcast %cst_15 : f32 to vector<16x8xf32>
    %46 = arith.mulf %44, %45 : vector<16x8xf32>
    %47 = vector.shape_cast %46 : vector<16x8xf32> to vector<2x8x8xf32>
    %48 = vector.extract_strided_slice %11 {offsets = [0, 8], sizes = [16, 8], strides = [1, 1]} : vector<16x32xf32> to vector<16x8xf32>
    %49 = vector.shape_cast %48 : vector<16x8xf32> to vector<2x8x8xf32>
    %50 = vector.extract_strided_slice %12 {offsets = [0, 8], sizes = [16, 8], strides = [1, 1]} : vector<16x32xf32> to vector<16x8xf32>
    %51 = vector.shape_cast %50 : vector<16x8xf32> to vector<2x8x8xf32>
    %52 = arith.truncf %47 : vector<2x8x8xf32> to vector<2x8x8xbf16>
    %53 = arith.truncf %49 : vector<2x8x8xf32> to vector<2x8x8xbf16>
    "tpu.trace_start"() <{level = 10 : i32, message = "bqd,bkd->bqk"}> : () -> ()
    %cst_16 = arith.constant dense<0.000000e+00> : vector<2x8x8xf32>
    %54 = tpu.matmul %52, %53, %cst_16 {dimension_numbers = #tpu.dot_dimension_numbers<[2], [2], [1], [1], [0, 0, 0, 1, 1, 1], [0], [0]>} : vector<2x8x8xbf16>, vector<2x8x8xbf16>, vector<2x8x8xf32> -> vector<2x8x8xf32>
    "tpu.trace_stop"() : () -> ()
    %55 = vector.broadcast %2 : vector<2x1x8xf32> to vector<2x8x8xf32>
    %56 = arith.addf %54, %55 : vector<2x8x8xf32>
    %cst_17 = arith.constant dense<0xFF800000> : vector<2x8xf32>
    %57 = vector.multi_reduction <maximumf>, %56, %cst_17 [2] : vector<2x8x8xf32> to vector<2x8xf32>
    %58 = vector.shape_cast %57 : vector<2x8xf32> to vector<2x8x1xf32>
    %59 = vector.broadcast %58 : vector<2x8x1xf32> to vector<2x8x8xf32>
    %60 = arith.subf %56, %59 : vector<2x8x8xf32>
    %61 = math.exp %60 : vector<2x8x8xf32>
    %cst_18 = arith.constant dense<0.000000e+00> : vector<2x8xf32>
    %62 = vector.multi_reduction <add>, %61, %cst_18 [2] : vector<2x8x8xf32> to vector<2x8xf32>
    %63 = vector.shape_cast %62 : vector<2x8xf32> to vector<2x8x1xf32>
    %64 = tpu.reciprocal %63 {approx = true} : vector<2x8x1xf32> -> vector<2x8x1xf32>
    %65 = vector.broadcast %64 : vector<2x8x1xf32> to vector<2x8x8xf32>
    %66 = arith.mulf %61, %65 : vector<2x8x8xf32>
    %67 = arith.truncf %66 : vector<2x8x8xf32> to vector<2x8x8xbf16>
    %68 = arith.truncf %51 : vector<2x8x8xf32> to vector<2x8x8xbf16>
    "tpu.trace_start"() <{level = 10 : i32, message = "bqk,bkd->bqd"}> : () -> ()
    %cst_19 = arith.constant dense<0.000000e+00> : vector<2x8x8xf32>
    %69 = tpu.matmul %67, %68, %cst_19 {dimension_numbers = #tpu.dot_dimension_numbers<[2], [1], [1], [2], [0, 0, 0, 1, 1, 2], [0], [0]>} : vector<2x8x8xbf16>, vector<2x8x8xbf16>, vector<2x8x8xf32> -> vector<2x8x8xf32>
    "tpu.trace_stop"() : () -> ()
    %70 = vector.shape_cast %69 : vector<2x8x8xf32> to vector<16x8xf32>
    %71 = arith.truncf %70 : vector<16x8xf32> to vector<16x8xbf16>
    %c8 = arith.constant 8 : index
    %c0_20 = arith.constant 0 : index
    %72 = vector.load %arg5[%c8, %c0_20] : memref<32x32xf32, #tpu.memory_space<vmem>>, vector<8x32xf32>
    %73 = arith.truncf %72 : vector<8x32xf32> to vector<8x32xbf16>
    %cst_21 = arith.constant dense<0.000000e+00> : vector<16x32xf32>
    %74 = tpu.matmul %71, %73, %cst_21 {dimension_numbers = #tpu.dot_dimension_numbers<[1], [0], [0], [1], [0, 0, 1, 1], [], []>} : vector<16x8xbf16>, vector<8x32xbf16>, vector<16x32xf32> -> vector<16x32xf32>
    %75 = arith.addf %43, %74 : vector<16x32xf32>
    %76 = vector.extract_strided_slice %10 {offsets = [0, 16], sizes = [16, 8], strides = [1, 1]} : vector<16x32xf32> to vector<16x8xf32>
    %cst_22 = arith.constant 0.353553385 : f32
    %77 = vector.broadcast %cst_22 : f32 to vector<16x8xf32>
    %78 = arith.mulf %76, %77 : vector<16x8xf32>
    %79 = vector.shape_cast %78 : vector<16x8xf32> to vector<2x8x8xf32>
    %80 = vector.extract_strided_slice %11 {offsets = [0, 16], sizes = [16, 8], strides = [1, 1]} : vector<16x32xf32> to vector<16x8xf32>
    %81 = vector.shape_cast %80 : vector<16x8xf32> to vector<2x8x8xf32>
    %82 = vector.extract_strided_slice %12 {offsets = [0, 16], sizes = [16, 8], strides = [1, 1]} : vector<16x32xf32> to vector<16x8xf32>
    %83 = vector.shape_cast %82 : vector<16x8xf32> to vector<2x8x8xf32>
    %84 = arith.truncf %79 : vector<2x8x8xf32> to vector<2x8x8xbf16>
    %85 = arith.truncf %81 : vector<2x8x8xf32> to vector<2x8x8xbf16>
    "tpu.trace_start"() <{level = 10 : i32, message = "bqd,bkd->bqk"}> : () -> ()
    %cst_23 = arith.constant dense<0.000000e+00> : vector<2x8x8xf32>
    %86 = tpu.matmul %84, %85, %cst_23 {dimension_numbers = #tpu.dot_dimension_numbers<[2], [2], [1], [1], [0, 0, 0, 1, 1, 1], [0], [0]>} : vector<2x8x8xbf16>, vector<2x8x8xbf16>, vector<2x8x8xf32> -> vector<2x8x8xf32>
    "tpu.trace_stop"() : () -> ()
    %87 = vector.broadcast %2 : vector<2x1x8xf32> to vector<2x8x8xf32>
    %88 = arith.addf %86, %87 : vector<2x8x8xf32>
    %cst_24 = arith.constant dense<0xFF800000> : vector<2x8xf32>
    %89 = vector.multi_reduction <maximumf>, %88, %cst_24 [2] : vector<2x8x8xf32> to vector<2x8xf32>
    %90 = vector.shape_cast %89 : vector<2x8xf32> to vector<2x8x1xf32>
    %91 = vector.broadcast %90 : vector<2x8x1xf32> to vector<2x8x8xf32>
    %92 = arith.subf %88, %91 : vector<2x8x8xf32>
    %93 = math.exp %92 : vector<2x8x8xf32>
    %cst_25 = arith.constant dense<0.000000e+00> : vector<2x8xf32>
    %94 = vector.multi_reduction <add>, %93, %cst_25 [2] : vector<2x8x8xf32> to vector<2x8xf32>
    %95 = vector.shape_cast %94 : vector<2x8xf32> to vector<2x8x1xf32>
    %96 = tpu.reciprocal %95 {approx = true} : vector<2x8x1xf32> -> vector<2x8x1xf32>
    %97 = vector.broadcast %96 : vector<2x8x1xf32> to vector<2x8x8xf32>
    %98 = arith.mulf %93, %97 : vector<2x8x8xf32>
    %99 = arith.truncf %98 : vector<2x8x8xf32> to vector<2x8x8xbf16>
    %100 = arith.truncf %83 : vector<2x8x8xf32> to vector<2x8x8xbf16>
    "tpu.trace_start"() <{level = 10 : i32, message = "bqk,bkd->bqd"}> : () -> ()
    %cst_26 = arith.constant dense<0.000000e+00> : vector<2x8x8xf32>
    %101 = tpu.matmul %99, %100, %cst_26 {dimension_numbers = #tpu.dot_dimension_numbers<[2], [1], [1], [2], [0, 0, 0, 1, 1, 2], [0], [0]>} : vector<2x8x8xbf16>, vector<2x8x8xbf16>, vector<2x8x8xf32> -> vector<2x8x8xf32>
    "tpu.trace_stop"() : () -> ()
    %102 = vector.shape_cast %101 : vector<2x8x8xf32> to vector<16x8xf32>
    %103 = arith.truncf %102 : vector<16x8xf32> to vector<16x8xbf16>
    %c16 = arith.constant 16 : index
    %c0_27 = arith.constant 0 : index
    %104 = vector.load %arg5[%c16, %c0_27] : memref<32x32xf32, #tpu.memory_space<vmem>>, vector<8x32xf32>
    %105 = arith.truncf %104 : vector<8x32xf32> to vector<8x32xbf16>
    %cst_28 = arith.constant dense<0.000000e+00> : vector<16x32xf32>
    %106 = tpu.matmul %103, %105, %cst_28 {dimension_numbers = #tpu.dot_dimension_numbers<[1], [0], [0], [1], [0, 0, 1, 1], [], []>} : vector<16x8xbf16>, vector<8x32xbf16>, vector<16x32xf32> -> vector<16x32xf32>
    %107 = arith.addf %75, %106 : vector<16x32xf32>
    %108 = vector.extract_strided_slice %10 {offsets = [0, 24], sizes = [16, 8], strides = [1, 1]} : vector<16x32xf32> to vector<16x8xf32>
    %cst_29 = arith.constant 0.353553385 : f32
    %109 = vector.broadcast %cst_29 : f32 to vector<16x8xf32>
    %110 = arith.mulf %108, %109 : vector<16x8xf32>
    %111 = vector.shape_cast %110 : vector<16x8xf32> to vector<2x8x8xf32>
    %112 = vector.extract_strided_slice %11 {offsets = [0, 24], sizes = [16, 8], strides = [1, 1]} : vector<16x32xf32> to vector<16x8xf32>
    %113 = vector.shape_cast %112 : vector<16x8xf32> to vector<2x8x8xf32>
    %114 = vector.extract_strided_slice %12 {offsets = [0, 24], sizes = [16, 8], strides = [1, 1]} : vector<16x32xf32> to vector<16x8xf32>
    %115 = vector.shape_cast %114 : vector<16x8xf32> to vector<2x8x8xf32>
    %116 = arith.truncf %111 : vector<2x8x8xf32> to vector<2x8x8xbf16>
    %117 = arith.truncf %113 : vector<2x8x8xf32> to vector<2x8x8xbf16>
    "tpu.trace_start"() <{level = 10 : i32, message = "bqd,bkd->bqk"}> : () -> ()
    %cst_30 = arith.constant dense<0.000000e+00> : vector<2x8x8xf32>
    %118 = tpu.matmul %116, %117, %cst_30 {dimension_numbers = #tpu.dot_dimension_numbers<[2], [2], [1], [1], [0, 0, 0, 1, 1, 1], [0], [0]>} : vector<2x8x8xbf16>, vector<2x8x8xbf16>, vector<2x8x8xf32> -> vector<2x8x8xf32>
    "tpu.trace_stop"() : () -> ()
    %119 = vector.broadcast %2 : vector<2x1x8xf32> to vector<2x8x8xf32>
    %120 = arith.addf %118, %119 : vector<2x8x8xf32>
    %cst_31 = arith.constant dense<0xFF800000> : vector<2x8xf32>
    %121 = vector.multi_reduction <maximumf>, %120, %cst_31 [2] : vector<2x8x8xf32> to vector<2x8xf32>
    %122 = vector.shape_cast %121 : vector<2x8xf32> to vector<2x8x1xf32>
    %123 = vector.broadcast %122 : vector<2x8x1xf32> to vector<2x8x8xf32>
    %124 = arith.subf %120, %123 : vector<2x8x8xf32>
    %125 = math.exp %124 : vector<2x8x8xf32>
    %cst_32 = arith.constant dense<0.000000e+00> : vector<2x8xf32>
    %126 = vector.multi_reduction <add>, %125, %cst_32 [2] : vector<2x8x8xf32> to vector<2x8xf32>
    %127 = vector.shape_cast %126 : vector<2x8xf32> to vector<2x8x1xf32>
    %128 = tpu.reciprocal %127 {approx = true} : vector<2x8x1xf32> -> vector<2x8x1xf32>
    %129 = vector.broadcast %128 : vector<2x8x1xf32> to vector<2x8x8xf32>
    %130 = arith.mulf %125, %129 : vector<2x8x8xf32>
    %131 = arith.truncf %130 : vector<2x8x8xf32> to vector<2x8x8xbf16>
    %132 = arith.truncf %115 : vector<2x8x8xf32> to vector<2x8x8xbf16>
    "tpu.trace_start"() <{level = 10 : i32, message = "bqk,bkd->bqd"}> : () -> ()
    %cst_33 = arith.constant dense<0.000000e+00> : vector<2x8x8xf32>
    %133 = tpu.matmul %131, %132, %cst_33 {dimension_numbers = #tpu.dot_dimension_numbers<[2], [1], [1], [2], [0, 0, 0, 1, 1, 2], [0], [0]>} : vector<2x8x8xbf16>, vector<2x8x8xbf16>, vector<2x8x8xf32> -> vector<2x8x8xf32>
    "tpu.trace_stop"() : () -> ()
    %134 = vector.shape_cast %133 : vector<2x8x8xf32> to vector<16x8xf32>
    %135 = arith.truncf %134 : vector<16x8xf32> to vector<16x8xbf16>
    %c24 = arith.constant 24 : index
    %c0_34 = arith.constant 0 : index
    %136 = vector.load %arg5[%c24, %c0_34] : memref<32x32xf32, #tpu.memory_space<vmem>>, vector<8x32xf32>
    %137 = arith.truncf %136 : vector<8x32xf32> to vector<8x32xbf16>
    %cst_35 = arith.constant dense<0.000000e+00> : vector<16x32xf32>
    %138 = tpu.matmul %135, %137, %cst_35 {dimension_numbers = #tpu.dot_dimension_numbers<[1], [0], [0], [1], [0, 0, 1, 1], [], []>} : vector<16x8xbf16>, vector<8x32xbf16>, vector<16x32xf32> -> vector<16x32xf32>
    %139 = arith.addf %107, %138 : vector<16x32xf32>
    %c0_36 = arith.constant 0 : index
    %c0_37 = arith.constant 0 : index
    %140 = vector.load %arg6[%c0_36, %c0_37] : memref<1x32xf32, #tpu.memory_space<vmem>>, vector<1x32xf32>
    %141 = vector.broadcast %140 : vector<1x32xf32> to vector<16x32xf32>
    %142 = arith.addf %139, %141 : vector<16x32xf32>
    %143 = arith.addf %0, %142 : vector<16x32xf32>
    %c0_38 = arith.constant 0 : index
    %c0_39 = arith.constant 0 : index
    %144 = vector.load %arg7[%c0_38, %c0_39] : memref<1x32xf32, #tpu.memory_space<vmem>>, vector<1x32xf32>
    %c0_40 = arith.constant 0 : index
    %c0_41 = arith.constant 0 : index
    %145 = vector.load %arg8[%c0_40, %c0_41] : memref<1x32xf32, #tpu.memory_space<vmem>>, vector<1x32xf32>
    %cst_42 = arith.constant dense<0.000000e+00> : vector<16xf32>
    %146 = vector.multi_reduction <add>, %143, %cst_42 [1] : vector<16x32xf32> to vector<16xf32>
    %147 = vector.shape_cast %146 : vector<16xf32> to vector<16x1xf32>
    %cst_43 = arith.constant 3.200000e+01 : f32
    %148 = vector.broadcast %cst_43 : f32 to vector<16x1xf32>
    %149 = arith.divf %147, %148 : vector<16x1xf32>
    %150 = vector.broadcast %149 : vector<16x1xf32> to vector<16x32xf32>
    %151 = arith.subf %143, %150 : vector<16x32xf32>
    %152 = arith.mulf %151, %151 : vector<16x32xf32>
    %cst_44 = arith.constant dense<0.000000e+00> : vector<16xf32>
    %153 = vector.multi_reduction <add>, %152, %cst_44 [1] : vector<16x32xf32> to vector<16xf32>
    %154 = vector.shape_cast %153 : vector<16xf32> to vector<16x1xf32>
    %cst_45 = arith.constant 3.200000e+01 : f32
    %155 = vector.broadcast %cst_45 : f32 to vector<16x1xf32>
    %156 = arith.divf %154, %155 : vector<16x1xf32>
    %cst_46 = arith.constant 9.99999974E-6 : f32
    %157 = vector.broadcast %cst_46 : f32 to vector<16x1xf32>
    %158 = arith.addf %156, %157 : vector<16x1xf32>
    %159 = math.rsqrt %158 : vector<16x1xf32>
    %160 = vector.broadcast %159 : vector<16x1xf32> to vector<16x32xf32>
    %161 = arith.mulf %151, %160 : vector<16x32xf32>
    %162 = vector.broadcast %144 : vector<1x32xf32> to vector<16x32xf32>
    %163 = arith.mulf %161, %162 : vector<16x32xf32>
    %164 = vector.broadcast %145 : vector<1x32xf32> to vector<16x32xf32>
    %165 = arith.addf %163, %164 : vector<16x32xf32>
    %166 = arith.truncf %165 : vector<16x32xf32> to vector<16x32xbf16>
    %c0_47 = arith.constant 0 : index
    %c0_48 = arith.constant 0 : index
    %167 = vector.load %arg9[%c0_47, %c0_48] : memref<32x64xf32, #tpu.memory_space<vmem>>, vector<32x64xf32>
    %168 = arith.truncf %167 : vector<32x64xf32> to vector<32x64xbf16>
    %cst_49 = arith.constant dense<0.000000e+00> : vector<16x64xf32>
    %169 = tpu.matmul %166, %168, %cst_49 {dimension_numbers = #tpu.dot_dimension_numbers<[1], [0], [0], [1], [0, 0, 1, 1], [], []>} : vector<16x32xbf16>, vector<32x64xbf16>, vector<16x64xf32> -> vector<16x64xf32>
    %c0_50 = arith.constant 0 : index
    %c0_51 = arith.constant 0 : index
    %170 = vector.load %arg10[%c0_50, %c0_51] : memref<1x64xf32, #tpu.memory_space<vmem>>, vector<1x64xf32>
    %171 = vector.broadcast %170 : vector<1x64xf32> to vector<16x64xf32>
    %172 = arith.addf %169, %171 : vector<16x64xf32>
    %cst_52 = arith.constant 0.000000e+00 : f32
    %173 = vector.broadcast %cst_52 : f32 to vector<16x64xf32>
    %174 = arith.maximumf %172, %173 : vector<16x64xf32>
    %175 = arith.truncf %174 : vector<16x64xf32> to vector<16x64xbf16>
    %c0_53 = arith.constant 0 : index
    %c0_54 = arith.constant 0 : index
    %176 = vector.load %arg11[%c0_53, %c0_54] : memref<64x32xf32, #tpu.memory_space<vmem>>, vector<64x32xf32>
    %177 = arith.truncf %176 : vector<64x32xf32> to vector<64x32xbf16>
    %cst_55 = arith.constant dense<0.000000e+00> : vector<16x32xf32>
    %178 = tpu.matmul %175, %177, %cst_55 {dimension_numbers = #tpu.dot_dimension_numbers<[1], [0], [0], [1], [0, 0, 1, 1], [], []>} : vector<16x64xbf16>, vector<64x32xbf16>, vector<16x32xf32> -> vector<16x32xf32>
    %c0_56 = arith.constant 0 : index
    %c0_57 = arith.constant 0 : index
    %179 = vector.load %arg12[%c0_56, %c0_57] : memref<1x32xf32, #tpu.memory_space<vmem>>, vector<1x32xf32>
    %180 = vector.broadcast %179 : vector<1x32xf32> to vector<16x32xf32>
    %181 = arith.addf %178, %180 : vector<16x32xf32>
    %182 = arith.addf %165, %181 : vector<16x32xf32>
    %c0_58 = arith.constant 0 : index
    %c0_59 = arith.constant 0 : index
    %183 = vector.load %arg13[%c0_58, %c0_59] : memref<1x32xf32, #tpu.memory_space<vmem>>, vector<1x32xf32>
    %c0_60 = arith.constant 0 : index
    %c0_61 = arith.constant 0 : index
    %184 = vector.load %arg14[%c0_60, %c0_61] : memref<1x32xf32, #tpu.memory_space<vmem>>, vector<1x32xf32>
    %cst_62 = arith.constant dense<0.000000e+00> : vector<16xf32>
    %185 = vector.multi_reduction <add>, %182, %cst_62 [1] : vector<16x32xf32> to vector<16xf32>
    %186 = vector.shape_cast %185 : vector<16xf32> to vector<16x1xf32>
    %cst_63 = arith.constant 3.200000e+01 : f32
    %187 = vector.broadcast %cst_63 : f32 to vector<16x1xf32>
    %188 = arith.divf %186, %187 : vector<16x1xf32>
    %189 = vector.broadcast %188 : vector<16x1xf32> to vector<16x32xf32>
    %190 = arith.subf %182, %189 : vector<16x32xf32>
    %191 = arith.mulf %190, %190 : vector<16x32xf32>
    %cst_64 = arith.constant dense<0.000000e+00> : vector<16xf32>
    %192 = vector.multi_reduction <add>, %191, %cst_64 [1] : vector<16x32xf32> to vector<16xf32>
    %193 = vector.shape_cast %192 : vector<16xf32> to vector<16x1xf32>
    %cst_65 = arith.constant 3.200000e+01 : f32
    %194 = vector.broadcast %cst_65 : f32 to vector<16x1xf32>
    %195 = arith.divf %193, %194 : vector<16x1xf32>
    %cst_66 = arith.constant 9.99999974E-6 : f32
    %196 = vector.broadcast %cst_66 : f32 to vector<16x1xf32>
    %197 = arith.addf %195, %196 : vector<16x1xf32>
    %198 = math.rsqrt %197 : vector<16x1xf32>
    %199 = vector.broadcast %198 : vector<16x1xf32> to vector<16x32xf32>
    %200 = arith.mulf %190, %199 : vector<16x32xf32>
    %201 = vector.broadcast %183 : vector<1x32xf32> to vector<16x32xf32>
    %202 = arith.mulf %200, %201 : vector<16x32xf32>
    %203 = vector.broadcast %184 : vector<1x32xf32> to vector<16x32xf32>
    %204 = arith.addf %202, %203 : vector<16x32xf32>
    %c0_67 = arith.constant 0 : index
    %c0_68 = arith.constant 0 : index
    %205 = vector.load %arg15[%c0_67, %c0_68] : memref<1x32xf32, #tpu.memory_space<vmem>>, vector<1x32xf32>
    %c0_69 = arith.constant 0 : index
    %c0_70 = arith.constant 0 : index
    %206 = vector.load %arg16[%c0_69, %c0_70] : memref<1x32xf32, #tpu.memory_space<vmem>>, vector<1x32xf32>
    %cst_71 = arith.constant dense<0.000000e+00> : vector<16xf32>
    %207 = vector.multi_reduction <add>, %204, %cst_71 [1] : vector<16x32xf32> to vector<16xf32>
    %208 = vector.shape_cast %207 : vector<16xf32> to vector<16x1xf32>
    %cst_72 = arith.constant 3.200000e+01 : f32
    %209 = vector.broadcast %cst_72 : f32 to vector<16x1xf32>
    %210 = arith.divf %208, %209 : vector<16x1xf32>
    %211 = vector.broadcast %210 : vector<16x1xf32> to vector<16x32xf32>
    %212 = arith.subf %204, %211 : vector<16x32xf32>
    %213 = arith.mulf %212, %212 : vector<16x32xf32>
    %cst_73 = arith.constant dense<0.000000e+00> : vector<16xf32>
    %214 = vector.multi_reduction <add>, %213, %cst_73 [1] : vector<16x32xf32> to vector<16xf32>
    %215 = vector.shape_cast %214 : vector<16xf32> to vector<16x1xf32>
    %cst_74 = arith.constant 3.200000e+01 : f32
    %216 = vector.broadcast %cst_74 : f32 to vector<16x1xf32>
    %217 = arith.divf %215, %216 : vector<16x1xf32>
    %cst_75 = arith.constant 9.99999974E-6 : f32
    %218 = vector.broadcast %cst_75 : f32 to vector<16x1xf32>
    %219 = arith.addf %217, %218 : vector<16x1xf32>
    %220 = math.rsqrt %219 : vector<16x1xf32>
    %221 = vector.broadcast %220 : vector<16x1xf32> to vector<16x32xf32>
    %222 = arith.mulf %212, %221 : vector<16x32xf32>
    %223 = vector.broadcast %205 : vector<1x32xf32> to vector<16x32xf32>
    %224 = arith.mulf %222, %223 : vector<16x32xf32>
    %225 = vector.broadcast %206 : vector<1x32xf32> to vector<16x32xf32>
    %226 = arith.addf %224, %225 : vector<16x32xf32>
    %cst_76 = arith.constant 0.000000e+00 : f32
    %227 = vector.broadcast %cst_76 : f32 to vector<16x96xf32>
    %228 = tpu.concatenate %226, %227 in 1 : vector<16x32xf32>, vector<16x96xf32> -> vector<16x128xf32>
    %c0_77 = arith.constant 0 : index
    %c0_78 = arith.constant 0 : index
    %229 = vector.load %arg17[%c0_77, %c0_78] : memref<16x128xf32, #tpu.memory_space<vmem>>, vector<16x128xf32>
    tpu.vector_store %arg17[%c0_77, %c0_78], %228 {strides = array<i32>} : memref<16x128xf32, #tpu.memory_space<vmem>>, vector<16x128xf32>,
    return
  }
  func.func @transform_0(%arg0: i32) -> (i32, i32) {
    %c0_i32 = arith.constant 0 : i32
    %c0_i32_0 = arith.constant 0 : i32
    %c0_i32_1 = arith.constant 0 : i32
    return %c0_i32, %c0_i32_0 : i32, i32
  }
  func.func @transform_1(%arg0: i32) -> (i32, i32) {
    %c0_i32 = arith.constant 0 : i32
    %c0_i32_0 = arith.constant 0 : i32
    %c0_i32_1 = arith.constant 0 : i32
    return %c0_i32, %c0_i32_0 : i32, i32
  }
  func.func @transform_2(%arg0: i32) -> (i32, i32) {
    %c0_i32 = arith.constant 0 : i32
    %c0_i32_0 = arith.constant 0 : i32
    %c0_i32_1 = arith.constant 0 : i32
    return %c0_i32, %c0_i32_0 : i32, i32
  }
  func.func @transform_3(%arg0: i32) -> (i32, i32) {
    %c0_i32 = arith.constant 0 : i32
    %c0_i32_0 = arith.constant 0 : i32
    %c0_i32_1 = arith.constant 0 : i32
    return %c0_i32, %c0_i32_0 : i32, i32
  }
  func.func @transform_4(%arg0: i32) -> (i32, i32) {
    %c0_i32 = arith.constant 0 : i32
    %c0_i32_0 = arith.constant 0 : i32
    %c0_i32_1 = arith.constant 0 : i32
    return %c0_i32, %c0_i32_0 : i32, i32
  }
  func.func @transform_5(%arg0: i32) -> (i32, i32) {
    %c0_i32 = arith.constant 0 : i32
    %c0_i32_0 = arith.constant 0 : i32
    %c0_i32_1 = arith.constant 0 : i32
    return %c0_i32, %c0_i32_0 : i32, i32
  }
  func.func @transform_6(%arg0: i32) -> (i32, i32) {
    %c0_i32 = arith.constant 0 : i32
    %c0_i32_0 = arith.constant 0 : i32
    %c0_i32_1 = arith.constant 0 : i32
    return %c0_i32, %c0_i32_0 : i32, i32
  }
  func.func @transform_7(%arg0: i32) -> (i32, i32) {
    %c0_i32 = arith.constant 0 : i32
    %c0_i32_0 = arith.constant 0 : i32
    %c0_i32_1 = arith.constant 0 : i32
    return %c0_i32, %c0_i32_0 : i32, i32
  }
  func.func @transform_8(%arg0: i32) -> (i32, i32) {
    %c0_i32 = arith.constant 0 : i32
    %c0_i32_0 = arith.constant 0 : i32
    %c0_i32_1 = arith.constant 0 : i32
    return %c0_i32, %c0_i32_0 : i32, i32
  }
  func.func @transform_9(%arg0: i32) -> (i32, i32) {
    %c0_i32 = arith.constant 0 : i32
    %c0_i32_0 = arith.constant 0 : i32
    %c0_i32_1 = arith.constant 0 : i32
    return %c0_i32, %c0_i32_0 : i32, i32
  }
  func.func @transform_10(%arg0: i32) -> (i32, i32) {
    %c0_i32 = arith.constant 0 : i32
    %c0_i32_0 = arith.constant 0 : i32
    %c0_i32_1 = arith.constant 0 : i32
    return %c0_i32, %c0_i32_0 : i32, i32
  }
  func.func @transform_11(%arg0: i32) -> (i32, i32) {
    %c0_i32 = arith.constant 0 : i32
    %c0_i32_0 = arith.constant 0 : i32
    %c0_i32_1 = arith.constant 0 : i32
    return %c0_i32, %c0_i32_0 : i32, i32
  }
  func.func @transform_12(%arg0: i32) -> (i32, i32) {
    %c0_i32 = arith.constant 0 : i32
    %c0_i32_0 = arith.constant 0 : i32
    %c0_i32_1 = arith.constant 0 : i32
    return %c0_i32, %c0_i32_0 : i32, i32
  }
  func.func @transform_13(%arg0: i32) -> (i32, i32) {
    %c0_i32 = arith.constant 0 : i32
    %c0_i32_0 = arith.constant 0 : i32
    %c0_i32_1 = arith.constant 0 : i32
    return %c0_i32, %c0_i32_0 : i32, i32
  }
  func.func @transform_14(%arg0: i32) -> (i32, i32) {
    %c0_i32 = arith.constant 0 : i32
    %c0_i32_0 = arith.constant 0 : i32
    %c0_i32_1 = arith.constant 0 : i32
    return %c0_i32, %c0_i32_0 : i32, i32
  }
  func.func @transform_15(%arg0: i32) -> (i32, i32) {
    %c0_i32 = arith.constant 0 : i32
    %c0_i32_0 = arith.constant 0 : i32
    %c0_i32_1 = arith.constant 0 : i32
    return %c0_i32, %c0_i32_0 : i32, i32
  }
  func.func @transform_16(%arg0: i32) -> (i32, i32) {
    %c0_i32 = arith.constant 0 : i32
    %c0_i32_0 = arith.constant 0 : i32
    %c0_i32_1 = arith.constant 0 : i32
    return %c0_i32, %c0_i32_0 : i32, i32
  }
}

module attributes {stable_mosaic.version = 11 : i64} {
  func.func @_dec_layer_kernel(%arg0: i32, %arg1: memref<16x128xf32, #tpu.memory_space<vmem>>, %arg2: memref<16x128xf32, #tpu.memory_space<vmem>>, %arg3: memref<2x8xf32, #tpu.memory_space<vmem>>, %arg4: memref<32x96xf32, #tpu.memory_space<vmem>>, %arg5: memref<1x96xf32, #tpu.memory_space<vmem>>, %arg6: memref<32x32xf32, #tpu.memory_space<vmem>>, %arg7: memref<1x32xf32, #tpu.memory_space<vmem>>, %arg8: memref<1x32xf32, #tpu.memory_space<vmem>>, %arg9: memref<1x32xf32, #tpu.memory_space<vmem>>, %arg10: memref<32x32xf32, #tpu.memory_space<vmem>>, %arg11: memref<1x32xf32, #tpu.memory_space<vmem>>, %arg12: memref<32x64xf32, #tpu.memory_space<vmem>>, %arg13: memref<1x64xf32, #tpu.memory_space<vmem>>, %arg14: memref<32x32xf32, #tpu.memory_space<vmem>>, %arg15: memref<1x32xf32, #tpu.memory_space<vmem>>, %arg16: memref<1x32xf32, #tpu.memory_space<vmem>>, %arg17: memref<1x32xf32, #tpu.memory_space<vmem>>, %arg18: memref<32x64xf32, #tpu.memory_space<vmem>>, %arg19: memref<1x64xf32, #tpu.memory_space<vmem>>, %arg20: memref<64x32xf32, #tpu.memory_space<vmem>>, %arg21: memref<1x32xf32, #tpu.memory_space<vmem>>, %arg22: memref<1x32xf32, #tpu.memory_space<vmem>>, %arg23: memref<1x32xf32, #tpu.memory_space<vmem>>, %arg24: memref<16x128xf32, #tpu.memory_space<vmem>>) attributes {dimension_semantics = [#tpu.dimension_semantics<arbitrary>], iteration_bounds = array<i64: 1>, scalar_prefetch = 0 : i64, scratch_operands = 0 : i64, tpu.core_type = #tpu.core_type<tc>, window_params = [{pipeline_mode = #tpu.pipeline_mode<synchronous>, transform_indices = @transform_0, window_bounds = array<i64: 16, 128>}, {pipeline_mode = #tpu.pipeline_mode<synchronous>, transform_indices = @transform_1, window_bounds = array<i64: 16, 128>}, {pipeline_mode = #tpu.pipeline_mode<synchronous>, transform_indices = @transform_2, window_bounds = array<i64: 2, 8>}, {pipeline_mode = #tpu.pipeline_mode<synchronous>, transform_indices = @transform_3, window_bounds = array<i64: 32, 96>}, {pipeline_mode = #tpu.pipeline_mode<synchronous>, transform_indices = @transform_4, window_bounds = array<i64: 1, 96>}, {pipeline_mode = #tpu.pipeline_mode<synchronous>, transform_indices = @transform_5, window_bounds = array<i64: 32, 32>}, {pipeline_mode = #tpu.pipeline_mode<synchronous>, transform_indices = @transform_6, window_bounds = array<i64: 1, 32>}, {pipeline_mode = #tpu.pipeline_mode<synchronous>, transform_indices = @transform_7, window_bounds = array<i64: 1, 32>}, {pipeline_mode = #tpu.pipeline_mode<synchronous>, transform_indices = @transform_8, window_bounds = array<i64: 1, 32>}, {pipeline_mode = #tpu.pipeline_mode<synchronous>, transform_indices = @transform_9, window_bounds = array<i64: 32, 32>}, {pipeline_mode = #tpu.pipeline_mode<synchronous>, transform_indices = @transform_10, window_bounds = array<i64: 1, 32>}, {pipeline_mode = #tpu.pipeline_mode<synchronous>, transform_indices = @transform_11, window_bounds = array<i64: 32, 64>}, {pipeline_mode = #tpu.pipeline_mode<synchronous>, transform_indices = @transform_12, window_bounds = array<i64: 1, 64>}, {pipeline_mode = #tpu.pipeline_mode<synchronous>, transform_indices = @transform_13, window_bounds = array<i64: 32, 32>}, {pipeline_mode = #tpu.pipeline_mode<synchronous>, transform_indices = @transform_14, window_bounds = array<i64: 1, 32>}, {pipeline_mode = #tpu.pipeline_mode<synchronous>, transform_indices = @transform_15, window_bounds = array<i64: 1, 32>}, {pipeline_mode = #tpu.pipeline_mode<synchronous>, transform_indices = @transform_16, window_bounds = array<i64: 1, 32>}, {pipeline_mode = #tpu.pipeline_mode<synchronous>, transform_indices = @transform_17, window_bounds = array<i64: 32, 64>}, {pipeline_mode = #tpu.pipeline_mode<synchronous>, transform_indices = @transform_18, window_bounds = array<i64: 1, 64>}, {pipeline_mode = #tpu.pipeline_mode<synchronous>, transform_indices = @transform_19, window_bounds = array<i64: 64, 32>}, {pipeline_mode = #tpu.pipeline_mode<synchronous>, transform_indices = @transform_20, window_bounds = array<i64: 1, 32>}, {pipeline_mode = #tpu.pipeline_mode<synchronous>, transform_indices = @transform_21, window_bounds = array<i64: 1, 32>}, {pipeline_mode = #tpu.pipeline_mode<synchronous>, transform_indices = @transform_22, window_bounds = array<i64: 1, 32>}, {pipeline_mode = #tpu.pipeline_mode<synchronous>, transform_indices = @transform_23, window_bounds = array<i64: 16, 128>}]} {
    %c0 = arith.constant 0 : index
    %c0_0 = arith.constant 0 : index
    %0 = vector.load %arg1[%c0, %c0_0] : memref<16x128xf32, #tpu.memory_space<vmem>>, vector<16x32xf32>
    %c0_1 = arith.constant 0 : index
    %c0_2 = arith.constant 0 : index
    %1 = vector.load %arg2[%c0_1, %c0_2] : memref<16x128xf32, #tpu.memory_space<vmem>>, vector<16x32xf32>
    %2 = tpu.iota {dimensions = array<i32: 0>} : vector<8x8xi32>
    %3 = tpu.iota {dimensions = array<i32: 1>} : vector<8x8xi32>
    %4 = arith.cmpi sgt, %3, %2 : vector<8x8xi32>
    %cst = arith.constant -1.000000e+09 : f32
    %cst_3 = arith.constant 0.000000e+00 : f32
    %5 = vector.broadcast %cst : f32 to vector<8x8xf32>
    %6 = vector.broadcast %cst_3 : f32 to vector<8x8xf32>
    %7 = arith.select %4, %5, %6 : vector<8x8xi1>, vector<8x8xf32>
    %8 = vector.shape_cast %7 : vector<8x8xf32> to vector<1x8x8xf32>
    %c0_4 = arith.constant 0 : index
    %c0_5 = arith.constant 0 : index
    %9 = vector.load %arg3[%c0_4, %c0_5] : memref<2x8xf32, #tpu.memory_space<vmem>>, vector<2x8xf32>
    %10 = vector.shape_cast %9 : vector<2x8xf32> to vector<2x1x8xf32>
    %11 = vector.broadcast %8 : vector<1x8x8xf32> to vector<2x8x8xf32>
    %12 = vector.broadcast %10 : vector<2x1x8xf32> to vector<2x8x8xf32>
    %13 = arith.addf %11, %12 : vector<2x8x8xf32>
    %14 = arith.truncf %0 : vector<16x32xf32> to vector<16x32xbf16>
    %c0_6 = arith.constant 0 : index
    %c0_7 = arith.constant 0 : index
    %15 = vector.load %arg4[%c0_6, %c0_7] : memref<32x96xf32, #tpu.memory_space<vmem>>, vector<32x96xf32>
    %16 = arith.truncf %15 : vector<32x96xf32> to vector<32x96xbf16>
    %cst_8 = arith.constant dense<0.000000e+00> : vector<16x96xf32>
    %17 = tpu.matmul %14, %16, %cst_8 {dimension_numbers = #tpu.dot_dimension_numbers<[1], [0], [0], [1], [0, 0, 1, 1], [], []>} : vector<16x32xbf16>, vector<32x96xbf16>, vector<16x96xf32> -> vector<16x96xf32>
    %c0_9 = arith.constant 0 : index
    %c0_10 = arith.constant 0 : index
    %18 = vector.load %arg5[%c0_9, %c0_10] : memref<1x96xf32, #tpu.memory_space<vmem>>, vector<1x96xf32>
    %19 = vector.broadcast %18 : vector<1x96xf32> to vector<16x96xf32>
    %20 = arith.addf %17, %19 : vector<16x96xf32>
    %21 = vector.extract_strided_slice %20 {offsets = [0, 0], sizes = [16, 32], strides = [1, 1]} : vector<16x96xf32> to vector<16x32xf32>
    %22 = vector.extract_strided_slice %20 {offsets = [0, 32], sizes = [16, 32], strides = [1, 1]} : vector<16x96xf32> to vector<16x32xf32>
    %23 = vector.extract_strided_slice %20 {offsets = [0, 64], sizes = [16, 32], strides = [1, 1]} : vector<16x96xf32> to vector<16x32xf32>
    %24 = vector.extract_strided_slice %21 {offsets = [0, 0], sizes = [16, 8], strides = [1, 1]} : vector<16x32xf32> to vector<16x8xf32>
    %cst_11 = arith.constant 0.353553385 : f32
    %25 = vector.broadcast %cst_11 : f32 to vector<16x8xf32>
    %26 = arith.mulf %24, %25 : vector<16x8xf32>
    %27 = vector.shape_cast %26 : vector<16x8xf32> to vector<2x8x8xf32>
    %28 = vector.extract_strided_slice %22 {offsets = [0, 0], sizes = [16, 8], strides = [1, 1]} : vector<16x32xf32> to vector<16x8xf32>
    %29 = vector.shape_cast %28 : vector<16x8xf32> to vector<2x8x8xf32>
    %30 = vector.extract_strided_slice %23 {offsets = [0, 0], sizes = [16, 8], strides = [1, 1]} : vector<16x32xf32> to vector<16x8xf32>
    %31 = vector.shape_cast %30 : vector<16x8xf32> to vector<2x8x8xf32>
    %32 = arith.truncf %27 : vector<2x8x8xf32> to vector<2x8x8xbf16>
    %33 = arith.truncf %29 : vector<2x8x8xf32> to vector<2x8x8xbf16>
    "tpu.trace_start"() <{level = 10 : i32, message = "bqd,bkd->bqk"}> : () -> ()
    %cst_12 = arith.constant dense<0.000000e+00> : vector<2x8x8xf32>
    %34 = tpu.matmul %32, %33, %cst_12 {dimension_numbers = #tpu.dot_dimension_numbers<[2], [2], [1], [1], [0, 0, 0, 1, 1, 1], [0], [0]>} : vector<2x8x8xbf16>, vector<2x8x8xbf16>, vector<2x8x8xf32> -> vector<2x8x8xf32>
    "tpu.trace_stop"() : () -> ()
    %35 = arith.addf %34, %13 : vector<2x8x8xf32>
    %cst_13 = arith.constant dense<0xFF800000> : vector<2x8xf32>
    %36 = vector.multi_reduction <maximumf>, %35, %cst_13 [2] : vector<2x8x8xf32> to vector<2x8xf32>
    %37 = vector.shape_cast %36 : vector<2x8xf32> to vector<2x8x1xf32>
    %38 = vector.broadcast %37 : vector<2x8x1xf32> to vector<2x8x8xf32>
    %39 = arith.subf %35, %38 : vector<2x8x8xf32>
    %40 = math.exp %39 : vector<2x8x8xf32>
    %cst_14 = arith.constant dense<0.000000e+00> : vector<2x8xf32>
    %41 = vector.multi_reduction <add>, %40, %cst_14 [2] : vector<2x8x8xf32> to vector<2x8xf32>
    %42 = vector.shape_cast %41 : vector<2x8xf32> to vector<2x8x1xf32>
    %43 = tpu.reciprocal %42 {approx = true} : vector<2x8x1xf32> -> vector<2x8x1xf32>
    %44 = vector.broadcast %43 : vector<2x8x1xf32> to vector<2x8x8xf32>
    %45 = arith.mulf %40, %44 : vector<2x8x8xf32>
    %46 = arith.truncf %45 : vector<2x8x8xf32> to vector<2x8x8xbf16>
    %47 = arith.truncf %31 : vector<2x8x8xf32> to vector<2x8x8xbf16>
    "tpu.trace_start"() <{level = 10 : i32, message = "bqk,bkd->bqd"}> : () -> ()
    %cst_15 = arith.constant dense<0.000000e+00> : vector<2x8x8xf32>
    %48 = tpu.matmul %46, %47, %cst_15 {dimension_numbers = #tpu.dot_dimension_numbers<[2], [1], [1], [2], [0, 0, 0, 1, 1, 2], [0], [0]>} : vector<2x8x8xbf16>, vector<2x8x8xbf16>, vector<2x8x8xf32> -> vector<2x8x8xf32>
    "tpu.trace_stop"() : () -> ()
    %49 = vector.shape_cast %48 : vector<2x8x8xf32> to vector<16x8xf32>
    %50 = arith.truncf %49 : vector<16x8xf32> to vector<16x8xbf16>
    %c0_16 = arith.constant 0 : index
    %c0_17 = arith.constant 0 : index
    %51 = vector.load %arg6[%c0_16, %c0_17] : memref<32x32xf32, #tpu.memory_space<vmem>>, vector<8x32xf32>
    %52 = arith.truncf %51 : vector<8x32xf32> to vector<8x32xbf16>
    %cst_18 = arith.constant dense<0.000000e+00> : vector<16x32xf32>
    %53 = tpu.matmul %50, %52, %cst_18 {dimension_numbers = #tpu.dot_dimension_numbers<[1], [0], [0], [1], [0, 0, 1, 1], [], []>} : vector<16x8xbf16>, vector<8x32xbf16>, vector<16x32xf32> -> vector<16x32xf32>
    %54 = vector.extract_strided_slice %21 {offsets = [0, 8], sizes = [16, 8], strides = [1, 1]} : vector<16x32xf32> to vector<16x8xf32>
    %cst_19 = arith.constant 0.353553385 : f32
    %55 = vector.broadcast %cst_19 : f32 to vector<16x8xf32>
    %56 = arith.mulf %54, %55 : vector<16x8xf32>
    %57 = vector.shape_cast %56 : vector<16x8xf32> to vector<2x8x8xf32>
    %58 = vector.extract_strided_slice %22 {offsets = [0, 8], sizes = [16, 8], strides = [1, 1]} : vector<16x32xf32> to vector<16x8xf32>
    %59 = vector.shape_cast %58 : vector<16x8xf32> to vector<2x8x8xf32>
    %60 = vector.extract_strided_slice %23 {offsets = [0, 8], sizes = [16, 8], strides = [1, 1]} : vector<16x32xf32> to vector<16x8xf32>
    %61 = vector.shape_cast %60 : vector<16x8xf32> to vector<2x8x8xf32>
    %62 = arith.truncf %57 : vector<2x8x8xf32> to vector<2x8x8xbf16>
    %63 = arith.truncf %59 : vector<2x8x8xf32> to vector<2x8x8xbf16>
    "tpu.trace_start"() <{level = 10 : i32, message = "bqd,bkd->bqk"}> : () -> ()
    %cst_20 = arith.constant dense<0.000000e+00> : vector<2x8x8xf32>
    %64 = tpu.matmul %62, %63, %cst_20 {dimension_numbers = #tpu.dot_dimension_numbers<[2], [2], [1], [1], [0, 0, 0, 1, 1, 1], [0], [0]>} : vector<2x8x8xbf16>, vector<2x8x8xbf16>, vector<2x8x8xf32> -> vector<2x8x8xf32>
    "tpu.trace_stop"() : () -> ()
    %65 = arith.addf %64, %13 : vector<2x8x8xf32>
    %cst_21 = arith.constant dense<0xFF800000> : vector<2x8xf32>
    %66 = vector.multi_reduction <maximumf>, %65, %cst_21 [2] : vector<2x8x8xf32> to vector<2x8xf32>
    %67 = vector.shape_cast %66 : vector<2x8xf32> to vector<2x8x1xf32>
    %68 = vector.broadcast %67 : vector<2x8x1xf32> to vector<2x8x8xf32>
    %69 = arith.subf %65, %68 : vector<2x8x8xf32>
    %70 = math.exp %69 : vector<2x8x8xf32>
    %cst_22 = arith.constant dense<0.000000e+00> : vector<2x8xf32>
    %71 = vector.multi_reduction <add>, %70, %cst_22 [2] : vector<2x8x8xf32> to vector<2x8xf32>
    %72 = vector.shape_cast %71 : vector<2x8xf32> to vector<2x8x1xf32>
    %73 = tpu.reciprocal %72 {approx = true} : vector<2x8x1xf32> -> vector<2x8x1xf32>
    %74 = vector.broadcast %73 : vector<2x8x1xf32> to vector<2x8x8xf32>
    %75 = arith.mulf %70, %74 : vector<2x8x8xf32>
    %76 = arith.truncf %75 : vector<2x8x8xf32> to vector<2x8x8xbf16>
    %77 = arith.truncf %61 : vector<2x8x8xf32> to vector<2x8x8xbf16>
    "tpu.trace_start"() <{level = 10 : i32, message = "bqk,bkd->bqd"}> : () -> ()
    %cst_23 = arith.constant dense<0.000000e+00> : vector<2x8x8xf32>
    %78 = tpu.matmul %76, %77, %cst_23 {dimension_numbers = #tpu.dot_dimension_numbers<[2], [1], [1], [2], [0, 0, 0, 1, 1, 2], [0], [0]>} : vector<2x8x8xbf16>, vector<2x8x8xbf16>, vector<2x8x8xf32> -> vector<2x8x8xf32>
    "tpu.trace_stop"() : () -> ()
    %79 = vector.shape_cast %78 : vector<2x8x8xf32> to vector<16x8xf32>
    %80 = arith.truncf %79 : vector<16x8xf32> to vector<16x8xbf16>
    %c8 = arith.constant 8 : index
    %c0_24 = arith.constant 0 : index
    %81 = vector.load %arg6[%c8, %c0_24] : memref<32x32xf32, #tpu.memory_space<vmem>>, vector<8x32xf32>
    %82 = arith.truncf %81 : vector<8x32xf32> to vector<8x32xbf16>
    %cst_25 = arith.constant dense<0.000000e+00> : vector<16x32xf32>
    %83 = tpu.matmul %80, %82, %cst_25 {dimension_numbers = #tpu.dot_dimension_numbers<[1], [0], [0], [1], [0, 0, 1, 1], [], []>} : vector<16x8xbf16>, vector<8x32xbf16>, vector<16x32xf32> -> vector<16x32xf32>
    %84 = arith.addf %53, %83 : vector<16x32xf32>
    %85 = vector.extract_strided_slice %21 {offsets = [0, 16], sizes = [16, 8], strides = [1, 1]} : vector<16x32xf32> to vector<16x8xf32>
    %cst_26 = arith.constant 0.353553385 : f32
    %86 = vector.broadcast %cst_26 : f32 to vector<16x8xf32>
    %87 = arith.mulf %85, %86 : vector<16x8xf32>
    %88 = vector.shape_cast %87 : vector<16x8xf32> to vector<2x8x8xf32>
    %89 = vector.extract_strided_slice %22 {offsets = [0, 16], sizes = [16, 8], strides = [1, 1]} : vector<16x32xf32> to vector<16x8xf32>
    %90 = vector.shape_cast %89 : vector<16x8xf32> to vector<2x8x8xf32>
    %91 = vector.extract_strided_slice %23 {offsets = [0, 16], sizes = [16, 8], strides = [1, 1]} : vector<16x32xf32> to vector<16x8xf32>
    %92 = vector.shape_cast %91 : vector<16x8xf32> to vector<2x8x8xf32>
    %93 = arith.truncf %88 : vector<2x8x8xf32> to vector<2x8x8xbf16>
    %94 = arith.truncf %90 : vector<2x8x8xf32> to vector<2x8x8xbf16>
    "tpu.trace_start"() <{level = 10 : i32, message = "bqd,bkd->bqk"}> : () -> ()
    %cst_27 = arith.constant dense<0.000000e+00> : vector<2x8x8xf32>
    %95 = tpu.matmul %93, %94, %cst_27 {dimension_numbers = #tpu.dot_dimension_numbers<[2], [2], [1], [1], [0, 0, 0, 1, 1, 1], [0], [0]>} : vector<2x8x8xbf16>, vector<2x8x8xbf16>, vector<2x8x8xf32> -> vector<2x8x8xf32>
    "tpu.trace_stop"() : () -> ()
    %96 = arith.addf %95, %13 : vector<2x8x8xf32>
    %cst_28 = arith.constant dense<0xFF800000> : vector<2x8xf32>
    %97 = vector.multi_reduction <maximumf>, %96, %cst_28 [2] : vector<2x8x8xf32> to vector<2x8xf32>
    %98 = vector.shape_cast %97 : vector<2x8xf32> to vector<2x8x1xf32>
    %99 = vector.broadcast %98 : vector<2x8x1xf32> to vector<2x8x8xf32>
    %100 = arith.subf %96, %99 : vector<2x8x8xf32>
    %101 = math.exp %100 : vector<2x8x8xf32>
    %cst_29 = arith.constant dense<0.000000e+00> : vector<2x8xf32>
    %102 = vector.multi_reduction <add>, %101, %cst_29 [2] : vector<2x8x8xf32> to vector<2x8xf32>
    %103 = vector.shape_cast %102 : vector<2x8xf32> to vector<2x8x1xf32>
    %104 = tpu.reciprocal %103 {approx = true} : vector<2x8x1xf32> -> vector<2x8x1xf32>
    %105 = vector.broadcast %104 : vector<2x8x1xf32> to vector<2x8x8xf32>
    %106 = arith.mulf %101, %105 : vector<2x8x8xf32>
    %107 = arith.truncf %106 : vector<2x8x8xf32> to vector<2x8x8xbf16>
    %108 = arith.truncf %92 : vector<2x8x8xf32> to vector<2x8x8xbf16>
    "tpu.trace_start"() <{level = 10 : i32, message = "bqk,bkd->bqd"}> : () -> ()
    %cst_30 = arith.constant dense<0.000000e+00> : vector<2x8x8xf32>
    %109 = tpu.matmul %107, %108, %cst_30 {dimension_numbers = #tpu.dot_dimension_numbers<[2], [1], [1], [2], [0, 0, 0, 1, 1, 2], [0], [0]>} : vector<2x8x8xbf16>, vector<2x8x8xbf16>, vector<2x8x8xf32> -> vector<2x8x8xf32>
    "tpu.trace_stop"() : () -> ()
    %110 = vector.shape_cast %109 : vector<2x8x8xf32> to vector<16x8xf32>
    %111 = arith.truncf %110 : vector<16x8xf32> to vector<16x8xbf16>
    %c16 = arith.constant 16 : index
    %c0_31 = arith.constant 0 : index
    %112 = vector.load %arg6[%c16, %c0_31] : memref<32x32xf32, #tpu.memory_space<vmem>>, vector<8x32xf32>
    %113 = arith.truncf %112 : vector<8x32xf32> to vector<8x32xbf16>
    %cst_32 = arith.constant dense<0.000000e+00> : vector<16x32xf32>
    %114 = tpu.matmul %111, %113, %cst_32 {dimension_numbers = #tpu.dot_dimension_numbers<[1], [0], [0], [1], [0, 0, 1, 1], [], []>} : vector<16x8xbf16>, vector<8x32xbf16>, vector<16x32xf32> -> vector<16x32xf32>
    %115 = arith.addf %84, %114 : vector<16x32xf32>
    %116 = vector.extract_strided_slice %21 {offsets = [0, 24], sizes = [16, 8], strides = [1, 1]} : vector<16x32xf32> to vector<16x8xf32>
    %cst_33 = arith.constant 0.353553385 : f32
    %117 = vector.broadcast %cst_33 : f32 to vector<16x8xf32>
    %118 = arith.mulf %116, %117 : vector<16x8xf32>
    %119 = vector.shape_cast %118 : vector<16x8xf32> to vector<2x8x8xf32>
    %120 = vector.extract_strided_slice %22 {offsets = [0, 24], sizes = [16, 8], strides = [1, 1]} : vector<16x32xf32> to vector<16x8xf32>
    %121 = vector.shape_cast %120 : vector<16x8xf32> to vector<2x8x8xf32>
    %122 = vector.extract_strided_slice %23 {offsets = [0, 24], sizes = [16, 8], strides = [1, 1]} : vector<16x32xf32> to vector<16x8xf32>
    %123 = vector.shape_cast %122 : vector<16x8xf32> to vector<2x8x8xf32>
    %124 = arith.truncf %119 : vector<2x8x8xf32> to vector<2x8x8xbf16>
    %125 = arith.truncf %121 : vector<2x8x8xf32> to vector<2x8x8xbf16>
    "tpu.trace_start"() <{level = 10 : i32, message = "bqd,bkd->bqk"}> : () -> ()
    %cst_34 = arith.constant dense<0.000000e+00> : vector<2x8x8xf32>
    %126 = tpu.matmul %124, %125, %cst_34 {dimension_numbers = #tpu.dot_dimension_numbers<[2], [2], [1], [1], [0, 0, 0, 1, 1, 1], [0], [0]>} : vector<2x8x8xbf16>, vector<2x8x8xbf16>, vector<2x8x8xf32> -> vector<2x8x8xf32>
    "tpu.trace_stop"() : () -> ()
    %127 = arith.addf %126, %13 : vector<2x8x8xf32>
    %cst_35 = arith.constant dense<0xFF800000> : vector<2x8xf32>
    %128 = vector.multi_reduction <maximumf>, %127, %cst_35 [2] : vector<2x8x8xf32> to vector<2x8xf32>
    %129 = vector.shape_cast %128 : vector<2x8xf32> to vector<2x8x1xf32>
    %130 = vector.broadcast %129 : vector<2x8x1xf32> to vector<2x8x8xf32>
    %131 = arith.subf %127, %130 : vector<2x8x8xf32>
    %132 = math.exp %131 : vector<2x8x8xf32>
    %cst_36 = arith.constant dense<0.000000e+00> : vector<2x8xf32>
    %133 = vector.multi_reduction <add>, %132, %cst_36 [2] : vector<2x8x8xf32> to vector<2x8xf32>
    %134 = vector.shape_cast %133 : vector<2x8xf32> to vector<2x8x1xf32>
    %135 = tpu.reciprocal %134 {approx = true} : vector<2x8x1xf32> -> vector<2x8x1xf32>
    %136 = vector.broadcast %135 : vector<2x8x1xf32> to vector<2x8x8xf32>
    %137 = arith.mulf %132, %136 : vector<2x8x8xf32>
    %138 = arith.truncf %137 : vector<2x8x8xf32> to vector<2x8x8xbf16>
    %139 = arith.truncf %123 : vector<2x8x8xf32> to vector<2x8x8xbf16>
    "tpu.trace_start"() <{level = 10 : i32, message = "bqk,bkd->bqd"}> : () -> ()
    %cst_37 = arith.constant dense<0.000000e+00> : vector<2x8x8xf32>
    %140 = tpu.matmul %138, %139, %cst_37 {dimension_numbers = #tpu.dot_dimension_numbers<[2], [1], [1], [2], [0, 0, 0, 1, 1, 2], [0], [0]>} : vector<2x8x8xbf16>, vector<2x8x8xbf16>, vector<2x8x8xf32> -> vector<2x8x8xf32>
    "tpu.trace_stop"() : () -> ()
    %141 = vector.shape_cast %140 : vector<2x8x8xf32> to vector<16x8xf32>
    %142 = arith.truncf %141 : vector<16x8xf32> to vector<16x8xbf16>
    %c24 = arith.constant 24 : index
    %c0_38 = arith.constant 0 : index
    %143 = vector.load %arg6[%c24, %c0_38] : memref<32x32xf32, #tpu.memory_space<vmem>>, vector<8x32xf32>
    %144 = arith.truncf %143 : vector<8x32xf32> to vector<8x32xbf16>
    %cst_39 = arith.constant dense<0.000000e+00> : vector<16x32xf32>
    %145 = tpu.matmul %142, %144, %cst_39 {dimension_numbers = #tpu.dot_dimension_numbers<[1], [0], [0], [1], [0, 0, 1, 1], [], []>} : vector<16x8xbf16>, vector<8x32xbf16>, vector<16x32xf32> -> vector<16x32xf32>
    %146 = arith.addf %115, %145 : vector<16x32xf32>
    %c0_40 = arith.constant 0 : index
    %c0_41 = arith.constant 0 : index
    %147 = vector.load %arg7[%c0_40, %c0_41] : memref<1x32xf32, #tpu.memory_space<vmem>>, vector<1x32xf32>
    %148 = vector.broadcast %147 : vector<1x32xf32> to vector<16x32xf32>
    %149 = arith.addf %146, %148 : vector<16x32xf32>
    %150 = arith.addf %0, %149 : vector<16x32xf32>
    %c0_42 = arith.constant 0 : index
    %c0_43 = arith.constant 0 : index
    %151 = vector.load %arg8[%c0_42, %c0_43] : memref<1x32xf32, #tpu.memory_space<vmem>>, vector<1x32xf32>
    %c0_44 = arith.constant 0 : index
    %c0_45 = arith.constant 0 : index
    %152 = vector.load %arg9[%c0_44, %c0_45] : memref<1x32xf32, #tpu.memory_space<vmem>>, vector<1x32xf32>
    %cst_46 = arith.constant dense<0.000000e+00> : vector<16xf32>
    %153 = vector.multi_reduction <add>, %150, %cst_46 [1] : vector<16x32xf32> to vector<16xf32>
    %154 = vector.shape_cast %153 : vector<16xf32> to vector<16x1xf32>
    %cst_47 = arith.constant 3.200000e+01 : f32
    %155 = vector.broadcast %cst_47 : f32 to vector<16x1xf32>
    %156 = arith.divf %154, %155 : vector<16x1xf32>
    %157 = vector.broadcast %156 : vector<16x1xf32> to vector<16x32xf32>
    %158 = arith.subf %150, %157 : vector<16x32xf32>
    %159 = arith.mulf %158, %158 : vector<16x32xf32>
    %cst_48 = arith.constant dense<0.000000e+00> : vector<16xf32>
    %160 = vector.multi_reduction <add>, %159, %cst_48 [1] : vector<16x32xf32> to vector<16xf32>
    %161 = vector.shape_cast %160 : vector<16xf32> to vector<16x1xf32>
    %cst_49 = arith.constant 3.200000e+01 : f32
    %162 = vector.broadcast %cst_49 : f32 to vector<16x1xf32>
    %163 = arith.divf %161, %162 : vector<16x1xf32>
    %cst_50 = arith.constant 9.99999974E-6 : f32
    %164 = vector.broadcast %cst_50 : f32 to vector<16x1xf32>
    %165 = arith.addf %163, %164 : vector<16x1xf32>
    %166 = math.rsqrt %165 : vector<16x1xf32>
    %167 = vector.broadcast %166 : vector<16x1xf32> to vector<16x32xf32>
    %168 = arith.mulf %158, %167 : vector<16x32xf32>
    %169 = vector.broadcast %151 : vector<1x32xf32> to vector<16x32xf32>
    %170 = arith.mulf %168, %169 : vector<16x32xf32>
    %171 = vector.broadcast %152 : vector<1x32xf32> to vector<16x32xf32>
    %172 = arith.addf %170, %171 : vector<16x32xf32>
    %173 = arith.truncf %172 : vector<16x32xf32> to vector<16x32xbf16>
    %c0_51 = arith.constant 0 : index
    %c0_52 = arith.constant 0 : index
    %174 = vector.load %arg10[%c0_51, %c0_52] : memref<32x32xf32, #tpu.memory_space<vmem>>, vector<32x32xf32>
    %175 = arith.truncf %174 : vector<32x32xf32> to vector<32x32xbf16>
    %cst_53 = arith.constant dense<0.000000e+00> : vector<16x32xf32>
    %176 = tpu.matmul %173, %175, %cst_53 {dimension_numbers = #tpu.dot_dimension_numbers<[1], [0], [0], [1], [0, 0, 1, 1], [], []>} : vector<16x32xbf16>, vector<32x32xbf16>, vector<16x32xf32> -> vector<16x32xf32>
    %c0_54 = arith.constant 0 : index
    %c0_55 = arith.constant 0 : index
    %177 = vector.load %arg11[%c0_54, %c0_55] : memref<1x32xf32, #tpu.memory_space<vmem>>, vector<1x32xf32>
    %178 = vector.broadcast %177 : vector<1x32xf32> to vector<16x32xf32>
    %179 = arith.addf %176, %178 : vector<16x32xf32>
    %180 = arith.truncf %1 : vector<16x32xf32> to vector<16x32xbf16>
    %c0_56 = arith.constant 0 : index
    %c0_57 = arith.constant 0 : index
    %181 = vector.load %arg12[%c0_56, %c0_57] : memref<32x64xf32, #tpu.memory_space<vmem>>, vector<32x64xf32>
    %182 = arith.truncf %181 : vector<32x64xf32> to vector<32x64xbf16>
    %cst_58 = arith.constant dense<0.000000e+00> : vector<16x64xf32>
    %183 = tpu.matmul %180, %182, %cst_58 {dimension_numbers = #tpu.dot_dimension_numbers<[1], [0], [0], [1], [0, 0, 1, 1], [], []>} : vector<16x32xbf16>, vector<32x64xbf16>, vector<16x64xf32> -> vector<16x64xf32>
    %c0_59 = arith.constant 0 : index
    %c0_60 = arith.constant 0 : index
    %184 = vector.load %arg13[%c0_59, %c0_60] : memref<1x64xf32, #tpu.memory_space<vmem>>, vector<1x64xf32>
    %185 = vector.broadcast %184 : vector<1x64xf32> to vector<16x64xf32>
    %186 = arith.addf %183, %185 : vector<16x64xf32>
    %187 = vector.extract_strided_slice %186 {offsets = [0, 0], sizes = [16, 32], strides = [1, 1]} : vector<16x64xf32> to vector<16x32xf32>
    %188 = vector.extract_strided_slice %186 {offsets = [0, 32], sizes = [16, 32], strides = [1, 1]} : vector<16x64xf32> to vector<16x32xf32>
    %189 = vector.extract_strided_slice %179 {offsets = [0, 0], sizes = [16, 8], strides = [1, 1]} : vector<16x32xf32> to vector<16x8xf32>
    %cst_61 = arith.constant 0.353553385 : f32
    %190 = vector.broadcast %cst_61 : f32 to vector<16x8xf32>
    %191 = arith.mulf %189, %190 : vector<16x8xf32>
    %192 = vector.shape_cast %191 : vector<16x8xf32> to vector<2x8x8xf32>
    %193 = vector.extract_strided_slice %187 {offsets = [0, 0], sizes = [16, 8], strides = [1, 1]} : vector<16x32xf32> to vector<16x8xf32>
    %194 = vector.shape_cast %193 : vector<16x8xf32> to vector<2x8x8xf32>
    %195 = vector.extract_strided_slice %188 {offsets = [0, 0], sizes = [16, 8], strides = [1, 1]} : vector<16x32xf32> to vector<16x8xf32>
    %196 = vector.shape_cast %195 : vector<16x8xf32> to vector<2x8x8xf32>
    %197 = arith.truncf %192 : vector<2x8x8xf32> to vector<2x8x8xbf16>
    %198 = arith.truncf %194 : vector<2x8x8xf32> to vector<2x8x8xbf16>
    "tpu.trace_start"() <{level = 10 : i32, message = "bqd,bkd->bqk"}> : () -> ()
    %cst_62 = arith.constant dense<0.000000e+00> : vector<2x8x8xf32>
    %199 = tpu.matmul %197, %198, %cst_62 {dimension_numbers = #tpu.dot_dimension_numbers<[2], [2], [1], [1], [0, 0, 0, 1, 1, 1], [0], [0]>} : vector<2x8x8xbf16>, vector<2x8x8xbf16>, vector<2x8x8xf32> -> vector<2x8x8xf32>
    "tpu.trace_stop"() : () -> ()
    %cst_63 = arith.constant dense<0xFF800000> : vector<2x8xf32>
    %200 = vector.multi_reduction <maximumf>, %199, %cst_63 [2] : vector<2x8x8xf32> to vector<2x8xf32>
    %201 = vector.shape_cast %200 : vector<2x8xf32> to vector<2x8x1xf32>
    %202 = vector.broadcast %201 : vector<2x8x1xf32> to vector<2x8x8xf32>
    %203 = arith.subf %199, %202 : vector<2x8x8xf32>
    %204 = math.exp %203 : vector<2x8x8xf32>
    %cst_64 = arith.constant dense<0.000000e+00> : vector<2x8xf32>
    %205 = vector.multi_reduction <add>, %204, %cst_64 [2] : vector<2x8x8xf32> to vector<2x8xf32>
    %206 = vector.shape_cast %205 : vector<2x8xf32> to vector<2x8x1xf32>
    %207 = tpu.reciprocal %206 {approx = true} : vector<2x8x1xf32> -> vector<2x8x1xf32>
    %208 = vector.broadcast %207 : vector<2x8x1xf32> to vector<2x8x8xf32>
    %209 = arith.mulf %204, %208 : vector<2x8x8xf32>
    %210 = arith.truncf %209 : vector<2x8x8xf32> to vector<2x8x8xbf16>
    %211 = arith.truncf %196 : vector<2x8x8xf32> to vector<2x8x8xbf16>
    "tpu.trace_start"() <{level = 10 : i32, message = "bqk,bkd->bqd"}> : () -> ()
    %cst_65 = arith.constant dense<0.000000e+00> : vector<2x8x8xf32>
    %212 = tpu.matmul %210, %211, %cst_65 {dimension_numbers = #tpu.dot_dimension_numbers<[2], [1], [1], [2], [0, 0, 0, 1, 1, 2], [0], [0]>} : vector<2x8x8xbf16>, vector<2x8x8xbf16>, vector<2x8x8xf32> -> vector<2x8x8xf32>
    "tpu.trace_stop"() : () -> ()
    %213 = vector.shape_cast %212 : vector<2x8x8xf32> to vector<16x8xf32>
    %214 = arith.truncf %213 : vector<16x8xf32> to vector<16x8xbf16>
    %c0_66 = arith.constant 0 : index
    %c0_67 = arith.constant 0 : index
    %215 = vector.load %arg14[%c0_66, %c0_67] : memref<32x32xf32, #tpu.memory_space<vmem>>, vector<8x32xf32>
    %216 = arith.truncf %215 : vector<8x32xf32> to vector<8x32xbf16>
    %cst_68 = arith.constant dense<0.000000e+00> : vector<16x32xf32>
    %217 = tpu.matmul %214, %216, %cst_68 {dimension_numbers = #tpu.dot_dimension_numbers<[1], [0], [0], [1], [0, 0, 1, 1], [], []>} : vector<16x8xbf16>, vector<8x32xbf16>, vector<16x32xf32> -> vector<16x32xf32>
    %218 = vector.extract_strided_slice %179 {offsets = [0, 8], sizes = [16, 8], strides = [1, 1]} : vector<16x32xf32> to vector<16x8xf32>
    %cst_69 = arith.constant 0.353553385 : f32
    %219 = vector.broadcast %cst_69 : f32 to vector<16x8xf32>
    %220 = arith.mulf %218, %219 : vector<16x8xf32>
    %221 = vector.shape_cast %220 : vector<16x8xf32> to vector<2x8x8xf32>
    %222 = vector.extract_strided_slice %187 {offsets = [0, 8], sizes = [16, 8], strides = [1, 1]} : vector<16x32xf32> to vector<16x8xf32>
    %223 = vector.shape_cast %222 : vector<16x8xf32> to vector<2x8x8xf32>
    %224 = vector.extract_strided_slice %188 {offsets = [0, 8], sizes = [16, 8], strides = [1, 1]} : vector<16x32xf32> to vector<16x8xf32>
    %225 = vector.shape_cast %224 : vector<16x8xf32> to vector<2x8x8xf32>
    %226 = arith.truncf %221 : vector<2x8x8xf32> to vector<2x8x8xbf16>
    %227 = arith.truncf %223 : vector<2x8x8xf32> to vector<2x8x8xbf16>
    "tpu.trace_start"() <{level = 10 : i32, message = "bqd,bkd->bqk"}> : () -> ()
    %cst_70 = arith.constant dense<0.000000e+00> : vector<2x8x8xf32>
    %228 = tpu.matmul %226, %227, %cst_70 {dimension_numbers = #tpu.dot_dimension_numbers<[2], [2], [1], [1], [0, 0, 0, 1, 1, 1], [0], [0]>} : vector<2x8x8xbf16>, vector<2x8x8xbf16>, vector<2x8x8xf32> -> vector<2x8x8xf32>
    "tpu.trace_stop"() : () -> ()
    %cst_71 = arith.constant dense<0xFF800000> : vector<2x8xf32>
    %229 = vector.multi_reduction <maximumf>, %228, %cst_71 [2] : vector<2x8x8xf32> to vector<2x8xf32>
    %230 = vector.shape_cast %229 : vector<2x8xf32> to vector<2x8x1xf32>
    %231 = vector.broadcast %230 : vector<2x8x1xf32> to vector<2x8x8xf32>
    %232 = arith.subf %228, %231 : vector<2x8x8xf32>
    %233 = math.exp %232 : vector<2x8x8xf32>
    %cst_72 = arith.constant dense<0.000000e+00> : vector<2x8xf32>
    %234 = vector.multi_reduction <add>, %233, %cst_72 [2] : vector<2x8x8xf32> to vector<2x8xf32>
    %235 = vector.shape_cast %234 : vector<2x8xf32> to vector<2x8x1xf32>
    %236 = tpu.reciprocal %235 {approx = true} : vector<2x8x1xf32> -> vector<2x8x1xf32>
    %237 = vector.broadcast %236 : vector<2x8x1xf32> to vector<2x8x8xf32>
    %238 = arith.mulf %233, %237 : vector<2x8x8xf32>
    %239 = arith.truncf %238 : vector<2x8x8xf32> to vector<2x8x8xbf16>
    %240 = arith.truncf %225 : vector<2x8x8xf32> to vector<2x8x8xbf16>
    "tpu.trace_start"() <{level = 10 : i32, message = "bqk,bkd->bqd"}> : () -> ()
    %cst_73 = arith.constant dense<0.000000e+00> : vector<2x8x8xf32>
    %241 = tpu.matmul %239, %240, %cst_73 {dimension_numbers = #tpu.dot_dimension_numbers<[2], [1], [1], [2], [0, 0, 0, 1, 1, 2], [0], [0]>} : vector<2x8x8xbf16>, vector<2x8x8xbf16>, vector<2x8x8xf32> -> vector<2x8x8xf32>
    "tpu.trace_stop"() : () -> ()
    %242 = vector.shape_cast %241 : vector<2x8x8xf32> to vector<16x8xf32>
    %243 = arith.truncf %242 : vector<16x8xf32> to vector<16x8xbf16>
    %c8_74 = arith.constant 8 : index
    %c0_75 = arith.constant 0 : index
    %244 = vector.load %arg14[%c8_74, %c0_75] : memref<32x32xf32, #tpu.memory_space<vmem>>, vector<8x32xf32>
    %245 = arith.truncf %244 : vector<8x32xf32> to vector<8x32xbf16>
    %cst_76 = arith.constant dense<0.000000e+00> : vector<16x32xf32>
    %246 = tpu.matmul %243, %245, %cst_76 {dimension_numbers = #tpu.dot_dimension_numbers<[1], [0], [0], [1], [0, 0, 1, 1], [], []>} : vector<16x8xbf16>, vector<8x32xbf16>, vector<16x32xf32> -> vector<16x32xf32>
    %247 = arith.addf %217, %246 : vector<16x32xf32>
    %248 = vector.extract_strided_slice %179 {offsets = [0, 16], sizes = [16, 8], strides = [1, 1]} : vector<16x32xf32> to vector<16x8xf32>
    %cst_77 = arith.constant 0.353553385 : f32
    %249 = vector.broadcast %cst_77 : f32 to vector<16x8xf32>
    %250 = arith.mulf %248, %249 : vector<16x8xf32>
    %251 = vector.shape_cast %250 : vector<16x8xf32> to vector<2x8x8xf32>
    %252 = vector.extract_strided_slice %187 {offsets = [0, 16], sizes = [16, 8], strides = [1, 1]} : vector<16x32xf32> to vector<16x8xf32>
    %253 = vector.shape_cast %252 : vector<16x8xf32> to vector<2x8x8xf32>
    %254 = vector.extract_strided_slice %188 {offsets = [0, 16], sizes = [16, 8], strides = [1, 1]} : vector<16x32xf32> to vector<16x8xf32>
    %255 = vector.shape_cast %254 : vector<16x8xf32> to vector<2x8x8xf32>
    %256 = arith.truncf %251 : vector<2x8x8xf32> to vector<2x8x8xbf16>
    %257 = arith.truncf %253 : vector<2x8x8xf32> to vector<2x8x8xbf16>
    "tpu.trace_start"() <{level = 10 : i32, message = "bqd,bkd->bqk"}> : () -> ()
    %cst_78 = arith.constant dense<0.000000e+00> : vector<2x8x8xf32>
    %258 = tpu.matmul %256, %257, %cst_78 {dimension_numbers = #tpu.dot_dimension_numbers<[2], [2], [1], [1], [0, 0, 0, 1, 1, 1], [0], [0]>} : vector<2x8x8xbf16>, vector<2x8x8xbf16>, vector<2x8x8xf32> -> vector<2x8x8xf32>
    "tpu.trace_stop"() : () -> ()
    %cst_79 = arith.constant dense<0xFF800000> : vector<2x8xf32>
    %259 = vector.multi_reduction <maximumf>, %258, %cst_79 [2] : vector<2x8x8xf32> to vector<2x8xf32>
    %260 = vector.shape_cast %259 : vector<2x8xf32> to vector<2x8x1xf32>
    %261 = vector.broadcast %260 : vector<2x8x1xf32> to vector<2x8x8xf32>
    %262 = arith.subf %258, %261 : vector<2x8x8xf32>
    %263 = math.exp %262 : vector<2x8x8xf32>
    %cst_80 = arith.constant dense<0.000000e+00> : vector<2x8xf32>
    %264 = vector.multi_reduction <add>, %263, %cst_80 [2] : vector<2x8x8xf32> to vector<2x8xf32>
    %265 = vector.shape_cast %264 : vector<2x8xf32> to vector<2x8x1xf32>
    %266 = tpu.reciprocal %265 {approx = true} : vector<2x8x1xf32> -> vector<2x8x1xf32>
    %267 = vector.broadcast %266 : vector<2x8x1xf32> to vector<2x8x8xf32>
    %268 = arith.mulf %263, %267 : vector<2x8x8xf32>
    %269 = arith.truncf %268 : vector<2x8x8xf32> to vector<2x8x8xbf16>
    %270 = arith.truncf %255 : vector<2x8x8xf32> to vector<2x8x8xbf16>
    "tpu.trace_start"() <{level = 10 : i32, message = "bqk,bkd->bqd"}> : () -> ()
    %cst_81 = arith.constant dense<0.000000e+00> : vector<2x8x8xf32>
    %271 = tpu.matmul %269, %270, %cst_81 {dimension_numbers = #tpu.dot_dimension_numbers<[2], [1], [1], [2], [0, 0, 0, 1, 1, 2], [0], [0]>} : vector<2x8x8xbf16>, vector<2x8x8xbf16>, vector<2x8x8xf32> -> vector<2x8x8xf32>
    "tpu.trace_stop"() : () -> ()
    %272 = vector.shape_cast %271 : vector<2x8x8xf32> to vector<16x8xf32>
    %273 = arith.truncf %272 : vector<16x8xf32> to vector<16x8xbf16>
    %c16_82 = arith.constant 16 : index
    %c0_83 = arith.constant 0 : index
    %274 = vector.load %arg14[%c16_82, %c0_83] : memref<32x32xf32, #tpu.memory_space<vmem>>, vector<8x32xf32>
    %275 = arith.truncf %274 : vector<8x32xf32> to vector<8x32xbf16>
    %cst_84 = arith.constant dense<0.000000e+00> : vector<16x32xf32>
    %276 = tpu.matmul %273, %275, %cst_84 {dimension_numbers = #tpu.dot_dimension_numbers<[1], [0], [0], [1], [0, 0, 1, 1], [], []>} : vector<16x8xbf16>, vector<8x32xbf16>, vector<16x32xf32> -> vector<16x32xf32>
    %277 = arith.addf %247, %276 : vector<16x32xf32>
    %278 = vector.extract_strided_slice %179 {offsets = [0, 24], sizes = [16, 8], strides = [1, 1]} : vector<16x32xf32> to vector<16x8xf32>
    %cst_85 = arith.constant 0.353553385 : f32
    %279 = vector.broadcast %cst_85 : f32 to vector<16x8xf32>
    %280 = arith.mulf %278, %279 : vector<16x8xf32>
    %281 = vector.shape_cast %280 : vector<16x8xf32> to vector<2x8x8xf32>
    %282 = vector.extract_strided_slice %187 {offsets = [0, 24], sizes = [16, 8], strides = [1, 1]} : vector<16x32xf32> to vector<16x8xf32>
    %283 = vector.shape_cast %282 : vector<16x8xf32> to vector<2x8x8xf32>
    %284 = vector.extract_strided_slice %188 {offsets = [0, 24], sizes = [16, 8], strides = [1, 1]} : vector<16x32xf32> to vector<16x8xf32>
    %285 = vector.shape_cast %284 : vector<16x8xf32> to vector<2x8x8xf32>
    %286 = arith.truncf %281 : vector<2x8x8xf32> to vector<2x8x8xbf16>
    %287 = arith.truncf %283 : vector<2x8x8xf32> to vector<2x8x8xbf16>
    "tpu.trace_start"() <{level = 10 : i32, message = "bqd,bkd->bqk"}> : () -> ()
    %cst_86 = arith.constant dense<0.000000e+00> : vector<2x8x8xf32>
    %288 = tpu.matmul %286, %287, %cst_86 {dimension_numbers = #tpu.dot_dimension_numbers<[2], [2], [1], [1], [0, 0, 0, 1, 1, 1], [0], [0]>} : vector<2x8x8xbf16>, vector<2x8x8xbf16>, vector<2x8x8xf32> -> vector<2x8x8xf32>
    "tpu.trace_stop"() : () -> ()
    %cst_87 = arith.constant dense<0xFF800000> : vector<2x8xf32>
    %289 = vector.multi_reduction <maximumf>, %288, %cst_87 [2] : vector<2x8x8xf32> to vector<2x8xf32>
    %290 = vector.shape_cast %289 : vector<2x8xf32> to vector<2x8x1xf32>
    %291 = vector.broadcast %290 : vector<2x8x1xf32> to vector<2x8x8xf32>
    %292 = arith.subf %288, %291 : vector<2x8x8xf32>
    %293 = math.exp %292 : vector<2x8x8xf32>
    %cst_88 = arith.constant dense<0.000000e+00> : vector<2x8xf32>
    %294 = vector.multi_reduction <add>, %293, %cst_88 [2] : vector<2x8x8xf32> to vector<2x8xf32>
    %295 = vector.shape_cast %294 : vector<2x8xf32> to vector<2x8x1xf32>
    %296 = tpu.reciprocal %295 {approx = true} : vector<2x8x1xf32> -> vector<2x8x1xf32>
    %297 = vector.broadcast %296 : vector<2x8x1xf32> to vector<2x8x8xf32>
    %298 = arith.mulf %293, %297 : vector<2x8x8xf32>
    %299 = arith.truncf %298 : vector<2x8x8xf32> to vector<2x8x8xbf16>
    %300 = arith.truncf %285 : vector<2x8x8xf32> to vector<2x8x8xbf16>
    "tpu.trace_start"() <{level = 10 : i32, message = "bqk,bkd->bqd"}> : () -> ()
    %cst_89 = arith.constant dense<0.000000e+00> : vector<2x8x8xf32>
    %301 = tpu.matmul %299, %300, %cst_89 {dimension_numbers = #tpu.dot_dimension_numbers<[2], [1], [1], [2], [0, 0, 0, 1, 1, 2], [0], [0]>} : vector<2x8x8xbf16>, vector<2x8x8xbf16>, vector<2x8x8xf32> -> vector<2x8x8xf32>
    "tpu.trace_stop"() : () -> ()
    %302 = vector.shape_cast %301 : vector<2x8x8xf32> to vector<16x8xf32>
    %303 = arith.truncf %302 : vector<16x8xf32> to vector<16x8xbf16>
    %c24_90 = arith.constant 24 : index
    %c0_91 = arith.constant 0 : index
    %304 = vector.load %arg14[%c24_90, %c0_91] : memref<32x32xf32, #tpu.memory_space<vmem>>, vector<8x32xf32>
    %305 = arith.truncf %304 : vector<8x32xf32> to vector<8x32xbf16>
    %cst_92 = arith.constant dense<0.000000e+00> : vector<16x32xf32>
    %306 = tpu.matmul %303, %305, %cst_92 {dimension_numbers = #tpu.dot_dimension_numbers<[1], [0], [0], [1], [0, 0, 1, 1], [], []>} : vector<16x8xbf16>, vector<8x32xbf16>, vector<16x32xf32> -> vector<16x32xf32>
    %307 = arith.addf %277, %306 : vector<16x32xf32>
    %c0_93 = arith.constant 0 : index
    %c0_94 = arith.constant 0 : index
    %308 = vector.load %arg15[%c0_93, %c0_94] : memref<1x32xf32, #tpu.memory_space<vmem>>, vector<1x32xf32>
    %309 = vector.broadcast %308 : vector<1x32xf32> to vector<16x32xf32>
    %310 = arith.addf %307, %309 : vector<16x32xf32>
    %311 = arith.addf %172, %310 : vector<16x32xf32>
    %c0_95 = arith.constant 0 : index
    %c0_96 = arith.constant 0 : index
    %312 = vector.load %arg16[%c0_95, %c0_96] : memref<1x32xf32, #tpu.memory_space<vmem>>, vector<1x32xf32>
    %c0_97 = arith.constant 0 : index
    %c0_98 = arith.constant 0 : index
    %313 = vector.load %arg17[%c0_97, %c0_98] : memref<1x32xf32, #tpu.memory_space<vmem>>, vector<1x32xf32>
    %cst_99 = arith.constant dense<0.000000e+00> : vector<16xf32>
    %314 = vector.multi_reduction <add>, %311, %cst_99 [1] : vector<16x32xf32> to vector<16xf32>
    %315 = vector.shape_cast %314 : vector<16xf32> to vector<16x1xf32>
    %cst_100 = arith.constant 3.200000e+01 : f32
    %316 = vector.broadcast %cst_100 : f32 to vector<16x1xf32>
    %317 = arith.divf %315, %316 : vector<16x1xf32>
    %318 = vector.broadcast %317 : vector<16x1xf32> to vector<16x32xf32>
    %319 = arith.subf %311, %318 : vector<16x32xf32>
    %320 = arith.mulf %319, %319 : vector<16x32xf32>
    %cst_101 = arith.constant dense<0.000000e+00> : vector<16xf32>
    %321 = vector.multi_reduction <add>, %320, %cst_101 [1] : vector<16x32xf32> to vector<16xf32>
    %322 = vector.shape_cast %321 : vector<16xf32> to vector<16x1xf32>
    %cst_102 = arith.constant 3.200000e+01 : f32
    %323 = vector.broadcast %cst_102 : f32 to vector<16x1xf32>
    %324 = arith.divf %322, %323 : vector<16x1xf32>
    %cst_103 = arith.constant 9.99999974E-6 : f32
    %325 = vector.broadcast %cst_103 : f32 to vector<16x1xf32>
    %326 = arith.addf %324, %325 : vector<16x1xf32>
    %327 = math.rsqrt %326 : vector<16x1xf32>
    %328 = vector.broadcast %327 : vector<16x1xf32> to vector<16x32xf32>
    %329 = arith.mulf %319, %328 : vector<16x32xf32>
    %330 = vector.broadcast %312 : vector<1x32xf32> to vector<16x32xf32>
    %331 = arith.mulf %329, %330 : vector<16x32xf32>
    %332 = vector.broadcast %313 : vector<1x32xf32> to vector<16x32xf32>
    %333 = arith.addf %331, %332 : vector<16x32xf32>
    %334 = arith.truncf %333 : vector<16x32xf32> to vector<16x32xbf16>
    %c0_104 = arith.constant 0 : index
    %c0_105 = arith.constant 0 : index
    %335 = vector.load %arg18[%c0_104, %c0_105] : memref<32x64xf32, #tpu.memory_space<vmem>>, vector<32x64xf32>
    %336 = arith.truncf %335 : vector<32x64xf32> to vector<32x64xbf16>
    %cst_106 = arith.constant dense<0.000000e+00> : vector<16x64xf32>
    %337 = tpu.matmul %334, %336, %cst_106 {dimension_numbers = #tpu.dot_dimension_numbers<[1], [0], [0], [1], [0, 0, 1, 1], [], []>} : vector<16x32xbf16>, vector<32x64xbf16>, vector<16x64xf32> -> vector<16x64xf32>
    %c0_107 = arith.constant 0 : index
    %c0_108 = arith.constant 0 : index
    %338 = vector.load %arg19[%c0_107, %c0_108] : memref<1x64xf32, #tpu.memory_space<vmem>>, vector<1x64xf32>
    %339 = vector.broadcast %338 : vector<1x64xf32> to vector<16x64xf32>
    %340 = arith.addf %337, %339 : vector<16x64xf32>
    %cst_109 = arith.constant 0.000000e+00 : f32
    %341 = vector.broadcast %cst_109 : f32 to vector<16x64xf32>
    %342 = arith.maximumf %340, %341 : vector<16x64xf32>
    %343 = arith.truncf %342 : vector<16x64xf32> to vector<16x64xbf16>
    %c0_110 = arith.constant 0 : index
    %c0_111 = arith.constant 0 : index
    %344 = vector.load %arg20[%c0_110, %c0_111] : memref<64x32xf32, #tpu.memory_space<vmem>>, vector<64x32xf32>
    %345 = arith.truncf %344 : vector<64x32xf32> to vector<64x32xbf16>
    %cst_112 = arith.constant dense<0.000000e+00> : vector<16x32xf32>
    %346 = tpu.matmul %343, %345, %cst_112 {dimension_numbers = #tpu.dot_dimension_numbers<[1], [0], [0], [1], [0, 0, 1, 1], [], []>} : vector<16x64xbf16>, vector<64x32xbf16>, vector<16x32xf32> -> vector<16x32xf32>
    %c0_113 = arith.constant 0 : index
    %c0_114 = arith.constant 0 : index
    %347 = vector.load %arg21[%c0_113, %c0_114] : memref<1x32xf32, #tpu.memory_space<vmem>>, vector<1x32xf32>
    %348 = vector.broadcast %347 : vector<1x32xf32> to vector<16x32xf32>
    %349 = arith.addf %346, %348 : vector<16x32xf32>
    %350 = arith.addf %333, %349 : vector<16x32xf32>
    %c0_115 = arith.constant 0 : index
    %c0_116 = arith.constant 0 : index
    %351 = vector.load %arg22[%c0_115, %c0_116] : memref<1x32xf32, #tpu.memory_space<vmem>>, vector<1x32xf32>
    %c0_117 = arith.constant 0 : index
    %c0_118 = arith.constant 0 : index
    %352 = vector.load %arg23[%c0_117, %c0_118] : memref<1x32xf32, #tpu.memory_space<vmem>>, vector<1x32xf32>
    %cst_119 = arith.constant dense<0.000000e+00> : vector<16xf32>
    %353 = vector.multi_reduction <add>, %350, %cst_119 [1] : vector<16x32xf32> to vector<16xf32>
    %354 = vector.shape_cast %353 : vector<16xf32> to vector<16x1xf32>
    %cst_120 = arith.constant 3.200000e+01 : f32
    %355 = vector.broadcast %cst_120 : f32 to vector<16x1xf32>
    %356 = arith.divf %354, %355 : vector<16x1xf32>
    %357 = vector.broadcast %356 : vector<16x1xf32> to vector<16x32xf32>
    %358 = arith.subf %350, %357 : vector<16x32xf32>
    %359 = arith.mulf %358, %358 : vector<16x32xf32>
    %cst_121 = arith.constant dense<0.000000e+00> : vector<16xf32>
    %360 = vector.multi_reduction <add>, %359, %cst_121 [1] : vector<16x32xf32> to vector<16xf32>
    %361 = vector.shape_cast %360 : vector<16xf32> to vector<16x1xf32>
    %cst_122 = arith.constant 3.200000e+01 : f32
    %362 = vector.broadcast %cst_122 : f32 to vector<16x1xf32>
    %363 = arith.divf %361, %362 : vector<16x1xf32>
    %cst_123 = arith.constant 9.99999974E-6 : f32
    %364 = vector.broadcast %cst_123 : f32 to vector<16x1xf32>
    %365 = arith.addf %363, %364 : vector<16x1xf32>
    %366 = math.rsqrt %365 : vector<16x1xf32>
    %367 = vector.broadcast %366 : vector<16x1xf32> to vector<16x32xf32>
    %368 = arith.mulf %358, %367 : vector<16x32xf32>
    %369 = vector.broadcast %351 : vector<1x32xf32> to vector<16x32xf32>
    %370 = arith.mulf %368, %369 : vector<16x32xf32>
    %371 = vector.broadcast %352 : vector<1x32xf32> to vector<16x32xf32>
    %372 = arith.addf %370, %371 : vector<16x32xf32>
    %cst_124 = arith.constant 0.000000e+00 : f32
    %373 = vector.broadcast %cst_124 : f32 to vector<16x96xf32>
    %374 = tpu.concatenate %372, %373 in 1 : vector<16x32xf32>, vector<16x96xf32> -> vector<16x128xf32>
    %c0_125 = arith.constant 0 : index
    %c0_126 = arith.constant 0 : index
    %375 = vector.load %arg24[%c0_125, %c0_126] : memref<16x128xf32, #tpu.memory_space<vmem>>, vector<16x128xf32>
    tpu.vector_store %arg24[%c0_125, %c0_126], %374 {strides = array<i32>} : memref<16x128xf32, #tpu.memory_space<vmem>>, vector<16x128xf32>,
    return
  }
  func.func @transform_0(%arg0: i32) -> (i32, i32) {
    %c0_i32 = arith.constant 0 : i32
    %c0_i32_0 = arith.constant 0 : i32
    %c0_i32_1 = arith.constant 0 : i32
    return %c0_i32, %c0_i32_0 : i32, i32
  }
  func.func @transform_1(%arg0: i32) -> (i32, i32) {
    %c0_i32 = arith.constant 0 : i32
    %c0_i32_0 = arith.constant 0 : i32
    %c0_i32_1 = arith.constant 0 : i32
    return %c0_i32, %c0_i32_0 : i32, i32
  }
  func.func @transform_2(%arg0: i32) -> (i32, i32) {
    %c0_i32 = arith.constant 0 : i32
    %c0_i32_0 = arith.constant 0 : i32
    %c0_i32_1 = arith.constant 0 : i32
    return %c0_i32, %c0_i32_0 : i32, i32
  }
  func.func @transform_3(%arg0: i32) -> (i32, i32) {
    %c0_i32 = arith.constant 0 : i32
    %c0_i32_0 = arith.constant 0 : i32
    %c0_i32_1 = arith.constant 0 : i32
    return %c0_i32, %c0_i32_0 : i32, i32
  }
  func.func @transform_4(%arg0: i32) -> (i32, i32) {
    %c0_i32 = arith.constant 0 : i32
    %c0_i32_0 = arith.constant 0 : i32
    %c0_i32_1 = arith.constant 0 : i32
    return %c0_i32, %c0_i32_0 : i32, i32
  }
  func.func @transform_5(%arg0: i32) -> (i32, i32) {
    %c0_i32 = arith.constant 0 : i32
    %c0_i32_0 = arith.constant 0 : i32
    %c0_i32_1 = arith.constant 0 : i32
    return %c0_i32, %c0_i32_0 : i32, i32
  }
  func.func @transform_6(%arg0: i32) -> (i32, i32) {
    %c0_i32 = arith.constant 0 : i32
    %c0_i32_0 = arith.constant 0 : i32
    %c0_i32_1 = arith.constant 0 : i32
    return %c0_i32, %c0_i32_0 : i32, i32
  }
  func.func @transform_7(%arg0: i32) -> (i32, i32) {
    %c0_i32 = arith.constant 0 : i32
    %c0_i32_0 = arith.constant 0 : i32
    %c0_i32_1 = arith.constant 0 : i32
    return %c0_i32, %c0_i32_0 : i32, i32
  }
  func.func @transform_8(%arg0: i32) -> (i32, i32) {
    %c0_i32 = arith.constant 0 : i32
    %c0_i32_0 = arith.constant 0 : i32
    %c0_i32_1 = arith.constant 0 : i32
    return %c0_i32, %c0_i32_0 : i32, i32
  }
  func.func @transform_9(%arg0: i32) -> (i32, i32) {
    %c0_i32 = arith.constant 0 : i32
    %c0_i32_0 = arith.constant 0 : i32
    %c0_i32_1 = arith.constant 0 : i32
    return %c0_i32, %c0_i32_0 : i32, i32
  }
  func.func @transform_10(%arg0: i32) -> (i32, i32) {
    %c0_i32 = arith.constant 0 : i32
    %c0_i32_0 = arith.constant 0 : i32
    %c0_i32_1 = arith.constant 0 : i32
    return %c0_i32, %c0_i32_0 : i32, i32
  }
  func.func @transform_11(%arg0: i32) -> (i32, i32) {
    %c0_i32 = arith.constant 0 : i32
    %c0_i32_0 = arith.constant 0 : i32
    %c0_i32_1 = arith.constant 0 : i32
    return %c0_i32, %c0_i32_0 : i32, i32
  }
  func.func @transform_12(%arg0: i32) -> (i32, i32) {
    %c0_i32 = arith.constant 0 : i32
    %c0_i32_0 = arith.constant 0 : i32
    %c0_i32_1 = arith.constant 0 : i32
    return %c0_i32, %c0_i32_0 : i32, i32
  }
  func.func @transform_13(%arg0: i32) -> (i32, i32) {
    %c0_i32 = arith.constant 0 : i32
    %c0_i32_0 = arith.constant 0 : i32
    %c0_i32_1 = arith.constant 0 : i32
    return %c0_i32, %c0_i32_0 : i32, i32
  }
  func.func @transform_14(%arg0: i32) -> (i32, i32) {
    %c0_i32 = arith.constant 0 : i32
    %c0_i32_0 = arith.constant 0 : i32
    %c0_i32_1 = arith.constant 0 : i32
    return %c0_i32, %c0_i32_0 : i32, i32
  }
  func.func @transform_15(%arg0: i32) -> (i32, i32) {
    %c0_i32 = arith.constant 0 : i32
    %c0_i32_0 = arith.constant 0 : i32
    %c0_i32_1 = arith.constant 0 : i32
    return %c0_i32, %c0_i32_0 : i32, i32
  }
  func.func @transform_16(%arg0: i32) -> (i32, i32) {
    %c0_i32 = arith.constant 0 : i32
    %c0_i32_0 = arith.constant 0 : i32
    %c0_i32_1 = arith.constant 0 : i32
    return %c0_i32, %c0_i32_0 : i32, i32
  }
  func.func @transform_17(%arg0: i32) -> (i32, i32) {
    %c0_i32 = arith.constant 0 : i32
    %c0_i32_0 = arith.constant 0 : i32
    %c0_i32_1 = arith.constant 0 : i32
    return %c0_i32, %c0_i32_0 : i32, i32
  }
  func.func @transform_18(%arg0: i32) -> (i32, i32) {
    %c0_i32 = arith.constant 0 : i32
    %c0_i32_0 = arith.constant 0 : i32
    %c0_i32_1 = arith.constant 0 : i32
    return %c0_i32, %c0_i32_0 : i32, i32
  }
  func.func @transform_19(%arg0: i32) -> (i32, i32) {
    %c0_i32 = arith.constant 0 : i32
    %c0_i32_0 = arith.constant 0 : i32
    %c0_i32_1 = arith.constant 0 : i32
    return %c0_i32, %c0_i32_0 : i32, i32
  }
  func.func @transform_20(%arg0: i32) -> (i32, i32) {
    %c0_i32 = arith.constant 0 : i32
    %c0_i32_0 = arith.constant 0 : i32
    %c0_i32_1 = arith.constant 0 : i32
    return %c0_i32, %c0_i32_0 : i32, i32
  }
  func.func @transform_21(%arg0: i32) -> (i32, i32) {
    %c0_i32 = arith.constant 0 : i32
    %c0_i32_0 = arith.constant 0 : i32
    %c0_i32_1 = arith.constant 0 : i32
    return %c0_i32, %c0_i32_0 : i32, i32
  }
  func.func @transform_22(%arg0: i32) -> (i32, i32) {
    %c0_i32 = arith.constant 0 : i32
    %c0_i32_0 = arith.constant 0 : i32
    %c0_i32_1 = arith.constant 0 : i32
    return %c0_i32, %c0_i32_0 : i32, i32
  }
  func.func @transform_23(%arg0: i32) -> (i32, i32) {
    %c0_i32 = arith.constant 0 : i32
    %c0_i32_0 = arith.constant 0 : i32
    %c0_i32_1 = arith.constant 0 : i32
    return %c0_i32, %c0_i32_0 : i32, i32
  }
}

</mosaic_0001>

<llo_original>
// kernel: transformer_forward.9
$region0: #{transformer_forward.9}
  #allocation0 [shape = 'u32[]', space=smem, size = 0x4, offset = 0x4, fixed_abs, tag = 'smem constant byte address 0x4 - core index']
  #allocation1 [shape = 'u32[144,128]{1,0:T(1,128)}', space=vmem, size = 0x12000, scoped, tag = 'internal scratch']
  %s0 = inlined_call_operand.vmem [shape: f32[16,128], index: 0, kind: input, shape index: {}]
  %s1 = inlined_call_operand.vmem [shape: f32[1,32], index: 1, kind: input, shape index: {}]
  %s2 = inlined_call_operand.vmem [shape: f32[1,32], index: 2, kind: input, shape index: {}]
  %s3 = inlined_call_operand.vmem [shape: f32[100,32], index: 3, kind: input, shape index: {}]
  %s4 = inlined_call_operand.hbm [shape: f32[16,100], index: 4, kind: output, shape index: {}]
  %s5 = sld [smem:[#allocation0]]
  $region26: #{transformer_forward.9} parent=0
    _
  %s7 = ssub.s32 1, %s5
  %s8 = scalar_select 0, %s7, %s5
  $region1: #{transformer_forward.9} parent=0
    #allocation2 [shape = 'u8[8192]{0}', space=vmem, size = 0x2000, scoped, tag = 'output window, operand 0, single buffered']
    #allocation3 [shape = 's32[1]{0}', space=sflag, size = 0x4, scoped, tag = 'scoped memory for transformer_forward.9']
    %9 = vsyncpa [#allocation3], 0
    // Predicated region
    $region2: #{transformer_forward.9} parent=1 // pred_check
      _
    $region3: #{transformer_forward.9} parent=1 // pred_check_branch
      %11 = sbr.rel (0) target = $region5
    $region4: #{transformer_forward.9} parent=1 // pred_region
      _
    $region5: #{transformer_forward.9} parent=1 // pred_fallthru
      _
    // Predicated region
    $region6: #{transformer_forward.9} parent=1 // pred_check
      _
    $region7: #{transformer_forward.9} parent=1 // pred_check_branch
      %13 = sbr.rel (0) target = $region9
    $region8: #{transformer_forward.9} parent=1 // pred_region
      _
    $region9: #{transformer_forward.9} parent=1 // pred_fallthru
      _
    // Predicated region
    $region10: #{transformer_forward.9} parent=1 // pred_check
      _
    $region11: #{transformer_forward.9} parent=1 // pred_check_branch
      %15 = sbr.rel (0) target = $region13
    $region12: #{transformer_forward.9} parent=1 // pred_region
      _
    $region13: #{transformer_forward.9} parent=1 // pred_fallthru
      _
    // Predicated region
    $region14: #{transformer_forward.9} parent=1 // pred_check
      _
    $region15: #{transformer_forward.9} parent=1 // pred_check_branch
      %17 = sbr.rel (0) target = $region17
    $region16: #{transformer_forward.9} parent=1 // pred_region
      _
    $region17: #{transformer_forward.9} parent=1 // pred_fallthru
      _
    %v19 = vld [vmem:[%s0] sm:$0xff]
    %v20 = vld [vmem:[%s0 + $0x8] sm:$0xff]
    %v21 = vld [vmem:[%s1] sm:$0x1]
    %v22 = vld [vmem:[%s2] sm:$0x1]
    %vm23 = vcmask 261120
    %v24 = vsel %vm23, %v19, 0.0
    %25 = vadd.xlane.f32.xlu0 %v24
    %v26 = vpop.xlane.xlu0 %25
    %v27 = vsel %vm23, %v20, 0.0
    %28 = vadd.xlane.f32.xlu0 %v27
    %v29 = vpop.xlane.xlu0 %28
    %v30 = vrcp.pop 32.0
    %v31 = vmul.f32 %v26, %v30
    %v32 = vmul.f32 %v29, %v30
    %v33 = vsub.f32 %v19, %v31
    %v34 = vsub.f32 %v20, %v32
    %v35 = vmul.f32 %v33, %v33
    %v36 = vmul.f32 %v34, %v34
    %v37 = vsel %vm23, %v35, 0.0
    %38 = vadd.xlane.f32.xlu0 %v37
    %v39 = vpop.xlane.xlu0 %38
    %v40 = vsel %vm23, %v36, 0.0
    %41 = vadd.xlane.f32.xlu0 %v40
    %v42 = vpop.xlane.xlu0 %41
    %v43 = vmul.f32 %v39, %v30
    %v44 = vmul.f32 %v42, %v30
    %v45 = vadd.f32 %v43, 1e-05
    %v46 = vadd.f32 %v44, 1e-05
    %v47 = vrsqrt.pop %v45
    %v48 = vrsqrt.pop %v46
    %v49 = vmul.f32 %v33, %v47
    %v50 = vmul.f32 %v34, %v48
    %v52 = vlaneseq
    %v53 = vshrl.u32 %v52, 7
    %v54 = vsub.s32 0, %v53
    %v55 = vrot.slane %v21, %v54
    %v57 = vmul.f32 %v49, %v55
    %v58 = vmul.f32 %v50, %v55
    %v60 = vlaneseq
    %v61 = vshrl.u32 %v60, 7
    %v62 = vsub.s32 0, %v61
    %v63 = vrot.slane %v22, %v62
    %v65 = vadd.f32 %v57, %v63
    %v66 = vadd.f32 %v58, %v63
    %v67 = vpack.c.bf16 %v66, %v65
    %v68 = vld [vmem:[%s3] sm:$0xff]
    %v69 = vld [vmem:[%s3 + $0x8] sm:$0xff]
    %v70 = vld [vmem:[%s3 + $0x10] sm:$0xff]
    %v71 = vld [vmem:[%s3 + $0x18] sm:$0xff]
    %v72 = vld [vmem:[%s3 + $0x20] sm:$0xff]
    %v73 = vld [vmem:[%s3 + $0x28] sm:$0xff]
    %v74 = vld [vmem:[%s3 + $0x30] sm:$0xff]
    %v75 = vld [vmem:[%s3 + $0x38] sm:$0xff]
    %v76 = vld [vmem:[%s3 + $0x40] sm:$0xff]
    %v77 = vld [vmem:[%s3 + $0x48] sm:$0xff]
    %v78 = vld [vmem:[%s3 + $0x50] sm:$0xff]
    %v79 = vld [vmem:[%s3 + $0x58] sm:$0xff]
    %v80 = vld [vmem:[%s3 + $0x60] sm:$0xf]
    %v81 = vpack.c.bf16 %v69, %v68
    %v82 = vpack.c.bf16 %v71, %v70
    %v83 = vpack.c.bf16 %v73, %v72
    %v84 = vpack.c.bf16 %v75, %v74
    %v85 = vpack.c.bf16 %v77, %v76
    %v86 = vpack.c.bf16 %v79, %v78
    %v87 = vpack.c.bf16 %v80, %v80
    %v89 = vsel %vm23, %v67, 0
    %v92 = vsel %vm23, %v81, 0
    %v95 = vsel %vm23, %v82, 0
    %v98 = vsel %vm23, %v83, 0
    %v101 = vsel %vm23, %v84, 0
    %v104 = vsel %vm23, %v85, 0
    %v107 = vsel %vm23, %v86, 0
    %v110 = vsel %vm23, %v87, 0
    %112 = vmatprep.subr.bf16.mxu0 0
    %113 = vmatpush1.bf16.xpose.msra.mxu0 %v92
    %114 = vmatprep.subr.bf16.mxu0 0
    %115 = vmatpush1.bf16.xpose.msra.mxu0 %v95
    %116 = vmatprep.subr.bf16.mxu0 0
    %117 = vmatpush1.bf16.xpose.msra.mxu0 %v98
    %118 = vmatprep.subr.bf16.mxu0 0
    %119 = vmatpush1.bf16.xpose.msra.mxu0 %v101
    %120 = vmatprep.subr.bf16.mxu0 0
    %121 = vmatpush1.bf16.xpose.msra.mxu0 %v104
    %122 = vmatprep.subr.bf16.mxu0 0
    %123 = vmatpush1.bf16.xpose.msra.mxu0 %v107
    %124 = vmatprep.subr.bf16.mxu0 0
    %125 = vmatpush1.bf16.xpose.msra.mxu0 %v110
    %126 = vmatprep.subr.bf16.mxu0 0
    %127 = vmatpush1.bf16.xpose.msra.mxu0 0
    %128 = vmatprep.subr.bf16.mxu0 0
    %129 = vmatpush1.bf16.xpose.msra.mxu0 0
    %130 = vmatprep.subr.bf16.mxu0 0
    %131 = vmatpush1.bf16.xpose.msra.mxu0 0
    %132 = vmatprep.subr.bf16.mxu0 0
    %133 = vmatpush1.bf16.xpose.msra.mxu0 0
    %134 = vmatprep.subr.bf16.mxu0 0
    %135 = vmatpush1.bf16.xpose.msra.mxu0 0
    %136 = vmatprep.subr.bf16.mxu0 0
    %137 = vmatpush1.bf16.xpose.msra.mxu0 0
    %138 = vmatprep.subr.bf16.mxu0 0
    %139 = vmatpush1.bf16.xpose.msra.mxu0 0
    %140 = vmatprep.subr.bf16.mxu0 0
    %141 = vmatpush1.bf16.xpose.msra.mxu0 0
    %142 = vmatprep.subr.bf16.mxu0 0
    %143 = vmatpush1.bf16.xpose.msra.mxu0 0
    %144 = vmatprep.mubr.bf16.mxu0 0
    %145 = vmatmul.mubr.bf16.gmra.mrb[0].mxu0 %v89
    %v146 = vpop.f32.mrb[0].mxu0
    %v147 = vadd.f32 0.0, %v146
    %v148 = vpop.f32.mrb[0].mxu0
    %v149 = vpop.f32.mrb[0].mxu0
    %v150 = vadd.f32 0.0, %v149
    %v151 = vpop.f32.mrb[0].mxu0
    %152 = vdwg.mxu0
    %vm153 = vcmask 818176
    %154 = vst.msk [vmem:[#allocation2] sm:$0xff] %vm153, %v147
    %155 = vst.msk [vmem:[#allocation2 + $0x8] sm:$0xff] %vm153, %v150
    // Predicated region
    $region18: #{transformer_forward.9} parent=1 // pred_check
      _
    $region19: #{transformer_forward.9} parent=1 // pred_check_branch
      %157 = sbr.rel (0) target = $region21
    $region20: #{transformer_forward.9} parent=1 // pred_region
      %s159 = ssub.s32 256, 256
      %160 = vsyncadd [#allocation3], %s159
      %s161 = sshll.u32 [#allocation2], 4
      %s162 = int_to_ptr.vmem [resolvable:$true] %s161
      %167 = dma.vmem_to_hbm [thread:$0]  %s162, 256, %s4, [#allocation3], 128, 128, 8
    $region21: #{transformer_forward.9} parent=1 // pred_fallthru
      _
    // Predicated region
    $region22: #{transformer_forward.9} parent=1 // pred_check
      _
    $region23: #{transformer_forward.9} parent=1 // pred_check_branch
      %169 = sbr.rel (0) target = $region25
    $region24: #{transformer_forward.9} parent=1 // pred_region
      %170 = dma.done [#allocation3], 256
    $region25: #{transformer_forward.9} parent=1 // pred_fallthru
      _
    %171 = vsyncpa [#allocation3], 1

// kernel: transformer_forward.5
$region0: #{transformer_forward.5}
  #allocation0 [shape = 'u32[]', space=smem, size = 0x4, offset = 0x4, fixed_abs, tag = 'smem constant byte address 0x4 - core index']
  #allocation1 [shape = 'u32[144,128]{1,0:T(1,128)}', space=vmem, size = 0x12000, scoped, tag = 'internal scratch']
  %s0 = inlined_call_operand.vmem [shape: f32[16,128], index: 0, kind: input, shape index: {}]
  %s1 = inlined_call_operand.vmem [shape: f32[2,8], index: 1, kind: input, shape index: {}]
  %s2 = inlined_call_operand.vmem [shape: f32[32,96], index: 2, kind: input, shape index: {}]
  %s3 = inlined_call_operand.vmem [shape: f32[1,96], index: 3, kind: input, shape index: {}]
  %s4 = inlined_call_operand.vmem [shape: f32[32,32], index: 4, kind: input, shape index: {}]
  %s5 = inlined_call_operand.vmem [shape: f32[1,32], index: 5, kind: input, shape index: {}]
  %s6 = inlined_call_operand.vmem [shape: f32[1,32], index: 6, kind: input, shape index: {}]
  %s7 = inlined_call_operand.vmem [shape: f32[1,32], index: 7, kind: input, shape index: {}]
  %s8 = inlined_call_operand.vmem [shape: f32[32,64], index: 8, kind: input, shape index: {}]
  %s9 = inlined_call_operand.vmem [shape: f32[1,64], index: 9, kind: input, shape index: {}]
  %s10 = inlined_call_operand.vmem [shape: f32[64,32], index: 10, kind: input, shape index: {}]
  %s11 = inlined_call_operand.vmem [shape: f32[1,32], index: 11, kind: input, shape index: {}]
  %s12 = inlined_call_operand.vmem [shape: f32[1,32], index: 12, kind: input, shape index: {}]
  %s13 = inlined_call_operand.vmem [shape: f32[1,32], index: 13, kind: input, shape index: {}]
  %s14 = inlined_call_operand.vmem [shape: f32[16,128], index: 14, kind: output, shape index: {}]
  %s15 = sld [smem:[#allocation0]]
  $region66: #{transformer_forward.5} parent=0
    _
  %s17 = ssub.s32 1, %s15
  %s18 = scalar_select 0, %s17, %s15
  // Predicated region
  $region2: #{transformer_forward.5} parent=0 // pred_check
    _
  $region3: #{transformer_forward.5} parent=0 // pred_check_branch
    %20 = sbr.rel (0) target = $region5
  $region4: #{transformer_forward.5} parent=0 // pred_region
    _
  $region5: #{transformer_forward.5} parent=0 // pred_fallthru
    _
  // Predicated region
  $region6: #{transformer_forward.5} parent=0 // pred_check
    _
  $region7: #{transformer_forward.5} parent=0 // pred_check_branch
    %22 = sbr.rel (0) target = $region9
  $region8: #{transformer_forward.5} parent=0 // pred_region
    _
  $region9: #{transformer_forward.5} parent=0 // pred_fallthru
    _
  // Predicated region
  $region10: #{transformer_forward.5} parent=0 // pred_check
    _
  $region11: #{transformer_forward.5} parent=0 // pred_check_branch
    %24 = sbr.rel (0) target = $region13
  $region12: #{transformer_forward.5} parent=0 // pred_region
    _
  $region13: #{transformer_forward.5} parent=0 // pred_fallthru
    _
  // Predicated region
  $region14: #{transformer_forward.5} parent=0 // pred_check
    _
  $region15: #{transformer_forward.5} parent=0 // pred_check_branch
    %26 = sbr.rel (0) target = $region17
  $region16: #{transformer_forward.5} parent=0 // pred_region
    _
  $region17: #{transformer_forward.5} parent=0 // pred_fallthru
    _
  // Predicated region
  $region18: #{transformer_forward.5} parent=0 // pred_check
    _
  $region19: #{transformer_forward.5} parent=0 // pred_check_branch
    %28 = sbr.rel (0) target = $region21
  $region20: #{transformer_forward.5} parent=0 // pred_region
    _
  $region21: #{transformer_forward.5} parent=0 // pred_fallthru
    _
  // Predicated region
  $region22: #{transformer_forward.5} parent=0 // pred_check
    _
  $region23: #{transformer_forward.5} parent=0 // pred_check_branch
    %30 = sbr.rel (0) target = $region25
  $region24: #{transformer_forward.5} parent=0 // pred_region
    _
  $region25: #{transformer_forward.5} parent=0 // pred_fallthru
    _
  // Predicated region
  $region26: #{transformer_forward.5} parent=0 // pred_check
    _
  $region27: #{transformer_forward.5} parent=0 // pred_check_branch
    %32 = sbr.rel (0) target = $region29
  $region28: #{transformer_forward.5} parent=0 // pred_region
    _
  $region29: #{transformer_forward.5} parent=0 // pred_fallthru
    _
  // Predicated region
  $region30: #{transformer_forward.5} parent=0 // pred_check
    _
  $region31: #{transformer_forward.5} parent=0 // pred_check_branch
    %34 = sbr.rel (0) target = $region33
  $region32: #{transformer_forward.5} parent=0 // pred_region
    _
  $region33: #{transformer_forward.5} parent=0 // pred_fallthru
    _
  // Predicated region
  $region34: #{transformer_forward.5} parent=0 // pred_check
    _
  $region35: #{transformer_forward.5} parent=0 // pred_check_branch
    %36 = sbr.rel (0) target = $region37
  $region36: #{transformer_forward.5} parent=0 // pred_region
    _
  $region37: #{transformer_forward.5} parent=0 // pred_fallthru
    _
  // Predicated region
  $region38: #{transformer_forward.5} parent=0 // pred_check
    _
  $region39: #{transformer_forward.5} parent=0 // pred_check_branch
    %38 = sbr.rel (0) target = $region41
  $region40: #{transformer_forward.5} parent=0 // pred_region
    _
  $region41: #{transformer_forward.5} parent=0 // pred_fallthru
    _
  // Predicated region
  $region42: #{transformer_forward.5} parent=0 // pred_check
    _
  $region43: #{transformer_forward.5} parent=0 // pred_check_branch
    %40 = sbr.rel (0) target = $region45
  $region44: #{transformer_forward.5} parent=0 // pred_region
    _
  $region45: #{transformer_forward.5} parent=0 // pred_fallthru
    _
  // Predicated region
  $region46: #{transformer_forward.5} parent=0 // pred_check
    _
  $region47: #{transformer_forward.5} parent=0 // pred_check_branch
    %42 = sbr.rel (0) target = $region49
  $region48: #{transformer_forward.5} parent=0 // pred_region
    _
  $region49: #{transformer_forward.5} parent=0 // pred_fallthru
    _
  // Predicated region
  $region50: #{transformer_forward.5} parent=0 // pred_check
    _
  $region51: #{transformer_forward.5} parent=0 // pred_check_branch
    %44 = sbr.rel (0) target = $region53
  $region52: #{transformer_forward.5} parent=0 // pred_region
    _
  $region53: #{transformer_forward.5} parent=0 // pred_fallthru
    _
  // Predicated region
  $region54: #{transformer_forward.5} parent=0 // pred_check
    _
  $region55: #{transformer_forward.5} parent=0 // pred_check_branch
    %46 = sbr.rel (0) target = $region57
  $region56: #{transformer_forward.5} parent=0 // pred_region
    _
  $region57: #{transformer_forward.5} parent=0 // pred_fallthru
    _
  %v48 = vld [vmem:[%s0] sm:$0xff]
  %v49 = vld [vmem:[%s0 + $0x8] sm:$0xff]
  %v50 = vld [vmem:[%s1] sm:$0x3]
  %v53 = vunpack.c.l.s4 1966171168
  %v54 = vunpack.c.0.s8 %v53
  %v55 = vlaneseq
  %v56 = vshrl.u32 %v55, 7
  %v57 = vsub.s32 %v54, %v56
  %v58 = vrot.slane %v50, %v57
  %v59 = vcombine.high %v58, %v58
  %v61 = vunpack.c.l.s4 1966171168
  %v62 = vunpack.c.0.s8 %v61
  %v63 = vlaneseq
  %v64 = vshrl.u32 %v63, 7
  %v65 = vsub.s32 %v62, %v64
  %v66 = vrot.slane %v58, %v65
  %v68 = vunpack.c.l.s4 1966171168
  %v69 = vunpack.c.0.s8 %v68
  %v70 = vlaneseq
  %v71 = vshrl.u32 %v70, 7
  %v72 = vsub.s32 %v69, %v71
  %v73 = vrot.slane %v59, %v72
  %v74 = vpack.c.bf16 %v49, %v48
  %v75 = vld [vmem:[%s2] sm:$0xff]
  %v76 = vld [vmem:[%s2 + $0x8] sm:$0xff]
  %v77 = vld [vmem:[%s2 + $0x10] sm:$0xff]
  %v78 = vld [vmem:[%s2 + $0x18] sm:$0xff]
  %v79 = vpack.c.bf16 %v76, %v75
  %v80 = vpack.c.bf16 %v78, %v77
  %v81 = vld [vmem:[%s3] sm:$0x1]
  %v83 = vlaneseq
  %v84 = vshrl.u32 %v83, 7
  %v85 = vsub.s32 0, %v84
  %v86 = vrot.slane %v81, %v85
  %vm88 = vcmask 261120
  %v90 = vsel %vm88, %v74, 0
  %92 = vmatprep.subr.bf16.mxu0 0
  %93 = vmatpush1.bf16.msra.mxu0 %v79
  %94 = vmatprep.subr.bf16.mxu0 0
  %95 = vmatpush1.bf16.msra.mxu0 %v80
  %96 = vmatprep.subr.bf16.mxu0 0
  %97 = vmatpush1.bf16.msra.mxu0 0
  %98 = vmatprep.subr.bf16.mxu0 0
  %99 = vmatpush1.bf16.msra.mxu0 0
  %100 = vmatprep.subr.bf16.mxu0 0
  %101 = vmatpush1.bf16.msra.mxu0 0
  %102 = vmatprep.subr.bf16.mxu0 0
  %103 = vmatpush1.bf16.msra.mxu0 0
  %104 = vmatprep.subr.bf16.mxu0 0
  %105 = vmatpush1.bf16.msra.mxu0 0
  %106 = vmatprep.subr.bf16.mxu0 0
  %107 = vmatpush1.bf16.msra.mxu0 0
  %108 = vmatprep.subr.bf16.mxu0 0
  %109 = vmatpush1.bf16.msra.mxu0 0
  %110 = vmatprep.subr.bf16.mxu0 0
  %111 = vmatpush1.bf16.msra.mxu0 0
  %112 = vmatprep.subr.bf16.mxu0 0
  %113 = vmatpush1.bf16.msra.mxu0 0
  %114 = vmatprep.subr.bf16.mxu0 0
  %115 = vmatpush1.bf16.msra.mxu0 0
  %116 = vmatprep.subr.bf16.mxu0 0
  %117 = vmatpush1.bf16.msra.mxu0 0
  %118 = vmatprep.subr.bf16.mxu0 0
  %119 = vmatpush1.bf16.msra.mxu0 0
  %120 = vmatprep.subr.bf16.mxu0 0
  %121 = vmatpush1.bf16.msra.mxu0 0
  %122 = vmatprep.subr.bf16.mxu0 0
  %123 = vmatpush1.bf16.msra.mxu0 0
  %124 = vmatprep.mubr.bf16.mxu0 0
  %125 = vmatmul.mubr.bf16.gmra.mrb[0].mxu0 %v90
  %v126 = vpop.f32.mrb[0].mxu0
  %v127 = vadd.f32 %v86, %v126
  %v128 = vpop.f32.mrb[0].mxu0
  %v129 = vpop.f32.mrb[0].mxu0
  %v130 = vadd.f32 %v86, %v129
  %v131 = vpop.f32.mrb[0].mxu0
  %132 = vdwg.mxu0
  %v133 = vmul.f32 %v127, 0.35355338
  %v134 = vmul.f32 %v130, 0.35355338
  %v135 = vpack.c.bf16 %v133, %v133
  %v136 = vpack.c.bf16 %v134, %v134
  %v137 = vpack.c.bf16 %v127, %v127
  %v138 = vpack.c.bf16 %v130, %v130
  %v139 = vlaneseq
  %v140 = vshrl.u32 %v139, 7
  %v141 = vsub.s32 0, %v140
  %v142 = vrot.slane %v66, %v141
  %v143 = vlaneseq
  %v144 = vshrl.u32 %v143, 7
  %v145 = vsub.s32 0, %v144
  %v146 = vrot.slane %v73, %v145
  %150 = vrot.lane.b32.xlu0 %v137, 96
  %v151 = vpop.permute.xlu0 %150
  %vm152 = vcmask 64512
  %v154 = vsel %vm152, %v135, 0
  %v157 = vsel %vm152, %v151, 0
  %159 = vmatprep.subr.bf16.mxu0 0
  %160 = vmatpush1.bf16.xpose.msra.mxu0 %v157
  %161 = vmatprep.subr.bf16.mxu0 0
  %162 = vmatpush1.bf16.xpose.msra.mxu0 0
  %163 = vmatprep.subr.bf16.mxu0 0
  %164 = vmatpush1.bf16.xpose.msra.mxu0 0
  %165 = vmatprep.subr.bf16.mxu0 0
  %166 = vmatpush1.bf16.xpose.msra.mxu0 0
  %167 = vmatprep.subr.bf16.mxu0 0
  %168 = vmatpush1.bf16.xpose.msra.mxu0 0
  %169 = vmatprep.subr.bf16.mxu0 0
  %170 = vmatpush1.bf16.xpose.msra.mxu0 0
  %171 = vmatprep.subr.bf16.mxu0 0
  %172 = vmatpush1.bf16.xpose.msra.mxu0 0
  %173 = vmatprep.subr.bf16.mxu0 0
  %174 = vmatpush1.bf16.xpose.msra.mxu0 0
  %175 = vmatprep.subr.bf16.mxu0 0
  %176 = vmatpush1.bf16.xpose.msra.mxu0 0
  %177 = vmatprep.subr.bf16.mxu0 0
  %178 = vmatpush1.bf16.xpose.msra.mxu0 0
  %179 = vmatprep.subr.bf16.mxu0 0
  %180 = vmatpush1.bf16.xpose.msra.mxu0 0
  %181 = vmatprep.subr.bf16.mxu0 0
  %182 = vmatpush1.bf16.xpose.msra.mxu0 0
  %183 = vmatprep.subr.bf16.mxu0 0
  %184 = vmatpush1.bf16.xpose.msra.mxu0 0
  %185 = vmatprep.subr.bf16.mxu0 0
  %186 = vmatpush1.bf16.xpose.msra.mxu0 0
  %187 = vmatprep.subr.bf16.mxu0 0
  %188 = vmatpush1.bf16.xpose.msra.mxu0 0
  %189 = vmatprep.subr.bf16.mxu0 0
  %190 = vmatpush1.bf16.xpose.msra.mxu0 0
  %191 = vmatprep.mubr.bf16.mxu0 0
  %192 = vmatmul.mubr.bf16.gmra.mrb[0].mxu0 %v154
  %v193 = vpop.f32.mrb[0].mxu0
  %v194 = vadd.f32 %v142, %v193
  %v195 = vpop.f32.mrb[0].mxu0
  %v196 = vpop.f32.mrb[0].mxu0
  %v197 = vpop.f32.mrb[0].mxu0
  %198 = vdwg.mxu0
  %200 = vrot.lane.b32.xlu0 %v138, 96
  %v201 = vpop.permute.xlu0 %200
  %v203 = vsel %vm152, %v136, 0
  %v206 = vsel %vm152, %v201, 0
  %208 = vmatprep.subr.bf16.mxu0 0
  %209 = vmatpush1.bf16.xpose.msra.mxu0 %v206
  %210 = vmatprep.subr.bf16.mxu0 0
  %211 = vmatpush1.bf16.xpose.msra.mxu0 0
  %212 = vmatprep.subr.bf16.mxu0 0
  %213 = vmatpush1.bf16.xpose.msra.mxu0 0
  %214 = vmatprep.subr.bf16.mxu0 0
  %215 = vmatpush1.bf16.xpose.msra.mxu0 0
  %216 = vmatprep.subr.bf16.mxu0 0
  %217 = vmatpush1.bf16.xpose.msra.mxu0 0
  %218 = vmatprep.subr.bf16.mxu0 0
  %219 = vmatpush1.bf16.xpose.msra.mxu0 0
  %220 = vmatprep.subr.bf16.mxu0 0
  %221 = vmatpush1.bf16.xpose.msra.mxu0 0
  %222 = vmatprep.subr.bf16.mxu0 0
  %223 = vmatpush1.bf16.xpose.msra.mxu0 0
  %224 = vmatprep.subr.bf16.mxu0 0
  %225 = vmatpush1.bf16.xpose.msra.mxu0 0
  %226 = vmatprep.subr.bf16.mxu0 0
  %227 = vmatpush1.bf16.xpose.msra.mxu0 0
  %228 = vmatprep.subr.bf16.mxu0 0
  %229 = vmatpush1.bf16.xpose.msra.mxu0 0
  %230 = vmatprep.subr.bf16.mxu0 0
  %231 = vmatpush1.bf16.xpose.msra.mxu0 0
  %232 = vmatprep.subr.bf16.mxu0 0
  %233 = vmatpush1.bf16.xpose.msra.mxu0 0
  %234 = vmatprep.subr.bf16.mxu0 0
  %235 = vmatpush1.bf16.xpose.msra.mxu0 0
  %236 = vmatprep.subr.bf16.mxu0 0
  %237 = vmatpush1.bf16.xpose.msra.mxu0 0
  %238 = vmatprep.subr.bf16.mxu0 0
  %239 = vmatpush1.bf16.xpose.msra.mxu0 0
  %240 = vmatprep.mubr.bf16.mxu0 0
  %241 = vmatmul.mubr.bf16.gmra.mrb[0].mxu0 %v203
  %v242 = vpop.f32.mrb[0].mxu0
  %v243 = vadd.f32 %v146, %v242
  %v244 = vpop.f32.mrb[0].mxu0
  %v245 = vpop.f32.mrb[0].mxu0
  %v246 = vpop.f32.mrb[0].mxu0
  %247 = vdwg.mxu0
  %v248 = vsel %vm152, %v194, -inf
  %249 = vmax.xlane.f32.xlu0 %v248
  %v250 = vpop.xlane.xlu0 %249
  %v251 = vsel %vm152, %v243, -inf
  %252 = vmax.xlane.f32.xlu0 %v251
  %v253 = vpop.xlane.xlu0 %252
  %v254 = vsub.f32 %v194, %v250
  %v255 = vsub.f32 %v243, %v253
  %v256 = vmul.f32 %v254, 1.442695
  %v257 = vpow.pop %v256
  %v258 = vmul.f32 %v255, 1.442695
  %v259 = vpow.pop %v258
  %v260 = vsel %vm152, %v257, 0.0
  %261 = vadd.xlane.f32.xlu0 %v260
  %v262 = vpop.xlane.xlu0 %261
  %v263 = vsel %vm152, %v259, 0.0
  %264 = vadd.xlane.f32.xlu0 %v263
  %v265 = vpop.xlane.xlu0 %264
  %v266 = vrcp.pop %v262
  %v267 = vrcp.pop %v265
  %v268 = vmul.f32 %v257, %v266
  %v269 = vmul.f32 %v259, %v267
  %v270 = vpack.c.bf16 %v268, %v268
  %v271 = vpack.c.bf16 %v269, %v269
  %272 = vrot.lane.b32.xlu0 %v137, 64
  %v273 = vpop.permute.xlu0 %272
  %v275 = vsel %vm152, %v270, 0
  %vm277 = vcmask 1043456
  %v279 = vsel %vm277, %v273, 0
  %281 = vmatprep.subr.bf16.mxu0 0
  %282 = vmatpush1.bf16.msra.mxu0 %v279
  %283 = vmatprep.subr.bf16.mxu0 0
  %284 = vmatpush1.bf16.msra.mxu0 0
  %285 = vmatprep.subr.bf16.mxu0 0
  %286 = vmatpush1.bf16.msra.mxu0 0
  %287 = vmatprep.subr.bf16.mxu0 0
  %288 = vmatpush1.bf16.msra.mxu0 0
  %289 = vmatprep.subr.bf16.mxu0 0
  %290 = vmatpush1.bf16.msra.mxu0 0
  %291 = vmatprep.subr.bf16.mxu0 0
  %292 = vmatpush1.bf16.msra.mxu0 0
  %293 = vmatprep.subr.bf16.mxu0 0
  %294 = vmatpush1.bf16.msra.mxu0 0
  %295 = vmatprep.subr.bf16.mxu0 0
  %296 = vmatpush1.bf16.msra.mxu0 0
  %297 = vmatprep.subr.bf16.mxu0 0
  %298 = vmatpush1.bf16.msra.mxu0 0
  %299 = vmatprep.subr.bf16.mxu0 0
  %300 = vmatpush1.bf16.msra.mxu0 0
  %301 = vmatprep.subr.bf16.mxu0 0
  %302 = vmatpush1.bf16.msra.mxu0 0
  %303 = vmatprep.subr.bf16.mxu0 0
  %304 = vmatpush1.bf16.msra.mxu0 0
  %305 = vmatprep.subr.bf16.mxu0 0
  %306 = vmatpush1.bf16.msra.mxu0 0
  %307 = vmatprep.subr.bf16.mxu0 0
  %308 = vmatpush1.bf16.msra.mxu0 0
  %309 = vmatprep.subr.bf16.mxu0 0
  %310 = vmatpush1.bf16.msra.mxu0 0
  %311 = vmatprep.subr.bf16.mxu0 0
  %312 = vmatpush1.bf16.msra.mxu0 0
  %313 = vmatprep.mubr.bf16.mxu0 0
  %314 = vmatmul.mubr.bf16.gmra.mrb[0].mxu0 %v275
  %v315 = vpop.f32.mrb[0].mxu0
  %v316 = vadd.f32 0.0, %v315
  %v317 = vpop.f32.mrb[0].mxu0
  %v318 = vpop.f32.mrb[0].mxu0
  %v319 = vpop.f32.mrb[0].mxu0
  %320 = vdwg.mxu0
  %321 = vrot.lane.b32.xlu0 %v138, 64
  %v322 = vpop.permute.xlu0 %321
  %v324 = vsel %vm152, %v271, 0
  %v327 = vsel %vm277, %v322, 0
  %329 = vmatprep.subr.bf16.mxu0 0
  %330 = vmatpush1.bf16.msra.mxu0 %v327
  %331 = vmatprep.subr.bf16.mxu0 0
  %332 = vmatpush1.bf16.msra.mxu0 0
  %333 = vmatprep.subr.bf16.mxu0 0
  %334 = vmatpush1.bf16.msra.mxu0 0
  %335 = vmatprep.subr.bf16.mxu0 0
  %336 = vmatpush1.bf16.msra.mxu0 0
  %337 = vmatprep.subr.bf16.mxu0 0
  %338 = vmatpush1.bf16.msra.mxu0 0
  %339 = vmatprep.subr.bf16.mxu0 0
  %340 = vmatpush1.bf16.msra.mxu0 0
  %341 = vmatprep.subr.bf16.mxu0 0
  %342 = vmatpush1.bf16.msra.mxu0 0
  %343 = vmatprep.subr.bf16.mxu0 0
  %344 = vmatpush1.bf16.msra.mxu0 0
  %345 = vmatprep.subr.bf16.mxu0 0
  %346 = vmatpush1.bf16.msra.mxu0 0
  %347 = vmatprep.subr.bf16.mxu0 0
  %348 = vmatpush1.bf16.msra.mxu0 0
  %349 = vmatprep.subr.bf16.mxu0 0
  %350 = vmatpush1.bf16.msra.mxu0 0
  %351 = vmatprep.subr.bf16.mxu0 0
  %352 = vmatpush1.bf16.msra.mxu0 0
  %353 = vmatprep.subr.bf16.mxu0 0
  %354 = vmatpush1.bf16.msra.mxu0 0
  %355 = vmatprep.subr.bf16.mxu0 0
  %356 = vmatpush1.bf16.msra.mxu0 0
  %357 = vmatprep.subr.bf16.mxu0 0
  %358 = vmatpush1.bf16.msra.mxu0 0
  %359 = vmatprep.subr.bf16.mxu0 0
  %360 = vmatpush1.bf16.msra.mxu0 0
  %361 = vmatprep.mubr.bf16.mxu0 0
  %362 = vmatmul.mubr.bf16.gmra.mrb[0].mxu0 %v324
  %v363 = vpop.f32.mrb[0].mxu0
  %v364 = vadd.f32 0.0, %v363
  %v365 = vpop.f32.mrb[0].mxu0
  %v366 = vpop.f32.mrb[0].mxu0
  %v367 = vpop.f32.mrb[0].mxu0
  %368 = vdwg.mxu0
  %v369 = vpack.c.bf16 %v364, %v316
  %v370 = vld [vmem:[%s4] sm:$0xff]
  %v371 = vpack.c.bf16 %v370, %v370
  %373 = vrot.lane.b32.xlu0 %v135, 120
  %v374 = vpop.permute.xlu0 %373
  %375 = vrot.lane.b32.xlu0 %v137, 88
  %v376 = vpop.permute.xlu0 %375
  %v378 = vsel %vm152, %v374, 0
  %v381 = vsel %vm152, %v376, 0
  %383 = vmatprep.subr.bf16.mxu0 0
  %384 = vmatpush1.bf16.xpose.msra.mxu0 %v381
  %385 = vmatprep.subr.bf16.mxu0 0
  %386 = vmatpush1.bf16.xpose.msra.mxu0 0
  %387 = vmatprep.subr.bf16.mxu0 0
  %388 = vmatpush1.bf16.xpose.msra.mxu0 0
  %389 = vmatprep.subr.bf16.mxu0 0
  %390 = vmatpush1.bf16.xpose.msra.mxu0 0
  %391 = vmatprep.subr.bf16.mxu0 0
  %392 = vmatpush1.bf16.xpose.msra.mxu0 0
  %393 = vmatprep.subr.bf16.mxu0 0
  %394 = vmatpush1.bf16.xpose.msra.mxu0 0
  %395 = vmatprep.subr.bf16.mxu0 0
  %396 = vmatpush1.bf16.xpose.msra.mxu0 0
  %397 = vmatprep.subr.bf16.mxu0 0
  %398 = vmatpush1.bf16.xpose.msra.mxu0 0
  %399 = vmatprep.subr.bf16.mxu0 0
  %400 = vmatpush1.bf16.xpose.msra.mxu0 0
  %401 = vmatprep.subr.bf16.mxu0 0
  %402 = vmatpush1.bf16.xpose.msra.mxu0 0
  %403 = vmatprep.subr.bf16.mxu0 0
  %404 = vmatpush1.bf16.xpose.msra.mxu0 0
  %405 = vmatprep.subr.bf16.mxu0 0
  %406 = vmatpush1.bf16.xpose.msra.mxu0 0
  %407 = vmatprep.subr.bf16.mxu0 0
  %408 = vmatpush1.bf16.xpose.msra.mxu0 0
  %409 = vmatprep.subr.bf16.mxu0 0
  %410 = vmatpush1.bf16.xpose.msra.mxu0 0
  %411 = vmatprep.subr.bf16.mxu0 0
  %412 = vmatpush1.bf16.xpose.msra.mxu0 0
  %413 = vmatprep.subr.bf16.mxu0 0
  %414 = vmatpush1.bf16.xpose.msra.mxu0 0
  %415 = vmatprep.mubr.bf16.mxu0 0
  %416 = vmatmul.mubr.bf16.gmra.mrb[0].mxu0 %v378
  %v417 = vpop.f32.mrb[0].mxu0
  %v418 = vadd.f32 %v142, %v417
  %v419 = vpop.f32.mrb[0].mxu0
  %v420 = vpop.f32.mrb[0].mxu0
  %v421 = vpop.f32.mrb[0].mxu0
  %422 = vdwg.mxu0
  %424 = vrot.lane.b32.xlu0 %v136, 120
  %v425 = vpop.permute.xlu0 %424
  %426 = vrot.lane.b32.xlu0 %v138, 88
  %v427 = vpop.permute.xlu0 %426
  %v429 = vsel %vm152, %v425, 0
  %v432 = vsel %vm152, %v427, 0
  %434 = vmatprep.subr.bf16.mxu0 0
  %435 = vmatpush1.bf16.xpose.msra.mxu0 %v432
  %436 = vmatprep.subr.bf16.mxu0 0
  %437 = vmatpush1.bf16.xpose.msra.mxu0 0
  %438 = vmatprep.subr.bf16.mxu0 0
  %439 = vmatpush1.bf16.xpose.msra.mxu0 0
  %440 = vmatprep.subr.bf16.mxu0 0
  %441 = vmatpush1.bf16.xpose.msra.mxu0 0
  %442 = vmatprep.subr.bf16.mxu0 0
  %443 = vmatpush1.bf16.xpose.msra.mxu0 0
  %444 = vmatprep.subr.bf16.mxu0 0
  %445 = vmatpush1.bf16.xpose.msra.mxu0 0
  %446 = vmatprep.subr.bf16.mxu0 0
  %447 = vmatpush1.bf16.xpose.msra.mxu0 0
  %448 = vmatprep.subr.bf16.mxu0 0
  %449 = vmatpush1.bf16.xpose.msra.mxu0 0
  %450 = vmatprep.subr.bf16.mxu0 0
  %451 = vmatpush1.bf16.xpose.msra.mxu0 0
  %452 = vmatprep.subr.bf16.mxu0 0
  %453 = vmatpush1.bf16.xpose.msra.mxu0 0
  %454 = vmatprep.subr.bf16.mxu0 0
  %455 = vmatpush1.bf16.xpose.msra.mxu0 0
  %456 = vmatprep.subr.bf16.mxu0 0
  %457 = vmatpush1.bf16.xpose.msra.mxu0 0
  %458 = vmatprep.subr.bf16.mxu0 0
  %459 = vmatpush1.bf16.xpose.msra.mxu0 0
  %460 = vmatprep.subr.bf16.mxu0 0
  %461 = vmatpush1.bf16.xpose.msra.mxu0 0
  %462 = vmatprep.subr.bf16.mxu0 0
  %463 = vmatpush1.bf16.xpose.msra.mxu0 0
  %464 = vmatprep.subr.bf16.mxu0 0
  %465 = vmatpush1.bf16.xpose.msra.mxu0 0
  %466 = vmatprep.mubr.bf16.mxu0 0
  %467 = vmatmul.mubr.bf16.gmra.mrb[0].mxu0 %v429
  %v468 = vpop.f32.mrb[0].mxu0
  %v469 = vadd.f32 %v146, %v468
  %v470 = vpop.f32.mrb[0].mxu0
  %v471 = vpop.f32.mrb[0].mxu0
  %v472 = vpop.f32.mrb[0].mxu0
  %473 = vdwg.mxu0
  %v474 = vsel %vm152, %v418, -inf
  %475 = vmax.xlane.f32.xlu0 %v474
  %v476 = vpop.xlane.xlu0 %475
  %v477 = vsel %vm152, %v469, -inf
  %478 = vmax.xlane.f32.xlu0 %v477
  %v479 = vpop.xlane.xlu0 %478
  %v480 = vsub.f32 %v418, %v476
  %v481 = vsub.f32 %v469, %v479
  %v482 = vmul.f32 %v480, 1.442695
  %v483 = vpow.pop %v482
  %v484 = vmul.f32 %v481, 1.442695
  %v485 = vpow.pop %v484
  %v486 = vsel %vm152, %v483, 0.0
  %487 = vadd.xlane.f32.xlu0 %v486
  %v488 = vpop.xlane.xlu0 %487
  %v489 = vsel %vm152, %v485, 0.0
  %490 = vadd.xlane.f32.xlu0 %v489
  %v491 = vpop.xlane.xlu0 %490
  %v492 = vrcp.pop %v488
  %v493 = vrcp.pop %v491
  %v494 = vmul.f32 %v483, %v492
  %v495 = vmul.f32 %v485, %v493
  %v496 = vpack.c.bf16 %v494, %v494
  %v497 = vpack.c.bf16 %v495, %v495
  %498 = vrot.lane.b32.xlu0 %v137, 56
  %v499 = vpop.permute.xlu0 %498
  %v501 = vsel %vm152, %v496, 0
  %v504 = vsel %vm277, %v499, 0
  %506 = vmatprep.subr.bf16.mxu0 0
  %507 = vmatpush1.bf16.msra.mxu0 %v504
  %508 = vmatprep.subr.bf16.mxu0 0
  %509 = vmatpush1.bf16.msra.mxu0 0
  %510 = vmatprep.subr.bf16.mxu0 0
  %511 = vmatpush1.bf16.msra.mxu0 0
  %512 = vmatprep.subr.bf16.mxu0 0
  %513 = vmatpush1.bf16.msra.mxu0 0
  %514 = vmatprep.subr.bf16.mxu0 0
  %515 = vmatpush1.bf16.msra.mxu0 0
  %516 = vmatprep.subr.bf16.mxu0 0
  %517 = vmatpush1.bf16.msra.mxu0 0
  %518 = vmatprep.subr.bf16.mxu0 0
  %519 = vmatpush1.bf16.msra.mxu0 0
  %520 = vmatprep.subr.bf16.mxu0 0
  %521 = vmatpush1.bf16.msra.mxu0 0
  %522 = vmatprep.subr.bf16.mxu0 0
  %523 = vmatpush1.bf16.msra.mxu0 0
  %524 = vmatprep.subr.bf16.mxu0 0
  %525 = vmatpush1.bf16.msra.mxu0 0
  %526 = vmatprep.subr.bf16.mxu0 0
  %527 = vmatpush1.bf16.msra.mxu0 0
  %528 = vmatprep.subr.bf16.mxu0 0
  %529 = vmatpush1.bf16.msra.mxu0 0
  %530 = vmatprep.subr.bf16.mxu0 0
  %531 = vmatpush1.bf16.msra.mxu0 0
  %532 = vmatprep.subr.bf16.mxu0 0
  %533 = vmatpush1.bf16.msra.mxu0 0
  %534 = vmatprep.subr.bf16.mxu0 0
  %535 = vmatpush1.bf16.msra.mxu0 0
  %536 = vmatprep.subr.bf16.mxu0 0
  %537 = vmatpush1.bf16.msra.mxu0 0
  %538 = vmatprep.mubr.bf16.mxu0 0
  %539 = vmatmul.mubr.bf16.gmra.mrb[0].mxu0 %v501
  %v540 = vpop.f32.mrb[0].mxu0
  %v541 = vadd.f32 0.0, %v540
  %v542 = vpop.f32.mrb[0].mxu0
  %v543 = vpop.f32.mrb[0].mxu0
  %v544 = vpop.f32.mrb[0].mxu0
  %545 = vdwg.mxu0
  %546 = vrot.lane.b32.xlu0 %v138, 56
  %v547 = vpop.permute.xlu0 %546
  %v549 = vsel %vm152, %v497, 0
  %v552 = vsel %vm277, %v547, 0
  %554 = vmatprep.subr.bf16.mxu0 0
  %555 = vmatpush1.bf16.msra.mxu0 %v552
  %556 = vmatprep.subr.bf16.mxu0 0
  %557 = vmatpush1.bf16.msra.mxu0 0
  %558 = vmatprep.subr.bf16.mxu0 0
  %559 = vmatpush1.bf16.msra.mxu0 0
  %560 = vmatprep.subr.bf16.mxu0 0
  %561 = vmatpush1.bf16.msra.mxu0 0
  %562 = vmatprep.subr.bf16.mxu0 0
  %563 = vmatpush1.bf16.msra.mxu0 0
  %564 = vmatprep.subr.bf16.mxu0 0
  %565 = vmatpush1.bf16.msra.mxu0 0
  %566 = vmatprep.subr.bf16.mxu0 0
  %567 = vmatpush1.bf16.msra.mxu0 0
  %568 = vmatprep.subr.bf16.mxu0 0
  %569 = vmatpush1.bf16.msra.mxu0 0
  %570 = vmatprep.subr.bf16.mxu0 0
  %571 = vmatpush1.bf16.msra.mxu0 0
  %572 = vmatprep.subr.bf16.mxu0 0
  %573 = vmatpush1.bf16.msra.mxu0 0
  %574 = vmatprep.subr.bf16.mxu0 0
  %575 = vmatpush1.bf16.msra.mxu0 0
  %576 = vmatprep.subr.bf16.mxu0 0
  %577 = vmatpush1.bf16.msra.mxu0 0
  %578 = vmatprep.subr.bf16.mxu0 0
  %579 = vmatpush1.bf16.msra.mxu0 0
  %580 = vmatprep.subr.bf16.mxu0 0
  %581 = vmatpush1.bf16.msra.mxu0 0
  %582 = vmatprep.subr.bf16.mxu0 0
  %583 = vmatpush1.bf16.msra.mxu0 0
  %584 = vmatprep.subr.bf16.mxu0 0
  %585 = vmatpush1.bf16.msra.mxu0 0
  %586 = vmatprep.mubr.bf16.mxu0 0
  %587 = vmatmul.mubr.bf16.gmra.mrb[0].mxu0 %v549
  %v588 = vpop.f32.mrb[0].mxu0
  %v589 = vadd.f32 0.0, %v588
  %v590 = vpop.f32.mrb[0].mxu0
  %v591 = vpop.f32.mrb[0].mxu0
  %v592 = vpop.f32.mrb[0].mxu0
  %593 = vdwg.mxu0
  %v594 = vpack.c.bf16 %v589, %v541
  %v595 = vld [vmem:[%s4 + $0x8] sm:$0xff]
  %v596 = vpack.c.bf16 %v595, %v595
  %v598 = vsel %vm152, %v594, 0
  %v601 = vsel %vm277, %v596, 0
  %603 = vmatprep.subr.bf16.mxu0 0
  %604 = vmatpush1.bf16.msra.mxu0 %v601
  %605 = vmatprep.subr.bf16.mxu0 0
  %606 = vmatpush1.bf16.msra.mxu0 0
  %607 = vmatprep.subr.bf16.mxu0 0
  %608 = vmatpush1.bf16.msra.mxu0 0
  %609 = vmatprep.subr.bf16.mxu0 0
  %610 = vmatpush1.bf16.msra.mxu0 0
  %611 = vmatprep.subr.bf16.mxu0 0
  %612 = vmatpush1.bf16.msra.mxu0 0
  %613 = vmatprep.subr.bf16.mxu0 0
  %614 = vmatpush1.bf16.msra.mxu0 0
  %615 = vmatprep.subr.bf16.mxu0 0
  %616 = vmatpush1.bf16.msra.mxu0 0
  %617 = vmatprep.subr.bf16.mxu0 0
  %618 = vmatpush1.bf16.msra.mxu0 0
  %619 = vmatprep.subr.bf16.mxu0 0
  %620 = vmatpush1.bf16.msra.mxu0 0
  %621 = vmatprep.subr.bf16.mxu0 0
  %622 = vmatpush1.bf16.msra.mxu0 0
  %623 = vmatprep.subr.bf16.mxu0 0
  %624 = vmatpush1.bf16.msra.mxu0 0
  %625 = vmatprep.subr.bf16.mxu0 0
  %626 = vmatpush1.bf16.msra.mxu0 0
  %627 = vmatprep.subr.bf16.mxu0 0
  %628 = vmatpush1.bf16.msra.mxu0 0
  %629 = vmatprep.subr.bf16.mxu0 0
  %630 = vmatpush1.bf16.msra.mxu0 0
  %631 = vmatprep.subr.bf16.mxu0 0
  %632 = vmatpush1.bf16.msra.mxu0 0
  %633 = vmatprep.subr.bf16.mxu0 0
  %634 = vmatpush1.bf16.msra.mxu0 0
  %635 = vmatprep.mubr.bf16.mxu0 0
  %636 = vmatmul.mubr.bf16.gmra.mrb[0].mxu0 %v598
  %v637 = vpop.f32.mrb[0].mxu0
  %v638 = vadd.f32 0.0, %v637
  %v639 = vpop.f32.mrb[0].mxu0
  %v640 = vpop.f32.mrb[0].mxu0
  %v641 = vadd.f32 0.0, %v640
  %v642 = vpop.f32.mrb[0].mxu0
  %643 = vdwg.mxu0
  %v645 = vsel %vm152, %v369, 0
  %v648 = vsel %vm277, %v371, 0
  %650 = vmatprep.subr.bf16.mxu0 0
  %651 = vmatpush1.bf16.msra.mxu0 %v648
  %652 = vmatprep.subr.bf16.mxu0 0
  %653 = vmatpush1.bf16.msra.mxu0 0
  %654 = vmatprep.subr.bf16.mxu0 0
  %655 = vmatpush1.bf16.msra.mxu0 0
  %656 = vmatprep.subr.bf16.mxu0 0
  %657 = vmatpush1.bf16.msra.mxu0 0
  %658 = vmatprep.subr.bf16.mxu0 0
  %659 = vmatpush1.bf16.msra.mxu0 0
  %660 = vmatprep.subr.bf16.mxu0 0
  %661 = vmatpush1.bf16.msra.mxu0 0
  %662 = vmatprep.subr.bf16.mxu0 0
  %663 = vmatpush1.bf16.msra.mxu0 0
  %664 = vmatprep.subr.bf16.mxu0 0
  %665 = vmatpush1.bf16.msra.mxu0 0
  %666 = vmatprep.subr.bf16.mxu0 0
  %667 = vmatpush1.bf16.msra.mxu0 0
  %668 = vmatprep.subr.bf16.mxu0 0
  %669 = vmatpush1.bf16.msra.mxu0 0
  %670 = vmatprep.subr.bf16.mxu0 0
  %671 = vmatpush1.bf16.msra.mxu0 0
  %672 = vmatprep.subr.bf16.mxu0 0
  %673 = vmatpush1.bf16.msra.mxu0 0
  %674 = vmatprep.subr.bf16.mxu0 0
  %675 = vmatpush1.bf16.msra.mxu0 0
  %676 = vmatprep.subr.bf16.mxu0 0
  %677 = vmatpush1.bf16.msra.mxu0 0
  %678 = vmatprep.subr.bf16.mxu0 0
  %679 = vmatpush1.bf16.msra.mxu0 0
  %680 = vmatprep.subr.bf16.mxu0 0
  %681 = vmatpush1.bf16.msra.mxu0 0
  %682 = vmatprep.mubr.bf16.mxu0 0
  %683 = vmatmul.mubr.bf16.gmra.mrb[0].mxu0 %v645
  %v684 = vpop.f32.mrb[0].mxu0
  %v685 = vadd.f32 %v638, %v684
  %v686 = vpop.f32.mrb[0].mxu0
  %v687 = vpop.f32.mrb[0].mxu0
  %v688 = vadd.f32 %v641, %v687
  %v689 = vpop.f32.mrb[0].mxu0
  %690 = vdwg.mxu0
  %691 = vrot.lane.b32.xlu0 %v135, 112
  %v692 = vpop.permute.xlu0 %691
  %693 = vrot.lane.b32.xlu0 %v137, 80
  %v694 = vpop.permute.xlu0 %693
  %v696 = vsel %vm152, %v692, 0
  %v699 = vsel %vm152, %v694, 0
  %701 = vmatprep.subr.bf16.mxu0 0
  %702 = vmatpush1.bf16.xpose.msra.mxu0 %v699
  %703 = vmatprep.subr.bf16.mxu0 0
  %704 = vmatpush1.bf16.xpose.msra.mxu0 0
  %705 = vmatprep.subr.bf16.mxu0 0
  %706 = vmatpush1.bf16.xpose.msra.mxu0 0
  %707 = vmatprep.subr.bf16.mxu0 0
  %708 = vmatpush1.bf16.xpose.msra.mxu0 0
  %709 = vmatprep.subr.bf16.mxu0 0
  %710 = vmatpush1.bf16.xpose.msra.mxu0 0
  %711 = vmatprep.subr.bf16.mxu0 0
  %712 = vmatpush1.bf16.xpose.msra.mxu0 0
  %713 = vmatprep.subr.bf16.mxu0 0
  %714 = vmatpush1.bf16.xpose.msra.mxu0 0
  %715 = vmatprep.subr.bf16.mxu0 0
  %716 = vmatpush1.bf16.xpose.msra.mxu0 0
  %717 = vmatprep.subr.bf16.mxu0 0
  %718 = vmatpush1.bf16.xpose.msra.mxu0 0
  %719 = vmatprep.subr.bf16.mxu0 0
  %720 = vmatpush1.bf16.xpose.msra.mxu0 0
  %721 = vmatprep.subr.bf16.mxu0 0
  %722 = vmatpush1.bf16.xpose.msra.mxu0 0
  %723 = vmatprep.subr.bf16.mxu0 0
  %724 = vmatpush1.bf16.xpose.msra.mxu0 0
  %725 = vmatprep.subr.bf16.mxu0 0
  %726 = vmatpush1.bf16.xpose.msra.mxu0 0
  %727 = vmatprep.subr.bf16.mxu0 0
  %728 = vmatpush1.bf16.xpose.msra.mxu0 0
  %729 = vmatprep.subr.bf16.mxu0 0
  %730 = vmatpush1.bf16.xpose.msra.mxu0 0
  %731 = vmatprep.subr.bf16.mxu0 0
  %732 = vmatpush1.bf16.xpose.msra.mxu0 0
  %733 = vmatprep.mubr.bf16.mxu0 0
  %734 = vmatmul.mubr.bf16.gmra.mrb[0].mxu0 %v696
  %v735 = vpop.f32.mrb[0].mxu0
  %v736 = vadd.f32 %v142, %v735
  %v737 = vpop.f32.mrb[0].mxu0
  %v738 = vpop.f32.mrb[0].mxu0
  %v739 = vpop.f32.mrb[0].mxu0
  %740 = vdwg.mxu0
  %741 = vrot.lane.b32.xlu0 %v136, 112
  %v742 = vpop.permute.xlu0 %741
  %743 = vrot.lane.b32.xlu0 %v138, 80
  %v744 = vpop.permute.xlu0 %743
  %v746 = vsel %vm152, %v742, 0
  %v749 = vsel %vm152, %v744, 0
  %751 = vmatprep.subr.bf16.mxu0 0
  %752 = vmatpush1.bf16.xpose.msra.mxu0 %v749
  %753 = vmatprep.subr.bf16.mxu0 0
  %754 = vmatpush1.bf16.xpose.msra.mxu0 0
  %755 = vmatprep.subr.bf16.mxu0 0
  %756 = vmatpush1.bf16.xpose.msra.mxu0 0
  %757 = vmatprep.subr.bf16.mxu0 0
  %758 = vmatpush1.bf16.xpose.msra.mxu0 0
  %759 = vmatprep.subr.bf16.mxu0 0
  %760 = vmatpush1.bf16.xpose.msra.mxu0 0
  %761 = vmatprep.subr.bf16.mxu0 0
  %762 = vmatpush1.bf16.xpose.msra.mxu0 0
  %763 = vmatprep.subr.bf16.mxu0 0
  %764 = vmatpush1.bf16.xpose.msra.mxu0 0
  %765 = vmatprep.subr.bf16.mxu0 0
  %766 = vmatpush1.bf16.xpose.msra.mxu0 0
  %767 = vmatprep.subr.bf16.mxu0 0
  %768 = vmatpush1.bf16.xpose.msra.mxu0 0
  %769 = vmatprep.subr.bf16.mxu0 0
  %770 = vmatpush1.bf16.xpose.msra.mxu0 0
  %771 = vmatprep.subr.bf16.mxu0 0
  %772 = vmatpush1.bf16.xpose.msra.mxu0 0
  %773 = vmatprep.subr.bf16.mxu0 0
  %774 = vmatpush1.bf16.xpose.msra.mxu0 0
  %775 = vmatprep.subr.bf16.mxu0 0
  %776 = vmatpush1.bf16.xpose.msra.mxu0 0
  %777 = vmatprep.subr.bf16.mxu0 0
  %778 = vmatpush1.bf16.xpose.msra.mxu0 0
  %779 = vmatprep.subr.bf16.mxu0 0
  %780 = vmatpush1.bf16.xpose.msra.mxu0 0
  %781 = vmatprep.subr.bf16.mxu0 0
  %782 = vmatpush1.bf16.xpose.msra.mxu0 0
  %783 = vmatprep.mubr.bf16.mxu0 0
  %784 = vmatmul.mubr.bf16.gmra.mrb[0].mxu0 %v746
  %v785 = vpop.f32.mrb[0].mxu0
  %v786 = vadd.f32 %v146, %v785
  %v787 = vpop.f32.mrb[0].mxu0
  %v788 = vpop.f32.mrb[0].mxu0
  %v789 = vpop.f32.mrb[0].mxu0
  %790 = vdwg.mxu0
  %v791 = vsel %vm152, %v736, -inf
  %792 = vmax.xlane.f32.xlu0 %v791
  %v793 = vpop.xlane.xlu0 %792
  %v794 = vsel %vm152, %v786, -inf
  %795 = vmax.xlane.f32.xlu0 %v794
  %v796 = vpop.xlane.xlu0 %795
  %v797 = vsub.f32 %v736, %v793
  %v798 = vsub.f32 %v786, %v796
  %v799 = vmul.f32 %v797, 1.442695
  %v800 = vpow.pop %v799
  %v801 = vmul.f32 %v798, 1.442695
  %v802 = vpow.pop %v801
  %v803 = vsel %vm152, %v800, 0.0
  %804 = vadd.xlane.f32.xlu0 %v803
  %v805 = vpop.xlane.xlu0 %804
  %v806 = vsel %vm152, %v802, 0.0
  %807 = vadd.xlane.f32.xlu0 %v806
  %v808 = vpop.xlane.xlu0 %807
  %v809 = vrcp.pop %v805
  %v810 = vrcp.pop %v808
  %v811 = vmul.f32 %v800, %v809
  %v812 = vmul.f32 %v802, %v810
  %v813 = vpack.c.bf16 %v811, %v811
  %v814 = vpack.c.bf16 %v812, %v812
  %815 = vrot.lane.b32.xlu0 %v137, 48
  %v816 = vpop.permute.xlu0 %815
  %v818 = vsel %vm152, %v813, 0
  %v821 = vsel %vm277, %v816, 0
  %823 = vmatprep.subr.bf16.mxu0 0
  %824 = vmatpush1.bf16.msra.mxu0 %v821
  %825 = vmatprep.subr.bf16.mxu0 0
  %826 = vmatpush1.bf16.msra.mxu0 0
  %827 = vmatprep.subr.bf16.mxu0 0
  %828 = vmatpush1.bf16.msra.mxu0 0
  %829 = vmatprep.subr.bf16.mxu0 0
  %830 = vmatpush1.bf16.msra.mxu0 0
  %831 = vmatprep.subr.bf16.mxu0 0
  %832 = vmatpush1.bf16.msra.mxu0 0
  %833 = vmatprep.subr.bf16.mxu0 0
  %834 = vmatpush1.bf16.msra.mxu0 0
  %835 = vmatprep.subr.bf16.mxu0 0
  %836 = vmatpush1.bf16.msra.mxu0 0
  %837 = vmatprep.subr.bf16.mxu0 0
  %838 = vmatpush1.bf16.msra.mxu0 0
  %839 = vmatprep.subr.bf16.mxu0 0
  %840 = vmatpush1.bf16.msra.mxu0 0
  %841 = vmatprep.subr.bf16.mxu0 0
  %842 = vmatpush1.bf16.msra.mxu0 0
  %843 = vmatprep.subr.bf16.mxu0 0
  %844 = vmatpush1.bf16.msra.mxu0 0
  %845 = vmatprep.subr.bf16.mxu0 0
  %846 = vmatpush1.bf16.msra.mxu0 0
  %847 = vmatprep.subr.bf16.mxu0 0
  %848 = vmatpush1.bf16.msra.mxu0 0
  %849 = vmatprep.subr.bf16.mxu0 0
  %850 = vmatpush1.bf16.msra.mxu0 0
  %851 = vmatprep.subr.bf16.mxu0 0
  %852 = vmatpush1.bf16.msra.mxu0 0
  %853 = vmatprep.subr.bf16.mxu0 0
  %854 = vmatpush1.bf16.msra.mxu0 0
  %855 = vmatprep.mubr.bf16.mxu0 0
  %856 = vmatmul.mubr.bf16.gmra.mrb[0].mxu0 %v818
  %v857 = vpop.f32.mrb[0].mxu0
  %v858 = vadd.f32 0.0, %v857
  %v859 = vpop.f32.mrb[0].mxu0
  %v860 = vpop.f32.mrb[0].mxu0
  %v861 = vpop.f32.mrb[0].mxu0
  %862 = vdwg.mxu0
  %863 = vrot.lane.b32.xlu0 %v138, 48
  %v864 = vpop.permute.xlu0 %863
  %v866 = vsel %vm152, %v814, 0
  %v869 = vsel %vm277, %v864, 0
  %871 = vmatprep.subr.bf16.mxu0 0
  %872 = vmatpush1.bf16.msra.mxu0 %v869
  %873 = vmatprep.subr.bf16.mxu0 0
  %874 = vmatpush1.bf16.msra.mxu0 0
  %875 = vmatprep.subr.bf16.mxu0 0
  %876 = vmatpush1.bf16.msra.mxu0 0
  %877 = vmatprep.subr.bf16.mxu0 0
  %878 = vmatpush1.bf16.msra.mxu0 0
  %879 = vmatprep.subr.bf16.mxu0 0
  %880 = vmatpush1.bf16.msra.mxu0 0
  %881 = vmatprep.subr.bf16.mxu0 0
  %882 = vmatpush1.bf16.msra.mxu0 0
  %883 = vmatprep.subr.bf16.mxu0 0
  %884 = vmatpush1.bf16.msra.mxu0 0
  %885 = vmatprep.subr.bf16.mxu0 0
  %886 = vmatpush1.bf16.msra.mxu0 0
  %887 = vmatprep.subr.bf16.mxu0 0
  %888 = vmatpush1.bf16.msra.mxu0 0
  %889 = vmatprep.subr.bf16.mxu0 0
  %890 = vmatpush1.bf16.msra.mxu0 0
  %891 = vmatprep.subr.bf16.mxu0 0
  %892 = vmatpush1.bf16.msra.mxu0 0
  %893 = vmatprep.subr.bf16.mxu0 0
  %894 = vmatpush1.bf16.msra.mxu0 0
  %895 = vmatprep.subr.bf16.mxu0 0
  %896 = vmatpush1.bf16.msra.mxu0 0
  %897 = vmatprep.subr.bf16.mxu0 0
  %898 = vmatpush1.bf16.msra.mxu0 0
  %899 = vmatprep.subr.bf16.mxu0 0
  %900 = vmatpush1.bf16.msra.mxu0 0
  %901 = vmatprep.subr.bf16.mxu0 0
  %902 = vmatpush1.bf16.msra.mxu0 0
  %903 = vmatprep.mubr.bf16.mxu0 0
  %904 = vmatmul.mubr.bf16.gmra.mrb[0].mxu0 %v866
  %v905 = vpop.f32.mrb[0].mxu0
  %v906 = vadd.f32 0.0, %v905
  %v907 = vpop.f32.mrb[0].mxu0
  %v908 = vpop.f32.mrb[0].mxu0
  %v909 = vpop.f32.mrb[0].mxu0
  %910 = vdwg.mxu0
  %v911 = vpack.c.bf16 %v906, %v858
  %v912 = vld [vmem:[%s4 + $0x10] sm:$0xff]
  %v913 = vpack.c.bf16 %v912, %v912
  %v915 = vsel %vm152, %v911, 0
  %v918 = vsel %vm277, %v913, 0
  %920 = vmatprep.subr.bf16.mxu0 0
  %921 = vmatpush1.bf16.msra.mxu0 %v918
  %922 = vmatprep.subr.bf16.mxu0 0
  %923 = vmatpush1.bf16.msra.mxu0 0
  %924 = vmatprep.subr.bf16.mxu0 0
  %925 = vmatpush1.bf16.msra.mxu0 0
  %926 = vmatprep.subr.bf16.mxu0 0
  %927 = vmatpush1.bf16.msra.mxu0 0
  %928 = vmatprep.subr.bf16.mxu0 0
  %929 = vmatpush1.bf16.msra.mxu0 0
  %930 = vmatprep.subr.bf16.mxu0 0
  %931 = vmatpush1.bf16.msra.mxu0 0
  %932 = vmatprep.subr.bf16.mxu0 0
  %933 = vmatpush1.bf16.msra.mxu0 0
  %934 = vmatprep.subr.bf16.mxu0 0
  %935 = vmatpush1.bf16.msra.mxu0 0
  %936 = vmatprep.subr.bf16.mxu0 0
  %937 = vmatpush1.bf16.msra.mxu0 0
  %938 = vmatprep.subr.bf16.mxu0 0
  %939 = vmatpush1.bf16.msra.mxu0 0
  %940 = vmatprep.subr.bf16.mxu0 0
  %941 = vmatpush1.bf16.msra.mxu0 0
  %942 = vmatprep.subr.bf16.mxu0 0
  %943 = vmatpush1.bf16.msra.mxu0 0
  %944 = vmatprep.subr.bf16.mxu0 0
  %945 = vmatpush1.bf16.msra.mxu0 0
  %946 = vmatprep.subr.bf16.mxu0 0
  %947 = vmatpush1.bf16.msra.mxu0 0
  %948 = vmatprep.subr.bf16.mxu0 0
  %949 = vmatpush1.bf16.msra.mxu0 0
  %950 = vmatprep.subr.bf16.mxu0 0
  %951 = vmatpush1.bf16.msra.mxu0 0
  %952 = vmatprep.mubr.bf16.mxu0 0
  %953 = vmatmul.mubr.bf16.gmra.mrb[0].mxu0 %v915
  %v954 = vpop.f32.mrb[0].mxu0
  %v955 = vadd.f32 0.0, %v954
  %v956 = vpop.f32.mrb[0].mxu0
  %v957 = vpop.f32.mrb[0].mxu0
  %v958 = vadd.f32 0.0, %v957
  %v959 = vpop.f32.mrb[0].mxu0
  %960 = vdwg.mxu0
  %v961 = vadd.f32 %v685, %v955
  %v962 = vadd.f32 %v688, %v958
  %963 = vrot.lane.b32.xlu0 %v135, 104
  %v964 = vpop.permute.xlu0 %963
  %965 = vrot.lane.b32.xlu0 %v137, 72
  %v966 = vpop.permute.xlu0 %965
  %v968 = vsel %vm152, %v964, 0
  %v971 = vsel %vm152, %v966, 0
  %973 = vmatprep.subr.bf16.mxu0 0
  %974 = vmatpush1.bf16.xpose.msra.mxu0 %v971
  %975 = vmatprep.subr.bf16.mxu0 0
  %976 = vmatpush1.bf16.xpose.msra.mxu0 0
  %977 = vmatprep.subr.bf16.mxu0 0
  %978 = vmatpush1.bf16.xpose.msra.mxu0 0
  %979 = vmatprep.subr.bf16.mxu0 0
  %980 = vmatpush1.bf16.xpose.msra.mxu0 0
  %981 = vmatprep.subr.bf16.mxu0 0
  %982 = vmatpush1.bf16.xpose.msra.mxu0 0
  %983 = vmatprep.subr.bf16.mxu0 0
  %984 = vmatpush1.bf16.xpose.msra.mxu0 0
  %985 = vmatprep.subr.bf16.mxu0 0
  %986 = vmatpush1.bf16.xpose.msra.mxu0 0
  %987 = vmatprep.subr.bf16.mxu0 0
  %988 = vmatpush1.bf16.xpose.msra.mxu0 0
  %989 = vmatprep.subr.bf16.mxu0 0
  %990 = vmatpush1.bf16.xpose.msra.mxu0 0
  %991 = vmatprep.subr.bf16.mxu0 0
  %992 = vmatpush1.bf16.xpose.msra.mxu0 0
  %993 = vmatprep.subr.bf16.mxu0 0
  %994 = vmatpush1.bf16.xpose.msra.mxu0 0
  %995 = vmatprep.subr.bf16.mxu0 0
  %996 = vmatpush1.bf16.xpose.msra.mxu0 0
  %997 = vmatprep.subr.bf16.mxu0 0
  %998 = vmatpush1.bf16.xpose.msra.mxu0 0
  %999 = vmatprep.subr.bf16.mxu0 0
  %1000 = vmatpush1.bf16.xpose.msra.mxu0 0
  %1001 = vmatprep.subr.bf16.mxu0 0
  %1002 = vmatpush1.bf16.xpose.msra.mxu0 0
  %1003 = vmatprep.subr.bf16.mxu0 0
  %1004 = vmatpush1.bf16.xpose.msra.mxu0 0
  %1005 = vmatprep.mubr.bf16.mxu0 0
  %1006 = vmatmul.mubr.bf16.gmra.mrb[0].mxu0 %v968
  %v1007 = vpop.f32.mrb[0].mxu0
  %v1008 = vadd.f32 %v142, %v1007
  %v1009 = vpop.f32.mrb[0].mxu0
  %v1010 = vpop.f32.mrb[0].mxu0
  %v1011 = vpop.f32.mrb[0].mxu0
  %1012 = vdwg.mxu0
  %1013 = vrot.lane.b32.xlu0 %v136, 104
  %v1014 = vpop.permute.xlu0 %1013
  %1015 = vrot.lane.b32.xlu0 %v138, 72
  %v1016 = vpop.permute.xlu0 %1015
  %v1018 = vsel %vm152, %v1014, 0
  %v1021 = vsel %vm152, %v1016, 0
  %1023 = vmatprep.subr.bf16.mxu0 0
  %1024 = vmatpush1.bf16.xpose.msra.mxu0 %v1021
  %1025 = vmatprep.subr.bf16.mxu0 0
  %1026 = vmatpush1.bf16.xpose.msra.mxu0 0
  %1027 = vmatprep.subr.bf16.mxu0 0
  %1028 = vmatpush1.bf16.xpose.msra.mxu0 0
  %1029 = vmatprep.subr.bf16.mxu0 0
  %1030 = vmatpush1.bf16.xpose.msra.mxu0 0
  %1031 = vmatprep.subr.bf16.mxu0 0
  %1032 = vmatpush1.bf16.xpose.msra.mxu0 0
  %1033 = vmatprep.subr.bf16.mxu0 0
  %1034 = vmatpush1.bf16.xpose.msra.mxu0 0
  %1035 = vmatprep.subr.bf16.mxu0 0
  %1036 = vmatpush1.bf16.xpose.msra.mxu0 0
  %1037 = vmatprep.subr.bf16.mxu0 0
  %1038 = vmatpush1.bf16.xpose.msra.mxu0 0
  %1039 = vmatprep.subr.bf16.mxu0 0
  %1040 = vmatpush1.bf16.xpose.msra.mxu0 0
  %1041 = vmatprep.subr.bf16.mxu0 0
  %1042 = vmatpush1.bf16.xpose.msra.mxu0 0
  %1043 = vmatprep.subr.bf16.mxu0 0
  %1044 = vmatpush1.bf16.xpose.msra.mxu0 0
  %1045 = vmatprep.subr.bf16.mxu0 0
  %1046 = vmatpush1.bf16.xpose.msra.mxu0 0
  %1047 = vmatprep.subr.bf16.mxu0 0
  %1048 = vmatpush1.bf16.xpose.msra.mxu0 0
  %1049 = vmatprep.subr.bf16.mxu0 0
  %1050 = vmatpush1.bf16.xpose.msra.mxu0 0
  %1051 = vmatprep.subr.bf16.mxu0 0
  %1052 = vmatpush1.bf16.xpose.msra.mxu0 0
  %1053 = vmatprep.subr.bf16.mxu0 0
  %1054 = vmatpush1.bf16.xpose.msra.mxu0 0
  %1055 = vmatprep.mubr.bf16.mxu0 0
  %1056 = vmatmul.mubr.bf16.gmra.mrb[0].mxu0 %v1018
  %v1057 = vpop.f32.mrb[0].mxu0
  %v1058 = vadd.f32 %v146, %v1057
  %v1059 = vpop.f32.mrb[0].mxu0
  %v1060 = vpop.f32.mrb[0].mxu0
  %v1061 = vpop.f32.mrb[0].mxu0
  %1062 = vdwg.mxu0
  %v1063 = vsel %vm152, %v1008, -inf
  %1064 = vmax.xlane.f32.xlu0 %v1063
  %v1065 = vpop.xlane.xlu0 %1064
  %v1066 = vsel %vm152, %v1058, -inf
  %1067 = vmax.xlane.f32.xlu0 %v1066
  %v1068 = vpop.xlane.xlu0 %1067
  %v1069 = vsub.f32 %v1008, %v1065
  %v1070 = vsub.f32 %v1058, %v1068
  %v1071 = vmul.f32 %v1069, 1.442695
  %v1072 = vpow.pop %v1071
  %v1073 = vmul.f32 %v1070, 1.442695
  %v1074 = vpow.pop %v1073
  %v1075 = vsel %vm152, %v1072, 0.0
  %1076 = vadd.xlane.f32.xlu0 %v1075
  %v1077 = vpop.xlane.xlu0 %1076
  %v1078 = vsel %vm152, %v1074, 0.0
  %1079 = vadd.xlane.f32.xlu0 %v1078
  %v1080 = vpop.xlane.xlu0 %1079
  %v1081 = vrcp.pop %v1077
  %v1082 = vrcp.pop %v1080
  %v1083 = vmul.f32 %v1072, %v1081
  %v1084 = vmul.f32 %v1074, %v1082
  %v1085 = vpack.c.bf16 %v1083, %v1083
  %v1086 = vpack.c.bf16 %v1084, %v1084
  %1087 = vrot.lane.b32.xlu0 %v137, 40
  %v1088 = vpop.permute.xlu0 %1087
  %v1090 = vsel %vm152, %v1085, 0
  %v1093 = vsel %vm277, %v1088, 0
  %1095 = vmatprep.subr.bf16.mxu0 0
  %1096 = vmatpush1.bf16.msra.mxu0 %v1093
  %1097 = vmatprep.subr.bf16.mxu0 0
  %1098 = vmatpush1.bf16.msra.mxu0 0
  %1099 = vmatprep.subr.bf16.mxu0 0
  %1100 = vmatpush1.bf16.msra.mxu0 0
  %1101 = vmatprep.subr.bf16.mxu0 0
  %1102 = vmatpush1.bf16.msra.mxu0 0
  %1103 = vmatprep.subr.bf16.mxu0 0
  %1104 = vmatpush1.bf16.msra.mxu0 0
  %1105 = vmatprep.subr.bf16.mxu0 0
  %1106 = vmatpush1.bf16.msra.mxu0 0
  %1107 = vmatprep.subr.bf16.mxu0 0
  %1108 = vmatpush1.bf16.msra.mxu0 0
  %1109 = vmatprep.subr.bf16.mxu0 0
  %1110 = vmatpush1.bf16.msra.mxu0 0
  %1111 = vmatprep.subr.bf16.mxu0 0
  %1112 = vmatpush1.bf16.msra.mxu0 0
  %1113 = vmatprep.subr.bf16.mxu0 0
  %1114 = vmatpush1.bf16.msra.mxu0 0
  %1115 = vmatprep.subr.bf16.mxu0 0
  %1116 = vmatpush1.bf16.msra.mxu0 0
  %1117 = vmatprep.subr.bf16.mxu0 0
  %1118 = vmatpush1.bf16.msra.mxu0 0
  %1119 = vmatprep.subr.bf16.mxu0 0
  %1120 = vmatpush1.bf16.msra.mxu0 0
  %1121 = vmatprep.subr.bf16.mxu0 0
  %1122 = vmatpush1.bf16.msra.mxu0 0
  %1123 = vmatprep.subr.bf16.mxu0 0
  %1124 = vmatpush1.bf16.msra.mxu0 0
  %1125 = vmatprep.subr.bf16.mxu0 0
  %1126 = vmatpush1.bf16.msra.mxu0 0
  %1127 = vmatprep.mubr.bf16.mxu0 0
  %1128 = vmatmul.mubr.bf16.gmra.mrb[0].mxu0 %v1090
  %v1129 = vpop.f32.mrb[0].mxu0
  %v1130 = vadd.f32 0.0, %v1129
  %v1131 = vpop.f32.mrb[0].mxu0
  %v1132 = vpop.f32.mrb[0].mxu0
  %v1133 = vpop.f32.mrb[0].mxu0
  %1134 = vdwg.mxu0
  %1135 = vrot.lane.b32.xlu0 %v138, 40
  %v1136 = vpop.permute.xlu0 %1135
  %v1138 = vsel %vm152, %v1086, 0
  %v1141 = vsel %vm277, %v1136, 0
  %1143 = vmatprep.subr.bf16.mxu0 0
  %1144 = vmatpush1.bf16.msra.mxu0 %v1141
  %1145 = vmatprep.subr.bf16.mxu0 0
  %1146 = vmatpush1.bf16.msra.mxu0 0
  %1147 = vmatprep.subr.bf16.mxu0 0
  %1148 = vmatpush1.bf16.msra.mxu0 0
  %1149 = vmatprep.subr.bf16.mxu0 0
  %1150 = vmatpush1.bf16.msra.mxu0 0
  %1151 = vmatprep.subr.bf16.mxu0 0
  %1152 = vmatpush1.bf16.msra.mxu0 0
  %1153 = vmatprep.subr.bf16.mxu0 0
  %1154 = vmatpush1.bf16.msra.mxu0 0
  %1155 = vmatprep.subr.bf16.mxu0 0
  %1156 = vmatpush1.bf16.msra.mxu0 0
  %1157 = vmatprep.subr.bf16.mxu0 0
  %1158 = vmatpush1.bf16.msra.mxu0 0
  %1159 = vmatprep.subr.bf16.mxu0 0
  %1160 = vmatpush1.bf16.msra.mxu0 0
  %1161 = vmatprep.subr.bf16.mxu0 0
  %1162 = vmatpush1.bf16.msra.mxu0 0
  %1163 = vmatprep.subr.bf16.mxu0 0
  %1164 = vmatpush1.bf16.msra.mxu0 0
  %1165 = vmatprep.subr.bf16.mxu0 0
  %1166 = vmatpush1.bf16.msra.mxu0 0
  %1167 = vmatprep.subr.bf16.mxu0 0
  %1168 = vmatpush1.bf16.msra.mxu0 0
  %1169 = vmatprep.subr.bf16.mxu0 0
  %1170 = vmatpush1.bf16.msra.mxu0 0
  %1171 = vmatprep.subr.bf16.mxu0 0
  %1172 = vmatpush1.bf16.msra.mxu0 0
  %1173 = vmatprep.subr.bf16.mxu0 0
  %1174 = vmatpush1.bf16.msra.mxu0 0
  %1175 = vmatprep.mubr.bf16.mxu0 0
  %1176 = vmatmul.mubr.bf16.gmra.mrb[0].mxu0 %v1138
  %v1177 = vpop.f32.mrb[0].mxu0
  %v1178 = vadd.f32 0.0, %v1177
  %v1179 = vpop.f32.mrb[0].mxu0
  %v1180 = vpop.f32.mrb[0].mxu0
  %v1181 = vpop.f32.mrb[0].mxu0
  %1182 = vdwg.mxu0
  %v1183 = vpack.c.bf16 %v1178, %v1130
  %v1184 = vld [vmem:[%s4 + $0x18] sm:$0xff]
  %v1185 = vpack.c.bf16 %v1184, %v1184
  %v1187 = vsel %vm152, %v1183, 0
  %v1190 = vsel %vm277, %v1185, 0
  %1192 = vmatprep.subr.bf16.mxu0 0
  %1193 = vmatpush1.bf16.msra.mxu0 %v1190
  %1194 = vmatprep.subr.bf16.mxu0 0
  %1195 = vmatpush1.bf16.msra.mxu0 0
  %1196 = vmatprep.subr.bf16.mxu0 0
  %1197 = vmatpush1.bf16.msra.mxu0 0
  %1198 = vmatprep.subr.bf16.mxu0 0
  %1199 = vmatpush1.bf16.msra.mxu0 0
  %1200 = vmatprep.subr.bf16.mxu0 0
  %1201 = vmatpush1.bf16.msra.mxu0 0
  %1202 = vmatprep.subr.bf16.mxu0 0
  %1203 = vmatpush1.bf16.msra.mxu0 0
  %1204 = vmatprep.subr.bf16.mxu0 0
  %1205 = vmatpush1.bf16.msra.mxu0 0
  %1206 = vmatprep.subr.bf16.mxu0 0
  %1207 = vmatpush1.bf16.msra.mxu0 0
  %1208 = vmatprep.subr.bf16.mxu0 0
  %1209 = vmatpush1.bf16.msra.mxu0 0
  %1210 = vmatprep.subr.bf16.mxu0 0
  %1211 = vmatpush1.bf16.msra.mxu0 0
  %1212 = vmatprep.subr.bf16.mxu0 0
  %1213 = vmatpush1.bf16.msra.mxu0 0
  %1214 = vmatprep.subr.bf16.mxu0 0
  %1215 = vmatpush1.bf16.msra.mxu0 0
  %1216 = vmatprep.subr.bf16.mxu0 0
  %1217 = vmatpush1.bf16.msra.mxu0 0
  %1218 = vmatprep.subr.bf16.mxu0 0
  %1219 = vmatpush1.bf16.msra.mxu0 0
  %1220 = vmatprep.subr.bf16.mxu0 0
  %1221 = vmatpush1.bf16.msra.mxu0 0
  %1222 = vmatprep.subr.bf16.mxu0 0
  %1223 = vmatpush1.bf16.msra.mxu0 0
  %1224 = vmatprep.mubr.bf16.mxu0 0
  %1225 = vmatmul.mubr.bf16.gmra.mrb[0].mxu0 %v1187
  %v1226 = vpop.f32.mrb[0].mxu0
  %v1227 = vadd.f32 0.0, %v1226
  %v1228 = vpop.f32.mrb[0].mxu0
  %v1229 = vpop.f32.mrb[0].mxu0
  %v1230 = vadd.f32 0.0, %v1229
  %v1231 = vpop.f32.mrb[0].mxu0
  %1232 = vdwg.mxu0
  %v1233 = vadd.f32 %v961, %v1227
  %v1234 = vadd.f32 %v962, %v1230
  %v1235 = vld [vmem:[%s5] sm:$0x1]
  %v1237 = vlaneseq
  %v1238 = vshrl.u32 %v1237, 7
  %v1239 = vsub.s32 0, %v1238
  %v1240 = vrot.slane %v1235, %v1239
  %v1242 = vadd.f32 %v1233, %v1240
  %v1243 = vadd.f32 %v1234, %v1240
  %v1244 = vadd.f32 %v48, %v1242
  %v1245 = vadd.f32 %v49, %v1243
  %v1246 = vld [vmem:[%s6] sm:$0x1]
  %v1247 = vld [vmem:[%s7] sm:$0x1]
  %v1248 = vsel %vm88, %v1244, 0.0
  %1249 = vadd.xlane.f32.xlu0 %v1248
  %v1250 = vpop.xlane.xlu0 %1249
  %v1251 = vsel %vm88, %v1245, 0.0
  %1252 = vadd.xlane.f32.xlu0 %v1251
  %v1253 = vpop.xlane.xlu0 %1252
  %v1254 = vrcp.pop 32.0
  %v1255 = vmul.f32 %v1250, %v1254
  %v1256 = vmul.f32 %v1253, %v1254
  %v1257 = vsub.f32 %v1244, %v1255
  %v1258 = vsub.f32 %v1245, %v1256
  %v1259 = vmul.f32 %v1257, %v1257
  %v1260 = vmul.f32 %v1258, %v1258
  %v1261 = vsel %vm88, %v1259, 0.0
  %1262 = vadd.xlane.f32.xlu0 %v1261
  %v1263 = vpop.xlane.xlu0 %1262
  %v1264 = vsel %vm88, %v1260, 0.0
  %1265 = vadd.xlane.f32.xlu0 %v1264
  %v1266 = vpop.xlane.xlu0 %1265
  %v1267 = vmul.f32 %v1263, %v1254
  %v1268 = vmul.f32 %v1266, %v1254
  %v1269 = vadd.f32 %v1267, 1e-05
  %v1270 = vadd.f32 %v1268, 1e-05
  %v1271 = vrsqrt.pop %v1269
  %v1272 = vrsqrt.pop %v1270
  %v1273 = vmul.f32 %v1257, %v1271
  %v1274 = vmul.f32 %v1258, %v1272
  %v1276 = vlaneseq
  %v1277 = vshrl.u32 %v1276, 7
  %v1278 = vsub.s32 0, %v1277
  %v1279 = vrot.slane %v1246, %v1278
  %v1281 = vmul.f32 %v1273, %v1279
  %v1282 = vmul.f32 %v1274, %v1279
  %v1284 = vlaneseq
  %v1285 = vshrl.u32 %v1284, 7
  %v1286 = vsub.s32 0, %v1285
  %v1287 = vrot.slane %v1247, %v1286
  %v1289 = vadd.f32 %v1281, %v1287
  %v1290 = vadd.f32 %v1282, %v1287
  %v1291 = vpack.c.bf16 %v1290, %v1289
  %v1292 = vld [vmem:[%s8] sm:$0xff]
  %v1293 = vld [vmem:[%s8 + $0x8] sm:$0xff]
  %v1294 = vld [vmem:[%s8 + $0x10] sm:$0xff]
  %v1295 = vld [vmem:[%s8 + $0x18] sm:$0xff]
  %v1296 = vpack.c.bf16 %v1293, %v1292
  %v1297 = vpack.c.bf16 %v1295, %v1294
  %v1298 = vld [vmem:[%s9] sm:$0x1]
  %v1300 = vlaneseq
  %v1301 = vshrl.u32 %v1300, 7
  %v1302 = vsub.s32 0, %v1301
  %v1303 = vrot.slane %v1298, %v1302
  %v1306 = vsel %vm88, %v1291, 0
  %1308 = vmatprep.subr.bf16.mxu0 0
  %1309 = vmatpush1.bf16.msra.mxu0 %v1296
  %1310 = vmatprep.subr.bf16.mxu0 0
  %1311 = vmatpush1.bf16.msra.mxu0 %v1297
  %1312 = vmatprep.subr.bf16.mxu0 0
  %1313 = vmatpush1.bf16.msra.mxu0 0
  %1314 = vmatprep.subr.bf16.mxu0 0
  %1315 = vmatpush1.bf16.msra.mxu0 0
  %1316 = vmatprep.subr.bf16.mxu0 0
  %1317 = vmatpush1.bf16.msra.mxu0 0
  %1318 = vmatprep.subr.bf16.mxu0 0
  %1319 = vmatpush1.bf16.msra.mxu0 0
  %1320 = vmatprep.subr.bf16.mxu0 0
  %1321 = vmatpush1.bf16.msra.mxu0 0
  %1322 = vmatprep.subr.bf16.mxu0 0
  %1323 = vmatpush1.bf16.msra.mxu0 0
  %1324 = vmatprep.subr.bf16.mxu0 0
  %1325 = vmatpush1.bf16.msra.mxu0 0
  %1326 = vmatprep.subr.bf16.mxu0 0
  %1327 = vmatpush1.bf16.msra.mxu0 0
  %1328 = vmatprep.subr.bf16.mxu0 0
  %1329 = vmatpush1.bf16.msra.mxu0 0
  %1330 = vmatprep.subr.bf16.mxu0 0
  %1331 = vmatpush1.bf16.msra.mxu0 0
  %1332 = vmatprep.subr.bf16.mxu0 0
  %1333 = vmatpush1.bf16.msra.mxu0 0
  %1334 = vmatprep.subr.bf16.mxu0 0
  %1335 = vmatpush1.bf16.msra.mxu0 0
  %1336 = vmatprep.subr.bf16.mxu0 0
  %1337 = vmatpush1.bf16.msra.mxu0 0
  %1338 = vmatprep.subr.bf16.mxu0 0
  %1339 = vmatpush1.bf16.msra.mxu0 0
  %1340 = vmatprep.mubr.bf16.mxu0 0
  %1341 = vmatmul.mubr.bf16.gmra.mrb[0].mxu0 %v1306
  %v1342 = vpop.f32.mrb[0].mxu0
  %v1343 = vadd.f32 %v1303, %v1342
  %v1344 = vpop.f32.mrb[0].mxu0
  %v1345 = vpop.f32.mrb[0].mxu0
  %v1346 = vadd.f32 %v1303, %v1345
  %v1347 = vpop.f32.mrb[0].mxu0
  %1348 = vdwg.mxu0
  %v1349 = vmax.f32 %v1343, 0.0
  %v1350 = vmax.f32 %v1346, 0.0
  %v1351 = vpack.c.bf16 %v1350, %v1349
  %v1352 = vld [vmem:[%s10] sm:$0xff]
  %v1353 = vld [vmem:[%s10 + $0x8] sm:$0xff]
  %v1354 = vld [vmem:[%s10 + $0x10] sm:$0xff]
  %v1355 = vld [vmem:[%s10 + $0x18] sm:$0xff]
  %v1356 = vld [vmem:[%s10 + $0x20] sm:$0xff]
  %v1357 = vld [vmem:[%s10 + $0x28] sm:$0xff]
  %v1358 = vld [vmem:[%s10 + $0x30] sm:$0xff]
  %v1359 = vld [vmem:[%s10 + $0x38] sm:$0xff]
  %v1360 = vpack.c.bf16 %v1353, %v1352
  %v1361 = vpack.c.bf16 %v1355, %v1354
  %v1362 = vpack.c.bf16 %v1357, %v1356
  %v1363 = vpack.c.bf16 %v1359, %v1358
  %v1364 = vld [vmem:[%s11] sm:$0x1]
  %v1366 = vlaneseq
  %v1367 = vshrl.u32 %v1366, 7
  %v1368 = vsub.s32 0, %v1367
  %v1369 = vrot.slane %v1364, %v1368
  %vm1371 = vcmask 523264
  %v1373 = vsel %vm1371, %v1351, 0
  %1375 = vmatprep.subr.bf16.mxu0 0
  %1376 = vmatpush1.bf16.msra.mxu0 %v1360
  %1377 = vmatprep.subr.bf16.mxu0 0
  %1378 = vmatpush1.bf16.msra.mxu0 %v1361
  %1379 = vmatprep.subr.bf16.mxu0 0
  %1380 = vmatpush1.bf16.msra.mxu0 %v1362
  %1381 = vmatprep.subr.bf16.mxu0 0
  %1382 = vmatpush1.bf16.msra.mxu0 %v1363
  %1383 = vmatprep.subr.bf16.mxu0 0
  %1384 = vmatpush1.bf16.msra.mxu0 0
  %1385 = vmatprep.subr.bf16.mxu0 0
  %1386 = vmatpush1.bf16.msra.mxu0 0
  %1387 = vmatprep.subr.bf16.mxu0 0
  %1388 = vmatpush1.bf16.msra.mxu0 0
  %1389 = vmatprep.subr.bf16.mxu0 0
  %1390 = vmatpush1.bf16.msra.mxu0 0
  %1391 = vmatprep.subr.bf16.mxu0 0
  %1392 = vmatpush1.bf16.msra.mxu0 0
  %1393 = vmatprep.subr.bf16.mxu0 0
  %1394 = vmatpush1.bf16.msra.mxu0 0
  %1395 = vmatprep.subr.bf16.mxu0 0
  %1396 = vmatpush1.bf16.msra.mxu0 0
  %1397 = vmatprep.subr.bf16.mxu0 0
  %1398 = vmatpush1.bf16.msra.mxu0 0
  %1399 = vmatprep.subr.bf16.mxu0 0
  %1400 = vmatpush1.bf16.msra.mxu0 0
  %1401 = vmatprep.subr.bf16.mxu0 0
  %1402 = vmatpush1.bf16.msra.mxu0 0
  %1403 = vmatprep.subr.bf16.mxu0 0
  %1404 = vmatpush1.bf16.msra.mxu0 0
  %1405 = vmatprep.subr.bf16.mxu0 0
  %1406 = vmatpush1.bf16.msra.mxu0 0
  %1407 = vmatprep.mubr.bf16.mxu0 0
  %1408 = vmatmul.mubr.bf16.gmra.mrb[0].mxu0 %v1373
  %v1409 = vpop.f32.mrb[0].mxu0
  %v1410 = vadd.f32 %v1369, %v1409
  %v1411 = vpop.f32.mrb[0].mxu0
  %v1412 = vpop.f32.mrb[0].mxu0
  %v1413 = vadd.f32 %v1369, %v1412
  %v1414 = vpop.f32.mrb[0].mxu0
  %1415 = vdwg.mxu0
  %v1416 = vadd.f32 %v1289, %v1410
  %v1417 = vadd.f32 %v1290, %v1413
  %v1418 = vld [vmem:[%s12] sm:$0x1]
  %v1419 = vld [vmem:[%s13] sm:$0x1]
  %v1420 = vsel %vm88, %v1416, 0.0
  %1421 = vadd.xlane.f32.xlu0 %v1420
  %v1422 = vpop.xlane.xlu0 %1421
  %v1423 = vsel %vm88, %v1417, 0.0
  %1424 = vadd.xlane.f32.xlu0 %v1423
  %v1425 = vpop.xlane.xlu0 %1424
  %v1426 = vmul.f32 %v1422, %v1254
  %v1427 = vmul.f32 %v1425, %v1254
  %v1428 = vsub.f32 %v1416, %v1426
  %v1429 = vsub.f32 %v1417, %v1427
  %v1430 = vmul.f32 %v1428, %v1428
  %v1431 = vmul.f32 %v1429, %v1429
  %v1432 = vsel %vm88, %v1430, 0.0
  %1433 = vadd.xlane.f32.xlu0 %v1432
  %v1434 = vpop.xlane.xlu0 %1433
  %v1435 = vsel %vm88, %v1431, 0.0
  %1436 = vadd.xlane.f32.xlu0 %v1435
  %v1437 = vpop.xlane.xlu0 %1436
  %v1438 = vmul.f32 %v1434, %v1254
  %v1439 = vmul.f32 %v1437, %v1254
  %v1440 = vadd.f32 %v1438, 1e-05
  %v1441 = vadd.f32 %v1439, 1e-05
  %v1442 = vrsqrt.pop %v1440
  %v1443 = vrsqrt.pop %v1441
  %v1444 = vmul.f32 %v1428, %v1442
  %v1445 = vmul.f32 %v1429, %v1443
  %v1447 = vlaneseq
  %v1448 = vshrl.u32 %v1447, 7
  %v1449 = vsub.s32 0, %v1448
  %v1450 = vrot.slane %v1418, %v1449
  %v1452 = vmul.f32 %v1444, %v1450
  %v1453 = vmul.f32 %v1445, %v1450
  %v1455 = vlaneseq
  %v1456 = vshrl.u32 %v1455, 7
  %v1457 = vsub.s32 0, %v1456
  %v1458 = vrot.slane %v1419, %v1457
  %v1460 = vadd.f32 %v1452, %v1458
  %v1461 = vadd.f32 %v1453, %v1458
  %v1462 = vsel %vm88, %v1460, 0.0
  %v1463 = vsel %vm88, %v1461, 0.0
  %1464 = vst [vmem:[%s14] sm:$0xff] %v1462
  %1465 = vst [vmem:[%s14 + $0x8] sm:$0xff] %v1463
  // Predicated region
  $region58: #{transformer_forward.5} parent=0 // pred_check
    _
  $region59: #{transformer_forward.5} parent=0 // pred_check_branch
    %1467 = sbr.rel (0) target = $region61
  $region60: #{transformer_forward.5} parent=0 // pred_region
    _
  $region61: #{transformer_forward.5} parent=0 // pred_fallthru
    _
  // Predicated region
  $region62: #{transformer_forward.5} parent=0 // pred_check
    _
  $region63: #{transformer_forward.5} parent=0 // pred_check_branch
    %1469 = sbr.rel (0) target = $region65
  $region64: #{transformer_forward.5} parent=0 // pred_region
    _
  $region65: #{transformer_forward.5} parent=0 // pred_fallthru
    _

// kernel: transformer_forward.6
$region0: #{transformer_forward.6}
  #allocation0 [shape = 'u32[]', space=smem, size = 0x4, offset = 0x4, fixed_abs, tag = 'smem constant byte address 0x4 - core index']
  #allocation1 [shape = 'u32[144,128]{1,0:T(1,128)}', space=vmem, size = 0x12000, scoped, tag = 'internal scratch']
  %s0 = inlined_call_operand.vmem [shape: f32[16,128], index: 0, kind: input, shape index: {}]
  %s1 = inlined_call_operand.vmem [shape: f32[2,8], index: 1, kind: input, shape index: {}]
  %s2 = inlined_call_operand.vmem [shape: f32[32,96], index: 2, kind: input, shape index: {}]
  %s3 = inlined_call_operand.vmem [shape: f32[1,96], index: 3, kind: input, shape index: {}]
  %s4 = inlined_call_operand.vmem [shape: f32[32,32], index: 4, kind: input, shape index: {}]
  %s5 = inlined_call_operand.vmem [shape: f32[1,32], index: 5, kind: input, shape index: {}]
  %s6 = inlined_call_operand.vmem [shape: f32[1,32], index: 6, kind: input, shape index: {}]
  %s7 = inlined_call_operand.vmem [shape: f32[1,32], index: 7, kind: input, shape index: {}]
  %s8 = inlined_call_operand.vmem [shape: f32[32,64], index: 8, kind: input, shape index: {}]
  %s9 = inlined_call_operand.vmem [shape: f32[1,64], index: 9, kind: input, shape index: {}]
  %s10 = inlined_call_operand.vmem [shape: f32[64,32], index: 10, kind: input, shape index: {}]
  %s11 = inlined_call_operand.vmem [shape: f32[1,32], index: 11, kind: input, shape index: {}]
  %s12 = inlined_call_operand.vmem [shape: f32[1,32], index: 12, kind: input, shape index: {}]
  %s13 = inlined_call_operand.vmem [shape: f32[1,32], index: 13, kind: input, shape index: {}]
  %s14 = inlined_call_operand.vmem [shape: f32[1,32], index: 14, kind: input, shape index: {}]
  %s15 = inlined_call_operand.vmem [shape: f32[1,32], index: 15, kind: input, shape index: {}]
  %s16 = inlined_call_operand.vmem [shape: f32[16,128], index: 16, kind: output, shape index: {}]
  %s17 = sld [smem:[#allocation0]]
  $region74: #{transformer_forward.6} parent=0
    _
  %s19 = ssub.s32 1, %s17
  %s20 = scalar_select 0, %s19, %s17
  // Predicated region
  $region2: #{transformer_forward.6} parent=0 // pred_check
    _
  $region3: #{transformer_forward.6} parent=0 // pred_check_branch
    %22 = sbr.rel (0) target = $region5
  $region4: #{transformer_forward.6} parent=0 // pred_region
    _
  $region5: #{transformer_forward.6} parent=0 // pred_fallthru
    _
  // Predicated region
  $region6: #{transformer_forward.6} parent=0 // pred_check
    _
  $region7: #{transformer_forward.6} parent=0 // pred_check_branch
    %24 = sbr.rel (0) target = $region9
  $region8: #{transformer_forward.6} parent=0 // pred_region
    _
  $region9: #{transformer_forward.6} parent=0 // pred_fallthru
    _
  // Predicated region
  $region10: #{transformer_forward.6} parent=0 // pred_check
    _
  $region11: #{transformer_forward.6} parent=0 // pred_check_branch
    %26 = sbr.rel (0) target = $region13
  $region12: #{transformer_forward.6} parent=0 // pred_region
    _
  $region13: #{transformer_forward.6} parent=0 // pred_fallthru
    _
  // Predicated region
  $region14: #{transformer_forward.6} parent=0 // pred_check
    _
  $region15: #{transformer_forward.6} parent=0 // pred_check_branch
    %28 = sbr.rel (0) target = $region17
  $region16: #{transformer_forward.6} parent=0 // pred_region
    _
  $region17: #{transformer_forward.6} parent=0 // pred_fallthru
    _
  // Predicated region
  $region18: #{transformer_forward.6} parent=0 // pred_check
    _
  $region19: #{transformer_forward.6} parent=0 // pred_check_branch
    %30 = sbr.rel (0) target = $region21
  $region20: #{transformer_forward.6} parent=0 // pred_region
    _
  $region21: #{transformer_forward.6} parent=0 // pred_fallthru
    _
  // Predicated region
  $region22: #{transformer_forward.6} parent=0 // pred_check
    _
  $region23: #{transformer_forward.6} parent=0 // pred_check_branch
    %32 = sbr.rel (0) target = $region25
  $region24: #{transformer_forward.6} parent=0 // pred_region
    _
  $region25: #{transformer_forward.6} parent=0 // pred_fallthru
    _
  // Predicated region
  $region26: #{transformer_forward.6} parent=0 // pred_check
    _
  $region27: #{transformer_forward.6} parent=0 // pred_check_branch
    %34 = sbr.rel (0) target = $region29
  $region28: #{transformer_forward.6} parent=0 // pred_region
    _
  $region29: #{transformer_forward.6} parent=0 // pred_fallthru
    _
  // Predicated region
  $region30: #{transformer_forward.6} parent=0 // pred_check
    _
  $region31: #{transformer_forward.6} parent=0 // pred_check_branch
    %36 = sbr.rel (0) target = $region33
  $region32: #{transformer_forward.6} parent=0 // pred_region
    _
  $region33: #{transformer_forward.6} parent=0 // pred_fallthru
    _
  // Predicated region
  $region34: #{transformer_forward.6} parent=0 // pred_check
    _
  $region35: #{transformer_forward.6} parent=0 // pred_check_branch
    %38 = sbr.rel (0) target = $region37
  $region36: #{transformer_forward.6} parent=0 // pred_region
    _
  $region37: #{transformer_forward.6} parent=0 // pred_fallthru
    _
  // Predicated region
  $region38: #{transformer_forward.6} parent=0 // pred_check
    _
  $region39: #{transformer_forward.6} parent=0 // pred_check_branch
    %40 = sbr.rel (0) target = $region41
  $region40: #{transformer_forward.6} parent=0 // pred_region
    _
  $region41: #{transformer_forward.6} parent=0 // pred_fallthru
    _
  // Predicated region
  $region42: #{transformer_forward.6} parent=0 // pred_check
    _
  $region43: #{transformer_forward.6} parent=0 // pred_check_branch
    %42 = sbr.rel (0) target = $region45
  $region44: #{transformer_forward.6} parent=0 // pred_region
    _
  $region45: #{transformer_forward.6} parent=0 // pred_fallthru
    _
  // Predicated region
  $region46: #{transformer_forward.6} parent=0 // pred_check
    _
  $region47: #{transformer_forward.6} parent=0 // pred_check_branch
    %44 = sbr.rel (0) target = $region49
  $region48: #{transformer_forward.6} parent=0 // pred_region
    _
  $region49: #{transformer_forward.6} parent=0 // pred_fallthru
    _
  // Predicated region
  $region50: #{transformer_forward.6} parent=0 // pred_check
    _
  $region51: #{transformer_forward.6} parent=0 // pred_check_branch
    %46 = sbr.rel (0) target = $region53
  $region52: #{transformer_forward.6} parent=0 // pred_region
    _
  $region53: #{transformer_forward.6} parent=0 // pred_fallthru
    _
  // Predicated region
  $region54: #{transformer_forward.6} parent=0 // pred_check
    _
  $region55: #{transformer_forward.6} parent=0 // pred_check_branch
    %48 = sbr.rel (0) target = $region57
  $region56: #{transformer_forward.6} parent=0 // pred_region
    _
  $region57: #{transformer_forward.6} parent=0 // pred_fallthru
    _
  // Predicated region
  $region58: #{transformer_forward.6} parent=0 // pred_check
    _
  $region59: #{transformer_forward.6} parent=0 // pred_check_branch
    %50 = sbr.rel (0) target = $region61
  $region60: #{transformer_forward.6} parent=0 // pred_region
    _
  $region61: #{transformer_forward.6} parent=0 // pred_fallthru
    _
  // Predicated region
  $region62: #{transformer_forward.6} parent=0 // pred_check
    _
  $region63: #{transformer_forward.6} parent=0 // pred_check_branch
    %52 = sbr.rel (0) target = $region65
  $region64: #{transformer_forward.6} parent=0 // pred_region
    _
  $region65: #{transformer_forward.6} parent=0 // pred_fallthru
    _
  %v54 = vld [vmem:[%s0] sm:$0xff]
  %v55 = vld [vmem:[%s0 + $0x8] sm:$0xff]
  %v56 = vld [vmem:[%s1] sm:$0x3]
  %v59 = vunpack.c.l.s4 1966171168
  %v60 = vunpack.c.0.s8 %v59
  %v61 = vlaneseq
  %v62 = vshrl.u32 %v61, 7
  %v63 = vsub.s32 %v60, %v62
  %v64 = vrot.slane %v56, %v63
  %v65 = vcombine.high %v64, %v64
  %v67 = vunpack.c.l.s4 1966171168
  %v68 = vunpack.c.0.s8 %v67
  %v69 = vlaneseq
  %v70 = vshrl.u32 %v69, 7
  %v71 = vsub.s32 %v68, %v70
  %v72 = vrot.slane %v64, %v71
  %v74 = vunpack.c.l.s4 1966171168
  %v75 = vunpack.c.0.s8 %v74
  %v76 = vlaneseq
  %v77 = vshrl.u32 %v76, 7
  %v78 = vsub.s32 %v75, %v77
  %v79 = vrot.slane %v65, %v78
  %v80 = vpack.c.bf16 %v55, %v54
  %v81 = vld [vmem:[%s2] sm:$0xff]
  %v82 = vld [vmem:[%s2 + $0x8] sm:$0xff]
  %v83 = vld [vmem:[%s2 + $0x10] sm:$0xff]
  %v84 = vld [vmem:[%s2 + $0x18] sm:$0xff]
  %v85 = vpack.c.bf16 %v82, %v81
  %v86 = vpack.c.bf16 %v84, %v83
  %v87 = vld [vmem:[%s3] sm:$0x1]
  %v89 = vlaneseq
  %v90 = vshrl.u32 %v89, 7
  %v91 = vsub.s32 0, %v90
  %v92 = vrot.slane %v87, %v91
  %vm94 = vcmask 261120
  %v96 = vsel %vm94, %v80, 0
  %98 = vmatprep.subr.bf16.mxu0 0
  %99 = vmatpush1.bf16.msra.mxu0 %v85
  %100 = vmatprep.subr.bf16.mxu0 0
  %101 = vmatpush1.bf16.msra.mxu0 %v86
  %102 = vmatprep.subr.bf16.mxu0 0
  %103 = vmatpush1.bf16.msra.mxu0 0
  %104 = vmatprep.subr.bf16.mxu0 0
  %105 = vmatpush1.bf16.msra.mxu0 0
  %106 = vmatprep.subr.bf16.mxu0 0
  %107 = vmatpush1.bf16.msra.mxu0 0
  %108 = vmatprep.subr.bf16.mxu0 0
  %109 = vmatpush1.bf16.msra.mxu0 0
  %110 = vmatprep.subr.bf16.mxu0 0
  %111 = vmatpush1.bf16.msra.mxu0 0
  %112 = vmatprep.subr.bf16.mxu0 0
  %113 = vmatpush1.bf16.msra.mxu0 0
  %114 = vmatprep.subr.bf16.mxu0 0
  %115 = vmatpush1.bf16.msra.mxu0 0
  %116 = vmatprep.subr.bf16.mxu0 0
  %117 = vmatpush1.bf16.msra.mxu0 0
  %118 = vmatprep.subr.bf16.mxu0 0
  %119 = vmatpush1.bf16.msra.mxu0 0
  %120 = vmatprep.subr.bf16.mxu0 0
  %121 = vmatpush1.bf16.msra.mxu0 0
  %122 = vmatprep.subr.bf16.mxu0 0
  %123 = vmatpush1.bf16.msra.mxu0 0
  %124 = vmatprep.subr.bf16.mxu0 0
  %125 = vmatpush1.bf16.msra.mxu0 0
  %126 = vmatprep.subr.bf16.mxu0 0
  %127 = vmatpush1.bf16.msra.mxu0 0
  %128 = vmatprep.subr.bf16.mxu0 0
  %129 = vmatpush1.bf16.msra.mxu0 0
  %130 = vmatprep.mubr.bf16.mxu0 0
  %131 = vmatmul.mubr.bf16.gmra.mrb[0].mxu0 %v96
  %v132 = vpop.f32.mrb[0].mxu0
  %v133 = vadd.f32 %v92, %v132
  %v134 = vpop.f32.mrb[0].mxu0
  %v135 = vpop.f32.mrb[0].mxu0
  %v136 = vadd.f32 %v92, %v135
  %v137 = vpop.f32.mrb[0].mxu0
  %138 = vdwg.mxu0
  %v139 = vmul.f32 %v133, 0.35355338
  %v140 = vmul.f32 %v136, 0.35355338
  %v141 = vpack.c.bf16 %v139, %v139
  %v142 = vpack.c.bf16 %v140, %v140
  %v143 = vpack.c.bf16 %v133, %v133
  %v144 = vpack.c.bf16 %v136, %v136
  %v145 = vlaneseq
  %v146 = vshrl.u32 %v145, 7
  %v147 = vsub.s32 0, %v146
  %v148 = vrot.slane %v72, %v147
  %v149 = vlaneseq
  %v150 = vshrl.u32 %v149, 7
  %v151 = vsub.s32 0, %v150
  %v152 = vrot.slane %v79, %v151
  %156 = vrot.lane.b32.xlu0 %v143, 96
  %v157 = vpop.permute.xlu0 %156
  %vm158 = vcmask 64512
  %v160 = vsel %vm158, %v141, 0
  %v163 = vsel %vm158, %v157, 0
  %165 = vmatprep.subr.bf16.mxu0 0
  %166 = vmatpush1.bf16.xpose.msra.mxu0 %v163
  %167 = vmatprep.subr.bf16.mxu0 0
  %168 = vmatpush1.bf16.xpose.msra.mxu0 0
  %169 = vmatprep.subr.bf16.mxu0 0
  %170 = vmatpush1.bf16.xpose.msra.mxu0 0
  %171 = vmatprep.subr.bf16.mxu0 0
  %172 = vmatpush1.bf16.xpose.msra.mxu0 0
  %173 = vmatprep.subr.bf16.mxu0 0
  %174 = vmatpush1.bf16.xpose.msra.mxu0 0
  %175 = vmatprep.subr.bf16.mxu0 0
  %176 = vmatpush1.bf16.xpose.msra.mxu0 0
  %177 = vmatprep.subr.bf16.mxu0 0
  %178 = vmatpush1.bf16.xpose.msra.mxu0 0
  %179 = vmatprep.subr.bf16.mxu0 0
  %180 = vmatpush1.bf16.xpose.msra.mxu0 0
  %181 = vmatprep.subr.bf16.mxu0 0
  %182 = vmatpush1.bf16.xpose.msra.mxu0 0
  %183 = vmatprep.subr.bf16.mxu0 0
  %184 = vmatpush1.bf16.xpose.msra.mxu0 0
  %185 = vmatprep.subr.bf16.mxu0 0
  %186 = vmatpush1.bf16.xpose.msra.mxu0 0
  %187 = vmatprep.subr.bf16.mxu0 0
  %188 = vmatpush1.bf16.xpose.msra.mxu0 0
  %189 = vmatprep.subr.bf16.mxu0 0
  %190 = vmatpush1.bf16.xpose.msra.mxu0 0
  %191 = vmatprep.subr.bf16.mxu0 0
  %192 = vmatpush1.bf16.xpose.msra.mxu0 0
  %193 = vmatprep.subr.bf16.mxu0 0
  %194 = vmatpush1.bf16.xpose.msra.mxu0 0
  %195 = vmatprep.subr.bf16.mxu0 0
  %196 = vmatpush1.bf16.xpose.msra.mxu0 0
  %197 = vmatprep.mubr.bf16.mxu0 0
  %198 = vmatmul.mubr.bf16.gmra.mrb[0].mxu0 %v160
  %v199 = vpop.f32.mrb[0].mxu0
  %v200 = vadd.f32 %v148, %v199
  %v201 = vpop.f32.mrb[0].mxu0
  %v202 = vpop.f32.mrb[0].mxu0
  %v203 = vpop.f32.mrb[0].mxu0
  %204 = vdwg.mxu0
  %206 = vrot.lane.b32.xlu0 %v144, 96
  %v207 = vpop.permute.xlu0 %206
  %v209 = vsel %vm158, %v142, 0
  %v212 = vsel %vm158, %v207, 0
  %214 = vmatprep.subr.bf16.mxu0 0
  %215 = vmatpush1.bf16.xpose.msra.mxu0 %v212
  %216 = vmatprep.subr.bf16.mxu0 0
  %217 = vmatpush1.bf16.xpose.msra.mxu0 0
  %218 = vmatprep.subr.bf16.mxu0 0
  %219 = vmatpush1.bf16.xpose.msra.mxu0 0
  %220 = vmatprep.subr.bf16.mxu0 0
  %221 = vmatpush1.bf16.xpose.msra.mxu0 0
  %222 = vmatprep.subr.bf16.mxu0 0
  %223 = vmatpush1.bf16.xpose.msra.mxu0 0
  %224 = vmatprep.subr.bf16.mxu0 0
  %225 = vmatpush1.bf16.xpose.msra.mxu0 0
  %226 = vmatprep.subr.bf16.mxu0 0
  %227 = vmatpush1.bf16.xpose.msra.mxu0 0
  %228 = vmatprep.subr.bf16.mxu0 0
  %229 = vmatpush1.bf16.xpose.msra.mxu0 0
  %230 = vmatprep.subr.bf16.mxu0 0
  %231 = vmatpush1.bf16.xpose.msra.mxu0 0
  %232 = vmatprep.subr.bf16.mxu0 0
  %233 = vmatpush1.bf16.xpose.msra.mxu0 0
  %234 = vmatprep.subr.bf16.mxu0 0
  %235 = vmatpush1.bf16.xpose.msra.mxu0 0
  %236 = vmatprep.subr.bf16.mxu0 0
  %237 = vmatpush1.bf16.xpose.msra.mxu0 0
  %238 = vmatprep.subr.bf16.mxu0 0
  %239 = vmatpush1.bf16.xpose.msra.mxu0 0
  %240 = vmatprep.subr.bf16.mxu0 0
  %241 = vmatpush1.bf16.xpose.msra.mxu0 0
  %242 = vmatprep.subr.bf16.mxu0 0
  %243 = vmatpush1.bf16.xpose.msra.mxu0 0
  %244 = vmatprep.subr.bf16.mxu0 0
  %245 = vmatpush1.bf16.xpose.msra.mxu0 0
  %246 = vmatprep.mubr.bf16.mxu0 0
  %247 = vmatmul.mubr.bf16.gmra.mrb[0].mxu0 %v209
  %v248 = vpop.f32.mrb[0].mxu0
  %v249 = vadd.f32 %v152, %v248
  %v250 = vpop.f32.mrb[0].mxu0
  %v251 = vpop.f32.mrb[0].mxu0
  %v252 = vpop.f32.mrb[0].mxu0
  %253 = vdwg.mxu0
  %v254 = vsel %vm158, %v200, -inf
  %255 = vmax.xlane.f32.xlu0 %v254
  %v256 = vpop.xlane.xlu0 %255
  %v257 = vsel %vm158, %v249, -inf
  %258 = vmax.xlane.f32.xlu0 %v257
  %v259 = vpop.xlane.xlu0 %258
  %v260 = vsub.f32 %v200, %v256
  %v261 = vsub.f32 %v249, %v259
  %v262 = vmul.f32 %v260, 1.442695
  %v263 = vpow.pop %v262
  %v264 = vmul.f32 %v261, 1.442695
  %v265 = vpow.pop %v264
  %v266 = vsel %vm158, %v263, 0.0
  %267 = vadd.xlane.f32.xlu0 %v266
  %v268 = vpop.xlane.xlu0 %267
  %v269 = vsel %vm158, %v265, 0.0
  %270 = vadd.xlane.f32.xlu0 %v269
  %v271 = vpop.xlane.xlu0 %270
  %v272 = vrcp.pop %v268
  %v273 = vrcp.pop %v271
  %v274 = vmul.f32 %v263, %v272
  %v275 = vmul.f32 %v265, %v273
  %v276 = vpack.c.bf16 %v274, %v274
  %v277 = vpack.c.bf16 %v275, %v275
  %278 = vrot.lane.b32.xlu0 %v143, 64
  %v279 = vpop.permute.xlu0 %278
  %v281 = vsel %vm158, %v276, 0
  %vm283 = vcmask 1043456
  %v285 = vsel %vm283, %v279, 0
  %287 = vmatprep.subr.bf16.mxu0 0
  %288 = vmatpush1.bf16.msra.mxu0 %v285
  %289 = vmatprep.subr.bf16.mxu0 0
  %290 = vmatpush1.bf16.msra.mxu0 0
  %291 = vmatprep.subr.bf16.mxu0 0
  %292 = vmatpush1.bf16.msra.mxu0 0
  %293 = vmatprep.subr.bf16.mxu0 0
  %294 = vmatpush1.bf16.msra.mxu0 0
  %295 = vmatprep.subr.bf16.mxu0 0
  %296 = vmatpush1.bf16.msra.mxu0 0
  %297 = vmatprep.subr.bf16.mxu0 0
  %298 = vmatpush1.bf16.msra.mxu0 0
  %299 = vmatprep.subr.bf16.mxu0 0
  %300 = vmatpush1.bf16.msra.mxu0 0
  %301 = vmatprep.subr.bf16.mxu0 0
  %302 = vmatpush1.bf16.msra.mxu0 0
  %303 = vmatprep.subr.bf16.mxu0 0
  %304 = vmatpush1.bf16.msra.mxu0 0
  %305 = vmatprep.subr.bf16.mxu0 0
  %306 = vmatpush1.bf16.msra.mxu0 0
  %307 = vmatprep.subr.bf16.mxu0 0
  %308 = vmatpush1.bf16.msra.mxu0 0
  %309 = vmatprep.subr.bf16.mxu0 0
  %310 = vmatpush1.bf16.msra.mxu0 0
  %311 = vmatprep.subr.bf16.mxu0 0
  %312 = vmatpush1.bf16.msra.mxu0 0
  %313 = vmatprep.subr.bf16.mxu0 0
  %314 = vmatpush1.bf16.msra.mxu0 0
  %315 = vmatprep.subr.bf16.mxu0 0
  %316 = vmatpush1.bf16.msra.mxu0 0
  %317 = vmatprep.subr.bf16.mxu0 0
  %318 = vmatpush1.bf16.msra.mxu0 0
  %319 = vmatprep.mubr.bf16.mxu0 0
  %320 = vmatmul.mubr.bf16.gmra.mrb[0].mxu0 %v281
  %v321 = vpop.f32.mrb[0].mxu0
  %v322 = vadd.f32 0.0, %v321
  %v323 = vpop.f32.mrb[0].mxu0
  %v324 = vpop.f32.mrb[0].mxu0
  %v325 = vpop.f32.mrb[0].mxu0
  %326 = vdwg.mxu0
  %327 = vrot.lane.b32.xlu0 %v144, 64
  %v328 = vpop.permute.xlu0 %327
  %v330 = vsel %vm158, %v277, 0
  %v333 = vsel %vm283, %v328, 0
  %335 = vmatprep.subr.bf16.mxu0 0
  %336 = vmatpush1.bf16.msra.mxu0 %v333
  %337 = vmatprep.subr.bf16.mxu0 0
  %338 = vmatpush1.bf16.msra.mxu0 0
  %339 = vmatprep.subr.bf16.mxu0 0
  %340 = vmatpush1.bf16.msra.mxu0 0
  %341 = vmatprep.subr.bf16.mxu0 0
  %342 = vmatpush1.bf16.msra.mxu0 0
  %343 = vmatprep.subr.bf16.mxu0 0
  %344 = vmatpush1.bf16.msra.mxu0 0
  %345 = vmatprep.subr.bf16.mxu0 0
  %346 = vmatpush1.bf16.msra.mxu0 0
  %347 = vmatprep.subr.bf16.mxu0 0
  %348 = vmatpush1.bf16.msra.mxu0 0
  %349 = vmatprep.subr.bf16.mxu0 0
  %350 = vmatpush1.bf16.msra.mxu0 0
  %351 = vmatprep.subr.bf16.mxu0 0
  %352 = vmatpush1.bf16.msra.mxu0 0
  %353 = vmatprep.subr.bf16.mxu0 0
  %354 = vmatpush1.bf16.msra.mxu0 0
  %355 = vmatprep.subr.bf16.mxu0 0
  %356 = vmatpush1.bf16.msra.mxu0 0
  %357 = vmatprep.subr.bf16.mxu0 0
  %358 = vmatpush1.bf16.msra.mxu0 0
  %359 = vmatprep.subr.bf16.mxu0 0
  %360 = vmatpush1.bf16.msra.mxu0 0
  %361 = vmatprep.subr.bf16.mxu0 0
  %362 = vmatpush1.bf16.msra.mxu0 0
  %363 = vmatprep.subr.bf16.mxu0 0
  %364 = vmatpush1.bf16.msra.mxu0 0
  %365 = vmatprep.subr.bf16.mxu0 0
  %366 = vmatpush1.bf16.msra.mxu0 0
  %367 = vmatprep.mubr.bf16.mxu0 0
  %368 = vmatmul.mubr.bf16.gmra.mrb[0].mxu0 %v330
  %v369 = vpop.f32.mrb[0].mxu0
  %v370 = vadd.f32 0.0, %v369
  %v371 = vpop.f32.mrb[0].mxu0
  %v372 = vpop.f32.mrb[0].mxu0
  %v373 = vpop.f32.mrb[0].mxu0
  %374 = vdwg.mxu0
  %v375 = vpack.c.bf16 %v370, %v322
  %v376 = vld [vmem:[%s4] sm:$0xff]
  %v377 = vpack.c.bf16 %v376, %v376
  %379 = vrot.lane.b32.xlu0 %v141, 120
  %v380 = vpop.permute.xlu0 %379
  %381 = vrot.lane.b32.xlu0 %v143, 88
  %v382 = vpop.permute.xlu0 %381
  %v384 = vsel %vm158, %v380, 0
  %v387 = vsel %vm158, %v382, 0
  %389 = vmatprep.subr.bf16.mxu0 0
  %390 = vmatpush1.bf16.xpose.msra.mxu0 %v387
  %391 = vmatprep.subr.bf16.mxu0 0
  %392 = vmatpush1.bf16.xpose.msra.mxu0 0
  %393 = vmatprep.subr.bf16.mxu0 0
  %394 = vmatpush1.bf16.xpose.msra.mxu0 0
  %395 = vmatprep.subr.bf16.mxu0 0
  %396 = vmatpush1.bf16.xpose.msra.mxu0 0
  %397 = vmatprep.subr.bf16.mxu0 0
  %398 = vmatpush1.bf16.xpose.msra.mxu0 0
  %399 = vmatprep.subr.bf16.mxu0 0
  %400 = vmatpush1.bf16.xpose.msra.mxu0 0
  %401 = vmatprep.subr.bf16.mxu0 0
  %402 = vmatpush1.bf16.xpose.msra.mxu0 0
  %403 = vmatprep.subr.bf16.mxu0 0
  %404 = vmatpush1.bf16.xpose.msra.mxu0 0
  %405 = vmatprep.subr.bf16.mxu0 0
  %406 = vmatpush1.bf16.xpose.msra.mxu0 0
  %407 = vmatprep.subr.bf16.mxu0 0
  %408 = vmatpush1.bf16.xpose.msra.mxu0 0
  %409 = vmatprep.subr.bf16.mxu0 0
  %410 = vmatpush1.bf16.xpose.msra.mxu0 0
  %411 = vmatprep.subr.bf16.mxu0 0
  %412 = vmatpush1.bf16.xpose.msra.mxu0 0
  %413 = vmatprep.subr.bf16.mxu0 0
  %414 = vmatpush1.bf16.xpose.msra.mxu0 0
  %415 = vmatprep.subr.bf16.mxu0 0
  %416 = vmatpush1.bf16.xpose.msra.mxu0 0
  %417 = vmatprep.subr.bf16.mxu0 0
  %418 = vmatpush1.bf16.xpose.msra.mxu0 0
  %419 = vmatprep.subr.bf16.mxu0 0
  %420 = vmatpush1.bf16.xpose.msra.mxu0 0
  %421 = vmatprep.mubr.bf16.mxu0 0
  %422 = vmatmul.mubr.bf16.gmra.mrb[0].mxu0 %v384
  %v423 = vpop.f32.mrb[0].mxu0
  %v424 = vadd.f32 %v148, %v423
  %v425 = vpop.f32.mrb[0].mxu0
  %v426 = vpop.f32.mrb[0].mxu0
  %v427 = vpop.f32.mrb[0].mxu0
  %428 = vdwg.mxu0
  %430 = vrot.lane.b32.xlu0 %v142, 120
  %v431 = vpop.permute.xlu0 %430
  %432 = vrot.lane.b32.xlu0 %v144, 88
  %v433 = vpop.permute.xlu0 %432
  %v435 = vsel %vm158, %v431, 0
  %v438 = vsel %vm158, %v433, 0
  %440 = vmatprep.subr.bf16.mxu0 0
  %441 = vmatpush1.bf16.xpose.msra.mxu0 %v438
  %442 = vmatprep.subr.bf16.mxu0 0
  %443 = vmatpush1.bf16.xpose.msra.mxu0 0
  %444 = vmatprep.subr.bf16.mxu0 0
  %445 = vmatpush1.bf16.xpose.msra.mxu0 0
  %446 = vmatprep.subr.bf16.mxu0 0
  %447 = vmatpush1.bf16.xpose.msra.mxu0 0
  %448 = vmatprep.subr.bf16.mxu0 0
  %449 = vmatpush1.bf16.xpose.msra.mxu0 0
  %450 = vmatprep.subr.bf16.mxu0 0
  %451 = vmatpush1.bf16.xpose.msra.mxu0 0
  %452 = vmatprep.subr.bf16.mxu0 0
  %453 = vmatpush1.bf16.xpose.msra.mxu0 0
  %454 = vmatprep.subr.bf16.mxu0 0
  %455 = vmatpush1.bf16.xpose.msra.mxu0 0
  %456 = vmatprep.subr.bf16.mxu0 0
  %457 = vmatpush1.bf16.xpose.msra.mxu0 0
  %458 = vmatprep.subr.bf16.mxu0 0
  %459 = vmatpush1.bf16.xpose.msra.mxu0 0
  %460 = vmatprep.subr.bf16.mxu0 0
  %461 = vmatpush1.bf16.xpose.msra.mxu0 0
  %462 = vmatprep.subr.bf16.mxu0 0
  %463 = vmatpush1.bf16.xpose.msra.mxu0 0
  %464 = vmatprep.subr.bf16.mxu0 0
  %465 = vmatpush1.bf16.xpose.msra.mxu0 0
  %466 = vmatprep.subr.bf16.mxu0 0
  %467 = vmatpush1.bf16.xpose.msra.mxu0 0
  %468 = vmatprep.subr.bf16.mxu0 0
  %469 = vmatpush1.bf16.xpose.msra.mxu0 0
  %470 = vmatprep.subr.bf16.mxu0 0
  %471 = vmatpush1.bf16.xpose.msra.mxu0 0
  %472 = vmatprep.mubr.bf16.mxu0 0
  %473 = vmatmul.mubr.bf16.gmra.mrb[0].mxu0 %v435
  %v474 = vpop.f32.mrb[0].mxu0
  %v475 = vadd.f32 %v152, %v474
  %v476 = vpop.f32.mrb[0].mxu0
  %v477 = vpop.f32.mrb[0].mxu0
  %v478 = vpop.f32.mrb[0].mxu0
  %479 = vdwg.mxu0
  %v480 = vsel %vm158, %v424, -inf
  %481 = vmax.xlane.f32.xlu0 %v480
  %v482 = vpop.xlane.xlu0 %481
  %v483 = vsel %vm158, %v475, -inf
  %484 = vmax.xlane.f32.xlu0 %v483
  %v485 = vpop.xlane.xlu0 %484
  %v486 = vsub.f32 %v424, %v482
  %v487 = vsub.f32 %v475, %v485
  %v488 = vmul.f32 %v486, 1.442695
  %v489 = vpow.pop %v488
  %v490 = vmul.f32 %v487, 1.442695
  %v491 = vpow.pop %v490
  %v492 = vsel %vm158, %v489, 0.0
  %493 = vadd.xlane.f32.xlu0 %v492
  %v494 = vpop.xlane.xlu0 %493
  %v495 = vsel %vm158, %v491, 0.0
  %496 = vadd.xlane.f32.xlu0 %v495
  %v497 = vpop.xlane.xlu0 %496
  %v498 = vrcp.pop %v494
  %v499 = vrcp.pop %v497
  %v500 = vmul.f32 %v489, %v498
  %v501 = vmul.f32 %v491, %v499
  %v502 = vpack.c.bf16 %v500, %v500
  %v503 = vpack.c.bf16 %v501, %v501
  %504 = vrot.lane.b32.xlu0 %v143, 56
  %v505 = vpop.permute.xlu0 %504
  %v507 = vsel %vm158, %v502, 0
  %v510 = vsel %vm283, %v505, 0
  %512 = vmatprep.subr.bf16.mxu0 0
  %513 = vmatpush1.bf16.msra.mxu0 %v510
  %514 = vmatprep.subr.bf16.mxu0 0
  %515 = vmatpush1.bf16.msra.mxu0 0
  %516 = vmatprep.subr.bf16.mxu0 0
  %517 = vmatpush1.bf16.msra.mxu0 0
  %518 = vmatprep.subr.bf16.mxu0 0
  %519 = vmatpush1.bf16.msra.mxu0 0
  %520 = vmatprep.subr.bf16.mxu0 0
  %521 = vmatpush1.bf16.msra.mxu0 0
  %522 = vmatprep.subr.bf16.mxu0 0
  %523 = vmatpush1.bf16.msra.mxu0 0
  %524 = vmatprep.subr.bf16.mxu0 0
  %525 = vmatpush1.bf16.msra.mxu0 0
  %526 = vmatprep.subr.bf16.mxu0 0
  %527 = vmatpush1.bf16.msra.mxu0 0
  %528 = vmatprep.subr.bf16.mxu0 0
  %529 = vmatpush1.bf16.msra.mxu0 0
  %530 = vmatprep.subr.bf16.mxu0 0
  %531 = vmatpush1.bf16.msra.mxu0 0
  %532 = vmatprep.subr.bf16.mxu0 0
  %533 = vmatpush1.bf16.msra.mxu0 0
  %534 = vmatprep.subr.bf16.mxu0 0
  %535 = vmatpush1.bf16.msra.mxu0 0
  %536 = vmatprep.subr.bf16.mxu0 0
  %537 = vmatpush1.bf16.msra.mxu0 0
  %538 = vmatprep.subr.bf16.mxu0 0
  %539 = vmatpush1.bf16.msra.mxu0 0
  %540 = vmatprep.subr.bf16.mxu0 0
  %541 = vmatpush1.bf16.msra.mxu0 0
  %542 = vmatprep.subr.bf16.mxu0 0
  %543 = vmatpush1.bf16.msra.mxu0 0
  %544 = vmatprep.mubr.bf16.mxu0 0
  %545 = vmatmul.mubr.bf16.gmra.mrb[0].mxu0 %v507
  %v546 = vpop.f32.mrb[0].mxu0
  %v547 = vadd.f32 0.0, %v546
  %v548 = vpop.f32.mrb[0].mxu0
  %v549 = vpop.f32.mrb[0].mxu0
  %v550 = vpop.f32.mrb[0].mxu0
  %551 = vdwg.mxu0
  %552 = vrot.lane.b32.xlu0 %v144, 56
  %v553 = vpop.permute.xlu0 %552
  %v555 = vsel %vm158, %v503, 0
  %v558 = vsel %vm283, %v553, 0
  %560 = vmatprep.subr.bf16.mxu0 0
  %561 = vmatpush1.bf16.msra.mxu0 %v558
  %562 = vmatprep.subr.bf16.mxu0 0
  %563 = vmatpush1.bf16.msra.mxu0 0
  %564 = vmatprep.subr.bf16.mxu0 0
  %565 = vmatpush1.bf16.msra.mxu0 0
  %566 = vmatprep.subr.bf16.mxu0 0
  %567 = vmatpush1.bf16.msra.mxu0 0
  %568 = vmatprep.subr.bf16.mxu0 0
  %569 = vmatpush1.bf16.msra.mxu0 0
  %570 = vmatprep.subr.bf16.mxu0 0
  %571 = vmatpush1.bf16.msra.mxu0 0
  %572 = vmatprep.subr.bf16.mxu0 0
  %573 = vmatpush1.bf16.msra.mxu0 0
  %574 = vmatprep.subr.bf16.mxu0 0
  %575 = vmatpush1.bf16.msra.mxu0 0
  %576 = vmatprep.subr.bf16.mxu0 0
  %577 = vmatpush1.bf16.msra.mxu0 0
  %578 = vmatprep.subr.bf16.mxu0 0
  %579 = vmatpush1.bf16.msra.mxu0 0
  %580 = vmatprep.subr.bf16.mxu0 0
  %581 = vmatpush1.bf16.msra.mxu0 0
  %582 = vmatprep.subr.bf16.mxu0 0
  %583 = vmatpush1.bf16.msra.mxu0 0
  %584 = vmatprep.subr.bf16.mxu0 0
  %585 = vmatpush1.bf16.msra.mxu0 0
  %586 = vmatprep.subr.bf16.mxu0 0
  %587 = vmatpush1.bf16.msra.mxu0 0
  %588 = vmatprep.subr.bf16.mxu0 0
  %589 = vmatpush1.bf16.msra.mxu0 0
  %590 = vmatprep.subr.bf16.mxu0 0
  %591 = vmatpush1.bf16.msra.mxu0 0
  %592 = vmatprep.mubr.bf16.mxu0 0
  %593 = vmatmul.mubr.bf16.gmra.mrb[0].mxu0 %v555
  %v594 = vpop.f32.mrb[0].mxu0
  %v595 = vadd.f32 0.0, %v594
  %v596 = vpop.f32.mrb[0].mxu0
  %v597 = vpop.f32.mrb[0].mxu0
  %v598 = vpop.f32.mrb[0].mxu0
  %599 = vdwg.mxu0
  %v600 = vpack.c.bf16 %v595, %v547
  %v601 = vld [vmem:[%s4 + $0x8] sm:$0xff]
  %v602 = vpack.c.bf16 %v601, %v601
  %v604 = vsel %vm158, %v600, 0
  %v607 = vsel %vm283, %v602, 0
  %609 = vmatprep.subr.bf16.mxu0 0
  %610 = vmatpush1.bf16.msra.mxu0 %v607
  %611 = vmatprep.subr.bf16.mxu0 0
  %612 = vmatpush1.bf16.msra.mxu0 0
  %613 = vmatprep.subr.bf16.mxu0 0
  %614 = vmatpush1.bf16.msra.mxu0 0
  %615 = vmatprep.subr.bf16.mxu0 0
  %616 = vmatpush1.bf16.msra.mxu0 0
  %617 = vmatprep.subr.bf16.mxu0 0
  %618 = vmatpush1.bf16.msra.mxu0 0
  %619 = vmatprep.subr.bf16.mxu0 0
  %620 = vmatpush1.bf16.msra.mxu0 0
  %621 = vmatprep.subr.bf16.mxu0 0
  %622 = vmatpush1.bf16.msra.mxu0 0
  %623 = vmatprep.subr.bf16.mxu0 0
  %624 = vmatpush1.bf16.msra.mxu0 0
  %625 = vmatprep.subr.bf16.mxu0 0
  %626 = vmatpush1.bf16.msra.mxu0 0
  %627 = vmatprep.subr.bf16.mxu0 0
  %628 = vmatpush1.bf16.msra.mxu0 0
  %629 = vmatprep.subr.bf16.mxu0 0
  %630 = vmatpush1.bf16.msra.mxu0 0
  %631 = vmatprep.subr.bf16.mxu0 0
  %632 = vmatpush1.bf16.msra.mxu0 0
  %633 = vmatprep.subr.bf16.mxu0 0
  %634 = vmatpush1.bf16.msra.mxu0 0
  %635 = vmatprep.subr.bf16.mxu0 0
  %636 = vmatpush1.bf16.msra.mxu0 0
  %637 = vmatprep.subr.bf16.mxu0 0
  %638 = vmatpush1.bf16.msra.mxu0 0
  %639 = vmatprep.subr.bf16.mxu0 0
  %640 = vmatpush1.bf16.msra.mxu0 0
  %641 = vmatprep.mubr.bf16.mxu0 0
  %642 = vmatmul.mubr.bf16.gmra.mrb[0].mxu0 %v604
  %v643 = vpop.f32.mrb[0].mxu0
  %v644 = vadd.f32 0.0, %v643
  %v645 = vpop.f32.mrb[0].mxu0
  %v646 = vpop.f32.mrb[0].mxu0
  %v647 = vadd.f32 0.0, %v646
  %v648 = vpop.f32.mrb[0].mxu0
  %649 = vdwg.mxu0
  %v651 = vsel %vm158, %v375, 0
  %v654 = vsel %vm283, %v377, 0
  %656 = vmatprep.subr.bf16.mxu0 0
  %657 = vmatpush1.bf16.msra.mxu0 %v654
  %658 = vmatprep.subr.bf16.mxu0 0
  %659 = vmatpush1.bf16.msra.mxu0 0
  %660 = vmatprep.subr.bf16.mxu0 0
  %661 = vmatpush1.bf16.msra.mxu0 0
  %662 = vmatprep.subr.bf16.mxu0 0
  %663 = vmatpush1.bf16.msra.mxu0 0
  %664 = vmatprep.subr.bf16.mxu0 0
  %665 = vmatpush1.bf16.msra.mxu0 0
  %666 = vmatprep.subr.bf16.mxu0 0
  %667 = vmatpush1.bf16.msra.mxu0 0
  %668 = vmatprep.subr.bf16.mxu0 0
  %669 = vmatpush1.bf16.msra.mxu0 0
  %670 = vmatprep.subr.bf16.mxu0 0
  %671 = vmatpush1.bf16.msra.mxu0 0
  %672 = vmatprep.subr.bf16.mxu0 0
  %673 = vmatpush1.bf16.msra.mxu0 0
  %674 = vmatprep.subr.bf16.mxu0 0
  %675 = vmatpush1.bf16.msra.mxu0 0
  %676 = vmatprep.subr.bf16.mxu0 0
  %677 = vmatpush1.bf16.msra.mxu0 0
  %678 = vmatprep.subr.bf16.mxu0 0
  %679 = vmatpush1.bf16.msra.mxu0 0
  %680 = vmatprep.subr.bf16.mxu0 0
  %681 = vmatpush1.bf16.msra.mxu0 0
  %682 = vmatprep.subr.bf16.mxu0 0
  %683 = vmatpush1.bf16.msra.mxu0 0
  %684 = vmatprep.subr.bf16.mxu0 0
  %685 = vmatpush1.bf16.msra.mxu0 0
  %686 = vmatprep.subr.bf16.mxu0 0
  %687 = vmatpush1.bf16.msra.mxu0 0
  %688 = vmatprep.mubr.bf16.mxu0 0
  %689 = vmatmul.mubr.bf16.gmra.mrb[0].mxu0 %v651
  %v690 = vpop.f32.mrb[0].mxu0
  %v691 = vadd.f32 %v644, %v690
  %v692 = vpop.f32.mrb[0].mxu0
  %v693 = vpop.f32.mrb[0].mxu0
  %v694 = vadd.f32 %v647, %v693
  %v695 = vpop.f32.mrb[0].mxu0
  %696 = vdwg.mxu0
  %697 = vrot.lane.b32.xlu0 %v141, 112
  %v698 = vpop.permute.xlu0 %697
  %699 = vrot.lane.b32.xlu0 %v143, 80
  %v700 = vpop.permute.xlu0 %699
  %v702 = vsel %vm158, %v698, 0
  %v705 = vsel %vm158, %v700, 0
  %707 = vmatprep.subr.bf16.mxu0 0
  %708 = vmatpush1.bf16.xpose.msra.mxu0 %v705
  %709 = vmatprep.subr.bf16.mxu0 0
  %710 = vmatpush1.bf16.xpose.msra.mxu0 0
  %711 = vmatprep.subr.bf16.mxu0 0
  %712 = vmatpush1.bf16.xpose.msra.mxu0 0
  %713 = vmatprep.subr.bf16.mxu0 0
  %714 = vmatpush1.bf16.xpose.msra.mxu0 0
  %715 = vmatprep.subr.bf16.mxu0 0
  %716 = vmatpush1.bf16.xpose.msra.mxu0 0
  %717 = vmatprep.subr.bf16.mxu0 0
  %718 = vmatpush1.bf16.xpose.msra.mxu0 0
  %719 = vmatprep.subr.bf16.mxu0 0
  %720 = vmatpush1.bf16.xpose.msra.mxu0 0
  %721 = vmatprep.subr.bf16.mxu0 0
  %722 = vmatpush1.bf16.xpose.msra.mxu0 0
  %723 = vmatprep.subr.bf16.mxu0 0
  %724 = vmatpush1.bf16.xpose.msra.mxu0 0
  %725 = vmatprep.subr.bf16.mxu0 0
  %726 = vmatpush1.bf16.xpose.msra.mxu0 0
  %727 = vmatprep.subr.bf16.mxu0 0
  %728 = vmatpush1.bf16.xpose.msra.mxu0 0
  %729 = vmatprep.subr.bf16.mxu0 0
  %730 = vmatpush1.bf16.xpose.msra.mxu0 0
  %731 = vmatprep.subr.bf16.mxu0 0
  %732 = vmatpush1.bf16.xpose.msra.mxu0 0
  %733 = vmatprep.subr.bf16.mxu0 0
  %734 = vmatpush1.bf16.xpose.msra.mxu0 0
  %735 = vmatprep.subr.bf16.mxu0 0
  %736 = vmatpush1.bf16.xpose.msra.mxu0 0
  %737 = vmatprep.subr.bf16.mxu0 0
  %738 = vmatpush1.bf16.xpose.msra.mxu0 0
  %739 = vmatprep.mubr.bf16.mxu0 0
  %740 = vmatmul.mubr.bf16.gmra.mrb[0].mxu0 %v702
  %v741 = vpop.f32.mrb[0].mxu0
  %v742 = vadd.f32 %v148, %v741
  %v743 = vpop.f32.mrb[0].mxu0
  %v744 = vpop.f32.mrb[0].mxu0
  %v745 = vpop.f32.mrb[0].mxu0
  %746 = vdwg.mxu0
  %747 = vrot.lane.b32.xlu0 %v142, 112
  %v748 = vpop.permute.xlu0 %747
  %749 = vrot.lane.b32.xlu0 %v144, 80
  %v750 = vpop.permute.xlu0 %749
  %v752 = vsel %vm158, %v748, 0
  %v755 = vsel %vm158, %v750, 0
  %757 = vmatprep.subr.bf16.mxu0 0
  %758 = vmatpush1.bf16.xpose.msra.mxu0 %v755
  %759 = vmatprep.subr.bf16.mxu0 0
  %760 = vmatpush1.bf16.xpose.msra.mxu0 0
  %761 = vmatprep.subr.bf16.mxu0 0
  %762 = vmatpush1.bf16.xpose.msra.mxu0 0
  %763 = vmatprep.subr.bf16.mxu0 0
  %764 = vmatpush1.bf16.xpose.msra.mxu0 0
  %765 = vmatprep.subr.bf16.mxu0 0
  %766 = vmatpush1.bf16.xpose.msra.mxu0 0
  %767 = vmatprep.subr.bf16.mxu0 0
  %768 = vmatpush1.bf16.xpose.msra.mxu0 0
  %769 = vmatprep.subr.bf16.mxu0 0
  %770 = vmatpush1.bf16.xpose.msra.mxu0 0
  %771 = vmatprep.subr.bf16.mxu0 0
  %772 = vmatpush1.bf16.xpose.msra.mxu0 0
  %773 = vmatprep.subr.bf16.mxu0 0
  %774 = vmatpush1.bf16.xpose.msra.mxu0 0
  %775 = vmatprep.subr.bf16.mxu0 0
  %776 = vmatpush1.bf16.xpose.msra.mxu0 0
  %777 = vmatprep.subr.bf16.mxu0 0
  %778 = vmatpush1.bf16.xpose.msra.mxu0 0
  %779 = vmatprep.subr.bf16.mxu0 0
  %780 = vmatpush1.bf16.xpose.msra.mxu0 0
  %781 = vmatprep.subr.bf16.mxu0 0
  %782 = vmatpush1.bf16.xpose.msra.mxu0 0
  %783 = vmatprep.subr.bf16.mxu0 0
  %784 = vmatpush1.bf16.xpose.msra.mxu0 0
  %785 = vmatprep.subr.bf16.mxu0 0
  %786 = vmatpush1.bf16.xpose.msra.mxu0 0
  %787 = vmatprep.subr.bf16.mxu0 0
  %788 = vmatpush1.bf16.xpose.msra.mxu0 0
  %789 = vmatprep.mubr.bf16.mxu0 0
  %790 = vmatmul.mubr.bf16.gmra.mrb[0].mxu0 %v752
  %v791 = vpop.f32.mrb[0].mxu0
  %v792 = vadd.f32 %v152, %v791
  %v793 = vpop.f32.mrb[0].mxu0
  %v794 = vpop.f32.mrb[0].mxu0
  %v795 = vpop.f32.mrb[0].mxu0
  %796 = vdwg.mxu0
  %v797 = vsel %vm158, %v742, -inf
  %798 = vmax.xlane.f32.xlu0 %v797
  %v799 = vpop.xlane.xlu0 %798
  %v800 = vsel %vm158, %v792, -inf
  %801 = vmax.xlane.f32.xlu0 %v800
  %v802 = vpop.xlane.xlu0 %801
  %v803 = vsub.f32 %v742, %v799
  %v804 = vsub.f32 %v792, %v802
  %v805 = vmul.f32 %v803, 1.442695
  %v806 = vpow.pop %v805
  %v807 = vmul.f32 %v804, 1.442695
  %v808 = vpow.pop %v807
  %v809 = vsel %vm158, %v806, 0.0
  %810 = vadd.xlane.f32.xlu0 %v809
  %v811 = vpop.xlane.xlu0 %810
  %v812 = vsel %vm158, %v808, 0.0
  %813 = vadd.xlane.f32.xlu0 %v812
  %v814 = vpop.xlane.xlu0 %813
  %v815 = vrcp.pop %v811
  %v816 = vrcp.pop %v814
  %v817 = vmul.f32 %v806, %v815
  %v818 = vmul.f32 %v808, %v816
  %v819 = vpack.c.bf16 %v817, %v817
  %v820 = vpack.c.bf16 %v818, %v818
  %821 = vrot.lane.b32.xlu0 %v143, 48
  %v822 = vpop.permute.xlu0 %821
  %v824 = vsel %vm158, %v819, 0
  %v827 = vsel %vm283, %v822, 0
  %829 = vmatprep.subr.bf16.mxu0 0
  %830 = vmatpush1.bf16.msra.mxu0 %v827
  %831 = vmatprep.subr.bf16.mxu0 0
  %832 = vmatpush1.bf16.msra.mxu0 0
  %833 = vmatprep.subr.bf16.mxu0 0
  %834 = vmatpush1.bf16.msra.mxu0 0
  %835 = vmatprep.subr.bf16.mxu0 0
  %836 = vmatpush1.bf16.msra.mxu0 0
  %837 = vmatprep.subr.bf16.mxu0 0
  %838 = vmatpush1.bf16.msra.mxu0 0
  %839 = vmatprep.subr.bf16.mxu0 0
  %840 = vmatpush1.bf16.msra.mxu0 0
  %841 = vmatprep.subr.bf16.mxu0 0
  %842 = vmatpush1.bf16.msra.mxu0 0
  %843 = vmatprep.subr.bf16.mxu0 0
  %844 = vmatpush1.bf16.msra.mxu0 0
  %845 = vmatprep.subr.bf16.mxu0 0
  %846 = vmatpush1.bf16.msra.mxu0 0
  %847 = vmatprep.subr.bf16.mxu0 0
  %848 = vmatpush1.bf16.msra.mxu0 0
  %849 = vmatprep.subr.bf16.mxu0 0
  %850 = vmatpush1.bf16.msra.mxu0 0
  %851 = vmatprep.subr.bf16.mxu0 0
  %852 = vmatpush1.bf16.msra.mxu0 0
  %853 = vmatprep.subr.bf16.mxu0 0
  %854 = vmatpush1.bf16.msra.mxu0 0
  %855 = vmatprep.subr.bf16.mxu0 0
  %856 = vmatpush1.bf16.msra.mxu0 0
  %857 = vmatprep.subr.bf16.mxu0 0
  %858 = vmatpush1.bf16.msra.mxu0 0
  %859 = vmatprep.subr.bf16.mxu0 0
  %860 = vmatpush1.bf16.msra.mxu0 0
  %861 = vmatprep.mubr.bf16.mxu0 0
  %862 = vmatmul.mubr.bf16.gmra.mrb[0].mxu0 %v824
  %v863 = vpop.f32.mrb[0].mxu0
  %v864 = vadd.f32 0.0, %v863
  %v865 = vpop.f32.mrb[0].mxu0
  %v866 = vpop.f32.mrb[0].mxu0
  %v867 = vpop.f32.mrb[0].mxu0
  %868 = vdwg.mxu0
  %869 = vrot.lane.b32.xlu0 %v144, 48
  %v870 = vpop.permute.xlu0 %869
  %v872 = vsel %vm158, %v820, 0
  %v875 = vsel %vm283, %v870, 0
  %877 = vmatprep.subr.bf16.mxu0 0
  %878 = vmatpush1.bf16.msra.mxu0 %v875
  %879 = vmatprep.subr.bf16.mxu0 0
  %880 = vmatpush1.bf16.msra.mxu0 0
  %881 = vmatprep.subr.bf16.mxu0 0
  %882 = vmatpush1.bf16.msra.mxu0 0
  %883 = vmatprep.subr.bf16.mxu0 0
  %884 = vmatpush1.bf16.msra.mxu0 0
  %885 = vmatprep.subr.bf16.mxu0 0
  %886 = vmatpush1.bf16.msra.mxu0 0
  %887 = vmatprep.subr.bf16.mxu0 0
  %888 = vmatpush1.bf16.msra.mxu0 0
  %889 = vmatprep.subr.bf16.mxu0 0
  %890 = vmatpush1.bf16.msra.mxu0 0
  %891 = vmatprep.subr.bf16.mxu0 0
  %892 = vmatpush1.bf16.msra.mxu0 0
  %893 = vmatprep.subr.bf16.mxu0 0
  %894 = vmatpush1.bf16.msra.mxu0 0
  %895 = vmatprep.subr.bf16.mxu0 0
  %896 = vmatpush1.bf16.msra.mxu0 0
  %897 = vmatprep.subr.bf16.mxu0 0
  %898 = vmatpush1.bf16.msra.mxu0 0
  %899 = vmatprep.subr.bf16.mxu0 0
  %900 = vmatpush1.bf16.msra.mxu0 0
  %901 = vmatprep.subr.bf16.mxu0 0
  %902 = vmatpush1.bf16.msra.mxu0 0
  %903 = vmatprep.subr.bf16.mxu0 0
  %904 = vmatpush1.bf16.msra.mxu0 0
  %905 = vmatprep.subr.bf16.mxu0 0
  %906 = vmatpush1.bf16.msra.mxu0 0
  %907 = vmatprep.subr.bf16.mxu0 0
  %908 = vmatpush1.bf16.msra.mxu0 0
  %909 = vmatprep.mubr.bf16.mxu0 0
  %910 = vmatmul.mubr.bf16.gmra.mrb[0].mxu0 %v872
  %v911 = vpop.f32.mrb[0].mxu0
  %v912 = vadd.f32 0.0, %v911
  %v913 = vpop.f32.mrb[0].mxu0
  %v914 = vpop.f32.mrb[0].mxu0
  %v915 = vpop.f32.mrb[0].mxu0
  %916 = vdwg.mxu0
  %v917 = vpack.c.bf16 %v912, %v864
  %v918 = vld [vmem:[%s4 + $0x10] sm:$0xff]
  %v919 = vpack.c.bf16 %v918, %v918
  %v921 = vsel %vm158, %v917, 0
  %v924 = vsel %vm283, %v919, 0
  %926 = vmatprep.subr.bf16.mxu0 0
  %927 = vmatpush1.bf16.msra.mxu0 %v924
  %928 = vmatprep.subr.bf16.mxu0 0
  %929 = vmatpush1.bf16.msra.mxu0 0
  %930 = vmatprep.subr.bf16.mxu0 0
  %931 = vmatpush1.bf16.msra.mxu0 0
  %932 = vmatprep.subr.bf16.mxu0 0
  %933 = vmatpush1.bf16.msra.mxu0 0
  %934 = vmatprep.subr.bf16.mxu0 0
  %935 = vmatpush1.bf16.msra.mxu0 0
  %936 = vmatprep.subr.bf16.mxu0 0
  %937 = vmatpush1.bf16.msra.mxu0 0
  %938 = vmatprep.subr.bf16.mxu0 0
  %939 = vmatpush1.bf16.msra.mxu0 0
  %940 = vmatprep.subr.bf16.mxu0 0
  %941 = vmatpush1.bf16.msra.mxu0 0
  %942 = vmatprep.subr.bf16.mxu0 0
  %943 = vmatpush1.bf16.msra.mxu0 0
  %944 = vmatprep.subr.bf16.mxu0 0
  %945 = vmatpush1.bf16.msra.mxu0 0
  %946 = vmatprep.subr.bf16.mxu0 0
  %947 = vmatpush1.bf16.msra.mxu0 0
  %948 = vmatprep.subr.bf16.mxu0 0
  %949 = vmatpush1.bf16.msra.mxu0 0
  %950 = vmatprep.subr.bf16.mxu0 0
  %951 = vmatpush1.bf16.msra.mxu0 0
  %952 = vmatprep.subr.bf16.mxu0 0
  %953 = vmatpush1.bf16.msra.mxu0 0
  %954 = vmatprep.subr.bf16.mxu0 0
  %955 = vmatpush1.bf16.msra.mxu0 0
  %956 = vmatprep.subr.bf16.mxu0 0
  %957 = vmatpush1.bf16.msra.mxu0 0
  %958 = vmatprep.mubr.bf16.mxu0 0
  %959 = vmatmul.mubr.bf16.gmra.mrb[0].mxu0 %v921
  %v960 = vpop.f32.mrb[0].mxu0
  %v961 = vadd.f32 0.0, %v960
  %v962 = vpop.f32.mrb[0].mxu0
  %v963 = vpop.f32.mrb[0].mxu0
  %v964 = vadd.f32 0.0, %v963
  %v965 = vpop.f32.mrb[0].mxu0
  %966 = vdwg.mxu0
  %v967 = vadd.f32 %v691, %v961
  %v968 = vadd.f32 %v694, %v964
  %969 = vrot.lane.b32.xlu0 %v141, 104
  %v970 = vpop.permute.xlu0 %969
  %971 = vrot.lane.b32.xlu0 %v143, 72
  %v972 = vpop.permute.xlu0 %971
  %v974 = vsel %vm158, %v970, 0
  %v977 = vsel %vm158, %v972, 0
  %979 = vmatprep.subr.bf16.mxu0 0
  %980 = vmatpush1.bf16.xpose.msra.mxu0 %v977
  %981 = vmatprep.subr.bf16.mxu0 0
  %982 = vmatpush1.bf16.xpose.msra.mxu0 0
  %983 = vmatprep.subr.bf16.mxu0 0
  %984 = vmatpush1.bf16.xpose.msra.mxu0 0
  %985 = vmatprep.subr.bf16.mxu0 0
  %986 = vmatpush1.bf16.xpose.msra.mxu0 0
  %987 = vmatprep.subr.bf16.mxu0 0
  %988 = vmatpush1.bf16.xpose.msra.mxu0 0
  %989 = vmatprep.subr.bf16.mxu0 0
  %990 = vmatpush1.bf16.xpose.msra.mxu0 0
  %991 = vmatprep.subr.bf16.mxu0 0
  %992 = vmatpush1.bf16.xpose.msra.mxu0 0
  %993 = vmatprep.subr.bf16.mxu0 0
  %994 = vmatpush1.bf16.xpose.msra.mxu0 0
  %995 = vmatprep.subr.bf16.mxu0 0
  %996 = vmatpush1.bf16.xpose.msra.mxu0 0
  %997 = vmatprep.subr.bf16.mxu0 0
  %998 = vmatpush1.bf16.xpose.msra.mxu0 0
  %999 = vmatprep.subr.bf16.mxu0 0
  %1000 = vmatpush1.bf16.xpose.msra.mxu0 0
  %1001 = vmatprep.subr.bf16.mxu0 0
  %1002 = vmatpush1.bf16.xpose.msra.mxu0 0
  %1003 = vmatprep.subr.bf16.mxu0 0
  %1004 = vmatpush1.bf16.xpose.msra.mxu0 0
  %1005 = vmatprep.subr.bf16.mxu0 0
  %1006 = vmatpush1.bf16.xpose.msra.mxu0 0
  %1007 = vmatprep.subr.bf16.mxu0 0
  %1008 = vmatpush1.bf16.xpose.msra.mxu0 0
  %1009 = vmatprep.subr.bf16.mxu0 0
  %1010 = vmatpush1.bf16.xpose.msra.mxu0 0
  %1011 = vmatprep.mubr.bf16.mxu0 0
  %1012 = vmatmul.mubr.bf16.gmra.mrb[0].mxu0 %v974
  %v1013 = vpop.f32.mrb[0].mxu0
  %v1014 = vadd.f32 %v148, %v1013
  %v1015 = vpop.f32.mrb[0].mxu0
  %v1016 = vpop.f32.mrb[0].mxu0
  %v1017 = vpop.f32.mrb[0].mxu0
  %1018 = vdwg.mxu0
  %1019 = vrot.lane.b32.xlu0 %v142, 104
  %v1020 = vpop.permute.xlu0 %1019
  %1021 = vrot.lane.b32.xlu0 %v144, 72
  %v1022 = vpop.permute.xlu0 %1021
  %v1024 = vsel %vm158, %v1020, 0
  %v1027 = vsel %vm158, %v1022, 0
  %1029 = vmatprep.subr.bf16.mxu0 0
  %1030 = vmatpush1.bf16.xpose.msra.mxu0 %v1027
  %1031 = vmatprep.subr.bf16.mxu0 0
  %1032 = vmatpush1.bf16.xpose.msra.mxu0 0
  %1033 = vmatprep.subr.bf16.mxu0 0
  %1034 = vmatpush1.bf16.xpose.msra.mxu0 0
  %1035 = vmatprep.subr.bf16.mxu0 0
  %1036 = vmatpush1.bf16.xpose.msra.mxu0 0
  %1037 = vmatprep.subr.bf16.mxu0 0
  %1038 = vmatpush1.bf16.xpose.msra.mxu0 0
  %1039 = vmatprep.subr.bf16.mxu0 0
  %1040 = vmatpush1.bf16.xpose.msra.mxu0 0
  %1041 = vmatprep.subr.bf16.mxu0 0
  %1042 = vmatpush1.bf16.xpose.msra.mxu0 0
  %1043 = vmatprep.subr.bf16.mxu0 0
  %1044 = vmatpush1.bf16.xpose.msra.mxu0 0
  %1045 = vmatprep.subr.bf16.mxu0 0
  %1046 = vmatpush1.bf16.xpose.msra.mxu0 0
  %1047 = vmatprep.subr.bf16.mxu0 0
  %1048 = vmatpush1.bf16.xpose.msra.mxu0 0
  %1049 = vmatprep.subr.bf16.mxu0 0
  %1050 = vmatpush1.bf16.xpose.msra.mxu0 0
  %1051 = vmatprep.subr.bf16.mxu0 0
  %1052 = vmatpush1.bf16.xpose.msra.mxu0 0
  %1053 = vmatprep.subr.bf16.mxu0 0
  %1054 = vmatpush1.bf16.xpose.msra.mxu0 0
  %1055 = vmatprep.subr.bf16.mxu0 0
  %1056 = vmatpush1.bf16.xpose.msra.mxu0 0
  %1057 = vmatprep.subr.bf16.mxu0 0
  %1058 = vmatpush1.bf16.xpose.msra.mxu0 0
  %1059 = vmatprep.subr.bf16.mxu0 0
  %1060 = vmatpush1.bf16.xpose.msra.mxu0 0
  %1061 = vmatprep.mubr.bf16.mxu0 0
  %1062 = vmatmul.mubr.bf16.gmra.mrb[0].mxu0 %v1024
  %v1063 = vpop.f32.mrb[0].mxu0
  %v1064 = vadd.f32 %v152, %v1063
  %v1065 = vpop.f32.mrb[0].mxu0
  %v1066 = vpop.f32.mrb[0].mxu0
  %v1067 = vpop.f32.mrb[0].mxu0
  %1068 = vdwg.mxu0
  %v1069 = vsel %vm158, %v1014, -inf
  %1070 = vmax.xlane.f32.xlu0 %v1069
  %v1071 = vpop.xlane.xlu0 %1070
  %v1072 = vsel %vm158, %v1064, -inf
  %1073 = vmax.xlane.f32.xlu0 %v1072
  %v1074 = vpop.xlane.xlu0 %1073
  %v1075 = vsub.f32 %v1014, %v1071
  %v1076 = vsub.f32 %v1064, %v1074
  %v1077 = vmul.f32 %v1075, 1.442695
  %v1078 = vpow.pop %v1077
  %v1079 = vmul.f32 %v1076, 1.442695
  %v1080 = vpow.pop %v1079
  %v1081 = vsel %vm158, %v1078, 0.0
  %1082 = vadd.xlane.f32.xlu0 %v1081
  %v1083 = vpop.xlane.xlu0 %1082
  %v1084 = vsel %vm158, %v1080, 0.0
  %1085 = vadd.xlane.f32.xlu0 %v1084
  %v1086 = vpop.xlane.xlu0 %1085
  %v1087 = vrcp.pop %v1083
  %v1088 = vrcp.pop %v1086
  %v1089 = vmul.f32 %v1078, %v1087
  %v1090 = vmul.f32 %v1080, %v1088
  %v1091 = vpack.c.bf16 %v1089, %v1089
  %v1092 = vpack.c.bf16 %v1090, %v1090
  %1093 = vrot.lane.b32.xlu0 %v143, 40
  %v1094 = vpop.permute.xlu0 %1093
  %v1096 = vsel %vm158, %v1091, 0
  %v1099 = vsel %vm283, %v1094, 0
  %1101 = vmatprep.subr.bf16.mxu0 0
  %1102 = vmatpush1.bf16.msra.mxu0 %v1099
  %1103 = vmatprep.subr.bf16.mxu0 0
  %1104 = vmatpush1.bf16.msra.mxu0 0
  %1105 = vmatprep.subr.bf16.mxu0 0
  %1106 = vmatpush1.bf16.msra.mxu0 0
  %1107 = vmatprep.subr.bf16.mxu0 0
  %1108 = vmatpush1.bf16.msra.mxu0 0
  %1109 = vmatprep.subr.bf16.mxu0 0
  %1110 = vmatpush1.bf16.msra.mxu0 0
  %1111 = vmatprep.subr.bf16.mxu0 0
  %1112 = vmatpush1.bf16.msra.mxu0 0
  %1113 = vmatprep.subr.bf16.mxu0 0
  %1114 = vmatpush1.bf16.msra.mxu0 0
  %1115 = vmatprep.subr.bf16.mxu0 0
  %1116 = vmatpush1.bf16.msra.mxu0 0
  %1117 = vmatprep.subr.bf16.mxu0 0
  %1118 = vmatpush1.bf16.msra.mxu0 0
  %1119 = vmatprep.subr.bf16.mxu0 0
  %1120 = vmatpush1.bf16.msra.mxu0 0
  %1121 = vmatprep.subr.bf16.mxu0 0
  %1122 = vmatpush1.bf16.msra.mxu0 0
  %1123 = vmatprep.subr.bf16.mxu0 0
  %1124 = vmatpush1.bf16.msra.mxu0 0
  %1125 = vmatprep.subr.bf16.mxu0 0
  %1126 = vmatpush1.bf16.msra.mxu0 0
  %1127 = vmatprep.subr.bf16.mxu0 0
  %1128 = vmatpush1.bf16.msra.mxu0 0
  %1129 = vmatprep.subr.bf16.mxu0 0
  %1130 = vmatpush1.bf16.msra.mxu0 0
  %1131 = vmatprep.subr.bf16.mxu0 0
  %1132 = vmatpush1.bf16.msra.mxu0 0
  %1133 = vmatprep.mubr.bf16.mxu0 0
  %1134 = vmatmul.mubr.bf16.gmra.mrb[0].mxu0 %v1096
  %v1135 = vpop.f32.mrb[0].mxu0
  %v1136 = vadd.f32 0.0, %v1135
  %v1137 = vpop.f32.mrb[0].mxu0
  %v1138 = vpop.f32.mrb[0].mxu0
  %v1139 = vpop.f32.mrb[0].mxu0
  %1140 = vdwg.mxu0
  %1141 = vrot.lane.b32.xlu0 %v144, 40
  %v1142 = vpop.permute.xlu0 %1141
  %v1144 = vsel %vm158, %v1092, 0
  %v1147 = vsel %vm283, %v1142, 0
  %1149 = vmatprep.subr.bf16.mxu0 0
  %1150 = vmatpush1.bf16.msra.mxu0 %v1147
  %1151 = vmatprep.subr.bf16.mxu0 0
  %1152 = vmatpush1.bf16.msra.mxu0 0
  %1153 = vmatprep.subr.bf16.mxu0 0
  %1154 = vmatpush1.bf16.msra.mxu0 0
  %1155 = vmatprep.subr.bf16.mxu0 0
  %1156 = vmatpush1.bf16.msra.mxu0 0
  %1157 = vmatprep.subr.bf16.mxu0 0
  %1158 = vmatpush1.bf16.msra.mxu0 0
  %1159 = vmatprep.subr.bf16.mxu0 0
  %1160 = vmatpush1.bf16.msra.mxu0 0
  %1161 = vmatprep.subr.bf16.mxu0 0
  %1162 = vmatpush1.bf16.msra.mxu0 0
  %1163 = vmatprep.subr.bf16.mxu0 0
  %1164 = vmatpush1.bf16.msra.mxu0 0
  %1165 = vmatprep.subr.bf16.mxu0 0
  %1166 = vmatpush1.bf16.msra.mxu0 0
  %1167 = vmatprep.subr.bf16.mxu0 0
  %1168 = vmatpush1.bf16.msra.mxu0 0
  %1169 = vmatprep.subr.bf16.mxu0 0
  %1170 = vmatpush1.bf16.msra.mxu0 0
  %1171 = vmatprep.subr.bf16.mxu0 0
  %1172 = vmatpush1.bf16.msra.mxu0 0
  %1173 = vmatprep.subr.bf16.mxu0 0
  %1174 = vmatpush1.bf16.msra.mxu0 0
  %1175 = vmatprep.subr.bf16.mxu0 0
  %1176 = vmatpush1.bf16.msra.mxu0 0
  %1177 = vmatprep.subr.bf16.mxu0 0
  %1178 = vmatpush1.bf16.msra.mxu0 0
  %1179 = vmatprep.subr.bf16.mxu0 0
  %1180 = vmatpush1.bf16.msra.mxu0 0
  %1181 = vmatprep.mubr.bf16.mxu0 0
  %1182 = vmatmul.mubr.bf16.gmra.mrb[0].mxu0 %v1144
  %v1183 = vpop.f32.mrb[0].mxu0
  %v1184 = vadd.f32 0.0, %v1183
  %v1185 = vpop.f32.mrb[0].mxu0
  %v1186 = vpop.f32.mrb[0].mxu0
  %v1187 = vpop.f32.mrb[0].mxu0
  %1188 = vdwg.mxu0
  %v1189 = vpack.c.bf16 %v1184, %v1136
  %v1190 = vld [vmem:[%s4 + $0x18] sm:$0xff]
  %v1191 = vpack.c.bf16 %v1190, %v1190
  %v1193 = vsel %vm158, %v1189, 0
  %v1196 = vsel %vm283, %v1191, 0
  %1198 = vmatprep.subr.bf16.mxu0 0
  %1199 = vmatpush1.bf16.msra.mxu0 %v1196
  %1200 = vmatprep.subr.bf16.mxu0 0
  %1201 = vmatpush1.bf16.msra.mxu0 0
  %1202 = vmatprep.subr.bf16.mxu0 0
  %1203 = vmatpush1.bf16.msra.mxu0 0
  %1204 = vmatprep.subr.bf16.mxu0 0
  %1205 = vmatpush1.bf16.msra.mxu0 0
  %1206 = vmatprep.subr.bf16.mxu0 0
  %1207 = vmatpush1.bf16.msra.mxu0 0
  %1208 = vmatprep.subr.bf16.mxu0 0
  %1209 = vmatpush1.bf16.msra.mxu0 0
  %1210 = vmatprep.subr.bf16.mxu0 0
  %1211 = vmatpush1.bf16.msra.mxu0 0
  %1212 = vmatprep.subr.bf16.mxu0 0
  %1213 = vmatpush1.bf16.msra.mxu0 0
  %1214 = vmatprep.subr.bf16.mxu0 0
  %1215 = vmatpush1.bf16.msra.mxu0 0
  %1216 = vmatprep.subr.bf16.mxu0 0
  %1217 = vmatpush1.bf16.msra.mxu0 0
  %1218 = vmatprep.subr.bf16.mxu0 0
  %1219 = vmatpush1.bf16.msra.mxu0 0
  %1220 = vmatprep.subr.bf16.mxu0 0
  %1221 = vmatpush1.bf16.msra.mxu0 0
  %1222 = vmatprep.subr.bf16.mxu0 0
  %1223 = vmatpush1.bf16.msra.mxu0 0
  %1224 = vmatprep.subr.bf16.mxu0 0
  %1225 = vmatpush1.bf16.msra.mxu0 0
  %1226 = vmatprep.subr.bf16.mxu0 0
  %1227 = vmatpush1.bf16.msra.mxu0 0
  %1228 = vmatprep.subr.bf16.mxu0 0
  %1229 = vmatpush1.bf16.msra.mxu0 0
  %1230 = vmatprep.mubr.bf16.mxu0 0
  %1231 = vmatmul.mubr.bf16.gmra.mrb[0].mxu0 %v1193
  %v1232 = vpop.f32.mrb[0].mxu0
  %v1233 = vadd.f32 0.0, %v1232
  %v1234 = vpop.f32.mrb[0].mxu0
  %v1235 = vpop.f32.mrb[0].mxu0
  %v1236 = vadd.f32 0.0, %v1235
  %v1237 = vpop.f32.mrb[0].mxu0
  %1238 = vdwg.mxu0
  %v1239 = vadd.f32 %v967, %v1233
  %v1240 = vadd.f32 %v968, %v1236
  %v1241 = vld [vmem:[%s5] sm:$0x1]
  %v1243 = vlaneseq
  %v1244 = vshrl.u32 %v1243, 7
  %v1245 = vsub.s32 0, %v1244
  %v1246 = vrot.slane %v1241, %v1245
  %v1248 = vadd.f32 %v1239, %v1246
  %v1249 = vadd.f32 %v1240, %v1246
  %v1250 = vadd.f32 %v54, %v1248
  %v1251 = vadd.f32 %v55, %v1249
  %v1252 = vld [vmem:[%s6] sm:$0x1]
  %v1253 = vld [vmem:[%s7] sm:$0x1]
  %v1254 = vsel %vm94, %v1250, 0.0
  %1255 = vadd.xlane.f32.xlu0 %v1254
  %v1256 = vpop.xlane.xlu0 %1255
  %v1257 = vsel %vm94, %v1251, 0.0
  %1258 = vadd.xlane.f32.xlu0 %v1257
  %v1259 = vpop.xlane.xlu0 %1258
  %v1260 = vrcp.pop 32.0
  %v1261 = vmul.f32 %v1256, %v1260
  %v1262 = vmul.f32 %v1259, %v1260
  %v1263 = vsub.f32 %v1250, %v1261
  %v1264 = vsub.f32 %v1251, %v1262
  %v1265 = vmul.f32 %v1263, %v1263
  %v1266 = vmul.f32 %v1264, %v1264
  %v1267 = vsel %vm94, %v1265, 0.0
  %1268 = vadd.xlane.f32.xlu0 %v1267
  %v1269 = vpop.xlane.xlu0 %1268
  %v1270 = vsel %vm94, %v1266, 0.0
  %1271 = vadd.xlane.f32.xlu0 %v1270
  %v1272 = vpop.xlane.xlu0 %1271
  %v1273 = vmul.f32 %v1269, %v1260
  %v1274 = vmul.f32 %v1272, %v1260
  %v1275 = vadd.f32 %v1273, 1e-05
  %v1276 = vadd.f32 %v1274, 1e-05
  %v1277 = vrsqrt.pop %v1275
  %v1278 = vrsqrt.pop %v1276
  %v1279 = vmul.f32 %v1263, %v1277
  %v1280 = vmul.f32 %v1264, %v1278
  %v1282 = vlaneseq
  %v1283 = vshrl.u32 %v1282, 7
  %v1284 = vsub.s32 0, %v1283
  %v1285 = vrot.slane %v1252, %v1284
  %v1287 = vmul.f32 %v1279, %v1285
  %v1288 = vmul.f32 %v1280, %v1285
  %v1290 = vlaneseq
  %v1291 = vshrl.u32 %v1290, 7
  %v1292 = vsub.s32 0, %v1291
  %v1293 = vrot.slane %v1253, %v1292
  %v1295 = vadd.f32 %v1287, %v1293
  %v1296 = vadd.f32 %v1288, %v1293
  %v1297 = vpack.c.bf16 %v1296, %v1295
  %v1298 = vld [vmem:[%s8] sm:$0xff]
  %v1299 = vld [vmem:[%s8 + $0x8] sm:$0xff]
  %v1300 = vld [vmem:[%s8 + $0x10] sm:$0xff]
  %v1301 = vld [vmem:[%s8 + $0x18] sm:$0xff]
  %v1302 = vpack.c.bf16 %v1299, %v1298
  %v1303 = vpack.c.bf16 %v1301, %v1300
  %v1304 = vld [vmem:[%s9] sm:$0x1]
  %v1306 = vlaneseq
  %v1307 = vshrl.u32 %v1306, 7
  %v1308 = vsub.s32 0, %v1307
  %v1309 = vrot.slane %v1304, %v1308
  %v1312 = vsel %vm94, %v1297, 0
  %1314 = vmatprep.subr.bf16.mxu0 0
  %1315 = vmatpush1.bf16.msra.mxu0 %v1302
  %1316 = vmatprep.subr.bf16.mxu0 0
  %1317 = vmatpush1.bf16.msra.mxu0 %v1303
  %1318 = vmatprep.subr.bf16.mxu0 0
  %1319 = vmatpush1.bf16.msra.mxu0 0
  %1320 = vmatprep.subr.bf16.mxu0 0
  %1321 = vmatpush1.bf16.msra.mxu0 0
  %1322 = vmatprep.subr.bf16.mxu0 0
  %1323 = vmatpush1.bf16.msra.mxu0 0
  %1324 = vmatprep.subr.bf16.mxu0 0
  %1325 = vmatpush1.bf16.msra.mxu0 0
  %1326 = vmatprep.subr.bf16.mxu0 0
  %1327 = vmatpush1.bf16.msra.mxu0 0
  %1328 = vmatprep.subr.bf16.mxu0 0
  %1329 = vmatpush1.bf16.msra.mxu0 0
  %1330 = vmatprep.subr.bf16.mxu0 0
  %1331 = vmatpush1.bf16.msra.mxu0 0
  %1332 = vmatprep.subr.bf16.mxu0 0
  %1333 = vmatpush1.bf16.msra.mxu0 0
  %1334 = vmatprep.subr.bf16.mxu0 0
  %1335 = vmatpush1.bf16.msra.mxu0 0
  %1336 = vmatprep.subr.bf16.mxu0 0
  %1337 = vmatpush1.bf16.msra.mxu0 0
  %1338 = vmatprep.subr.bf16.mxu0 0
  %1339 = vmatpush1.bf16.msra.mxu0 0
  %1340 = vmatprep.subr.bf16.mxu0 0
  %1341 = vmatpush1.bf16.msra.mxu0 0
  %1342 = vmatprep.subr.bf16.mxu0 0
  %1343 = vmatpush1.bf16.msra.mxu0 0
  %1344 = vmatprep.subr.bf16.mxu0 0
  %1345 = vmatpush1.bf16.msra.mxu0 0
  %1346 = vmatprep.mubr.bf16.mxu0 0
  %1347 = vmatmul.mubr.bf16.gmra.mrb[0].mxu0 %v1312
  %v1348 = vpop.f32.mrb[0].mxu0
  %v1349 = vadd.f32 %v1309, %v1348
  %v1350 = vpop.f32.mrb[0].mxu0
  %v1351 = vpop.f32.mrb[0].mxu0
  %v1352 = vadd.f32 %v1309, %v1351
  %v1353 = vpop.f32.mrb[0].mxu0
  %1354 = vdwg.mxu0
  %v1355 = vmax.f32 %v1349, 0.0
  %v1356 = vmax.f32 %v1352, 0.0
  %v1357 = vpack.c.bf16 %v1356, %v1355
  %v1358 = vld [vmem:[%s10] sm:$0xff]
  %v1359 = vld [vmem:[%s10 + $0x8] sm:$0xff]
  %v1360 = vld [vmem:[%s10 + $0x10] sm:$0xff]
  %v1361 = vld [vmem:[%s10 + $0x18] sm:$0xff]
  %v1362 = vld [vmem:[%s10 + $0x20] sm:$0xff]
  %v1363 = vld [vmem:[%s10 + $0x28] sm:$0xff]
  %v1364 = vld [vmem:[%s10 + $0x30] sm:$0xff]
  %v1365 = vld [vmem:[%s10 + $0x38] sm:$0xff]
  %v1366 = vpack.c.bf16 %v1359, %v1358
  %v1367 = vpack.c.bf16 %v1361, %v1360
  %v1368 = vpack.c.bf16 %v1363, %v1362
  %v1369 = vpack.c.bf16 %v1365, %v1364
  %v1370 = vld [vmem:[%s11] sm:$0x1]
  %v1372 = vlaneseq
  %v1373 = vshrl.u32 %v1372, 7
  %v1374 = vsub.s32 0, %v1373
  %v1375 = vrot.slane %v1370, %v1374
  %vm1377 = vcmask 523264
  %v1379 = vsel %vm1377, %v1357, 0
  %1381 = vmatprep.subr.bf16.mxu0 0
  %1382 = vmatpush1.bf16.msra.mxu0 %v1366
  %1383 = vmatprep.subr.bf16.mxu0 0
  %1384 = vmatpush1.bf16.msra.mxu0 %v1367
  %1385 = vmatprep.subr.bf16.mxu0 0
  %1386 = vmatpush1.bf16.msra.mxu0 %v1368
  %1387 = vmatprep.subr.bf16.mxu0 0
  %1388 = vmatpush1.bf16.msra.mxu0 %v1369
  %1389 = vmatprep.subr.bf16.mxu0 0
  %1390 = vmatpush1.bf16.msra.mxu0 0
  %1391 = vmatprep.subr.bf16.mxu0 0
  %1392 = vmatpush1.bf16.msra.mxu0 0
  %1393 = vmatprep.subr.bf16.mxu0 0
  %1394 = vmatpush1.bf16.msra.mxu0 0
  %1395 = vmatprep.subr.bf16.mxu0 0
  %1396 = vmatpush1.bf16.msra.mxu0 0
  %1397 = vmatprep.subr.bf16.mxu0 0
  %1398 = vmatpush1.bf16.msra.mxu0 0
  %1399 = vmatprep.subr.bf16.mxu0 0
  %1400 = vmatpush1.bf16.msra.mxu0 0
  %1401 = vmatprep.subr.bf16.mxu0 0
  %1402 = vmatpush1.bf16.msra.mxu0 0
  %1403 = vmatprep.subr.bf16.mxu0 0
  %1404 = vmatpush1.bf16.msra.mxu0 0
  %1405 = vmatprep.subr.bf16.mxu0 0
  %1406 = vmatpush1.bf16.msra.mxu0 0
  %1407 = vmatprep.subr.bf16.mxu0 0
  %1408 = vmatpush1.bf16.msra.mxu0 0
  %1409 = vmatprep.subr.bf16.mxu0 0
  %1410 = vmatpush1.bf16.msra.mxu0 0
  %1411 = vmatprep.subr.bf16.mxu0 0
  %1412 = vmatpush1.bf16.msra.mxu0 0
  %1413 = vmatprep.mubr.bf16.mxu0 0
  %1414 = vmatmul.mubr.bf16.gmra.mrb[0].mxu0 %v1379
  %v1415 = vpop.f32.mrb[0].mxu0
  %v1416 = vadd.f32 %v1375, %v1415
  %v1417 = vpop.f32.mrb[0].mxu0
  %v1418 = vpop.f32.mrb[0].mxu0
  %v1419 = vadd.f32 %v1375, %v1418
  %v1420 = vpop.f32.mrb[0].mxu0
  %1421 = vdwg.mxu0
  %v1422 = vadd.f32 %v1295, %v1416
  %v1423 = vadd.f32 %v1296, %v1419
  %v1424 = vld [vmem:[%s12] sm:$0x1]
  %v1425 = vld [vmem:[%s13] sm:$0x1]
  %v1426 = vsel %vm94, %v1422, 0.0
  %1427 = vadd.xlane.f32.xlu0 %v1426
  %v1428 = vpop.xlane.xlu0 %1427
  %v1429 = vsel %vm94, %v1423, 0.0
  %1430 = vadd.xlane.f32.xlu0 %v1429
  %v1431 = vpop.xlane.xlu0 %1430
  %v1432 = vmul.f32 %v1428, %v1260
  %v1433 = vmul.f32 %v1431, %v1260
  %v1434 = vsub.f32 %v1422, %v1432
  %v1435 = vsub.f32 %v1423, %v1433
  %v1436 = vmul.f32 %v1434, %v1434
  %v1437 = vmul.f32 %v1435, %v1435
  %v1438 = vsel %vm94, %v1436, 0.0
  %1439 = vadd.xlane.f32.xlu0 %v1438
  %v1440 = vpop.xlane.xlu0 %1439
  %v1441 = vsel %vm94, %v1437, 0.0
  %1442 = vadd.xlane.f32.xlu0 %v1441
  %v1443 = vpop.xlane.xlu0 %1442
  %v1444 = vmul.f32 %v1440, %v1260
  %v1445 = vmul.f32 %v1443, %v1260
  %v1446 = vadd.f32 %v1444, 1e-05
  %v1447 = vadd.f32 %v1445, 1e-05
  %v1448 = vrsqrt.pop %v1446
  %v1449 = vrsqrt.pop %v1447
  %v1450 = vmul.f32 %v1434, %v1448
  %v1451 = vmul.f32 %v1435, %v1449
  %v1453 = vlaneseq
  %v1454 = vshrl.u32 %v1453, 7
  %v1455 = vsub.s32 0, %v1454
  %v1456 = vrot.slane %v1424, %v1455
  %v1458 = vmul.f32 %v1450, %v1456
  %v1459 = vmul.f32 %v1451, %v1456
  %v1461 = vlaneseq
  %v1462 = vshrl.u32 %v1461, 7
  %v1463 = vsub.s32 0, %v1462
  %v1464 = vrot.slane %v1425, %v1463
  %v1466 = vadd.f32 %v1458, %v1464
  %v1467 = vadd.f32 %v1459, %v1464
  %v1468 = vld [vmem:[%s14] sm:$0x1]
  %v1469 = vld [vmem:[%s15] sm:$0x1]
  %v1470 = vsel %vm94, %v1466, 0.0
  %1471 = vadd.xlane.f32.xlu0 %v1470
  %v1472 = vpop.xlane.xlu0 %1471
  %v1473 = vsel %vm94, %v1467, 0.0
  %1474 = vadd.xlane.f32.xlu0 %v1473
  %v1475 = vpop.xlane.xlu0 %1474
  %v1476 = vmul.f32 %v1472, %v1260
  %v1477 = vmul.f32 %v1475, %v1260
  %v1478 = vsub.f32 %v1466, %v1476
  %v1479 = vsub.f32 %v1467, %v1477
  %v1480 = vmul.f32 %v1478, %v1478
  %v1481 = vmul.f32 %v1479, %v1479
  %v1482 = vsel %vm94, %v1480, 0.0
  %1483 = vadd.xlane.f32.xlu0 %v1482
  %v1484 = vpop.xlane.xlu0 %1483
  %v1485 = vsel %vm94, %v1481, 0.0
  %1486 = vadd.xlane.f32.xlu0 %v1485
  %v1487 = vpop.xlane.xlu0 %1486
  %v1488 = vmul.f32 %v1484, %v1260
  %v1489 = vmul.f32 %v1487, %v1260
  %v1490 = vadd.f32 %v1488, 1e-05
  %v1491 = vadd.f32 %v1489, 1e-05
  %v1492 = vrsqrt.pop %v1490
  %v1493 = vrsqrt.pop %v1491
  %v1494 = vmul.f32 %v1478, %v1492
  %v1495 = vmul.f32 %v1479, %v1493
  %v1497 = vlaneseq
  %v1498 = vshrl.u32 %v1497, 7
  %v1499 = vsub.s32 0, %v1498
  %v1500 = vrot.slane %v1468, %v1499
  %v1502 = vmul.f32 %v1494, %v1500
  %v1503 = vmul.f32 %v1495, %v1500
  %v1505 = vlaneseq
  %v1506 = vshrl.u32 %v1505, 7
  %v1507 = vsub.s32 0, %v1506
  %v1508 = vrot.slane %v1469, %v1507
  %v1510 = vadd.f32 %v1502, %v1508
  %v1511 = vadd.f32 %v1503, %v1508
  %v1512 = vsel %vm94, %v1510, 0.0
  %v1513 = vsel %vm94, %v1511, 0.0
  %1514 = vst [vmem:[%s16] sm:$0xff] %v1512
  %1515 = vst [vmem:[%s16 + $0x8] sm:$0xff] %v1513
  // Predicated region
  $region66: #{transformer_forward.6} parent=0 // pred_check
    _
  $region67: #{transformer_forward.6} parent=0 // pred_check_branch
    %1517 = sbr.rel (0) target = $region69
  $region68: #{transformer_forward.6} parent=0 // pred_region
    _
  $region69: #{transformer_forward.6} parent=0 // pred_fallthru
    _
  // Predicated region
  $region70: #{transformer_forward.6} parent=0 // pred_check
    _
  $region71: #{transformer_forward.6} parent=0 // pred_check_branch
    %1519 = sbr.rel (0) target = $region73
  $region72: #{transformer_forward.6} parent=0 // pred_region
    _
  $region73: #{transformer_forward.6} parent=0 // pred_fallthru
    _

// kernel: transformer_forward.7
$region0: #{transformer_forward.7}
  #allocation0 [shape = 'u32[]', space=smem, size = 0x4, offset = 0x4, fixed_abs, tag = 'smem constant byte address 0x4 - core index']
  #allocation1 [shape = 'u32[144,128]{1,0:T(1,128)}', space=vmem, size = 0x12000, scoped, tag = 'internal scratch']
  %s0 = inlined_call_operand.vmem [shape: f32[16,128], index: 0, kind: input, shape index: {}]
  %s1 = inlined_call_operand.vmem [shape: f32[16,128], index: 1, kind: input, shape index: {}]
  %s2 = inlined_call_operand.vmem [shape: f32[2,8], index: 2, kind: input, shape index: {}]
  %s3 = inlined_call_operand.vmem [shape: f32[32,96], index: 3, kind: input, shape index: {}]
  %s4 = inlined_call_operand.vmem [shape: f32[1,96], index: 4, kind: input, shape index: {}]
  %s5 = inlined_call_operand.vmem [shape: f32[32,32], index: 5, kind: input, shape index: {}]
  %s6 = inlined_call_operand.vmem [shape: f32[1,32], index: 6, kind: input, shape index: {}]
  %s7 = inlined_call_operand.vmem [shape: f32[1,32], index: 7, kind: input, shape index: {}]
  %s8 = inlined_call_operand.vmem [shape: f32[1,32], index: 8, kind: input, shape index: {}]
  %s9 = inlined_call_operand.vmem [shape: f32[32,32], index: 9, kind: input, shape index: {}]
  %s10 = inlined_call_operand.vmem [shape: f32[1,32], index: 10, kind: input, shape index: {}]
  %s11 = inlined_call_operand.vmem [shape: f32[32,64], index: 11, kind: input, shape index: {}]
  %s12 = inlined_call_operand.vmem [shape: f32[1,64], index: 12, kind: input, shape index: {}]
  %s13 = inlined_call_operand.vmem [shape: f32[32,32], index: 13, kind: input, shape index: {}]
  %s14 = inlined_call_operand.vmem [shape: f32[1,32], index: 14, kind: input, shape index: {}]
  %s15 = inlined_call_operand.vmem [shape: f32[1,32], index: 15, kind: input, shape index: {}]
  %s16 = inlined_call_operand.vmem [shape: f32[1,32], index: 16, kind: input, shape index: {}]
  %s17 = inlined_call_operand.vmem [shape: f32[32,64], index: 17, kind: input, shape index: {}]
  %s18 = inlined_call_operand.vmem [shape: f32[1,64], index: 18, kind: input, shape index: {}]
  %s19 = inlined_call_operand.vmem [shape: f32[64,32], index: 19, kind: input, shape index: {}]
  %s20 = inlined_call_operand.vmem [shape: f32[1,32], index: 20, kind: input, shape index: {}]
  %s21 = inlined_call_operand.vmem [shape: f32[1,32], index: 21, kind: input, shape index: {}]
  %s22 = inlined_call_operand.vmem [shape: f32[1,32], index: 22, kind: input, shape index: {}]
  %s23 = inlined_call_operand.vmem [shape: f32[16,128], index: 23, kind: output, shape index: {}]
  %s24 = sld [smem:[#allocation0]]
  $region102: #{transformer_forward.7} parent=0
    _
  %s26 = ssub.s32 1, %s24
  %s27 = scalar_select 0, %s26, %s24
  // Predicated region
  $region2: #{transformer_forward.7} parent=0 // pred_check
    _
  $region3: #{transformer_forward.7} parent=0 // pred_check_branch
    %29 = sbr.rel (0) target = $region5
  $region4: #{transformer_forward.7} parent=0 // pred_region
    _
  $region5: #{transformer_forward.7} parent=0 // pred_fallthru
    _
  // Predicated region
  $region6: #{transformer_forward.7} parent=0 // pred_check
    _
  $region7: #{transformer_forward.7} parent=0 // pred_check_branch
    %31 = sbr.rel (0) target = $region9
  $region8: #{transformer_forward.7} parent=0 // pred_region
    _
  $region9: #{transformer_forward.7} parent=0 // pred_fallthru
    _
  // Predicated region
  $region10: #{transformer_forward.7} parent=0 // pred_check
    _
  $region11: #{transformer_forward.7} parent=0 // pred_check_branch
    %33 = sbr.rel (0) target = $region13
  $region12: #{transformer_forward.7} parent=0 // pred_region
    _
  $region13: #{transformer_forward.7} parent=0 // pred_fallthru
    _
  // Predicated region
  $region14: #{transformer_forward.7} parent=0 // pred_check
    _
  $region15: #{transformer_forward.7} parent=0 // pred_check_branch
    %35 = sbr.rel (0) target = $region17
  $region16: #{transformer_forward.7} parent=0 // pred_region
    _
  $region17: #{transformer_forward.7} parent=0 // pred_fallthru
    _
  // Predicated region
  $region18: #{transformer_forward.7} parent=0 // pred_check
    _
  $region19: #{transformer_forward.7} parent=0 // pred_check_branch
    %37 = sbr.rel (0) target = $region21
  $region20: #{transformer_forward.7} parent=0 // pred_region
    _
  $region21: #{transformer_forward.7} parent=0 // pred_fallthru
    _
  // Predicated region
  $region22: #{transformer_forward.7} parent=0 // pred_check
    _
  $region23: #{transformer_forward.7} parent=0 // pred_check_branch
    %39 = sbr.rel (0) target = $region25
  $region24: #{transformer_forward.7} parent=0 // pred_region
    _
  $region25: #{transformer_forward.7} parent=0 // pred_fallthru
    _
  // Predicated region
  $region26: #{transformer_forward.7} parent=0 // pred_check
    _
  $region27: #{transformer_forward.7} parent=0 // pred_check_branch
    %41 = sbr.rel (0) target = $region29
  $region28: #{transformer_forward.7} parent=0 // pred_region
    _
  $region29: #{transformer_forward.7} parent=0 // pred_fallthru
    _
  // Predicated region
  $region30: #{transformer_forward.7} parent=0 // pred_check
    _
  $region31: #{transformer_forward.7} parent=0 // pred_check_branch
    %43 = sbr.rel (0) target = $region33
  $region32: #{transformer_forward.7} parent=0 // pred_region
    _
  $region33: #{transformer_forward.7} parent=0 // pred_fallthru
    _
  // Predicated region
  $region34: #{transformer_forward.7} parent=0 // pred_check
    _
  $region35: #{transformer_forward.7} parent=0 // pred_check_branch
    %45 = sbr.rel (0) target = $region37
  $region36: #{transformer_forward.7} parent=0 // pred_region
    _
  $region37: #{transformer_forward.7} parent=0 // pred_fallthru
    _
  // Predicated region
  $region38: #{transformer_forward.7} parent=0 // pred_check
    _
  $region39: #{transformer_forward.7} parent=0 // pred_check_branch
    %47 = sbr.rel (0) target = $region41
  $region40: #{transformer_forward.7} parent=0 // pred_region
    _
  $region41: #{transformer_forward.7} parent=0 // pred_fallthru
    _
  // Predicated region
  $region42: #{transformer_forward.7} parent=0 // pred_check
    _
  $region43: #{transformer_forward.7} parent=0 // pred_check_branch
    %49 = sbr.rel (0) target = $region45
  $region44: #{transformer_forward.7} parent=0 // pred_region
    _
  $region45: #{transformer_forward.7} parent=0 // pred_fallthru
    _
  // Predicated region
  $region46: #{transformer_forward.7} parent=0 // pred_check
    _
  $region47: #{transformer_forward.7} parent=0 // pred_check_branch
    %51 = sbr.rel (0) target = $region49
  $region48: #{transformer_forward.7} parent=0 // pred_region
    _
  $region49: #{transformer_forward.7} parent=0 // pred_fallthru
    _
  // Predicated region
  $region50: #{transformer_forward.7} parent=0 // pred_check
    _
  $region51: #{transformer_forward.7} parent=0 // pred_check_branch
    %53 = sbr.rel (0) target = $region53
  $region52: #{transformer_forward.7} parent=0 // pred_region
    _
  $region53: #{transformer_forward.7} parent=0 // pred_fallthru
    _
  // Predicated region
  $region54: #{transformer_forward.7} parent=0 // pred_check
    _
  $region55: #{transformer_forward.7} parent=0 // pred_check_branch
    %55 = sbr.rel (0) target = $region57
  $region56: #{transformer_forward.7} parent=0 // pred_region
    _
  $region57: #{transformer_forward.7} parent=0 // pred_fallthru
    _
  // Predicated region
  $region58: #{transformer_forward.7} parent=0 // pred_check
    _
  $region59: #{transformer_forward.7} parent=0 // pred_check_branch
    %57 = sbr.rel (0) target = $region61
  $region60: #{transformer_forward.7} parent=0 // pred_region
    _
  $region61: #{transformer_forward.7} parent=0 // pred_fallthru
    _
  // Predicated region
  $region62: #{transformer_forward.7} parent=0 // pred_check
    _
  $region63: #{transformer_forward.7} parent=0 // pred_check_branch
    %59 = sbr.rel (0) target = $region65
  $region64: #{transformer_forward.7} parent=0 // pred_region
    _
  $region65: #{transformer_forward.7} parent=0 // pred_fallthru
    _
  // Predicated region
  $region66: #{transformer_forward.7} parent=0 // pred_check
    _
  $region67: #{transformer_forward.7} parent=0 // pred_check_branch
    %61 = sbr.rel (0) target = $region69
  $region68: #{transformer_forward.7} parent=0 // pred_region
    _
  $region69: #{transformer_forward.7} parent=0 // pred_fallthru
    _
  // Predicated region
  $region70: #{transformer_forward.7} parent=0 // pred_check
    _
  $region71: #{transformer_forward.7} parent=0 // pred_check_branch
    %63 = sbr.rel (0) target = $region73
  $region72: #{transformer_forward.7} parent=0 // pred_region
    _
  $region73: #{transformer_forward.7} parent=0 // pred_fallthru
    _
  // Predicated region
  $region74: #{transformer_forward.7} parent=0 // pred_check
    _
  $region75: #{transformer_forward.7} parent=0 // pred_check_branch
    %65 = sbr.rel (0) target = $region77
  $region76: #{transformer_forward.7} parent=0 // pred_region
    _
  $region77: #{transformer_forward.7} parent=0 // pred_fallthru
    _
  // Predicated region
  $region78: #{transformer_forward.7} parent=0 // pred_check
    _
  $region79: #{transformer_forward.7} parent=0 // pred_check_branch
    %67 = sbr.rel (0) target = $region81
  $region80: #{transformer_forward.7} parent=0 // pred_region
    _
  $region81: #{transformer_forward.7} parent=0 // pred_fallthru
    _
  // Predicated region
  $region82: #{transformer_forward.7} parent=0 // pred_check
    _
  $region83: #{transformer_forward.7} parent=0 // pred_check_branch
    %69 = sbr.rel (0) target = $region85
  $region84: #{transformer_forward.7} parent=0 // pred_region
    _
  $region85: #{transformer_forward.7} parent=0 // pred_fallthru
    _
  // Predicated region
  $region86: #{transformer_forward.7} parent=0 // pred_check
    _
  $region87: #{transformer_forward.7} parent=0 // pred_check_branch
    %71 = sbr.rel (0) target = $region89
  $region88: #{transformer_forward.7} parent=0 // pred_region
    _
  $region89: #{transformer_forward.7} parent=0 // pred_fallthru
    _
  // Predicated region
  $region90: #{transformer_forward.7} parent=0 // pred_check
    _
  $region91: #{transformer_forward.7} parent=0 // pred_check_branch
    %73 = sbr.rel (0) target = $region93
  $region92: #{transformer_forward.7} parent=0 // pred_region
    _
  $region93: #{transformer_forward.7} parent=0 // pred_fallthru
    _
  %v75 = vld [vmem:[%s0] sm:$0xff]
  %v76 = vld [vmem:[%s0 + $0x8] sm:$0xff]
  %v77 = vld [vmem:[%s1] sm:$0xff]
  %v78 = vld [vmem:[%s1 + $0x8] sm:$0xff]
  %v79 = vlaneseq
  %v80 = vshrl.u32 %v79, 7
  %v81 = vlaneseq
  %v82 = vand.u32 %v81, 127
  %vm83 = vcmp.gt.s32.totalorder %v82, %v80
  %v84 = vsel %vm83, -1e+09, 0.0
  %v85 = vld [vmem:[%s2] sm:$0x3]
  %v88 = vunpack.c.l.s4 1966171168
  %v89 = vunpack.c.0.s8 %v88
  %v90 = vlaneseq
  %v91 = vshrl.u32 %v90, 7
  %v92 = vsub.s32 %v89, %v91
  %v93 = vrot.slane %v85, %v92
  %v94 = vcombine.high %v93, %v93
  %v96 = vunpack.c.l.s4 1966171168
  %v97 = vunpack.c.0.s8 %v96
  %v98 = vlaneseq
  %v99 = vshrl.u32 %v98, 7
  %v100 = vsub.s32 %v97, %v99
  %v101 = vrot.slane %v93, %v100
  %v103 = vunpack.c.l.s4 1966171168
  %v104 = vunpack.c.0.s8 %v103
  %v105 = vlaneseq
  %v106 = vshrl.u32 %v105, 7
  %v107 = vsub.s32 %v104, %v106
  %v108 = vrot.slane %v94, %v107
  %v109 = vlaneseq
  %v110 = vshrl.u32 %v109, 7
  %v111 = vsub.s32 0, %v110
  %v112 = vrot.slane %v101, %v111
  %v113 = vlaneseq
  %v114 = vshrl.u32 %v113, 7
  %v115 = vsub.s32 0, %v114
  %v116 = vrot.slane %v108, %v115
  %v119 = vadd.f32 %v84, %v112
  %v120 = vadd.f32 %v84, %v116
  %v121 = vpack.c.bf16 %v76, %v75
  %v122 = vld [vmem:[%s3] sm:$0xff]
  %v123 = vld [vmem:[%s3 + $0x8] sm:$0xff]
  %v124 = vld [vmem:[%s3 + $0x10] sm:$0xff]
  %v125 = vld [vmem:[%s3 + $0x18] sm:$0xff]
  %v126 = vpack.c.bf16 %v123, %v122
  %v127 = vpack.c.bf16 %v125, %v124
  %v128 = vld [vmem:[%s4] sm:$0x1]
  %v130 = vlaneseq
  %v131 = vshrl.u32 %v130, 7
  %v132 = vsub.s32 0, %v131
  %v133 = vrot.slane %v128, %v132
  %vm135 = vcmask 261120
  %v137 = vsel %vm135, %v121, 0
  %139 = vmatprep.subr.bf16.mxu0 0
  %140 = vmatpush1.bf16.msra.mxu0 %v126
  %141 = vmatprep.subr.bf16.mxu0 0
  %142 = vmatpush1.bf16.msra.mxu0 %v127
  %143 = vmatprep.subr.bf16.mxu0 0
  %144 = vmatpush1.bf16.msra.mxu0 0
  %145 = vmatprep.subr.bf16.mxu0 0
  %146 = vmatpush1.bf16.msra.mxu0 0
  %147 = vmatprep.subr.bf16.mxu0 0
  %148 = vmatpush1.bf16.msra.mxu0 0
  %149 = vmatprep.subr.bf16.mxu0 0
  %150 = vmatpush1.bf16.msra.mxu0 0
  %151 = vmatprep.subr.bf16.mxu0 0
  %152 = vmatpush1.bf16.msra.mxu0 0
  %153 = vmatprep.subr.bf16.mxu0 0
  %154 = vmatpush1.bf16.msra.mxu0 0
  %155 = vmatprep.subr.bf16.mxu0 0
  %156 = vmatpush1.bf16.msra.mxu0 0
  %157 = vmatprep.subr.bf16.mxu0 0
  %158 = vmatpush1.bf16.msra.mxu0 0
  %159 = vmatprep.subr.bf16.mxu0 0
  %160 = vmatpush1.bf16.msra.mxu0 0
  %161 = vmatprep.subr.bf16.mxu0 0
  %162 = vmatpush1.bf16.msra.mxu0 0
  %163 = vmatprep.subr.bf16.mxu0 0
  %164 = vmatpush1.bf16.msra.mxu0 0
  %165 = vmatprep.subr.bf16.mxu0 0
  %166 = vmatpush1.bf16.msra.mxu0 0
  %167 = vmatprep.subr.bf16.mxu0 0
  %168 = vmatpush1.bf16.msra.mxu0 0
  %169 = vmatprep.subr.bf16.mxu0 0
  %170 = vmatpush1.bf16.msra.mxu0 0
  %171 = vmatprep.mubr.bf16.mxu0 0
  %172 = vmatmul.mubr.bf16.gmra.mrb[0].mxu0 %v137
  %v173 = vpop.f32.mrb[0].mxu0
  %v174 = vadd.f32 %v133, %v173
  %v175 = vpop.f32.mrb[0].mxu0
  %v176 = vpop.f32.mrb[0].mxu0
  %v177 = vadd.f32 %v133, %v176
  %v178 = vpop.f32.mrb[0].mxu0
  %179 = vdwg.mxu0
  %v180 = vmul.f32 %v174, 0.35355338
  %v181 = vmul.f32 %v177, 0.35355338
  %v182 = vpack.c.bf16 %v180, %v180
  %v183 = vpack.c.bf16 %v181, %v181
  %v184 = vpack.c.bf16 %v174, %v174
  %v185 = vpack.c.bf16 %v177, %v177
  %187 = vrot.lane.b32.xlu0 %v184, 96
  %v188 = vpop.permute.xlu0 %187
  %vm189 = vcmask 64512
  %v191 = vsel %vm189, %v182, 0
  %v194 = vsel %vm189, %v188, 0
  %196 = vmatprep.subr.bf16.mxu0 0
  %197 = vmatpush1.bf16.xpose.msra.mxu0 %v194
  %198 = vmatprep.subr.bf16.mxu0 0
  %199 = vmatpush1.bf16.xpose.msra.mxu0 0
  %200 = vmatprep.subr.bf16.mxu0 0
  %201 = vmatpush1.bf16.xpose.msra.mxu0 0
  %202 = vmatprep.subr.bf16.mxu0 0
  %203 = vmatpush1.bf16.xpose.msra.mxu0 0
  %204 = vmatprep.subr.bf16.mxu0 0
  %205 = vmatpush1.bf16.xpose.msra.mxu0 0
  %206 = vmatprep.subr.bf16.mxu0 0
  %207 = vmatpush1.bf16.xpose.msra.mxu0 0
  %208 = vmatprep.subr.bf16.mxu0 0
  %209 = vmatpush1.bf16.xpose.msra.mxu0 0
  %210 = vmatprep.subr.bf16.mxu0 0
  %211 = vmatpush1.bf16.xpose.msra.mxu0 0
  %212 = vmatprep.subr.bf16.mxu0 0
  %213 = vmatpush1.bf16.xpose.msra.mxu0 0
  %214 = vmatprep.subr.bf16.mxu0 0
  %215 = vmatpush1.bf16.xpose.msra.mxu0 0
  %216 = vmatprep.subr.bf16.mxu0 0
  %217 = vmatpush1.bf16.xpose.msra.mxu0 0
  %218 = vmatprep.subr.bf16.mxu0 0
  %219 = vmatpush1.bf16.xpose.msra.mxu0 0
  %220 = vmatprep.subr.bf16.mxu0 0
  %221 = vmatpush1.bf16.xpose.msra.mxu0 0
  %222 = vmatprep.subr.bf16.mxu0 0
  %223 = vmatpush1.bf16.xpose.msra.mxu0 0
  %224 = vmatprep.subr.bf16.mxu0 0
  %225 = vmatpush1.bf16.xpose.msra.mxu0 0
  %226 = vmatprep.subr.bf16.mxu0 0
  %227 = vmatpush1.bf16.xpose.msra.mxu0 0
  %228 = vmatprep.mubr.bf16.mxu0 0
  %229 = vmatmul.mubr.bf16.gmra.mrb[0].mxu0 %v191
  %v230 = vpop.f32.mrb[0].mxu0
  %v231 = vadd.f32 %v119, %v230
  %v232 = vpop.f32.mrb[0].mxu0
  %v233 = vpop.f32.mrb[0].mxu0
  %v234 = vpop.f32.mrb[0].mxu0
  %235 = vdwg.mxu0
  %237 = vrot.lane.b32.xlu0 %v185, 96
  %v238 = vpop.permute.xlu0 %237
  %v240 = vsel %vm189, %v183, 0
  %v243 = vsel %vm189, %v238, 0
  %245 = vmatprep.subr.bf16.mxu0 0
  %246 = vmatpush1.bf16.xpose.msra.mxu0 %v243
  %247 = vmatprep.subr.bf16.mxu0 0
  %248 = vmatpush1.bf16.xpose.msra.mxu0 0
  %249 = vmatprep.subr.bf16.mxu0 0
  %250 = vmatpush1.bf16.xpose.msra.mxu0 0
  %251 = vmatprep.subr.bf16.mxu0 0
  %252 = vmatpush1.bf16.xpose.msra.mxu0 0
  %253 = vmatprep.subr.bf16.mxu0 0
  %254 = vmatpush1.bf16.xpose.msra.mxu0 0
  %255 = vmatprep.subr.bf16.mxu0 0
  %256 = vmatpush1.bf16.xpose.msra.mxu0 0
  %257 = vmatprep.subr.bf16.mxu0 0
  %258 = vmatpush1.bf16.xpose.msra.mxu0 0
  %259 = vmatprep.subr.bf16.mxu0 0
  %260 = vmatpush1.bf16.xpose.msra.mxu0 0
  %261 = vmatprep.subr.bf16.mxu0 0
  %262 = vmatpush1.bf16.xpose.msra.mxu0 0
  %263 = vmatprep.subr.bf16.mxu0 0
  %264 = vmatpush1.bf16.xpose.msra.mxu0 0
  %265 = vmatprep.subr.bf16.mxu0 0
  %266 = vmatpush1.bf16.xpose.msra.mxu0 0
  %267 = vmatprep.subr.bf16.mxu0 0
  %268 = vmatpush1.bf16.xpose.msra.mxu0 0
  %269 = vmatprep.subr.bf16.mxu0 0
  %270 = vmatpush1.bf16.xpose.msra.mxu0 0
  %271 = vmatprep.subr.bf16.mxu0 0
  %272 = vmatpush1.bf16.xpose.msra.mxu0 0
  %273 = vmatprep.subr.bf16.mxu0 0
  %274 = vmatpush1.bf16.xpose.msra.mxu0 0
  %275 = vmatprep.subr.bf16.mxu0 0
  %276 = vmatpush1.bf16.xpose.msra.mxu0 0
  %277 = vmatprep.mubr.bf16.mxu0 0
  %278 = vmatmul.mubr.bf16.gmra.mrb[0].mxu0 %v240
  %v279 = vpop.f32.mrb[0].mxu0
  %v280 = vadd.f32 %v120, %v279
  %v281 = vpop.f32.mrb[0].mxu0
  %v282 = vpop.f32.mrb[0].mxu0
  %v283 = vpop.f32.mrb[0].mxu0
  %284 = vdwg.mxu0
  %v285 = vsel %vm189, %v231, -inf
  %286 = vmax.xlane.f32.xlu0 %v285
  %v287 = vpop.xlane.xlu0 %286
  %v288 = vsel %vm189, %v280, -inf
  %289 = vmax.xlane.f32.xlu0 %v288
  %v290 = vpop.xlane.xlu0 %289
  %v291 = vsub.f32 %v231, %v287
  %v292 = vsub.f32 %v280, %v290
  %v293 = vmul.f32 %v291, 1.442695
  %v294 = vpow.pop %v293
  %v295 = vmul.f32 %v292, 1.442695
  %v296 = vpow.pop %v295
  %v297 = vsel %vm189, %v294, 0.0
  %298 = vadd.xlane.f32.xlu0 %v297
  %v299 = vpop.xlane.xlu0 %298
  %v300 = vsel %vm189, %v296, 0.0
  %301 = vadd.xlane.f32.xlu0 %v300
  %v302 = vpop.xlane.xlu0 %301
  %v303 = vrcp.pop %v299
  %v304 = vrcp.pop %v302
  %v305 = vmul.f32 %v294, %v303
  %v306 = vmul.f32 %v296, %v304
  %v307 = vpack.c.bf16 %v305, %v305
  %v308 = vpack.c.bf16 %v306, %v306
  %309 = vrot.lane.b32.xlu0 %v184, 64
  %v310 = vpop.permute.xlu0 %309
  %v312 = vsel %vm189, %v307, 0
  %vm314 = vcmask 1043456
  %v316 = vsel %vm314, %v310, 0
  %318 = vmatprep.subr.bf16.mxu0 0
  %319 = vmatpush1.bf16.msra.mxu0 %v316
  %320 = vmatprep.subr.bf16.mxu0 0
  %321 = vmatpush1.bf16.msra.mxu0 0
  %322 = vmatprep.subr.bf16.mxu0 0
  %323 = vmatpush1.bf16.msra.mxu0 0
  %324 = vmatprep.subr.bf16.mxu0 0
  %325 = vmatpush1.bf16.msra.mxu0 0
  %326 = vmatprep.subr.bf16.mxu0 0
  %327 = vmatpush1.bf16.msra.mxu0 0
  %328 = vmatprep.subr.bf16.mxu0 0
  %329 = vmatpush1.bf16.msra.mxu0 0
  %330 = vmatprep.subr.bf16.mxu0 0
  %331 = vmatpush1.bf16.msra.mxu0 0
  %332 = vmatprep.subr.bf16.mxu0 0
  %333 = vmatpush1.bf16.msra.mxu0 0
  %334 = vmatprep.subr.bf16.mxu0 0
  %335 = vmatpush1.bf16.msra.mxu0 0
  %336 = vmatprep.subr.bf16.mxu0 0
  %337 = vmatpush1.bf16.msra.mxu0 0
  %338 = vmatprep.subr.bf16.mxu0 0
  %339 = vmatpush1.bf16.msra.mxu0 0
  %340 = vmatprep.subr.bf16.mxu0 0
  %341 = vmatpush1.bf16.msra.mxu0 0
  %342 = vmatprep.subr.bf16.mxu0 0
  %343 = vmatpush1.bf16.msra.mxu0 0
  %344 = vmatprep.subr.bf16.mxu0 0
  %345 = vmatpush1.bf16.msra.mxu0 0
  %346 = vmatprep.subr.bf16.mxu0 0
  %347 = vmatpush1.bf16.msra.mxu0 0
  %348 = vmatprep.subr.bf16.mxu0 0
  %349 = vmatpush1.bf16.msra.mxu0 0
  %350 = vmatprep.mubr.bf16.mxu0 0
  %351 = vmatmul.mubr.bf16.gmra.mrb[0].mxu0 %v312
  %v352 = vpop.f32.mrb[0].mxu0
  %v353 = vadd.f32 0.0, %v352
  %v354 = vpop.f32.mrb[0].mxu0
  %v355 = vpop.f32.mrb[0].mxu0
  %v356 = vpop.f32.mrb[0].mxu0
  %357 = vdwg.mxu0
  %358 = vrot.lane.b32.xlu0 %v185, 64
  %v359 = vpop.permute.xlu0 %358
  %v361 = vsel %vm189, %v308, 0
  %v364 = vsel %vm314, %v359, 0
  %366 = vmatprep.subr.bf16.mxu0 0
  %367 = vmatpush1.bf16.msra.mxu0 %v364
  %368 = vmatprep.subr.bf16.mxu0 0
  %369 = vmatpush1.bf16.msra.mxu0 0
  %370 = vmatprep.subr.bf16.mxu0 0
  %371 = vmatpush1.bf16.msra.mxu0 0
  %372 = vmatprep.subr.bf16.mxu0 0
  %373 = vmatpush1.bf16.msra.mxu0 0
  %374 = vmatprep.subr.bf16.mxu0 0
  %375 = vmatpush1.bf16.msra.mxu0 0
  %376 = vmatprep.subr.bf16.mxu0 0
  %377 = vmatpush1.bf16.msra.mxu0 0
  %378 = vmatprep.subr.bf16.mxu0 0
  %379 = vmatpush1.bf16.msra.mxu0 0
  %380 = vmatprep.subr.bf16.mxu0 0
  %381 = vmatpush1.bf16.msra.mxu0 0
  %382 = vmatprep.subr.bf16.mxu0 0
  %383 = vmatpush1.bf16.msra.mxu0 0
  %384 = vmatprep.subr.bf16.mxu0 0
  %385 = vmatpush1.bf16.msra.mxu0 0
  %386 = vmatprep.subr.bf16.mxu0 0
  %387 = vmatpush1.bf16.msra.mxu0 0
  %388 = vmatprep.subr.bf16.mxu0 0
  %389 = vmatpush1.bf16.msra.mxu0 0
  %390 = vmatprep.subr.bf16.mxu0 0
  %391 = vmatpush1.bf16.msra.mxu0 0
  %392 = vmatprep.subr.bf16.mxu0 0
  %393 = vmatpush1.bf16.msra.mxu0 0
  %394 = vmatprep.subr.bf16.mxu0 0
  %395 = vmatpush1.bf16.msra.mxu0 0
  %396 = vmatprep.subr.bf16.mxu0 0
  %397 = vmatpush1.bf16.msra.mxu0 0
  %398 = vmatprep.mubr.bf16.mxu0 0
  %399 = vmatmul.mubr.bf16.gmra.mrb[0].mxu0 %v361
  %v400 = vpop.f32.mrb[0].mxu0
  %v401 = vadd.f32 0.0, %v400
  %v402 = vpop.f32.mrb[0].mxu0
  %v403 = vpop.f32.mrb[0].mxu0
  %v404 = vpop.f32.mrb[0].mxu0
  %405 = vdwg.mxu0
  %v406 = vpack.c.bf16 %v401, %v353
  %v407 = vld [vmem:[%s5] sm:$0xff]
  %v408 = vpack.c.bf16 %v407, %v407
  %410 = vrot.lane.b32.xlu0 %v182, 120
  %v411 = vpop.permute.xlu0 %410
  %412 = vrot.lane.b32.xlu0 %v184, 88
  %v413 = vpop.permute.xlu0 %412
  %v415 = vsel %vm189, %v411, 0
  %v418 = vsel %vm189, %v413, 0
  %420 = vmatprep.subr.bf16.mxu0 0
  %421 = vmatpush1.bf16.xpose.msra.mxu0 %v418
  %422 = vmatprep.subr.bf16.mxu0 0
  %423 = vmatpush1.bf16.xpose.msra.mxu0 0
  %424 = vmatprep.subr.bf16.mxu0 0
  %425 = vmatpush1.bf16.xpose.msra.mxu0 0
  %426 = vmatprep.subr.bf16.mxu0 0
  %427 = vmatpush1.bf16.xpose.msra.mxu0 0
  %428 = vmatprep.subr.bf16.mxu0 0
  %429 = vmatpush1.bf16.xpose.msra.mxu0 0
  %430 = vmatprep.subr.bf16.mxu0 0
  %431 = vmatpush1.bf16.xpose.msra.mxu0 0
  %432 = vmatprep.subr.bf16.mxu0 0
  %433 = vmatpush1.bf16.xpose.msra.mxu0 0
  %434 = vmatprep.subr.bf16.mxu0 0
  %435 = vmatpush1.bf16.xpose.msra.mxu0 0
  %436 = vmatprep.subr.bf16.mxu0 0
  %437 = vmatpush1.bf16.xpose.msra.mxu0 0
  %438 = vmatprep.subr.bf16.mxu0 0
  %439 = vmatpush1.bf16.xpose.msra.mxu0 0
  %440 = vmatprep.subr.bf16.mxu0 0
  %441 = vmatpush1.bf16.xpose.msra.mxu0 0
  %442 = vmatprep.subr.bf16.mxu0 0
  %443 = vmatpush1.bf16.xpose.msra.mxu0 0
  %444 = vmatprep.subr.bf16.mxu0 0
  %445 = vmatpush1.bf16.xpose.msra.mxu0 0
  %446 = vmatprep.subr.bf16.mxu0 0
  %447 = vmatpush1.bf16.xpose.msra.mxu0 0
  %448 = vmatprep.subr.bf16.mxu0 0
  %449 = vmatpush1.bf16.xpose.msra.mxu0 0
  %450 = vmatprep.subr.bf16.mxu0 0
  %451 = vmatpush1.bf16.xpose.msra.mxu0 0
  %452 = vmatprep.mubr.bf16.mxu0 0
  %453 = vmatmul.mubr.bf16.gmra.mrb[0].mxu0 %v415
  %v454 = vpop.f32.mrb[0].mxu0
  %v455 = vadd.f32 %v119, %v454
  %v456 = vpop.f32.mrb[0].mxu0
  %v457 = vpop.f32.mrb[0].mxu0
  %v458 = vpop.f32.mrb[0].mxu0
  %459 = vdwg.mxu0
  %461 = vrot.lane.b32.xlu0 %v183, 120
  %v462 = vpop.permute.xlu0 %461
  %463 = vrot.lane.b32.xlu0 %v185, 88
  %v464 = vpop.permute.xlu0 %463
  %v466 = vsel %vm189, %v462, 0
  %v469 = vsel %vm189, %v464, 0
  %471 = vmatprep.subr.bf16.mxu0 0
  %472 = vmatpush1.bf16.xpose.msra.mxu0 %v469
  %473 = vmatprep.subr.bf16.mxu0 0
  %474 = vmatpush1.bf16.xpose.msra.mxu0 0
  %475 = vmatprep.subr.bf16.mxu0 0
  %476 = vmatpush1.bf16.xpose.msra.mxu0 0
  %477 = vmatprep.subr.bf16.mxu0 0
  %478 = vmatpush1.bf16.xpose.msra.mxu0 0
  %479 = vmatprep.subr.bf16.mxu0 0
  %480 = vmatpush1.bf16.xpose.msra.mxu0 0
  %481 = vmatprep.subr.bf16.mxu0 0
  %482 = vmatpush1.bf16.xpose.msra.mxu0 0
  %483 = vmatprep.subr.bf16.mxu0 0
  %484 = vmatpush1.bf16.xpose.msra.mxu0 0
  %485 = vmatprep.subr.bf16.mxu0 0
  %486 = vmatpush1.bf16.xpose.msra.mxu0 0
  %487 = vmatprep.subr.bf16.mxu0 0
  %488 = vmatpush1.bf16.xpose.msra.mxu0 0
  %489 = vmatprep.subr.bf16.mxu0 0
  %490 = vmatpush1.bf16.xpose.msra.mxu0 0
  %491 = vmatprep.subr.bf16.mxu0 0
  %492 = vmatpush1.bf16.xpose.msra.mxu0 0
  %493 = vmatprep.subr.bf16.mxu0 0
  %494 = vmatpush1.bf16.xpose.msra.mxu0 0
  %495 = vmatprep.subr.bf16.mxu0 0
  %496 = vmatpush1.bf16.xpose.msra.mxu0 0
  %497 = vmatprep.subr.bf16.mxu0 0
  %498 = vmatpush1.bf16.xpose.msra.mxu0 0
  %499 = vmatprep.subr.bf16.mxu0 0
  %500 = vmatpush1.bf16.xpose.msra.mxu0 0
  %501 = vmatprep.subr.bf16.mxu0 0
  %502 = vmatpush1.bf16.xpose.msra.mxu0 0
  %503 = vmatprep.mubr.bf16.mxu0 0
  %504 = vmatmul.mubr.bf16.gmra.mrb[0].mxu0 %v466
  %v505 = vpop.f32.mrb[0].mxu0
  %v506 = vadd.f32 %v120, %v505
  %v507 = vpop.f32.mrb[0].mxu0
  %v508 = vpop.f32.mrb[0].mxu0
  %v509 = vpop.f32.mrb[0].mxu0
  %510 = vdwg.mxu0
  %v511 = vsel %vm189, %v455, -inf
  %512 = vmax.xlane.f32.xlu0 %v511
  %v513 = vpop.xlane.xlu0 %512
  %v514 = vsel %vm189, %v506, -inf
  %515 = vmax.xlane.f32.xlu0 %v514
  %v516 = vpop.xlane.xlu0 %515
  %v517 = vsub.f32 %v455, %v513
  %v518 = vsub.f32 %v506, %v516
  %v519 = vmul.f32 %v517, 1.442695
  %v520 = vpow.pop %v519
  %v521 = vmul.f32 %v518, 1.442695
  %v522 = vpow.pop %v521
  %v523 = vsel %vm189, %v520, 0.0
  %524 = vadd.xlane.f32.xlu0 %v523
  %v525 = vpop.xlane.xlu0 %524
  %v526 = vsel %vm189, %v522, 0.0
  %527 = vadd.xlane.f32.xlu0 %v526
  %v528 = vpop.xlane.xlu0 %527
  %v529 = vrcp.pop %v525
  %v530 = vrcp.pop %v528
  %v531 = vmul.f32 %v520, %v529
  %v532 = vmul.f32 %v522, %v530
  %v533 = vpack.c.bf16 %v531, %v531
  %v534 = vpack.c.bf16 %v532, %v532
  %535 = vrot.lane.b32.xlu0 %v184, 56
  %v536 = vpop.permute.xlu0 %535
  %v538 = vsel %vm189, %v533, 0
  %v541 = vsel %vm314, %v536, 0
  %543 = vmatprep.subr.bf16.mxu0 0
  %544 = vmatpush1.bf16.msra.mxu0 %v541
  %545 = vmatprep.subr.bf16.mxu0 0
  %546 = vmatpush1.bf16.msra.mxu0 0
  %547 = vmatprep.subr.bf16.mxu0 0
  %548 = vmatpush1.bf16.msra.mxu0 0
  %549 = vmatprep.subr.bf16.mxu0 0
  %550 = vmatpush1.bf16.msra.mxu0 0
  %551 = vmatprep.subr.bf16.mxu0 0
  %552 = vmatpush1.bf16.msra.mxu0 0
  %553 = vmatprep.subr.bf16.mxu0 0
  %554 = vmatpush1.bf16.msra.mxu0 0
  %555 = vmatprep.subr.bf16.mxu0 0
  %556 = vmatpush1.bf16.msra.mxu0 0
  %557 = vmatprep.subr.bf16.mxu0 0
  %558 = vmatpush1.bf16.msra.mxu0 0
  %559 = vmatprep.subr.bf16.mxu0 0
  %560 = vmatpush1.bf16.msra.mxu0 0
  %561 = vmatprep.subr.bf16.mxu0 0
  %562 = vmatpush1.bf16.msra.mxu0 0
  %563 = vmatprep.subr.bf16.mxu0 0
  %564 = vmatpush1.bf16.msra.mxu0 0
  %565 = vmatprep.subr.bf16.mxu0 0
  %566 = vmatpush1.bf16.msra.mxu0 0
  %567 = vmatprep.subr.bf16.mxu0 0
  %568 = vmatpush1.bf16.msra.mxu0 0
  %569 = vmatprep.subr.bf16.mxu0 0
  %570 = vmatpush1.bf16.msra.mxu0 0
  %571 = vmatprep.subr.bf16.mxu0 0
  %572 = vmatpush1.bf16.msra.mxu0 0
  %573 = vmatprep.subr.bf16.mxu0 0
  %574 = vmatpush1.bf16.msra.mxu0 0
  %575 = vmatprep.mubr.bf16.mxu0 0
  %576 = vmatmul.mubr.bf16.gmra.mrb[0].mxu0 %v538
  %v577 = vpop.f32.mrb[0].mxu0
  %v578 = vadd.f32 0.0, %v577
  %v579 = vpop.f32.mrb[0].mxu0
  %v580 = vpop.f32.mrb[0].mxu0
  %v581 = vpop.f32.mrb[0].mxu0
  %582 = vdwg.mxu0
  %583 = vrot.lane.b32.xlu0 %v185, 56
  %v584 = vpop.permute.xlu0 %583
  %v586 = vsel %vm189, %v534, 0
  %v589 = vsel %vm314, %v584, 0
  %591 = vmatprep.subr.bf16.mxu0 0
  %592 = vmatpush1.bf16.msra.mxu0 %v589
  %593 = vmatprep.subr.bf16.mxu0 0
  %594 = vmatpush1.bf16.msra.mxu0 0
  %595 = vmatprep.subr.bf16.mxu0 0
  %596 = vmatpush1.bf16.msra.mxu0 0
  %597 = vmatprep.subr.bf16.mxu0 0
  %598 = vmatpush1.bf16.msra.mxu0 0
  %599 = vmatprep.subr.bf16.mxu0 0
  %600 = vmatpush1.bf16.msra.mxu0 0
  %601 = vmatprep.subr.bf16.mxu0 0
  %602 = vmatpush1.bf16.msra.mxu0 0
  %603 = vmatprep.subr.bf16.mxu0 0
  %604 = vmatpush1.bf16.msra.mxu0 0
  %605 = vmatprep.subr.bf16.mxu0 0
  %606 = vmatpush1.bf16.msra.mxu0 0
  %607 = vmatprep.subr.bf16.mxu0 0
  %608 = vmatpush1.bf16.msra.mxu0 0
  %609 = vmatprep.subr.bf16.mxu0 0
  %610 = vmatpush1.bf16.msra.mxu0 0
  %611 = vmatprep.subr.bf16.mxu0 0
  %612 = vmatpush1.bf16.msra.mxu0 0
  %613 = vmatprep.subr.bf16.mxu0 0
  %614 = vmatpush1.bf16.msra.mxu0 0
  %615 = vmatprep.subr.bf16.mxu0 0
  %616 = vmatpush1.bf16.msra.mxu0 0
  %617 = vmatprep.subr.bf16.mxu0 0
  %618 = vmatpush1.bf16.msra.mxu0 0
  %619 = vmatprep.subr.bf16.mxu0 0
  %620 = vmatpush1.bf16.msra.mxu0 0
  %621 = vmatprep.subr.bf16.mxu0 0
  %622 = vmatpush1.bf16.msra.mxu0 0
  %623 = vmatprep.mubr.bf16.mxu0 0
  %624 = vmatmul.mubr.bf16.gmra.mrb[0].mxu0 %v586
  %v625 = vpop.f32.mrb[0].mxu0
  %v626 = vadd.f32 0.0, %v625
  %v627 = vpop.f32.mrb[0].mxu0
  %v628 = vpop.f32.mrb[0].mxu0
  %v629 = vpop.f32.mrb[0].mxu0
  %630 = vdwg.mxu0
  %v631 = vpack.c.bf16 %v626, %v578
  %v632 = vld [vmem:[%s5 + $0x8] sm:$0xff]
  %v633 = vpack.c.bf16 %v632, %v632
  %v635 = vsel %vm189, %v631, 0
  %v638 = vsel %vm314, %v633, 0
  %640 = vmatprep.subr.bf16.mxu0 0
  %641 = vmatpush1.bf16.msra.mxu0 %v638
  %642 = vmatprep.subr.bf16.mxu0 0
  %643 = vmatpush1.bf16.msra.mxu0 0
  %644 = vmatprep.subr.bf16.mxu0 0
  %645 = vmatpush1.bf16.msra.mxu0 0
  %646 = vmatprep.subr.bf16.mxu0 0
  %647 = vmatpush1.bf16.msra.mxu0 0
  %648 = vmatprep.subr.bf16.mxu0 0
  %649 = vmatpush1.bf16.msra.mxu0 0
  %650 = vmatprep.subr.bf16.mxu0 0
  %651 = vmatpush1.bf16.msra.mxu0 0
  %652 = vmatprep.subr.bf16.mxu0 0
  %653 = vmatpush1.bf16.msra.mxu0 0
  %654 = vmatprep.subr.bf16.mxu0 0
  %655 = vmatpush1.bf16.msra.mxu0 0
  %656 = vmatprep.subr.bf16.mxu0 0
  %657 = vmatpush1.bf16.msra.mxu0 0
  %658 = vmatprep.subr.bf16.mxu0 0
  %659 = vmatpush1.bf16.msra.mxu0 0
  %660 = vmatprep.subr.bf16.mxu0 0
  %661 = vmatpush1.bf16.msra.mxu0 0
  %662 = vmatprep.subr.bf16.mxu0 0
  %663 = vmatpush1.bf16.msra.mxu0 0
  %664 = vmatprep.subr.bf16.mxu0 0
  %665 = vmatpush1.bf16.msra.mxu0 0
  %666 = vmatprep.subr.bf16.mxu0 0
  %667 = vmatpush1.bf16.msra.mxu0 0
  %668 = vmatprep.subr.bf16.mxu0 0
  %669 = vmatpush1.bf16.msra.mxu0 0
  %670 = vmatprep.subr.bf16.mxu0 0
  %671 = vmatpush1.bf16.msra.mxu0 0
  %672 = vmatprep.mubr.bf16.mxu0 0
  %673 = vmatmul.mubr.bf16.gmra.mrb[0].mxu0 %v635
  %v674 = vpop.f32.mrb[0].mxu0
  %v675 = vadd.f32 0.0, %v674
  %v676 = vpop.f32.mrb[0].mxu0
  %v677 = vpop.f32.mrb[0].mxu0
  %v678 = vadd.f32 0.0, %v677
  %v679 = vpop.f32.mrb[0].mxu0
  %680 = vdwg.mxu0
  %v682 = vsel %vm189, %v406, 0
  %v685 = vsel %vm314, %v408, 0
  %687 = vmatprep.subr.bf16.mxu0 0
  %688 = vmatpush1.bf16.msra.mxu0 %v685
  %689 = vmatprep.subr.bf16.mxu0 0
  %690 = vmatpush1.bf16.msra.mxu0 0
  %691 = vmatprep.subr.bf16.mxu0 0
  %692 = vmatpush1.bf16.msra.mxu0 0
  %693 = vmatprep.subr.bf16.mxu0 0
  %694 = vmatpush1.bf16.msra.mxu0 0
  %695 = vmatprep.subr.bf16.mxu0 0
  %696 = vmatpush1.bf16.msra.mxu0 0
  %697 = vmatprep.subr.bf16.mxu0 0
  %698 = vmatpush1.bf16.msra.mxu0 0
  %699 = vmatprep.subr.bf16.mxu0 0
  %700 = vmatpush1.bf16.msra.mxu0 0
  %701 = vmatprep.subr.bf16.mxu0 0
  %702 = vmatpush1.bf16.msra.mxu0 0
  %703 = vmatprep.subr.bf16.mxu0 0
  %704 = vmatpush1.bf16.msra.mxu0 0
  %705 = vmatprep.subr.bf16.mxu0 0
  %706 = vmatpush1.bf16.msra.mxu0 0
  %707 = vmatprep.subr.bf16.mxu0 0
  %708 = vmatpush1.bf16.msra.mxu0 0
  %709 = vmatprep.subr.bf16.mxu0 0
  %710 = vmatpush1.bf16.msra.mxu0 0
  %711 = vmatprep.subr.bf16.mxu0 0
  %712 = vmatpush1.bf16.msra.mxu0 0
  %713 = vmatprep.subr.bf16.mxu0 0
  %714 = vmatpush1.bf16.msra.mxu0 0
  %715 = vmatprep.subr.bf16.mxu0 0
  %716 = vmatpush1.bf16.msra.mxu0 0
  %717 = vmatprep.subr.bf16.mxu0 0
  %718 = vmatpush1.bf16.msra.mxu0 0
  %719 = vmatprep.mubr.bf16.mxu0 0
  %720 = vmatmul.mubr.bf16.gmra.mrb[0].mxu0 %v682
  %v721 = vpop.f32.mrb[0].mxu0
  %v722 = vadd.f32 %v675, %v721
  %v723 = vpop.f32.mrb[0].mxu0
  %v724 = vpop.f32.mrb[0].mxu0
  %v725 = vadd.f32 %v678, %v724
  %v726 = vpop.f32.mrb[0].mxu0
  %727 = vdwg.mxu0
  %728 = vrot.lane.b32.xlu0 %v182, 112
  %v729 = vpop.permute.xlu0 %728
  %730 = vrot.lane.b32.xlu0 %v184, 80
  %v731 = vpop.permute.xlu0 %730
  %v733 = vsel %vm189, %v729, 0
  %v736 = vsel %vm189, %v731, 0
  %738 = vmatprep.subr.bf16.mxu0 0
  %739 = vmatpush1.bf16.xpose.msra.mxu0 %v736
  %740 = vmatprep.subr.bf16.mxu0 0
  %741 = vmatpush1.bf16.xpose.msra.mxu0 0
  %742 = vmatprep.subr.bf16.mxu0 0
  %743 = vmatpush1.bf16.xpose.msra.mxu0 0
  %744 = vmatprep.subr.bf16.mxu0 0
  %745 = vmatpush1.bf16.xpose.msra.mxu0 0
  %746 = vmatprep.subr.bf16.mxu0 0
  %747 = vmatpush1.bf16.xpose.msra.mxu0 0
  %748 = vmatprep.subr.bf16.mxu0 0
  %749 = vmatpush1.bf16.xpose.msra.mxu0 0
  %750 = vmatprep.subr.bf16.mxu0 0
  %751 = vmatpush1.bf16.xpose.msra.mxu0 0
  %752 = vmatprep.subr.bf16.mxu0 0
  %753 = vmatpush1.bf16.xpose.msra.mxu0 0
  %754 = vmatprep.subr.bf16.mxu0 0
  %755 = vmatpush1.bf16.xpose.msra.mxu0 0
  %756 = vmatprep.subr.bf16.mxu0 0
  %757 = vmatpush1.bf16.xpose.msra.mxu0 0
  %758 = vmatprep.subr.bf16.mxu0 0
  %759 = vmatpush1.bf16.xpose.msra.mxu0 0
  %760 = vmatprep.subr.bf16.mxu0 0
  %761 = vmatpush1.bf16.xpose.msra.mxu0 0
  %762 = vmatprep.subr.bf16.mxu0 0
  %763 = vmatpush1.bf16.xpose.msra.mxu0 0
  %764 = vmatprep.subr.bf16.mxu0 0
  %765 = vmatpush1.bf16.xpose.msra.mxu0 0
  %766 = vmatprep.subr.bf16.mxu0 0
  %767 = vmatpush1.bf16.xpose.msra.mxu0 0
  %768 = vmatprep.subr.bf16.mxu0 0
  %769 = vmatpush1.bf16.xpose.msra.mxu0 0
  %770 = vmatprep.mubr.bf16.mxu0 0
  %771 = vmatmul.mubr.bf16.gmra.mrb[0].mxu0 %v733
  %v772 = vpop.f32.mrb[0].mxu0
  %v773 = vadd.f32 %v119, %v772
  %v774 = vpop.f32.mrb[0].mxu0
  %v775 = vpop.f32.mrb[0].mxu0
  %v776 = vpop.f32.mrb[0].mxu0
  %777 = vdwg.mxu0
  %778 = vrot.lane.b32.xlu0 %v183, 112
  %v779 = vpop.permute.xlu0 %778
  %780 = vrot.lane.b32.xlu0 %v185, 80
  %v781 = vpop.permute.xlu0 %780
  %v783 = vsel %vm189, %v779, 0
  %v786 = vsel %vm189, %v781, 0
  %788 = vmatprep.subr.bf16.mxu0 0
  %789 = vmatpush1.bf16.xpose.msra.mxu0 %v786
  %790 = vmatprep.subr.bf16.mxu0 0
  %791 = vmatpush1.bf16.xpose.msra.mxu0 0
  %792 = vmatprep.subr.bf16.mxu0 0
  %793 = vmatpush1.bf16.xpose.msra.mxu0 0
  %794 = vmatprep.subr.bf16.mxu0 0
  %795 = vmatpush1.bf16.xpose.msra.mxu0 0
  %796 = vmatprep.subr.bf16.mxu0 0
  %797 = vmatpush1.bf16.xpose.msra.mxu0 0
  %798 = vmatprep.subr.bf16.mxu0 0
  %799 = vmatpush1.bf16.xpose.msra.mxu0 0
  %800 = vmatprep.subr.bf16.mxu0 0
  %801 = vmatpush1.bf16.xpose.msra.mxu0 0
  %802 = vmatprep.subr.bf16.mxu0 0
  %803 = vmatpush1.bf16.xpose.msra.mxu0 0
  %804 = vmatprep.subr.bf16.mxu0 0
  %805 = vmatpush1.bf16.xpose.msra.mxu0 0
  %806 = vmatprep.subr.bf16.mxu0 0
  %807 = vmatpush1.bf16.xpose.msra.mxu0 0
  %808 = vmatprep.subr.bf16.mxu0 0
  %809 = vmatpush1.bf16.xpose.msra.mxu0 0
  %810 = vmatprep.subr.bf16.mxu0 0
  %811 = vmatpush1.bf16.xpose.msra.mxu0 0
  %812 = vmatprep.subr.bf16.mxu0 0
  %813 = vmatpush1.bf16.xpose.msra.mxu0 0
  %814 = vmatprep.subr.bf16.mxu0 0
  %815 = vmatpush1.bf16.xpose.msra.mxu0 0
  %816 = vmatprep.subr.bf16.mxu0 0
  %817 = vmatpush1.bf16.xpose.msra.mxu0 0
  %818 = vmatprep.subr.bf16.mxu0 0
  %819 = vmatpush1.bf16.xpose.msra.mxu0 0
  %820 = vmatprep.mubr.bf16.mxu0 0
  %821 = vmatmul.mubr.bf16.gmra.mrb[0].mxu0 %v783
  %v822 = vpop.f32.mrb[0].mxu0
  %v823 = vadd.f32 %v120, %v822
  %v824 = vpop.f32.mrb[0].mxu0
  %v825 = vpop.f32.mrb[0].mxu0
  %v826 = vpop.f32.mrb[0].mxu0
  %827 = vdwg.mxu0
  %v828 = vsel %vm189, %v773, -inf
  %829 = vmax.xlane.f32.xlu0 %v828
  %v830 = vpop.xlane.xlu0 %829
  %v831 = vsel %vm189, %v823, -inf
  %832 = vmax.xlane.f32.xlu0 %v831
  %v833 = vpop.xlane.xlu0 %832
  %v834 = vsub.f32 %v773, %v830
  %v835 = vsub.f32 %v823, %v833
  %v836 = vmul.f32 %v834, 1.442695
  %v837 = vpow.pop %v836
  %v838 = vmul.f32 %v835, 1.442695
  %v839 = vpow.pop %v838
  %v840 = vsel %vm189, %v837, 0.0
  %841 = vadd.xlane.f32.xlu0 %v840
  %v842 = vpop.xlane.xlu0 %841
  %v843 = vsel %vm189, %v839, 0.0
  %844 = vadd.xlane.f32.xlu0 %v843
  %v845 = vpop.xlane.xlu0 %844
  %v846 = vrcp.pop %v842
  %v847 = vrcp.pop %v845
  %v848 = vmul.f32 %v837, %v846
  %v849 = vmul.f32 %v839, %v847
  %v850 = vpack.c.bf16 %v848, %v848
  %v851 = vpack.c.bf16 %v849, %v849
  %852 = vrot.lane.b32.xlu0 %v184, 48
  %v853 = vpop.permute.xlu0 %852
  %v855 = vsel %vm189, %v850, 0
  %v858 = vsel %vm314, %v853, 0
  %860 = vmatprep.subr.bf16.mxu0 0
  %861 = vmatpush1.bf16.msra.mxu0 %v858
  %862 = vmatprep.subr.bf16.mxu0 0
  %863 = vmatpush1.bf16.msra.mxu0 0
  %864 = vmatprep.subr.bf16.mxu0 0
  %865 = vmatpush1.bf16.msra.mxu0 0
  %866 = vmatprep.subr.bf16.mxu0 0
  %867 = vmatpush1.bf16.msra.mxu0 0
  %868 = vmatprep.subr.bf16.mxu0 0
  %869 = vmatpush1.bf16.msra.mxu0 0
  %870 = vmatprep.subr.bf16.mxu0 0
  %871 = vmatpush1.bf16.msra.mxu0 0
  %872 = vmatprep.subr.bf16.mxu0 0
  %873 = vmatpush1.bf16.msra.mxu0 0
  %874 = vmatprep.subr.bf16.mxu0 0
  %875 = vmatpush1.bf16.msra.mxu0 0
  %876 = vmatprep.subr.bf16.mxu0 0
  %877 = vmatpush1.bf16.msra.mxu0 0
  %878 = vmatprep.subr.bf16.mxu0 0
  %879 = vmatpush1.bf16.msra.mxu0 0
  %880 = vmatprep.subr.bf16.mxu0 0
  %881 = vmatpush1.bf16.msra.mxu0 0
  %882 = vmatprep.subr.bf16.mxu0 0
  %883 = vmatpush1.bf16.msra.mxu0 0
  %884 = vmatprep.subr.bf16.mxu0 0
  %885 = vmatpush1.bf16.msra.mxu0 0
  %886 = vmatprep.subr.bf16.mxu0 0
  %887 = vmatpush1.bf16.msra.mxu0 0
  %888 = vmatprep.subr.bf16.mxu0 0
  %889 = vmatpush1.bf16.msra.mxu0 0
  %890 = vmatprep.subr.bf16.mxu0 0
  %891 = vmatpush1.bf16.msra.mxu0 0
  %892 = vmatprep.mubr.bf16.mxu0 0
  %893 = vmatmul.mubr.bf16.gmra.mrb[0].mxu0 %v855
  %v894 = vpop.f32.mrb[0].mxu0
  %v895 = vadd.f32 0.0, %v894
  %v896 = vpop.f32.mrb[0].mxu0
  %v897 = vpop.f32.mrb[0].mxu0
  %v898 = vpop.f32.mrb[0].mxu0
  %899 = vdwg.mxu0
  %900 = vrot.lane.b32.xlu0 %v185, 48
  %v901 = vpop.permute.xlu0 %900
  %v903 = vsel %vm189, %v851, 0
  %v906 = vsel %vm314, %v901, 0
  %908 = vmatprep.subr.bf16.mxu0 0
  %909 = vmatpush1.bf16.msra.mxu0 %v906
  %910 = vmatprep.subr.bf16.mxu0 0
  %911 = vmatpush1.bf16.msra.mxu0 0
  %912 = vmatprep.subr.bf16.mxu0 0
  %913 = vmatpush1.bf16.msra.mxu0 0
  %914 = vmatprep.subr.bf16.mxu0 0
  %915 = vmatpush1.bf16.msra.mxu0 0
  %916 = vmatprep.subr.bf16.mxu0 0
  %917 = vmatpush1.bf16.msra.mxu0 0
  %918 = vmatprep.subr.bf16.mxu0 0
  %919 = vmatpush1.bf16.msra.mxu0 0
  %920 = vmatprep.subr.bf16.mxu0 0
  %921 = vmatpush1.bf16.msra.mxu0 0
  %922 = vmatprep.subr.bf16.mxu0 0
  %923 = vmatpush1.bf16.msra.mxu0 0
  %924 = vmatprep.subr.bf16.mxu0 0
  %925 = vmatpush1.bf16.msra.mxu0 0
  %926 = vmatprep.subr.bf16.mxu0 0
  %927 = vmatpush1.bf16.msra.mxu0 0
  %928 = vmatprep.subr.bf16.mxu0 0
  %929 = vmatpush1.bf16.msra.mxu0 0
  %930 = vmatprep.subr.bf16.mxu0 0
  %931 = vmatpush1.bf16.msra.mxu0 0
  %932 = vmatprep.subr.bf16.mxu0 0
  %933 = vmatpush1.bf16.msra.mxu0 0
  %934 = vmatprep.subr.bf16.mxu0 0
  %935 = vmatpush1.bf16.msra.mxu0 0
  %936 = vmatprep.subr.bf16.mxu0 0
  %937 = vmatpush1.bf16.msra.mxu0 0
  %938 = vmatprep.subr.bf16.mxu0 0
  %939 = vmatpush1.bf16.msra.mxu0 0
  %940 = vmatprep.mubr.bf16.mxu0 0
  %941 = vmatmul.mubr.bf16.gmra.mrb[0].mxu0 %v903
  %v942 = vpop.f32.mrb[0].mxu0
  %v943 = vadd.f32 0.0, %v942
  %v944 = vpop.f32.mrb[0].mxu0
  %v945 = vpop.f32.mrb[0].mxu0
  %v946 = vpop.f32.mrb[0].mxu0
  %947 = vdwg.mxu0
  %v948 = vpack.c.bf16 %v943, %v895
  %v949 = vld [vmem:[%s5 + $0x10] sm:$0xff]
  %v950 = vpack.c.bf16 %v949, %v949
  %v952 = vsel %vm189, %v948, 0
  %v955 = vsel %vm314, %v950, 0
  %957 = vmatprep.subr.bf16.mxu0 0
  %958 = vmatpush1.bf16.msra.mxu0 %v955
  %959 = vmatprep.subr.bf16.mxu0 0
  %960 = vmatpush1.bf16.msra.mxu0 0
  %961 = vmatprep.subr.bf16.mxu0 0
  %962 = vmatpush1.bf16.msra.mxu0 0
  %963 = vmatprep.subr.bf16.mxu0 0
  %964 = vmatpush1.bf16.msra.mxu0 0
  %965 = vmatprep.subr.bf16.mxu0 0
  %966 = vmatpush1.bf16.msra.mxu0 0
  %967 = vmatprep.subr.bf16.mxu0 0
  %968 = vmatpush1.bf16.msra.mxu0 0
  %969 = vmatprep.subr.bf16.mxu0 0
  %970 = vmatpush1.bf16.msra.mxu0 0
  %971 = vmatprep.subr.bf16.mxu0 0
  %972 = vmatpush1.bf16.msra.mxu0 0
  %973 = vmatprep.subr.bf16.mxu0 0
  %974 = vmatpush1.bf16.msra.mxu0 0
  %975 = vmatprep.subr.bf16.mxu0 0
  %976 = vmatpush1.bf16.msra.mxu0 0
  %977 = vmatprep.subr.bf16.mxu0 0
  %978 = vmatpush1.bf16.msra.mxu0 0
  %979 = vmatprep.subr.bf16.mxu0 0
  %980 = vmatpush1.bf16.msra.mxu0 0
  %981 = vmatprep.subr.bf16.mxu0 0
  %982 = vmatpush1.bf16.msra.mxu0 0
  %983 = vmatprep.subr.bf16.mxu0 0
  %984 = vmatpush1.bf16.msra.mxu0 0
  %985 = vmatprep.subr.bf16.mxu0 0
  %986 = vmatpush1.bf16.msra.mxu0 0
  %987 = vmatprep.subr.bf16.mxu0 0
  %988 = vmatpush1.bf16.msra.mxu0 0
  %989 = vmatprep.mubr.bf16.mxu0 0
  %990 = vmatmul.mubr.bf16.gmra.mrb[0].mxu0 %v952
  %v991 = vpop.f32.mrb[0].mxu0
  %v992 = vadd.f32 0.0, %v991
  %v993 = vpop.f32.mrb[0].mxu0
  %v994 = vpop.f32.mrb[0].mxu0
  %v995 = vadd.f32 0.0, %v994
  %v996 = vpop.f32.mrb[0].mxu0
  %997 = vdwg.mxu0
  %v998 = vadd.f32 %v722, %v992
  %v999 = vadd.f32 %v725, %v995
  %1000 = vrot.lane.b32.xlu0 %v182, 104
  %v1001 = vpop.permute.xlu0 %1000
  %1002 = vrot.lane.b32.xlu0 %v184, 72
  %v1003 = vpop.permute.xlu0 %1002
  %v1005 = vsel %vm189, %v1001, 0
  %v1008 = vsel %vm189, %v1003, 0
  %1010 = vmatprep.subr.bf16.mxu0 0
  %1011 = vmatpush1.bf16.xpose.msra.mxu0 %v1008
  %1012 = vmatprep.subr.bf16.mxu0 0
  %1013 = vmatpush1.bf16.xpose.msra.mxu0 0
  %1014 = vmatprep.subr.bf16.mxu0 0
  %1015 = vmatpush1.bf16.xpose.msra.mxu0 0
  %1016 = vmatprep.subr.bf16.mxu0 0
  %1017 = vmatpush1.bf16.xpose.msra.mxu0 0
  %1018 = vmatprep.subr.bf16.mxu0 0
  %1019 = vmatpush1.bf16.xpose.msra.mxu0 0
  %1020 = vmatprep.subr.bf16.mxu0 0
  %1021 = vmatpush1.bf16.xpose.msra.mxu0 0
  %1022 = vmatprep.subr.bf16.mxu0 0
  %1023 = vmatpush1.bf16.xpose.msra.mxu0 0
  %1024 = vmatprep.subr.bf16.mxu0 0
  %1025 = vmatpush1.bf16.xpose.msra.mxu0 0
  %1026 = vmatprep.subr.bf16.mxu0 0
  %1027 = vmatpush1.bf16.xpose.msra.mxu0 0
  %1028 = vmatprep.subr.bf16.mxu0 0
  %1029 = vmatpush1.bf16.xpose.msra.mxu0 0
  %1030 = vmatprep.subr.bf16.mxu0 0
  %1031 = vmatpush1.bf16.xpose.msra.mxu0 0
  %1032 = vmatprep.subr.bf16.mxu0 0
  %1033 = vmatpush1.bf16.xpose.msra.mxu0 0
  %1034 = vmatprep.subr.bf16.mxu0 0
  %1035 = vmatpush1.bf16.xpose.msra.mxu0 0
  %1036 = vmatprep.subr.bf16.mxu0 0
  %1037 = vmatpush1.bf16.xpose.msra.mxu0 0
  %1038 = vmatprep.subr.bf16.mxu0 0
  %1039 = vmatpush1.bf16.xpose.msra.mxu0 0
  %1040 = vmatprep.subr.bf16.mxu0 0
  %1041 = vmatpush1.bf16.xpose.msra.mxu0 0
  %1042 = vmatprep.mubr.bf16.mxu0 0
  %1043 = vmatmul.mubr.bf16.gmra.mrb[0].mxu0 %v1005
  %v1044 = vpop.f32.mrb[0].mxu0
  %v1045 = vadd.f32 %v119, %v1044
  %v1046 = vpop.f32.mrb[0].mxu0
  %v1047 = vpop.f32.mrb[0].mxu0
  %v1048 = vpop.f32.mrb[0].mxu0
  %1049 = vdwg.mxu0
  %1050 = vrot.lane.b32.xlu0 %v183, 104
  %v1051 = vpop.permute.xlu0 %1050
  %1052 = vrot.lane.b32.xlu0 %v185, 72
  %v1053 = vpop.permute.xlu0 %1052
  %v1055 = vsel %vm189, %v1051, 0
  %v1058 = vsel %vm189, %v1053, 0
  %1060 = vmatprep.subr.bf16.mxu0 0
  %1061 = vmatpush1.bf16.xpose.msra.mxu0 %v1058
  %1062 = vmatprep.subr.bf16.mxu0 0
  %1063 = vmatpush1.bf16.xpose.msra.mxu0 0
  %1064 = vmatprep.subr.bf16.mxu0 0
  %1065 = vmatpush1.bf16.xpose.msra.mxu0 0
  %1066 = vmatprep.subr.bf16.mxu0 0
  %1067 = vmatpush1.bf16.xpose.msra.mxu0 0
  %1068 = vmatprep.subr.bf16.mxu0 0
  %1069 = vmatpush1.bf16.xpose.msra.mxu0 0
  %1070 = vmatprep.subr.bf16.mxu0 0
  %1071 = vmatpush1.bf16.xpose.msra.mxu0 0
  %1072 = vmatprep.subr.bf16.mxu0 0
  %1073 = vmatpush1.bf16.xpose.msra.mxu0 0
  %1074 = vmatprep.subr.bf16.mxu0 0
  %1075 = vmatpush1.bf16.xpose.msra.mxu0 0
  %1076 = vmatprep.subr.bf16.mxu0 0
  %1077 = vmatpush1.bf16.xpose.msra.mxu0 0
  %1078 = vmatprep.subr.bf16.mxu0 0
  %1079 = vmatpush1.bf16.xpose.msra.mxu0 0
  %1080 = vmatprep.subr.bf16.mxu0 0
  %1081 = vmatpush1.bf16.xpose.msra.mxu0 0
  %1082 = vmatprep.subr.bf16.mxu0 0
  %1083 = vmatpush1.bf16.xpose.msra.mxu0 0
  %1084 = vmatprep.subr.bf16.mxu0 0
  %1085 = vmatpush1.bf16.xpose.msra.mxu0 0
  %1086 = vmatprep.subr.bf16.mxu0 0
  %1087 = vmatpush1.bf16.xpose.msra.mxu0 0
  %1088 = vmatprep.subr.bf16.mxu0 0
  %1089 = vmatpush1.bf16.xpose.msra.mxu0 0
  %1090 = vmatprep.subr.bf16.mxu0 0
  %1091 = vmatpush1.bf16.xpose.msra.mxu0 0
  %1092 = vmatprep.mubr.bf16.mxu0 0
  %1093 = vmatmul.mubr.bf16.gmra.mrb[0].mxu0 %v1055
  %v1094 = vpop.f32.mrb[0].mxu0
  %v1095 = vadd.f32 %v120, %v1094
  %v1096 = vpop.f32.mrb[0].mxu0
  %v1097 = vpop.f32.mrb[0].mxu0
  %v1098 = vpop.f32.mrb[0].mxu0
  %1099 = vdwg.mxu0
  %v1100 = vsel %vm189, %v1045, -inf
  %1101 = vmax.xlane.f32.xlu0 %v1100
  %v1102 = vpop.xlane.xlu0 %1101
  %v1103 = vsel %vm189, %v1095, -inf
  %1104 = vmax.xlane.f32.xlu0 %v1103
  %v1105 = vpop.xlane.xlu0 %1104
  %v1106 = vsub.f32 %v1045, %v1102
  %v1107 = vsub.f32 %v1095, %v1105
  %v1108 = vmul.f32 %v1106, 1.442695
  %v1109 = vpow.pop %v1108
  %v1110 = vmul.f32 %v1107, 1.442695
  %v1111 = vpow.pop %v1110
  %v1112 = vsel %vm189, %v1109, 0.0
  %1113 = vadd.xlane.f32.xlu0 %v1112
  %v1114 = vpop.xlane.xlu0 %1113
  %v1115 = vsel %vm189, %v1111, 0.0
  %1116 = vadd.xlane.f32.xlu0 %v1115
  %v1117 = vpop.xlane.xlu0 %1116
  %v1118 = vrcp.pop %v1114
  %v1119 = vrcp.pop %v1117
  %v1120 = vmul.f32 %v1109, %v1118
  %v1121 = vmul.f32 %v1111, %v1119
  %v1122 = vpack.c.bf16 %v1120, %v1120
  %v1123 = vpack.c.bf16 %v1121, %v1121
  %1124 = vrot.lane.b32.xlu0 %v184, 40
  %v1125 = vpop.permute.xlu0 %1124
  %v1127 = vsel %vm189, %v1122, 0
  %v1130 = vsel %vm314, %v1125, 0
  %1132 = vmatprep.subr.bf16.mxu0 0
  %1133 = vmatpush1.bf16.msra.mxu0 %v1130
  %1134 = vmatprep.subr.bf16.mxu0 0
  %1135 = vmatpush1.bf16.msra.mxu0 0
  %1136 = vmatprep.subr.bf16.mxu0 0
  %1137 = vmatpush1.bf16.msra.mxu0 0
  %1138 = vmatprep.subr.bf16.mxu0 0
  %1139 = vmatpush1.bf16.msra.mxu0 0
  %1140 = vmatprep.subr.bf16.mxu0 0
  %1141 = vmatpush1.bf16.msra.mxu0 0
  %1142 = vmatprep.subr.bf16.mxu0 0
  %1143 = vmatpush1.bf16.msra.mxu0 0
  %1144 = vmatprep.subr.bf16.mxu0 0
  %1145 = vmatpush1.bf16.msra.mxu0 0
  %1146 = vmatprep.subr.bf16.mxu0 0
  %1147 = vmatpush1.bf16.msra.mxu0 0
  %1148 = vmatprep.subr.bf16.mxu0 0
  %1149 = vmatpush1.bf16.msra.mxu0 0
  %1150 = vmatprep.subr.bf16.mxu0 0
  %1151 = vmatpush1.bf16.msra.mxu0 0
  %1152 = vmatprep.subr.bf16.mxu0 0
  %1153 = vmatpush1.bf16.msra.mxu0 0
  %1154 = vmatprep.subr.bf16.mxu0 0
  %1155 = vmatpush1.bf16.msra.mxu0 0
  %1156 = vmatprep.subr.bf16.mxu0 0
  %1157 = vmatpush1.bf16.msra.mxu0 0
  %1158 = vmatprep.subr.bf16.mxu0 0
  %1159 = vmatpush1.bf16.msra.mxu0 0
  %1160 = vmatprep.subr.bf16.mxu0 0
  %1161 = vmatpush1.bf16.msra.mxu0 0
  %1162 = vmatprep.subr.bf16.mxu0 0
  %1163 = vmatpush1.bf16.msra.mxu0 0
  %1164 = vmatprep.mubr.bf16.mxu0 0
  %1165 = vmatmul.mubr.bf16.gmra.mrb[0].mxu0 %v1127
  %v1166 = vpop.f32.mrb[0].mxu0
  %v1167 = vadd.f32 0.0, %v1166
  %v1168 = vpop.f32.mrb[0].mxu0
  %v1169 = vpop.f32.mrb[0].mxu0
  %v1170 = vpop.f32.mrb[0].mxu0
  %1171 = vdwg.mxu0
  %1172 = vrot.lane.b32.xlu0 %v185, 40
  %v1173 = vpop.permute.xlu0 %1172
  %v1175 = vsel %vm189, %v1123, 0
  %v1178 = vsel %vm314, %v1173, 0
  %1180 = vmatprep.subr.bf16.mxu0 0
  %1181 = vmatpush1.bf16.msra.mxu0 %v1178
  %1182 = vmatprep.subr.bf16.mxu0 0
  %1183 = vmatpush1.bf16.msra.mxu0 0
  %1184 = vmatprep.subr.bf16.mxu0 0
  %1185 = vmatpush1.bf16.msra.mxu0 0
  %1186 = vmatprep.subr.bf16.mxu0 0
  %1187 = vmatpush1.bf16.msra.mxu0 0
  %1188 = vmatprep.subr.bf16.mxu0 0
  %1189 = vmatpush1.bf16.msra.mxu0 0
  %1190 = vmatprep.subr.bf16.mxu0 0
  %1191 = vmatpush1.bf16.msra.mxu0 0
  %1192 = vmatprep.subr.bf16.mxu0 0
  %1193 = vmatpush1.bf16.msra.mxu0 0
  %1194 = vmatprep.subr.bf16.mxu0 0
  %1195 = vmatpush1.bf16.msra.mxu0 0
  %1196 = vmatprep.subr.bf16.mxu0 0
  %1197 = vmatpush1.bf16.msra.mxu0 0
  %1198 = vmatprep.subr.bf16.mxu0 0
  %1199 = vmatpush1.bf16.msra.mxu0 0
  %1200 = vmatprep.subr.bf16.mxu0 0
  %1201 = vmatpush1.bf16.msra.mxu0 0
  %1202 = vmatprep.subr.bf16.mxu0 0
  %1203 = vmatpush1.bf16.msra.mxu0 0
  %1204 = vmatprep.subr.bf16.mxu0 0
  %1205 = vmatpush1.bf16.msra.mxu0 0
  %1206 = vmatprep.subr.bf16.mxu0 0
  %1207 = vmatpush1.bf16.msra.mxu0 0
  %1208 = vmatprep.subr.bf16.mxu0 0
  %1209 = vmatpush1.bf16.msra.mxu0 0
  %1210 = vmatprep.subr.bf16.mxu0 0
  %1211 = vmatpush1.bf16.msra.mxu0 0
  %1212 = vmatprep.mubr.bf16.mxu0 0
  %1213 = vmatmul.mubr.bf16.gmra.mrb[0].mxu0 %v1175
  %v1214 = vpop.f32.mrb[0].mxu0
  %v1215 = vadd.f32 0.0, %v1214
  %v1216 = vpop.f32.mrb[0].mxu0
  %v1217 = vpop.f32.mrb[0].mxu0
  %v1218 = vpop.f32.mrb[0].mxu0
  %1219 = vdwg.mxu0
  %v1220 = vpack.c.bf16 %v1215, %v1167
  %v1221 = vld [vmem:[%s5 + $0x18] sm:$0xff]
  %v1222 = vpack.c.bf16 %v1221, %v1221
  %v1224 = vsel %vm189, %v1220, 0
  %v1227 = vsel %vm314, %v1222, 0
  %1229 = vmatprep.subr.bf16.mxu0 0
  %1230 = vmatpush1.bf16.msra.mxu0 %v1227
  %1231 = vmatprep.subr.bf16.mxu0 0
  %1232 = vmatpush1.bf16.msra.mxu0 0
  %1233 = vmatprep.subr.bf16.mxu0 0
  %1234 = vmatpush1.bf16.msra.mxu0 0
  %1235 = vmatprep.subr.bf16.mxu0 0
  %1236 = vmatpush1.bf16.msra.mxu0 0
  %1237 = vmatprep.subr.bf16.mxu0 0
  %1238 = vmatpush1.bf16.msra.mxu0 0
  %1239 = vmatprep.subr.bf16.mxu0 0
  %1240 = vmatpush1.bf16.msra.mxu0 0
  %1241 = vmatprep.subr.bf16.mxu0 0
  %1242 = vmatpush1.bf16.msra.mxu0 0
  %1243 = vmatprep.subr.bf16.mxu0 0
  %1244 = vmatpush1.bf16.msra.mxu0 0
  %1245 = vmatprep.subr.bf16.mxu0 0
  %1246 = vmatpush1.bf16.msra.mxu0 0
  %1247 = vmatprep.subr.bf16.mxu0 0
  %1248 = vmatpush1.bf16.msra.mxu0 0
  %1249 = vmatprep.subr.bf16.mxu0 0
  %1250 = vmatpush1.bf16.msra.mxu0 0
  %1251 = vmatprep.subr.bf16.mxu0 0
  %1252 = vmatpush1.bf16.msra.mxu0 0
  %1253 = vmatprep.subr.bf16.mxu0 0
  %1254 = vmatpush1.bf16.msra.mxu0 0
  %1255 = vmatprep.subr.bf16.mxu0 0
  %1256 = vmatpush1.bf16.msra.mxu0 0
  %1257 = vmatprep.subr.bf16.mxu0 0
  %1258 = vmatpush1.bf16.msra.mxu0 0
  %1259 = vmatprep.subr.bf16.mxu0 0
  %1260 = vmatpush1.bf16.msra.mxu0 0
  %1261 = vmatprep.mubr.bf16.mxu0 0
  %1262 = vmatmul.mubr.bf16.gmra.mrb[0].mxu0 %v1224
  %v1263 = vpop.f32.mrb[0].mxu0
  %v1264 = vadd.f32 0.0, %v1263
  %v1265 = vpop.f32.mrb[0].mxu0
  %v1266 = vpop.f32.mrb[0].mxu0
  %v1267 = vadd.f32 0.0, %v1266
  %v1268 = vpop.f32.mrb[0].mxu0
  %1269 = vdwg.mxu0
  %v1270 = vadd.f32 %v998, %v1264
  %v1271 = vadd.f32 %v999, %v1267
  %v1272 = vld [vmem:[%s6] sm:$0x1]
  %v1274 = vlaneseq
  %v1275 = vshrl.u32 %v1274, 7
  %v1276 = vsub.s32 0, %v1275
  %v1277 = vrot.slane %v1272, %v1276
  %v1279 = vadd.f32 %v1270, %v1277
  %v1280 = vadd.f32 %v1271, %v1277
  %v1281 = vadd.f32 %v75, %v1279
  %v1282 = vadd.f32 %v76, %v1280
  %v1283 = vld [vmem:[%s7] sm:$0x1]
  %v1284 = vld [vmem:[%s8] sm:$0x1]
  %v1285 = vsel %vm135, %v1281, 0.0
  %1286 = vadd.xlane.f32.xlu0 %v1285
  %v1287 = vpop.xlane.xlu0 %1286
  %v1288 = vsel %vm135, %v1282, 0.0
  %1289 = vadd.xlane.f32.xlu0 %v1288
  %v1290 = vpop.xlane.xlu0 %1289
  %v1291 = vrcp.pop 32.0
  %v1292 = vmul.f32 %v1287, %v1291
  %v1293 = vmul.f32 %v1290, %v1291
  %v1294 = vsub.f32 %v1281, %v1292
  %v1295 = vsub.f32 %v1282, %v1293
  %v1296 = vmul.f32 %v1294, %v1294
  %v1297 = vmul.f32 %v1295, %v1295
  %v1298 = vsel %vm135, %v1296, 0.0
  %1299 = vadd.xlane.f32.xlu0 %v1298
  %v1300 = vpop.xlane.xlu0 %1299
  %v1301 = vsel %vm135, %v1297, 0.0
  %1302 = vadd.xlane.f32.xlu0 %v1301
  %v1303 = vpop.xlane.xlu0 %1302
  %v1304 = vmul.f32 %v1300, %v1291
  %v1305 = vmul.f32 %v1303, %v1291
  %v1306 = vadd.f32 %v1304, 1e-05
  %v1307 = vadd.f32 %v1305, 1e-05
  %v1308 = vrsqrt.pop %v1306
  %v1309 = vrsqrt.pop %v1307
  %v1310 = vmul.f32 %v1294, %v1308
  %v1311 = vmul.f32 %v1295, %v1309
  %v1313 = vlaneseq
  %v1314 = vshrl.u32 %v1313, 7
  %v1315 = vsub.s32 0, %v1314
  %v1316 = vrot.slane %v1283, %v1315
  %v1318 = vmul.f32 %v1310, %v1316
  %v1319 = vmul.f32 %v1311, %v1316
  %v1321 = vlaneseq
  %v1322 = vshrl.u32 %v1321, 7
  %v1323 = vsub.s32 0, %v1322
  %v1324 = vrot.slane %v1284, %v1323
  %v1326 = vadd.f32 %v1318, %v1324
  %v1327 = vadd.f32 %v1319, %v1324
  %v1328 = vpack.c.bf16 %v1327, %v1326
  %v1329 = vld [vmem:[%s9] sm:$0xff]
  %v1330 = vld [vmem:[%s9 + $0x8] sm:$0xff]
  %v1331 = vld [vmem:[%s9 + $0x10] sm:$0xff]
  %v1332 = vld [vmem:[%s9 + $0x18] sm:$0xff]
  %v1333 = vpack.c.bf16 %v1330, %v1329
  %v1334 = vpack.c.bf16 %v1332, %v1331
  %v1335 = vld [vmem:[%s10] sm:$0x1]
  %v1337 = vlaneseq
  %v1338 = vshrl.u32 %v1337, 7
  %v1339 = vsub.s32 0, %v1338
  %v1340 = vrot.slane %v1335, %v1339
  %v1343 = vsel %vm135, %v1328, 0
  %1345 = vmatprep.subr.bf16.mxu0 0
  %1346 = vmatpush1.bf16.msra.mxu0 %v1333
  %1347 = vmatprep.subr.bf16.mxu0 0
  %1348 = vmatpush1.bf16.msra.mxu0 %v1334
  %1349 = vmatprep.subr.bf16.mxu0 0
  %1350 = vmatpush1.bf16.msra.mxu0 0
  %1351 = vmatprep.subr.bf16.mxu0 0
  %1352 = vmatpush1.bf16.msra.mxu0 0
  %1353 = vmatprep.subr.bf16.mxu0 0
  %1354 = vmatpush1.bf16.msra.mxu0 0
  %1355 = vmatprep.subr.bf16.mxu0 0
  %1356 = vmatpush1.bf16.msra.mxu0 0
  %1357 = vmatprep.subr.bf16.mxu0 0
  %1358 = vmatpush1.bf16.msra.mxu0 0
  %1359 = vmatprep.subr.bf16.mxu0 0
  %1360 = vmatpush1.bf16.msra.mxu0 0
  %1361 = vmatprep.subr.bf16.mxu0 0
  %1362 = vmatpush1.bf16.msra.mxu0 0
  %1363 = vmatprep.subr.bf16.mxu0 0
  %1364 = vmatpush1.bf16.msra.mxu0 0
  %1365 = vmatprep.subr.bf16.mxu0 0
  %1366 = vmatpush1.bf16.msra.mxu0 0
  %1367 = vmatprep.subr.bf16.mxu0 0
  %1368 = vmatpush1.bf16.msra.mxu0 0
  %1369 = vmatprep.subr.bf16.mxu0 0
  %1370 = vmatpush1.bf16.msra.mxu0 0
  %1371 = vmatprep.subr.bf16.mxu0 0
  %1372 = vmatpush1.bf16.msra.mxu0 0
  %1373 = vmatprep.subr.bf16.mxu0 0
  %1374 = vmatpush1.bf16.msra.mxu0 0
  %1375 = vmatprep.subr.bf16.mxu0 0
  %1376 = vmatpush1.bf16.msra.mxu0 0
  %1377 = vmatprep.mubr.bf16.mxu0 0
  %1378 = vmatmul.mubr.bf16.gmra.mrb[0].mxu0 %v1343
  %v1379 = vpop.f32.mrb[0].mxu0
  %v1380 = vadd.f32 %v1340, %v1379
  %v1381 = vpop.f32.mrb[0].mxu0
  %v1382 = vpop.f32.mrb[0].mxu0
  %v1383 = vadd.f32 %v1340, %v1382
  %v1384 = vpop.f32.mrb[0].mxu0
  %1385 = vdwg.mxu0
  %v1386 = vpack.c.bf16 %v78, %v77
  %v1387 = vld [vmem:[%s11] sm:$0xff]
  %v1388 = vld [vmem:[%s11 + $0x8] sm:$0xff]
  %v1389 = vld [vmem:[%s11 + $0x10] sm:$0xff]
  %v1390 = vld [vmem:[%s11 + $0x18] sm:$0xff]
  %v1391 = vpack.c.bf16 %v1388, %v1387
  %v1392 = vpack.c.bf16 %v1390, %v1389
  %v1393 = vld [vmem:[%s12] sm:$0x1]
  %v1395 = vlaneseq
  %v1396 = vshrl.u32 %v1395, 7
  %v1397 = vsub.s32 0, %v1396
  %v1398 = vrot.slane %v1393, %v1397
  %v1401 = vsel %vm135, %v1386, 0
  %1403 = vmatprep.subr.bf16.mxu0 0
  %1404 = vmatpush1.bf16.msra.mxu0 %v1391
  %1405 = vmatprep.subr.bf16.mxu0 0
  %1406 = vmatpush1.bf16.msra.mxu0 %v1392
  %1407 = vmatprep.subr.bf16.mxu0 0
  %1408 = vmatpush1.bf16.msra.mxu0 0
  %1409 = vmatprep.subr.bf16.mxu0 0
  %1410 = vmatpush1.bf16.msra.mxu0 0
  %1411 = vmatprep.subr.bf16.mxu0 0
  %1412 = vmatpush1.bf16.msra.mxu0 0
  %1413 = vmatprep.subr.bf16.mxu0 0
  %1414 = vmatpush1.bf16.msra.mxu0 0
  %1415 = vmatprep.subr.bf16.mxu0 0
  %1416 = vmatpush1.bf16.msra.mxu0 0
  %1417 = vmatprep.subr.bf16.mxu0 0
  %1418 = vmatpush1.bf16.msra.mxu0 0
  %1419 = vmatprep.subr.bf16.mxu0 0
  %1420 = vmatpush1.bf16.msra.mxu0 0
  %1421 = vmatprep.subr.bf16.mxu0 0
  %1422 = vmatpush1.bf16.msra.mxu0 0
  %1423 = vmatprep.subr.bf16.mxu0 0
  %1424 = vmatpush1.bf16.msra.mxu0 0
  %1425 = vmatprep.subr.bf16.mxu0 0
  %1426 = vmatpush1.bf16.msra.mxu0 0
  %1427 = vmatprep.subr.bf16.mxu0 0
  %1428 = vmatpush1.bf16.msra.mxu0 0
  %1429 = vmatprep.subr.bf16.mxu0 0
  %1430 = vmatpush1.bf16.msra.mxu0 0
  %1431 = vmatprep.subr.bf16.mxu0 0
  %1432 = vmatpush1.bf16.msra.mxu0 0
  %1433 = vmatprep.subr.bf16.mxu0 0
  %1434 = vmatpush1.bf16.msra.mxu0 0
  %1435 = vmatprep.mubr.bf16.mxu0 0
  %1436 = vmatmul.mubr.bf16.gmra.mrb[0].mxu0 %v1401
  %v1437 = vpop.f32.mrb[0].mxu0
  %v1438 = vadd.f32 %v1398, %v1437
  %v1439 = vpop.f32.mrb[0].mxu0
  %v1440 = vpop.f32.mrb[0].mxu0
  %v1441 = vadd.f32 %v1398, %v1440
  %v1442 = vpop.f32.mrb[0].mxu0
  %1443 = vdwg.mxu0
  %v1444 = vmul.f32 %v1380, 0.35355338
  %v1445 = vmul.f32 %v1383, 0.35355338
  %v1446 = vpack.c.bf16 %v1444, %v1444
  %v1447 = vpack.c.bf16 %v1445, %v1445
  %v1448 = vpack.c.bf16 %v1438, %v1438
  %v1449 = vpack.c.bf16 %v1441, %v1441
  %v1451 = vsel %vm189, %v1446, 0
  %v1454 = vsel %vm189, %v1448, 0
  %1456 = vmatprep.subr.bf16.mxu0 0
  %1457 = vmatpush1.bf16.xpose.msra.mxu0 %v1454
  %1458 = vmatprep.subr.bf16.mxu0 0
  %1459 = vmatpush1.bf16.xpose.msra.mxu0 0
  %1460 = vmatprep.subr.bf16.mxu0 0
  %1461 = vmatpush1.bf16.xpose.msra.mxu0 0
  %1462 = vmatprep.subr.bf16.mxu0 0
  %1463 = vmatpush1.bf16.xpose.msra.mxu0 0
  %1464 = vmatprep.subr.bf16.mxu0 0
  %1465 = vmatpush1.bf16.xpose.msra.mxu0 0
  %1466 = vmatprep.subr.bf16.mxu0 0
  %1467 = vmatpush1.bf16.xpose.msra.mxu0 0
  %1468 = vmatprep.subr.bf16.mxu0 0
  %1469 = vmatpush1.bf16.xpose.msra.mxu0 0
  %1470 = vmatprep.subr.bf16.mxu0 0
  %1471 = vmatpush1.bf16.xpose.msra.mxu0 0
  %1472 = vmatprep.subr.bf16.mxu0 0
  %1473 = vmatpush1.bf16.xpose.msra.mxu0 0
  %1474 = vmatprep.subr.bf16.mxu0 0
  %1475 = vmatpush1.bf16.xpose.msra.mxu0 0
  %1476 = vmatprep.subr.bf16.mxu0 0
  %1477 = vmatpush1.bf16.xpose.msra.mxu0 0
  %1478 = vmatprep.subr.bf16.mxu0 0
  %1479 = vmatpush1.bf16.xpose.msra.mxu0 0
  %1480 = vmatprep.subr.bf16.mxu0 0
  %1481 = vmatpush1.bf16.xpose.msra.mxu0 0
  %1482 = vmatprep.subr.bf16.mxu0 0
  %1483 = vmatpush1.bf16.xpose.msra.mxu0 0
  %1484 = vmatprep.subr.bf16.mxu0 0
  %1485 = vmatpush1.bf16.xpose.msra.mxu0 0
  %1486 = vmatprep.subr.bf16.mxu0 0
  %1487 = vmatpush1.bf16.xpose.msra.mxu0 0
  %1488 = vmatprep.mubr.bf16.mxu0 0
  %1489 = vmatmul.mubr.bf16.gmra.mrb[0].mxu0 %v1451
  %v1490 = vpop.f32.mrb[0].mxu0
  %v1491 = vadd.f32 0.0, %v1490
  %v1492 = vpop.f32.mrb[0].mxu0
  %v1493 = vpop.f32.mrb[0].mxu0
  %v1494 = vpop.f32.mrb[0].mxu0
  %1495 = vdwg.mxu0
  %v1497 = vsel %vm189, %v1447, 0
  %v1500 = vsel %vm189, %v1449, 0
  %1502 = vmatprep.subr.bf16.mxu0 0
  %1503 = vmatpush1.bf16.xpose.msra.mxu0 %v1500
  %1504 = vmatprep.subr.bf16.mxu0 0
  %1505 = vmatpush1.bf16.xpose.msra.mxu0 0
  %1506 = vmatprep.subr.bf16.mxu0 0
  %1507 = vmatpush1.bf16.xpose.msra.mxu0 0
  %1508 = vmatprep.subr.bf16.mxu0 0
  %1509 = vmatpush1.bf16.xpose.msra.mxu0 0
  %1510 = vmatprep.subr.bf16.mxu0 0
  %1511 = vmatpush1.bf16.xpose.msra.mxu0 0
  %1512 = vmatprep.subr.bf16.mxu0 0
  %1513 = vmatpush1.bf16.xpose.msra.mxu0 0
  %1514 = vmatprep.subr.bf16.mxu0 0
  %1515 = vmatpush1.bf16.xpose.msra.mxu0 0
  %1516 = vmatprep.subr.bf16.mxu0 0
  %1517 = vmatpush1.bf16.xpose.msra.mxu0 0
  %1518 = vmatprep.subr.bf16.mxu0 0
  %1519 = vmatpush1.bf16.xpose.msra.mxu0 0
  %1520 = vmatprep.subr.bf16.mxu0 0
  %1521 = vmatpush1.bf16.xpose.msra.mxu0 0
  %1522 = vmatprep.subr.bf16.mxu0 0
  %1523 = vmatpush1.bf16.xpose.msra.mxu0 0
  %1524 = vmatprep.subr.bf16.mxu0 0
  %1525 = vmatpush1.bf16.xpose.msra.mxu0 0
  %1526 = vmatprep.subr.bf16.mxu0 0
  %1527 = vmatpush1.bf16.xpose.msra.mxu0 0
  %1528 = vmatprep.subr.bf16.mxu0 0
  %1529 = vmatpush1.bf16.xpose.msra.mxu0 0
  %1530 = vmatprep.subr.bf16.mxu0 0
  %1531 = vmatpush1.bf16.xpose.msra.mxu0 0
  %1532 = vmatprep.subr.bf16.mxu0 0
  %1533 = vmatpush1.bf16.xpose.msra.mxu0 0
  %1534 = vmatprep.mubr.bf16.mxu0 0
  %1535 = vmatmul.mubr.bf16.gmra.mrb[0].mxu0 %v1497
  %v1536 = vpop.f32.mrb[0].mxu0
  %v1537 = vadd.f32 0.0, %v1536
  %v1538 = vpop.f32.mrb[0].mxu0
  %v1539 = vpop.f32.mrb[0].mxu0
  %v1540 = vpop.f32.mrb[0].mxu0
  %1541 = vdwg.mxu0
  %v1542 = vsel %vm189, %v1491, -inf
  %1543 = vmax.xlane.f32.xlu0 %v1542
  %v1544 = vpop.xlane.xlu0 %1543
  %v1545 = vsel %vm189, %v1537, -inf
  %1546 = vmax.xlane.f32.xlu0 %v1545
  %v1547 = vpop.xlane.xlu0 %1546
  %v1548 = vsub.f32 %v1491, %v1544
  %v1549 = vsub.f32 %v1537, %v1547
  %v1550 = vmul.f32 %v1548, 1.442695
  %v1551 = vpow.pop %v1550
  %v1552 = vmul.f32 %v1549, 1.442695
  %v1553 = vpow.pop %v1552
  %v1554 = vsel %vm189, %v1551, 0.0
  %1555 = vadd.xlane.f32.xlu0 %v1554
  %v1556 = vpop.xlane.xlu0 %1555
  %v1557 = vsel %vm189, %v1553, 0.0
  %1558 = vadd.xlane.f32.xlu0 %v1557
  %v1559 = vpop.xlane.xlu0 %1558
  %v1560 = vrcp.pop %v1556
  %v1561 = vrcp.pop %v1559
  %v1562 = vmul.f32 %v1551, %v1560
  %v1563 = vmul.f32 %v1553, %v1561
  %v1564 = vpack.c.bf16 %v1562, %v1562
  %v1565 = vpack.c.bf16 %v1563, %v1563
  %1567 = vrot.lane.b32.xlu0 %v1448, 96
  %v1568 = vpop.permute.xlu0 %1567
  %v1570 = vsel %vm189, %v1564, 0
  %v1573 = vsel %vm314, %v1568, 0
  %1575 = vmatprep.subr.bf16.mxu0 0
  %1576 = vmatpush1.bf16.msra.mxu0 %v1573
  %1577 = vmatprep.subr.bf16.mxu0 0
  %1578 = vmatpush1.bf16.msra.mxu0 0
  %1579 = vmatprep.subr.bf16.mxu0 0
  %1580 = vmatpush1.bf16.msra.mxu0 0
  %1581 = vmatprep.subr.bf16.mxu0 0
  %1582 = vmatpush1.bf16.msra.mxu0 0
  %1583 = vmatprep.subr.bf16.mxu0 0
  %1584 = vmatpush1.bf16.msra.mxu0 0
  %1585 = vmatprep.subr.bf16.mxu0 0
  %1586 = vmatpush1.bf16.msra.mxu0 0
  %1587 = vmatprep.subr.bf16.mxu0 0
  %1588 = vmatpush1.bf16.msra.mxu0 0
  %1589 = vmatprep.subr.bf16.mxu0 0
  %1590 = vmatpush1.bf16.msra.mxu0 0
  %1591 = vmatprep.subr.bf16.mxu0 0
  %1592 = vmatpush1.bf16.msra.mxu0 0
  %1593 = vmatprep.subr.bf16.mxu0 0
  %1594 = vmatpush1.bf16.msra.mxu0 0
  %1595 = vmatprep.subr.bf16.mxu0 0
  %1596 = vmatpush1.bf16.msra.mxu0 0
  %1597 = vmatprep.subr.bf16.mxu0 0
  %1598 = vmatpush1.bf16.msra.mxu0 0
  %1599 = vmatprep.subr.bf16.mxu0 0
  %1600 = vmatpush1.bf16.msra.mxu0 0
  %1601 = vmatprep.subr.bf16.mxu0 0
  %1602 = vmatpush1.bf16.msra.mxu0 0
  %1603 = vmatprep.subr.bf16.mxu0 0
  %1604 = vmatpush1.bf16.msra.mxu0 0
  %1605 = vmatprep.subr.bf16.mxu0 0
  %1606 = vmatpush1.bf16.msra.mxu0 0
  %1607 = vmatprep.mubr.bf16.mxu0 0
  %1608 = vmatmul.mubr.bf16.gmra.mrb[0].mxu0 %v1570
  %v1609 = vpop.f32.mrb[0].mxu0
  %v1610 = vadd.f32 0.0, %v1609
  %v1611 = vpop.f32.mrb[0].mxu0
  %v1612 = vpop.f32.mrb[0].mxu0
  %v1613 = vpop.f32.mrb[0].mxu0
  %1614 = vdwg.mxu0
  %1616 = vrot.lane.b32.xlu0 %v1449, 96
  %v1617 = vpop.permute.xlu0 %1616
  %v1619 = vsel %vm189, %v1565, 0
  %v1622 = vsel %vm314, %v1617, 0
  %1624 = vmatprep.subr.bf16.mxu0 0
  %1625 = vmatpush1.bf16.msra.mxu0 %v1622
  %1626 = vmatprep.subr.bf16.mxu0 0
  %1627 = vmatpush1.bf16.msra.mxu0 0
  %1628 = vmatprep.subr.bf16.mxu0 0
  %1629 = vmatpush1.bf16.msra.mxu0 0
  %1630 = vmatprep.subr.bf16.mxu0 0
  %1631 = vmatpush1.bf16.msra.mxu0 0
  %1632 = vmatprep.subr.bf16.mxu0 0
  %1633 = vmatpush1.bf16.msra.mxu0 0
  %1634 = vmatprep.subr.bf16.mxu0 0
  %1635 = vmatpush1.bf16.msra.mxu0 0
  %1636 = vmatprep.subr.bf16.mxu0 0
  %1637 = vmatpush1.bf16.msra.mxu0 0
  %1638 = vmatprep.subr.bf16.mxu0 0
  %1639 = vmatpush1.bf16.msra.mxu0 0
  %1640 = vmatprep.subr.bf16.mxu0 0
  %1641 = vmatpush1.bf16.msra.mxu0 0
  %1642 = vmatprep.subr.bf16.mxu0 0
  %1643 = vmatpush1.bf16.msra.mxu0 0
  %1644 = vmatprep.subr.bf16.mxu0 0
  %1645 = vmatpush1.bf16.msra.mxu0 0
  %1646 = vmatprep.subr.bf16.mxu0 0
  %1647 = vmatpush1.bf16.msra.mxu0 0
  %1648 = vmatprep.subr.bf16.mxu0 0
  %1649 = vmatpush1.bf16.msra.mxu0 0
  %1650 = vmatprep.subr.bf16.mxu0 0
  %1651 = vmatpush1.bf16.msra.mxu0 0
  %1652 = vmatprep.subr.bf16.mxu0 0
  %1653 = vmatpush1.bf16.msra.mxu0 0
  %1654 = vmatprep.subr.bf16.mxu0 0
  %1655 = vmatpush1.bf16.msra.mxu0 0
  %1656 = vmatprep.mubr.bf16.mxu0 0
  %1657 = vmatmul.mubr.bf16.gmra.mrb[0].mxu0 %v1619
  %v1658 = vpop.f32.mrb[0].mxu0
  %v1659 = vadd.f32 0.0, %v1658
  %v1660 = vpop.f32.mrb[0].mxu0
  %v1661 = vpop.f32.mrb[0].mxu0
  %v1662 = vpop.f32.mrb[0].mxu0
  %1663 = vdwg.mxu0
  %v1664 = vpack.c.bf16 %v1659, %v1610
  %v1665 = vld [vmem:[%s13] sm:$0xff]
  %v1666 = vpack.c.bf16 %v1665, %v1665
  %1668 = vrot.lane.b32.xlu0 %v1446, 120
  %v1669 = vpop.permute.xlu0 %1668
  %1670 = vrot.lane.b32.xlu0 %v1448, 120
  %v1671 = vpop.permute.xlu0 %1670
  %v1673 = vsel %vm189, %v1669, 0
  %v1676 = vsel %vm189, %v1671, 0
  %1678 = vmatprep.subr.bf16.mxu0 0
  %1679 = vmatpush1.bf16.xpose.msra.mxu0 %v1676
  %1680 = vmatprep.subr.bf16.mxu0 0
  %1681 = vmatpush1.bf16.xpose.msra.mxu0 0
  %1682 = vmatprep.subr.bf16.mxu0 0
  %1683 = vmatpush1.bf16.xpose.msra.mxu0 0
  %1684 = vmatprep.subr.bf16.mxu0 0
  %1685 = vmatpush1.bf16.xpose.msra.mxu0 0
  %1686 = vmatprep.subr.bf16.mxu0 0
  %1687 = vmatpush1.bf16.xpose.msra.mxu0 0
  %1688 = vmatprep.subr.bf16.mxu0 0
  %1689 = vmatpush1.bf16.xpose.msra.mxu0 0
  %1690 = vmatprep.subr.bf16.mxu0 0
  %1691 = vmatpush1.bf16.xpose.msra.mxu0 0
  %1692 = vmatprep.subr.bf16.mxu0 0
  %1693 = vmatpush1.bf16.xpose.msra.mxu0 0
  %1694 = vmatprep.subr.bf16.mxu0 0
  %1695 = vmatpush1.bf16.xpose.msra.mxu0 0
  %1696 = vmatprep.subr.bf16.mxu0 0
  %1697 = vmatpush1.bf16.xpose.msra.mxu0 0
  %1698 = vmatprep.subr.bf16.mxu0 0
  %1699 = vmatpush1.bf16.xpose.msra.mxu0 0
  %1700 = vmatprep.subr.bf16.mxu0 0
  %1701 = vmatpush1.bf16.xpose.msra.mxu0 0
  %1702 = vmatprep.subr.bf16.mxu0 0
  %1703 = vmatpush1.bf16.xpose.msra.mxu0 0
  %1704 = vmatprep.subr.bf16.mxu0 0
  %1705 = vmatpush1.bf16.xpose.msra.mxu0 0
  %1706 = vmatprep.subr.bf16.mxu0 0
  %1707 = vmatpush1.bf16.xpose.msra.mxu0 0
  %1708 = vmatprep.subr.bf16.mxu0 0
  %1709 = vmatpush1.bf16.xpose.msra.mxu0 0
  %1710 = vmatprep.mubr.bf16.mxu0 0
  %1711 = vmatmul.mubr.bf16.gmra.mrb[0].mxu0 %v1673
  %v1712 = vpop.f32.mrb[0].mxu0
  %v1713 = vadd.f32 0.0, %v1712
  %v1714 = vpop.f32.mrb[0].mxu0
  %v1715 = vpop.f32.mrb[0].mxu0
  %v1716 = vpop.f32.mrb[0].mxu0
  %1717 = vdwg.mxu0
  %1719 = vrot.lane.b32.xlu0 %v1447, 120
  %v1720 = vpop.permute.xlu0 %1719
  %1721 = vrot.lane.b32.xlu0 %v1449, 120
  %v1722 = vpop.permute.xlu0 %1721
  %v1724 = vsel %vm189, %v1720, 0
  %v1727 = vsel %vm189, %v1722, 0
  %1729 = vmatprep.subr.bf16.mxu0 0
  %1730 = vmatpush1.bf16.xpose.msra.mxu0 %v1727
  %1731 = vmatprep.subr.bf16.mxu0 0
  %1732 = vmatpush1.bf16.xpose.msra.mxu0 0
  %1733 = vmatprep.subr.bf16.mxu0 0
  %1734 = vmatpush1.bf16.xpose.msra.mxu0 0
  %1735 = vmatprep.subr.bf16.mxu0 0
  %1736 = vmatpush1.bf16.xpose.msra.mxu0 0
  %1737 = vmatprep.subr.bf16.mxu0 0
  %1738 = vmatpush1.bf16.xpose.msra.mxu0 0
  %1739 = vmatprep.subr.bf16.mxu0 0
  %1740 = vmatpush1.bf16.xpose.msra.mxu0 0
  %1741 = vmatprep.subr.bf16.mxu0 0
  %1742 = vmatpush1.bf16.xpose.msra.mxu0 0
  %1743 = vmatprep.subr.bf16.mxu0 0
  %1744 = vmatpush1.bf16.xpose.msra.mxu0 0
  %1745 = vmatprep.subr.bf16.mxu0 0
  %1746 = vmatpush1.bf16.xpose.msra.mxu0 0
  %1747 = vmatprep.subr.bf16.mxu0 0
  %1748 = vmatpush1.bf16.xpose.msra.mxu0 0
  %1749 = vmatprep.subr.bf16.mxu0 0
  %1750 = vmatpush1.bf16.xpose.msra.mxu0 0
  %1751 = vmatprep.subr.bf16.mxu0 0
  %1752 = vmatpush1.bf16.xpose.msra.mxu0 0
  %1753 = vmatprep.subr.bf16.mxu0 0
  %1754 = vmatpush1.bf16.xpose.msra.mxu0 0
  %1755 = vmatprep.subr.bf16.mxu0 0
  %1756 = vmatpush1.bf16.xpose.msra.mxu0 0
  %1757 = vmatprep.subr.bf16.mxu0 0
  %1758 = vmatpush1.bf16.xpose.msra.mxu0 0
  %1759 = vmatprep.subr.bf16.mxu0 0
  %1760 = vmatpush1.bf16.xpose.msra.mxu0 0
  %1761 = vmatprep.mubr.bf16.mxu0 0
  %1762 = vmatmul.mubr.bf16.gmra.mrb[0].mxu0 %v1724
  %v1763 = vpop.f32.mrb[0].mxu0
  %v1764 = vadd.f32 0.0, %v1763
  %v1765 = vpop.f32.mrb[0].mxu0
  %v1766 = vpop.f32.mrb[0].mxu0
  %v1767 = vpop.f32.mrb[0].mxu0
  %1768 = vdwg.mxu0
  %v1769 = vsel %vm189, %v1713, -inf
  %1770 = vmax.xlane.f32.xlu0 %v1769
  %v1771 = vpop.xlane.xlu0 %1770
  %v1772 = vsel %vm189, %v1764, -inf
  %1773 = vmax.xlane.f32.xlu0 %v1772
  %v1774 = vpop.xlane.xlu0 %1773
  %v1775 = vsub.f32 %v1713, %v1771
  %v1776 = vsub.f32 %v1764, %v1774
  %v1777 = vmul.f32 %v1775, 1.442695
  %v1778 = vpow.pop %v1777
  %v1779 = vmul.f32 %v1776, 1.442695
  %v1780 = vpow.pop %v1779
  %v1781 = vsel %vm189, %v1778, 0.0
  %1782 = vadd.xlane.f32.xlu0 %v1781
  %v1783 = vpop.xlane.xlu0 %1782
  %v1784 = vsel %vm189, %v1780, 0.0
  %1785 = vadd.xlane.f32.xlu0 %v1784
  %v1786 = vpop.xlane.xlu0 %1785
  %v1787 = vrcp.pop %v1783
  %v1788 = vrcp.pop %v1786
  %v1789 = vmul.f32 %v1778, %v1787
  %v1790 = vmul.f32 %v1780, %v1788
  %v1791 = vpack.c.bf16 %v1789, %v1789
  %v1792 = vpack.c.bf16 %v1790, %v1790
  %1793 = vrot.lane.b32.xlu0 %v1448, 88
  %v1794 = vpop.permute.xlu0 %1793
  %v1796 = vsel %vm189, %v1791, 0
  %v1799 = vsel %vm314, %v1794, 0
  %1801 = vmatprep.subr.bf16.mxu0 0
  %1802 = vmatpush1.bf16.msra.mxu0 %v1799
  %1803 = vmatprep.subr.bf16.mxu0 0
  %1804 = vmatpush1.bf16.msra.mxu0 0
  %1805 = vmatprep.subr.bf16.mxu0 0
  %1806 = vmatpush1.bf16.msra.mxu0 0
  %1807 = vmatprep.subr.bf16.mxu0 0
  %1808 = vmatpush1.bf16.msra.mxu0 0
  %1809 = vmatprep.subr.bf16.mxu0 0
  %1810 = vmatpush1.bf16.msra.mxu0 0
  %1811 = vmatprep.subr.bf16.mxu0 0
  %1812 = vmatpush1.bf16.msra.mxu0 0
  %1813 = vmatprep.subr.bf16.mxu0 0
  %1814 = vmatpush1.bf16.msra.mxu0 0
  %1815 = vmatprep.subr.bf16.mxu0 0
  %1816 = vmatpush1.bf16.msra.mxu0 0
  %1817 = vmatprep.subr.bf16.mxu0 0
  %1818 = vmatpush1.bf16.msra.mxu0 0
  %1819 = vmatprep.subr.bf16.mxu0 0
  %1820 = vmatpush1.bf16.msra.mxu0 0
  %1821 = vmatprep.subr.bf16.mxu0 0
  %1822 = vmatpush1.bf16.msra.mxu0 0
  %1823 = vmatprep.subr.bf16.mxu0 0
  %1824 = vmatpush1.bf16.msra.mxu0 0
  %1825 = vmatprep.subr.bf16.mxu0 0
  %1826 = vmatpush1.bf16.msra.mxu0 0
  %1827 = vmatprep.subr.bf16.mxu0 0
  %1828 = vmatpush1.bf16.msra.mxu0 0
  %1829 = vmatprep.subr.bf16.mxu0 0
  %1830 = vmatpush1.bf16.msra.mxu0 0
  %1831 = vmatprep.subr.bf16.mxu0 0
  %1832 = vmatpush1.bf16.msra.mxu0 0
  %1833 = vmatprep.mubr.bf16.mxu0 0
  %1834 = vmatmul.mubr.bf16.gmra.mrb[0].mxu0 %v1796
  %v1835 = vpop.f32.mrb[0].mxu0
  %v1836 = vadd.f32 0.0, %v1835
  %v1837 = vpop.f32.mrb[0].mxu0
  %v1838 = vpop.f32.mrb[0].mxu0
  %v1839 = vpop.f32.mrb[0].mxu0
  %1840 = vdwg.mxu0
  %1841 = vrot.lane.b32.xlu0 %v1449, 88
  %v1842 = vpop.permute.xlu0 %1841
  %v1844 = vsel %vm189, %v1792, 0
  %v1847 = vsel %vm314, %v1842, 0
  %1849 = vmatprep.subr.bf16.mxu0 0
  %1850 = vmatpush1.bf16.msra.mxu0 %v1847
  %1851 = vmatprep.subr.bf16.mxu0 0
  %1852 = vmatpush1.bf16.msra.mxu0 0
  %1853 = vmatprep.subr.bf16.mxu0 0
  %1854 = vmatpush1.bf16.msra.mxu0 0
  %1855 = vmatprep.subr.bf16.mxu0 0
  %1856 = vmatpush1.bf16.msra.mxu0 0
  %1857 = vmatprep.subr.bf16.mxu0 0
  %1858 = vmatpush1.bf16.msra.mxu0 0
  %1859 = vmatprep.subr.bf16.mxu0 0
  %1860 = vmatpush1.bf16.msra.mxu0 0
  %1861 = vmatprep.subr.bf16.mxu0 0
  %1862 = vmatpush1.bf16.msra.mxu0 0
  %1863 = vmatprep.subr.bf16.mxu0 0
  %1864 = vmatpush1.bf16.msra.mxu0 0
  %1865 = vmatprep.subr.bf16.mxu0 0
  %1866 = vmatpush1.bf16.msra.mxu0 0
  %1867 = vmatprep.subr.bf16.mxu0 0
  %1868 = vmatpush1.bf16.msra.mxu0 0
  %1869 = vmatprep.subr.bf16.mxu0 0
  %1870 = vmatpush1.bf16.msra.mxu0 0
  %1871 = vmatprep.subr.bf16.mxu0 0
  %1872 = vmatpush1.bf16.msra.mxu0 0
  %1873 = vmatprep.subr.bf16.mxu0 0
  %1874 = vmatpush1.bf16.msra.mxu0 0
  %1875 = vmatprep.subr.bf16.mxu0 0
  %1876 = vmatpush1.bf16.msra.mxu0 0
  %1877 = vmatprep.subr.bf16.mxu0 0
  %1878 = vmatpush1.bf16.msra.mxu0 0
  %1879 = vmatprep.subr.bf16.mxu0 0
  %1880 = vmatpush1.bf16.msra.mxu0 0
  %1881 = vmatprep.mubr.bf16.mxu0 0
  %1882 = vmatmul.mubr.bf16.gmra.mrb[0].mxu0 %v1844
  %v1883 = vpop.f32.mrb[0].mxu0
  %v1884 = vadd.f32 0.0, %v1883
  %v1885 = vpop.f32.mrb[0].mxu0
  %v1886 = vpop.f32.mrb[0].mxu0
  %v1887 = vpop.f32.mrb[0].mxu0
  %1888 = vdwg.mxu0
  %v1889 = vpack.c.bf16 %v1884, %v1836
  %v1890 = vld [vmem:[%s13 + $0x8] sm:$0xff]
  %v1891 = vpack.c.bf16 %v1890, %v1890
  %v1893 = vsel %vm189, %v1889, 0
  %v1896 = vsel %vm314, %v1891, 0
  %1898 = vmatprep.subr.bf16.mxu0 0
  %1899 = vmatpush1.bf16.msra.mxu0 %v1896
  %1900 = vmatprep.subr.bf16.mxu0 0
  %1901 = vmatpush1.bf16.msra.mxu0 0
  %1902 = vmatprep.subr.bf16.mxu0 0
  %1903 = vmatpush1.bf16.msra.mxu0 0
  %1904 = vmatprep.subr.bf16.mxu0 0
  %1905 = vmatpush1.bf16.msra.mxu0 0
  %1906 = vmatprep.subr.bf16.mxu0 0
  %1907 = vmatpush1.bf16.msra.mxu0 0
  %1908 = vmatprep.subr.bf16.mxu0 0
  %1909 = vmatpush1.bf16.msra.mxu0 0
  %1910 = vmatprep.subr.bf16.mxu0 0
  %1911 = vmatpush1.bf16.msra.mxu0 0
  %1912 = vmatprep.subr.bf16.mxu0 0
  %1913 = vmatpush1.bf16.msra.mxu0 0
  %1914 = vmatprep.subr.bf16.mxu0 0
  %1915 = vmatpush1.bf16.msra.mxu0 0
  %1916 = vmatprep.subr.bf16.mxu0 0
  %1917 = vmatpush1.bf16.msra.mxu0 0
  %1918 = vmatprep.subr.bf16.mxu0 0
  %1919 = vmatpush1.bf16.msra.mxu0 0
  %1920 = vmatprep.subr.bf16.mxu0 0
  %1921 = vmatpush1.bf16.msra.mxu0 0
  %1922 = vmatprep.subr.bf16.mxu0 0
  %1923 = vmatpush1.bf16.msra.mxu0 0
  %1924 = vmatprep.subr.bf16.mxu0 0
  %1925 = vmatpush1.bf16.msra.mxu0 0
  %1926 = vmatprep.subr.bf16.mxu0 0
  %1927 = vmatpush1.bf16.msra.mxu0 0
  %1928 = vmatprep.subr.bf16.mxu0 0
  %1929 = vmatpush1.bf16.msra.mxu0 0
  %1930 = vmatprep.mubr.bf16.mxu0 0
  %1931 = vmatmul.mubr.bf16.gmra.mrb[0].mxu0 %v1893
  %v1932 = vpop.f32.mrb[0].mxu0
  %v1933 = vadd.f32 0.0, %v1932
  %v1934 = vpop.f32.mrb[0].mxu0
  %v1935 = vpop.f32.mrb[0].mxu0
  %v1936 = vadd.f32 0.0, %v1935
  %v1937 = vpop.f32.mrb[0].mxu0
  %1938 = vdwg.mxu0
  %v1940 = vsel %vm189, %v1664, 0
  %v1943 = vsel %vm314, %v1666, 0
  %1945 = vmatprep.subr.bf16.mxu0 0
  %1946 = vmatpush1.bf16.msra.mxu0 %v1943
  %1947 = vmatprep.subr.bf16.mxu0 0
  %1948 = vmatpush1.bf16.msra.mxu0 0
  %1949 = vmatprep.subr.bf16.mxu0 0
  %1950 = vmatpush1.bf16.msra.mxu0 0
  %1951 = vmatprep.subr.bf16.mxu0 0
  %1952 = vmatpush1.bf16.msra.mxu0 0
  %1953 = vmatprep.subr.bf16.mxu0 0
  %1954 = vmatpush1.bf16.msra.mxu0 0
  %1955 = vmatprep.subr.bf16.mxu0 0
  %1956 = vmatpush1.bf16.msra.mxu0 0
  %1957 = vmatprep.subr.bf16.mxu0 0
  %1958 = vmatpush1.bf16.msra.mxu0 0
  %1959 = vmatprep.subr.bf16.mxu0 0
  %1960 = vmatpush1.bf16.msra.mxu0 0
  %1961 = vmatprep.subr.bf16.mxu0 0
  %1962 = vmatpush1.bf16.msra.mxu0 0
  %1963 = vmatprep.subr.bf16.mxu0 0
  %1964 = vmatpush1.bf16.msra.mxu0 0
  %1965 = vmatprep.subr.bf16.mxu0 0
  %1966 = vmatpush1.bf16.msra.mxu0 0
  %1967 = vmatprep.subr.bf16.mxu0 0
  %1968 = vmatpush1.bf16.msra.mxu0 0
  %1969 = vmatprep.subr.bf16.mxu0 0
  %1970 = vmatpush1.bf16.msra.mxu0 0
  %1971 = vmatprep.subr.bf16.mxu0 0
  %1972 = vmatpush1.bf16.msra.mxu0 0
  %1973 = vmatprep.subr.bf16.mxu0 0
  %1974 = vmatpush1.bf16.msra.mxu0 0
  %1975 = vmatprep.subr.bf16.mxu0 0
  %1976 = vmatpush1.bf16.msra.mxu0 0
  %1977 = vmatprep.mubr.bf16.mxu0 0
  %1978 = vmatmul.mubr.bf16.gmra.mrb[0].mxu0 %v1940
  %v1979 = vpop.f32.mrb[0].mxu0
  %v1980 = vadd.f32 %v1933, %v1979
  %v1981 = vpop.f32.mrb[0].mxu0
  %v1982 = vpop.f32.mrb[0].mxu0
  %v1983 = vadd.f32 %v1936, %v1982
  %v1984 = vpop.f32.mrb[0].mxu0
  %1985 = vdwg.mxu0
  %1986 = vrot.lane.b32.xlu0 %v1446, 112
  %v1987 = vpop.permute.xlu0 %1986
  %1988 = vrot.lane.b32.xlu0 %v1448, 112
  %v1989 = vpop.permute.xlu0 %1988
  %v1991 = vsel %vm189, %v1987, 0
  %v1994 = vsel %vm189, %v1989, 0
  %1996 = vmatprep.subr.bf16.mxu0 0
  %1997 = vmatpush1.bf16.xpose.msra.mxu0 %v1994
  %1998 = vmatprep.subr.bf16.mxu0 0
  %1999 = vmatpush1.bf16.xpose.msra.mxu0 0
  %2000 = vmatprep.subr.bf16.mxu0 0
  %2001 = vmatpush1.bf16.xpose.msra.mxu0 0
  %2002 = vmatprep.subr.bf16.mxu0 0
  %2003 = vmatpush1.bf16.xpose.msra.mxu0 0
  %2004 = vmatprep.subr.bf16.mxu0 0
  %2005 = vmatpush1.bf16.xpose.msra.mxu0 0
  %2006 = vmatprep.subr.bf16.mxu0 0
  %2007 = vmatpush1.bf16.xpose.msra.mxu0 0
  %2008 = vmatprep.subr.bf16.mxu0 0
  %2009 = vmatpush1.bf16.xpose.msra.mxu0 0
  %2010 = vmatprep.subr.bf16.mxu0 0
  %2011 = vmatpush1.bf16.xpose.msra.mxu0 0
  %2012 = vmatprep.subr.bf16.mxu0 0
  %2013 = vmatpush1.bf16.xpose.msra.mxu0 0
  %2014 = vmatprep.subr.bf16.mxu0 0
  %2015 = vmatpush1.bf16.xpose.msra.mxu0 0
  %2016 = vmatprep.subr.bf16.mxu0 0
  %2017 = vmatpush1.bf16.xpose.msra.mxu0 0
  %2018 = vmatprep.subr.bf16.mxu0 0
  %2019 = vmatpush1.bf16.xpose.msra.mxu0 0
  %2020 = vmatprep.subr.bf16.mxu0 0
  %2021 = vmatpush1.bf16.xpose.msra.mxu0 0
  %2022 = vmatprep.subr.bf16.mxu0 0
  %2023 = vmatpush1.bf16.xpose.msra.mxu0 0
  %2024 = vmatprep.subr.bf16.mxu0 0
  %2025 = vmatpush1.bf16.xpose.msra.mxu0 0
  %2026 = vmatprep.subr.bf16.mxu0 0
  %2027 = vmatpush1.bf16.xpose.msra.mxu0 0
  %2028 = vmatprep.mubr.bf16.mxu0 0
  %2029 = vmatmul.mubr.bf16.gmra.mrb[0].mxu0 %v1991
  %v2030 = vpop.f32.mrb[0].mxu0
  %v2031 = vadd.f32 0.0, %v2030
  %v2032 = vpop.f32.mrb[0].mxu0
  %v2033 = vpop.f32.mrb[0].mxu0
  %v2034 = vpop.f32.mrb[0].mxu0
  %2035 = vdwg.mxu0
  %2036 = vrot.lane.b32.xlu0 %v1447, 112
  %v2037 = vpop.permute.xlu0 %2036
  %2038 = vrot.lane.b32.xlu0 %v1449, 112
  %v2039 = vpop.permute.xlu0 %2038
  %v2041 = vsel %vm189, %v2037, 0
  %v2044 = vsel %vm189, %v2039, 0
  %2046 = vmatprep.subr.bf16.mxu0 0
  %2047 = vmatpush1.bf16.xpose.msra.mxu0 %v2044
  %2048 = vmatprep.subr.bf16.mxu0 0
  %2049 = vmatpush1.bf16.xpose.msra.mxu0 0
  %2050 = vmatprep.subr.bf16.mxu0 0
  %2051 = vmatpush1.bf16.xpose.msra.mxu0 0
  %2052 = vmatprep.subr.bf16.mxu0 0
  %2053 = vmatpush1.bf16.xpose.msra.mxu0 0
  %2054 = vmatprep.subr.bf16.mxu0 0
  %2055 = vmatpush1.bf16.xpose.msra.mxu0 0
  %2056 = vmatprep.subr.bf16.mxu0 0
  %2057 = vmatpush1.bf16.xpose.msra.mxu0 0
  %2058 = vmatprep.subr.bf16.mxu0 0
  %2059 = vmatpush1.bf16.xpose.msra.mxu0 0
  %2060 = vmatprep.subr.bf16.mxu0 0
  %2061 = vmatpush1.bf16.xpose.msra.mxu0 0
  %2062 = vmatprep.subr.bf16.mxu0 0
  %2063 = vmatpush1.bf16.xpose.msra.mxu0 0
  %2064 = vmatprep.subr.bf16.mxu0 0
  %2065 = vmatpush1.bf16.xpose.msra.mxu0 0
  %2066 = vmatprep.subr.bf16.mxu0 0
  %2067 = vmatpush1.bf16.xpose.msra.mxu0 0
  %2068 = vmatprep.subr.bf16.mxu0 0
  %2069 = vmatpush1.bf16.xpose.msra.mxu0 0
  %2070 = vmatprep.subr.bf16.mxu0 0
  %2071 = vmatpush1.bf16.xpose.msra.mxu0 0
  %2072 = vmatprep.subr.bf16.mxu0 0
  %2073 = vmatpush1.bf16.xpose.msra.mxu0 0
  %2074 = vmatprep.subr.bf16.mxu0 0
  %2075 = vmatpush1.bf16.xpose.msra.mxu0 0
  %2076 = vmatprep.subr.bf16.mxu0 0
  %2077 = vmatpush1.bf16.xpose.msra.mxu0 0
  %2078 = vmatprep.mubr.bf16.mxu0 0
  %2079 = vmatmul.mubr.bf16.gmra.mrb[0].mxu0 %v2041
  %v2080 = vpop.f32.mrb[0].mxu0
  %v2081 = vadd.f32 0.0, %v2080
  %v2082 = vpop.f32.mrb[0].mxu0
  %v2083 = vpop.f32.mrb[0].mxu0
  %v2084 = vpop.f32.mrb[0].mxu0
  %2085 = vdwg.mxu0
  %v2086 = vsel %vm189, %v2031, -inf
  %2087 = vmax.xlane.f32.xlu0 %v2086
  %v2088 = vpop.xlane.xlu0 %2087
  %v2089 = vsel %vm189, %v2081, -inf
  %2090 = vmax.xlane.f32.xlu0 %v2089
  %v2091 = vpop.xlane.xlu0 %2090
  %v2092 = vsub.f32 %v2031, %v2088
  %v2093 = vsub.f32 %v2081, %v2091
  %v2094 = vmul.f32 %v2092, 1.442695
  %v2095 = vpow.pop %v2094
  %v2096 = vmul.f32 %v2093, 1.442695
  %v2097 = vpow.pop %v2096
  %v2098 = vsel %vm189, %v2095, 0.0
  %2099 = vadd.xlane.f32.xlu0 %v2098
  %v2100 = vpop.xlane.xlu0 %2099
  %v2101 = vsel %vm189, %v2097, 0.0
  %2102 = vadd.xlane.f32.xlu0 %v2101
  %v2103 = vpop.xlane.xlu0 %2102
  %v2104 = vrcp.pop %v2100
  %v2105 = vrcp.pop %v2103
  %v2106 = vmul.f32 %v2095, %v2104
  %v2107 = vmul.f32 %v2097, %v2105
  %v2108 = vpack.c.bf16 %v2106, %v2106
  %v2109 = vpack.c.bf16 %v2107, %v2107
  %2110 = vrot.lane.b32.xlu0 %v1448, 80
  %v2111 = vpop.permute.xlu0 %2110
  %v2113 = vsel %vm189, %v2108, 0
  %v2116 = vsel %vm314, %v2111, 0
  %2118 = vmatprep.subr.bf16.mxu0 0
  %2119 = vmatpush1.bf16.msra.mxu0 %v2116
  %2120 = vmatprep.subr.bf16.mxu0 0
  %2121 = vmatpush1.bf16.msra.mxu0 0
  %2122 = vmatprep.subr.bf16.mxu0 0
  %2123 = vmatpush1.bf16.msra.mxu0 0
  %2124 = vmatprep.subr.bf16.mxu0 0
  %2125 = vmatpush1.bf16.msra.mxu0 0
  %2126 = vmatprep.subr.bf16.mxu0 0
  %2127 = vmatpush1.bf16.msra.mxu0 0
  %2128 = vmatprep.subr.bf16.mxu0 0
  %2129 = vmatpush1.bf16.msra.mxu0 0
  %2130 = vmatprep.subr.bf16.mxu0 0
  %2131 = vmatpush1.bf16.msra.mxu0 0
  %2132 = vmatprep.subr.bf16.mxu0 0
  %2133 = vmatpush1.bf16.msra.mxu0 0
  %2134 = vmatprep.subr.bf16.mxu0 0
  %2135 = vmatpush1.bf16.msra.mxu0 0
  %2136 = vmatprep.subr.bf16.mxu0 0
  %2137 = vmatpush1.bf16.msra.mxu0 0
  %2138 = vmatprep.subr.bf16.mxu0 0
  %2139 = vmatpush1.bf16.msra.mxu0 0
  %2140 = vmatprep.subr.bf16.mxu0 0
  %2141 = vmatpush1.bf16.msra.mxu0 0
  %2142 = vmatprep.subr.bf16.mxu0 0
  %2143 = vmatpush1.bf16.msra.mxu0 0
  %2144 = vmatprep.subr.bf16.mxu0 0
  %2145 = vmatpush1.bf16.msra.mxu0 0
  %2146 = vmatprep.subr.bf16.mxu0 0
  %2147 = vmatpush1.bf16.msra.mxu0 0
  %2148 = vmatprep.subr.bf16.mxu0 0
  %2149 = vmatpush1.bf16.msra.mxu0 0
  %2150 = vmatprep.mubr.bf16.mxu0 0
  %2151 = vmatmul.mubr.bf16.gmra.mrb[0].mxu0 %v2113
  %v2152 = vpop.f32.mrb[0].mxu0
  %v2153 = vadd.f32 0.0, %v2152
  %v2154 = vpop.f32.mrb[0].mxu0
  %v2155 = vpop.f32.mrb[0].mxu0
  %v2156 = vpop.f32.mrb[0].mxu0
  %2157 = vdwg.mxu0
  %2158 = vrot.lane.b32.xlu0 %v1449, 80
  %v2159 = vpop.permute.xlu0 %2158
  %v2161 = vsel %vm189, %v2109, 0
  %v2164 = vsel %vm314, %v2159, 0
  %2166 = vmatprep.subr.bf16.mxu0 0
  %2167 = vmatpush1.bf16.msra.mxu0 %v2164
  %2168 = vmatprep.subr.bf16.mxu0 0
  %2169 = vmatpush1.bf16.msra.mxu0 0
  %2170 = vmatprep.subr.bf16.mxu0 0
  %2171 = vmatpush1.bf16.msra.mxu0 0
  %2172 = vmatprep.subr.bf16.mxu0 0
  %2173 = vmatpush1.bf16.msra.mxu0 0
  %2174 = vmatprep.subr.bf16.mxu0 0
  %2175 = vmatpush1.bf16.msra.mxu0 0
  %2176 = vmatprep.subr.bf16.mxu0 0
  %2177 = vmatpush1.bf16.msra.mxu0 0
  %2178 = vmatprep.subr.bf16.mxu0 0
  %2179 = vmatpush1.bf16.msra.mxu0 0
  %2180 = vmatprep.subr.bf16.mxu0 0
  %2181 = vmatpush1.bf16.msra.mxu0 0
  %2182 = vmatprep.subr.bf16.mxu0 0
  %2183 = vmatpush1.bf16.msra.mxu0 0
  %2184 = vmatprep.subr.bf16.mxu0 0
  %2185 = vmatpush1.bf16.msra.mxu0 0
  %2186 = vmatprep.subr.bf16.mxu0 0
  %2187 = vmatpush1.bf16.msra.mxu0 0
  %2188 = vmatprep.subr.bf16.mxu0 0
  %2189 = vmatpush1.bf16.msra.mxu0 0
  %2190 = vmatprep.subr.bf16.mxu0 0
  %2191 = vmatpush1.bf16.msra.mxu0 0
  %2192 = vmatprep.subr.bf16.mxu0 0
  %2193 = vmatpush1.bf16.msra.mxu0 0
  %2194 = vmatprep.subr.bf16.mxu0 0
  %2195 = vmatpush1.bf16.msra.mxu0 0
  %2196 = vmatprep.subr.bf16.mxu0 0
  %2197 = vmatpush1.bf16.msra.mxu0 0
  %2198 = vmatprep.mubr.bf16.mxu0 0
  %2199 = vmatmul.mubr.bf16.gmra.mrb[0].mxu0 %v2161
  %v2200 = vpop.f32.mrb[0].mxu0
  %v2201 = vadd.f32 0.0, %v2200
  %v2202 = vpop.f32.mrb[0].mxu0
  %v2203 = vpop.f32.mrb[0].mxu0
  %v2204 = vpop.f32.mrb[0].mxu0
  %2205 = vdwg.mxu0
  %v2206 = vpack.c.bf16 %v2201, %v2153
  %v2207 = vld [vmem:[%s13 + $0x10] sm:$0xff]
  %v2208 = vpack.c.bf16 %v2207, %v2207
  %v2210 = vsel %vm189, %v2206, 0
  %v2213 = vsel %vm314, %v2208, 0
  %2215 = vmatprep.subr.bf16.mxu0 0
  %2216 = vmatpush1.bf16.msra.mxu0 %v2213
  %2217 = vmatprep.subr.bf16.mxu0 0
  %2218 = vmatpush1.bf16.msra.mxu0 0
  %2219 = vmatprep.subr.bf16.mxu0 0
  %2220 = vmatpush1.bf16.msra.mxu0 0
  %2221 = vmatprep.subr.bf16.mxu0 0
  %2222 = vmatpush1.bf16.msra.mxu0 0
  %2223 = vmatprep.subr.bf16.mxu0 0
  %2224 = vmatpush1.bf16.msra.mxu0 0
  %2225 = vmatprep.subr.bf16.mxu0 0
  %2226 = vmatpush1.bf16.msra.mxu0 0
  %2227 = vmatprep.subr.bf16.mxu0 0
  %2228 = vmatpush1.bf16.msra.mxu0 0
  %2229 = vmatprep.subr.bf16.mxu0 0
  %2230 = vmatpush1.bf16.msra.mxu0 0
  %2231 = vmatprep.subr.bf16.mxu0 0
  %2232 = vmatpush1.bf16.msra.mxu0 0
  %2233 = vmatprep.subr.bf16.mxu0 0
  %2234 = vmatpush1.bf16.msra.mxu0 0
  %2235 = vmatprep.subr.bf16.mxu0 0
  %2236 = vmatpush1.bf16.msra.mxu0 0
  %2237 = vmatprep.subr.bf16.mxu0 0
  %2238 = vmatpush1.bf16.msra.mxu0 0
  %2239 = vmatprep.subr.bf16.mxu0 0
  %2240 = vmatpush1.bf16.msra.mxu0 0
  %2241 = vmatprep.subr.bf16.mxu0 0
  %2242 = vmatpush1.bf16.msra.mxu0 0
  %2243 = vmatprep.subr.bf16.mxu0 0
  %2244 = vmatpush1.bf16.msra.mxu0 0
  %2245 = vmatprep.subr.bf16.mxu0 0
  %2246 = vmatpush1.bf16.msra.mxu0 0
  %2247 = vmatprep.mubr.bf16.mxu0 0
  %2248 = vmatmul.mubr.bf16.gmra.mrb[0].mxu0 %v2210
  %v2249 = vpop.f32.mrb[0].mxu0
  %v2250 = vadd.f32 0.0, %v2249
  %v2251 = vpop.f32.mrb[0].mxu0
  %v2252 = vpop.f32.mrb[0].mxu0
  %v2253 = vadd.f32 0.0, %v2252
  %v2254 = vpop.f32.mrb[0].mxu0
  %2255 = vdwg.mxu0
  %v2256 = vadd.f32 %v1980, %v2250
  %v2257 = vadd.f32 %v1983, %v2253
  %2258 = vrot.lane.b32.xlu0 %v1446, 104
  %v2259 = vpop.permute.xlu0 %2258
  %2260 = vrot.lane.b32.xlu0 %v1448, 104
  %v2261 = vpop.permute.xlu0 %2260
  %v2263 = vsel %vm189, %v2259, 0
  %v2266 = vsel %vm189, %v2261, 0
  %2268 = vmatprep.subr.bf16.mxu0 0
  %2269 = vmatpush1.bf16.xpose.msra.mxu0 %v2266
  %2270 = vmatprep.subr.bf16.mxu0 0
  %2271 = vmatpush1.bf16.xpose.msra.mxu0 0
  %2272 = vmatprep.subr.bf16.mxu0 0
  %2273 = vmatpush1.bf16.xpose.msra.mxu0 0
  %2274 = vmatprep.subr.bf16.mxu0 0
  %2275 = vmatpush1.bf16.xpose.msra.mxu0 0
  %2276 = vmatprep.subr.bf16.mxu0 0
  %2277 = vmatpush1.bf16.xpose.msra.mxu0 0
  %2278 = vmatprep.subr.bf16.mxu0 0
  %2279 = vmatpush1.bf16.xpose.msra.mxu0 0
  %2280 = vmatprep.subr.bf16.mxu0 0
  %2281 = vmatpush1.bf16.xpose.msra.mxu0 0
  %2282 = vmatprep.subr.bf16.mxu0 0
  %2283 = vmatpush1.bf16.xpose.msra.mxu0 0
  %2284 = vmatprep.subr.bf16.mxu0 0
  %2285 = vmatpush1.bf16.xpose.msra.mxu0 0
  %2286 = vmatprep.subr.bf16.mxu0 0
  %2287 = vmatpush1.bf16.xpose.msra.mxu0 0
  %2288 = vmatprep.subr.bf16.mxu0 0
  %2289 = vmatpush1.bf16.xpose.msra.mxu0 0
  %2290 = vmatprep.subr.bf16.mxu0 0
  %2291 = vmatpush1.bf16.xpose.msra.mxu0 0
  %2292 = vmatprep.subr.bf16.mxu0 0
  %2293 = vmatpush1.bf16.xpose.msra.mxu0 0
  %2294 = vmatprep.subr.bf16.mxu0 0
  %2295 = vmatpush1.bf16.xpose.msra.mxu0 0
  %2296 = vmatprep.subr.bf16.mxu0 0
  %2297 = vmatpush1.bf16.xpose.msra.mxu0 0
  %2298 = vmatprep.subr.bf16.mxu0 0
  %2299 = vmatpush1.bf16.xpose.msra.mxu0 0
  %2300 = vmatprep.mubr.bf16.mxu0 0
  %2301 = vmatmul.mubr.bf16.gmra.mrb[0].mxu0 %v2263
  %v2302 = vpop.f32.mrb[0].mxu0
  %v2303 = vadd.f32 0.0, %v2302
  %v2304 = vpop.f32.mrb[0].mxu0
  %v2305 = vpop.f32.mrb[0].mxu0
  %v2306 = vpop.f32.mrb[0].mxu0
  %2307 = vdwg.mxu0
  %2308 = vrot.lane.b32.xlu0 %v1447, 104
  %v2309 = vpop.permute.xlu0 %2308
  %2310 = vrot.lane.b32.xlu0 %v1449, 104
  %v2311 = vpop.permute.xlu0 %2310
  %v2313 = vsel %vm189, %v2309, 0
  %v2316 = vsel %vm189, %v2311, 0
  %2318 = vmatprep.subr.bf16.mxu0 0
  %2319 = vmatpush1.bf16.xpose.msra.mxu0 %v2316
  %2320 = vmatprep.subr.bf16.mxu0 0
  %2321 = vmatpush1.bf16.xpose.msra.mxu0 0
  %2322 = vmatprep.subr.bf16.mxu0 0
  %2323 = vmatpush1.bf16.xpose.msra.mxu0 0
  %2324 = vmatprep.subr.bf16.mxu0 0
  %2325 = vmatpush1.bf16.xpose.msra.mxu0 0
  %2326 = vmatprep.subr.bf16.mxu0 0
  %2327 = vmatpush1.bf16.xpose.msra.mxu0 0
  %2328 = vmatprep.subr.bf16.mxu0 0
  %2329 = vmatpush1.bf16.xpose.msra.mxu0 0
  %2330 = vmatprep.subr.bf16.mxu0 0
  %2331 = vmatpush1.bf16.xpose.msra.mxu0 0
  %2332 = vmatprep.subr.bf16.mxu0 0
  %2333 = vmatpush1.bf16.xpose.msra.mxu0 0
  %2334 = vmatprep.subr.bf16.mxu0 0
  %2335 = vmatpush1.bf16.xpose.msra.mxu0 0
  %2336 = vmatprep.subr.bf16.mxu0 0
  %2337 = vmatpush1.bf16.xpose.msra.mxu0 0
  %2338 = vmatprep.subr.bf16.mxu0 0
  %2339 = vmatpush1.bf16.xpose.msra.mxu0 0
  %2340 = vmatprep.subr.bf16.mxu0 0
  %2341 = vmatpush1.bf16.xpose.msra.mxu0 0
  %2342 = vmatprep.subr.bf16.mxu0 0
  %2343 = vmatpush1.bf16.xpose.msra.mxu0 0
  %2344 = vmatprep.subr.bf16.mxu0 0
  %2345 = vmatpush1.bf16.xpose.msra.mxu0 0
  %2346 = vmatprep.subr.bf16.mxu0 0
  %2347 = vmatpush1.bf16.xpose.msra.mxu0 0
  %2348 = vmatprep.subr.bf16.mxu0 0
  %2349 = vmatpush1.bf16.xpose.msra.mxu0 0
  %2350 = vmatprep.mubr.bf16.mxu0 0
  %2351 = vmatmul.mubr.bf16.gmra.mrb[0].mxu0 %v2313
  %v2352 = vpop.f32.mrb[0].mxu0
  %v2353 = vadd.f32 0.0, %v2352
  %v2354 = vpop.f32.mrb[0].mxu0
  %v2355 = vpop.f32.mrb[0].mxu0
  %v2356 = vpop.f32.mrb[0].mxu0
  %2357 = vdwg.mxu0
  %v2358 = vsel %vm189, %v2303, -inf
  %2359 = vmax.xlane.f32.xlu0 %v2358
  %v2360 = vpop.xlane.xlu0 %2359
  %v2361 = vsel %vm189, %v2353, -inf
  %2362 = vmax.xlane.f32.xlu0 %v2361
  %v2363 = vpop.xlane.xlu0 %2362
  %v2364 = vsub.f32 %v2303, %v2360
  %v2365 = vsub.f32 %v2353, %v2363
  %v2366 = vmul.f32 %v2364, 1.442695
  %v2367 = vpow.pop %v2366
  %v2368 = vmul.f32 %v2365, 1.442695
  %v2369 = vpow.pop %v2368
  %v2370 = vsel %vm189, %v2367, 0.0
  %2371 = vadd.xlane.f32.xlu0 %v2370
  %v2372 = vpop.xlane.xlu0 %2371
  %v2373 = vsel %vm189, %v2369, 0.0
  %2374 = vadd.xlane.f32.xlu0 %v2373
  %v2375 = vpop.xlane.xlu0 %2374
  %v2376 = vrcp.pop %v2372
  %v2377 = vrcp.pop %v2375
  %v2378 = vmul.f32 %v2367, %v2376
  %v2379 = vmul.f32 %v2369, %v2377
  %v2380 = vpack.c.bf16 %v2378, %v2378
  %v2381 = vpack.c.bf16 %v2379, %v2379
  %2382 = vrot.lane.b32.xlu0 %v1448, 72
  %v2383 = vpop.permute.xlu0 %2382
  %v2385 = vsel %vm189, %v2380, 0
  %v2388 = vsel %vm314, %v2383, 0
  %2390 = vmatprep.subr.bf16.mxu0 0
  %2391 = vmatpush1.bf16.msra.mxu0 %v2388
  %2392 = vmatprep.subr.bf16.mxu0 0
  %2393 = vmatpush1.bf16.msra.mxu0 0
  %2394 = vmatprep.subr.bf16.mxu0 0
  %2395 = vmatpush1.bf16.msra.mxu0 0
  %2396 = vmatprep.subr.bf16.mxu0 0
  %2397 = vmatpush1.bf16.msra.mxu0 0
  %2398 = vmatprep.subr.bf16.mxu0 0
  %2399 = vmatpush1.bf16.msra.mxu0 0
  %2400 = vmatprep.subr.bf16.mxu0 0
  %2401 = vmatpush1.bf16.msra.mxu0 0
  %2402 = vmatprep.subr.bf16.mxu0 0
  %2403 = vmatpush1.bf16.msra.mxu0 0
  %2404 = vmatprep.subr.bf16.mxu0 0
  %2405 = vmatpush1.bf16.msra.mxu0 0
  %2406 = vmatprep.subr.bf16.mxu0 0
  %2407 = vmatpush1.bf16.msra.mxu0 0
  %2408 = vmatprep.subr.bf16.mxu0 0
  %2409 = vmatpush1.bf16.msra.mxu0 0
  %2410 = vmatprep.subr.bf16.mxu0 0
  %2411 = vmatpush1.bf16.msra.mxu0 0
  %2412 = vmatprep.subr.bf16.mxu0 0
  %2413 = vmatpush1.bf16.msra.mxu0 0
  %2414 = vmatprep.subr.bf16.mxu0 0
  %2415 = vmatpush1.bf16.msra.mxu0 0
  %2416 = vmatprep.subr.bf16.mxu0 0
  %2417 = vmatpush1.bf16.msra.mxu0 0
  %2418 = vmatprep.subr.bf16.mxu0 0
  %2419 = vmatpush1.bf16.msra.mxu0 0
  %2420 = vmatprep.subr.bf16.mxu0 0
  %2421 = vmatpush1.bf16.msra.mxu0 0
  %2422 = vmatprep.mubr.bf16.mxu0 0
  %2423 = vmatmul.mubr.bf16.gmra.mrb[0].mxu0 %v2385
  %v2424 = vpop.f32.mrb[0].mxu0
  %v2425 = vadd.f32 0.0, %v2424
  %v2426 = vpop.f32.mrb[0].mxu0
  %v2427 = vpop.f32.mrb[0].mxu0
  %v2428 = vpop.f32.mrb[0].mxu0
  %2429 = vdwg.mxu0
  %2430 = vrot.lane.b32.xlu0 %v1449, 72
  %v2431 = vpop.permute.xlu0 %2430
  %v2433 = vsel %vm189, %v2381, 0
  %v2436 = vsel %vm314, %v2431, 0
  %2438 = vmatprep.subr.bf16.mxu0 0
  %2439 = vmatpush1.bf16.msra.mxu0 %v2436
  %2440 = vmatprep.subr.bf16.mxu0 0
  %2441 = vmatpush1.bf16.msra.mxu0 0
  %2442 = vmatprep.subr.bf16.mxu0 0
  %2443 = vmatpush1.bf16.msra.mxu0 0
  %2444 = vmatprep.subr.bf16.mxu0 0
  %2445 = vmatpush1.bf16.msra.mxu0 0
  %2446 = vmatprep.subr.bf16.mxu0 0
  %2447 = vmatpush1.bf16.msra.mxu0 0
  %2448 = vmatprep.subr.bf16.mxu0 0
  %2449 = vmatpush1.bf16.msra.mxu0 0
  %2450 = vmatprep.subr.bf16.mxu0 0
  %2451 = vmatpush1.bf16.msra.mxu0 0
  %2452 = vmatprep.subr.bf16.mxu0 0
  %2453 = vmatpush1.bf16.msra.mxu0 0
  %2454 = vmatprep.subr.bf16.mxu0 0
  %2455 = vmatpush1.bf16.msra.mxu0 0
  %2456 = vmatprep.subr.bf16.mxu0 0
  %2457 = vmatpush1.bf16.msra.mxu0 0
  %2458 = vmatprep.subr.bf16.mxu0 0
  %2459 = vmatpush1.bf16.msra.mxu0 0
  %2460 = vmatprep.subr.bf16.mxu0 0
  %2461 = vmatpush1.bf16.msra.mxu0 0
  %2462 = vmatprep.subr.bf16.mxu0 0
  %2463 = vmatpush1.bf16.msra.mxu0 0
  %2464 = vmatprep.subr.bf16.mxu0 0
  %2465 = vmatpush1.bf16.msra.mxu0 0
  %2466 = vmatprep.subr.bf16.mxu0 0
  %2467 = vmatpush1.bf16.msra.mxu0 0
  %2468 = vmatprep.subr.bf16.mxu0 0
  %2469 = vmatpush1.bf16.msra.mxu0 0
  %2470 = vmatprep.mubr.bf16.mxu0 0
  %2471 = vmatmul.mubr.bf16.gmra.mrb[0].mxu0 %v2433
  %v2472 = vpop.f32.mrb[0].mxu0
  %v2473 = vadd.f32 0.0, %v2472
  %v2474 = vpop.f32.mrb[0].mxu0
  %v2475 = vpop.f32.mrb[0].mxu0
  %v2476 = vpop.f32.mrb[0].mxu0
  %2477 = vdwg.mxu0
  %v2478 = vpack.c.bf16 %v2473, %v2425
  %v2479 = vld [vmem:[%s13 + $0x18] sm:$0xff]
  %v2480 = vpack.c.bf16 %v2479, %v2479
  %v2482 = vsel %vm189, %v2478, 0
  %v2485 = vsel %vm314, %v2480, 0
  %2487 = vmatprep.subr.bf16.mxu0 0
  %2488 = vmatpush1.bf16.msra.mxu0 %v2485
  %2489 = vmatprep.subr.bf16.mxu0 0
  %2490 = vmatpush1.bf16.msra.mxu0 0
  %2491 = vmatprep.subr.bf16.mxu0 0
  %2492 = vmatpush1.bf16.msra.mxu0 0
  %2493 = vmatprep.subr.bf16.mxu0 0
  %2494 = vmatpush1.bf16.msra.mxu0 0
  %2495 = vmatprep.subr.bf16.mxu0 0
  %2496 = vmatpush1.bf16.msra.mxu0 0
  %2497 = vmatprep.subr.bf16.mxu0 0
  %2498 = vmatpush1.bf16.msra.mxu0 0
  %2499 = vmatprep.subr.bf16.mxu0 0
  %2500 = vmatpush1.bf16.msra.mxu0 0
  %2501 = vmatprep.subr.bf16.mxu0 0
  %2502 = vmatpush1.bf16.msra.mxu0 0
  %2503 = vmatprep.subr.bf16.mxu0 0
  %2504 = vmatpush1.bf16.msra.mxu0 0
  %2505 = vmatprep.subr.bf16.mxu0 0
  %2506 = vmatpush1.bf16.msra.mxu0 0
  %2507 = vmatprep.subr.bf16.mxu0 0
  %2508 = vmatpush1.bf16.msra.mxu0 0
  %2509 = vmatprep.subr.bf16.mxu0 0
  %2510 = vmatpush1.bf16.msra.mxu0 0
  %2511 = vmatprep.subr.bf16.mxu0 0
  %2512 = vmatpush1.bf16.msra.mxu0 0
  %2513 = vmatprep.subr.bf16.mxu0 0
  %2514 = vmatpush1.bf16.msra.mxu0 0
  %2515 = vmatprep.subr.bf16.mxu0 0
  %2516 = vmatpush1.bf16.msra.mxu0 0
  %2517 = vmatprep.subr.bf16.mxu0 0
  %2518 = vmatpush1.bf16.msra.mxu0 0
  %2519 = vmatprep.mubr.bf16.mxu0 0
  %2520 = vmatmul.mubr.bf16.gmra.mrb[0].mxu0 %v2482
  %v2521 = vpop.f32.mrb[0].mxu0
  %v2522 = vadd.f32 0.0, %v2521
  %v2523 = vpop.f32.mrb[0].mxu0
  %v2524 = vpop.f32.mrb[0].mxu0
  %v2525 = vadd.f32 0.0, %v2524
  %v2526 = vpop.f32.mrb[0].mxu0
  %2527 = vdwg.mxu0
  %v2528 = vadd.f32 %v2256, %v2522
  %v2529 = vadd.f32 %v2257, %v2525
  %v2530 = vld [vmem:[%s14] sm:$0x1]
  %v2532 = vlaneseq
  %v2533 = vshrl.u32 %v2532, 7
  %v2534 = vsub.s32 0, %v2533
  %v2535 = vrot.slane %v2530, %v2534
  %v2537 = vadd.f32 %v2528, %v2535
  %v2538 = vadd.f32 %v2529, %v2535
  %v2539 = vadd.f32 %v1326, %v2537
  %v2540 = vadd.f32 %v1327, %v2538
  %v2541 = vld [vmem:[%s15] sm:$0x1]
  %v2542 = vld [vmem:[%s16] sm:$0x1]
  %v2543 = vsel %vm135, %v2539, 0.0
  %2544 = vadd.xlane.f32.xlu0 %v2543
  %v2545 = vpop.xlane.xlu0 %2544
  %v2546 = vsel %vm135, %v2540, 0.0
  %2547 = vadd.xlane.f32.xlu0 %v2546
  %v2548 = vpop.xlane.xlu0 %2547
  %v2549 = vmul.f32 %v2545, %v1291
  %v2550 = vmul.f32 %v2548, %v1291
  %v2551 = vsub.f32 %v2539, %v2549
  %v2552 = vsub.f32 %v2540, %v2550
  %v2553 = vmul.f32 %v2551, %v2551
  %v2554 = vmul.f32 %v2552, %v2552
  %v2555 = vsel %vm135, %v2553, 0.0
  %2556 = vadd.xlane.f32.xlu0 %v2555
  %v2557 = vpop.xlane.xlu0 %2556
  %v2558 = vsel %vm135, %v2554, 0.0
  %2559 = vadd.xlane.f32.xlu0 %v2558
  %v2560 = vpop.xlane.xlu0 %2559
  %v2561 = vmul.f32 %v2557, %v1291
  %v2562 = vmul.f32 %v2560, %v1291
  %v2563 = vadd.f32 %v2561, 1e-05
  %v2564 = vadd.f32 %v2562, 1e-05
  %v2565 = vrsqrt.pop %v2563
  %v2566 = vrsqrt.pop %v2564
  %v2567 = vmul.f32 %v2551, %v2565
  %v2568 = vmul.f32 %v2552, %v2566
  %v2570 = vlaneseq
  %v2571 = vshrl.u32 %v2570, 7
  %v2572 = vsub.s32 0, %v2571
  %v2573 = vrot.slane %v2541, %v2572
  %v2575 = vmul.f32 %v2567, %v2573
  %v2576 = vmul.f32 %v2568, %v2573
  %v2578 = vlaneseq
  %v2579 = vshrl.u32 %v2578, 7
  %v2580 = vsub.s32 0, %v2579
  %v2581 = vrot.slane %v2542, %v2580
  %v2583 = vadd.f32 %v2575, %v2581
  %v2584 = vadd.f32 %v2576, %v2581
  %v2585 = vpack.c.bf16 %v2584, %v2583
  %v2586 = vld [vmem:[%s17] sm:$0xff]
  %v2587 = vld [vmem:[%s17 + $0x8] sm:$0xff]
  %v2588 = vld [vmem:[%s17 + $0x10] sm:$0xff]
  %v2589 = vld [vmem:[%s17 + $0x18] sm:$0xff]
  %v2590 = vpack.c.bf16 %v2587, %v2586
  %v2591 = vpack.c.bf16 %v2589, %v2588
  %v2592 = vld [vmem:[%s18] sm:$0x1]
  %v2594 = vlaneseq
  %v2595 = vshrl.u32 %v2594, 7
  %v2596 = vsub.s32 0, %v2595
  %v2597 = vrot.slane %v2592, %v2596
  %v2600 = vsel %vm135, %v2585, 0
  %2602 = vmatprep.subr.bf16.mxu0 0
  %2603 = vmatpush1.bf16.msra.mxu0 %v2590
  %2604 = vmatprep.subr.bf16.mxu0 0
  %2605 = vmatpush1.bf16.msra.mxu0 %v2591
  %2606 = vmatprep.subr.bf16.mxu0 0
  %2607 = vmatpush1.bf16.msra.mxu0 0
  %2608 = vmatprep.subr.bf16.mxu0 0
  %2609 = vmatpush1.bf16.msra.mxu0 0
  %2610 = vmatprep.subr.bf16.mxu0 0
  %2611 = vmatpush1.bf16.msra.mxu0 0
  %2612 = vmatprep.subr.bf16.mxu0 0
  %2613 = vmatpush1.bf16.msra.mxu0 0
  %2614 = vmatprep.subr.bf16.mxu0 0
  %2615 = vmatpush1.bf16.msra.mxu0 0
  %2616 = vmatprep.subr.bf16.mxu0 0
  %2617 = vmatpush1.bf16.msra.mxu0 0
  %2618 = vmatprep.subr.bf16.mxu0 0
  %2619 = vmatpush1.bf16.msra.mxu0 0
  %2620 = vmatprep.subr.bf16.mxu0 0
  %2621 = vmatpush1.bf16.msra.mxu0 0
  %2622 = vmatprep.subr.bf16.mxu0 0
  %2623 = vmatpush1.bf16.msra.mxu0 0
  %2624 = vmatprep.subr.bf16.mxu0 0
  %2625 = vmatpush1.bf16.msra.mxu0 0
  %2626 = vmatprep.subr.bf16.mxu0 0
  %2627 = vmatpush1.bf16.msra.mxu0 0
  %2628 = vmatprep.subr.bf16.mxu0 0
  %2629 = vmatpush1.bf16.msra.mxu0 0
  %2630 = vmatprep.subr.bf16.mxu0 0
  %2631 = vmatpush1.bf16.msra.mxu0 0
  %2632 = vmatprep.subr.bf16.mxu0 0
  %2633 = vmatpush1.bf16.msra.mxu0 0
  %2634 = vmatprep.mubr.bf16.mxu0 0
  %2635 = vmatmul.mubr.bf16.gmra.mrb[0].mxu0 %v2600
  %v2636 = vpop.f32.mrb[0].mxu0
  %v2637 = vadd.f32 %v2597, %v2636
  %v2638 = vpop.f32.mrb[0].mxu0
  %v2639 = vpop.f32.mrb[0].mxu0
  %v2640 = vadd.f32 %v2597, %v2639
  %v2641 = vpop.f32.mrb[0].mxu0
  %2642 = vdwg.mxu0
  %v2643 = vmax.f32 %v2637, 0.0
  %v2644 = vmax.f32 %v2640, 0.0
  %v2645 = vpack.c.bf16 %v2644, %v2643
  %v2646 = vld [vmem:[%s19] sm:$0xff]
  %v2647 = vld [vmem:[%s19 + $0x8] sm:$0xff]
  %v2648 = vld [vmem:[%s19 + $0x10] sm:$0xff]
  %v2649 = vld [vmem:[%s19 + $0x18] sm:$0xff]
  %v2650 = vld [vmem:[%s19 + $0x20] sm:$0xff]
  %v2651 = vld [vmem:[%s19 + $0x28] sm:$0xff]
  %v2652 = vld [vmem:[%s19 + $0x30] sm:$0xff]
  %v2653 = vld [vmem:[%s19 + $0x38] sm:$0xff]
  %v2654 = vpack.c.bf16 %v2647, %v2646
  %v2655 = vpack.c.bf16 %v2649, %v2648
  %v2656 = vpack.c.bf16 %v2651, %v2650
  %v2657 = vpack.c.bf16 %v2653, %v2652
  %v2658 = vld [vmem:[%s20] sm:$0x1]
  %v2660 = vlaneseq
  %v2661 = vshrl.u32 %v2660, 7
  %v2662 = vsub.s32 0, %v2661
  %v2663 = vrot.slane %v2658, %v2662
  %vm2665 = vcmask 523264
  %v2667 = vsel %vm2665, %v2645, 0
  %2669 = vmatprep.subr.bf16.mxu0 0
  %2670 = vmatpush1.bf16.msra.mxu0 %v2654
  %2671 = vmatprep.subr.bf16.mxu0 0
  %2672 = vmatpush1.bf16.msra.mxu0 %v2655
  %2673 = vmatprep.subr.bf16.mxu0 0
  %2674 = vmatpush1.bf16.msra.mxu0 %v2656
  %2675 = vmatprep.subr.bf16.mxu0 0
  %2676 = vmatpush1.bf16.msra.mxu0 %v2657
  %2677 = vmatprep.subr.bf16.mxu0 0
  %2678 = vmatpush1.bf16.msra.mxu0 0
  %2679 = vmatprep.subr.bf16.mxu0 0
  %2680 = vmatpush1.bf16.msra.mxu0 0
  %2681 = vmatprep.subr.bf16.mxu0 0
  %2682 = vmatpush1.bf16.msra.mxu0 0
  %2683 = vmatprep.subr.bf16.mxu0 0
  %2684 = vmatpush1.bf16.msra.mxu0 0
  %2685 = vmatprep.subr.bf16.mxu0 0
  %2686 = vmatpush1.bf16.msra.mxu0 0
  %2687 = vmatprep.subr.bf16.mxu0 0
  %2688 = vmatpush1.bf16.msra.mxu0 0
  %2689 = vmatprep.subr.bf16.mxu0 0
  %2690 = vmatpush1.bf16.msra.mxu0 0
  %2691 = vmatprep.subr.bf16.mxu0 0
  %2692 = vmatpush1.bf16.msra.mxu0 0
  %2693 = vmatprep.subr.bf16.mxu0 0
  %2694 = vmatpush1.bf16.msra.mxu0 0
  %2695 = vmatprep.subr.bf16.mxu0 0
  %2696 = vmatpush1.bf16.msra.mxu0 0
  %2697 = vmatprep.subr.bf16.mxu0 0
  %2698 = vmatpush1.bf16.msra.mxu0 0
  %2699 = vmatprep.subr.bf16.mxu0 0
  %2700 = vmatpush1.bf16.msra.mxu0 0
  %2701 = vmatprep.mubr.bf16.mxu0 0
  %2702 = vmatmul.mubr.bf16.gmra.mrb[0].mxu0 %v2667
  %v2703 = vpop.f32.mrb[0].mxu0
  %v2704 = vadd.f32 %v2663, %v2703
  %v2705 = vpop.f32.mrb[0].mxu0
  %v2706 = vpop.f32.mrb[0].mxu0
  %v2707 = vadd.f32 %v2663, %v2706
  %v2708 = vpop.f32.mrb[0].mxu0
  %2709 = vdwg.mxu0
  %v2710 = vadd.f32 %v2583, %v2704
  %v2711 = vadd.f32 %v2584, %v2707
  %v2712 = vld [vmem:[%s21] sm:$0x1]
  %v2713 = vld [vmem:[%s22] sm:$0x1]
  %v2714 = vsel %vm135, %v2710, 0.0
  %2715 = vadd.xlane.f32.xlu0 %v2714
  %v2716 = vpop.xlane.xlu0 %2715
  %v2717 = vsel %vm135, %v2711, 0.0
  %2718 = vadd.xlane.f32.xlu0 %v2717
  %v2719 = vpop.xlane.xlu0 %2718
  %v2720 = vmul.f32 %v2716, %v1291
  %v2721 = vmul.f32 %v2719, %v1291
  %v2722 = vsub.f32 %v2710, %v2720
  %v2723 = vsub.f32 %v2711, %v2721
  %v2724 = vmul.f32 %v2722, %v2722
  %v2725 = vmul.f32 %v2723, %v2723
  %v2726 = vsel %vm135, %v2724, 0.0
  %2727 = vadd.xlane.f32.xlu0 %v2726
  %v2728 = vpop.xlane.xlu0 %2727
  %v2729 = vsel %vm135, %v2725, 0.0
  %2730 = vadd.xlane.f32.xlu0 %v2729
  %v2731 = vpop.xlane.xlu0 %2730
  %v2732 = vmul.f32 %v2728, %v1291
  %v2733 = vmul.f32 %v2731, %v1291
  %v2734 = vadd.f32 %v2732, 1e-05
  %v2735 = vadd.f32 %v2733, 1e-05
  %v2736 = vrsqrt.pop %v2734
  %v2737 = vrsqrt.pop %v2735
  %v2738 = vmul.f32 %v2722, %v2736
  %v2739 = vmul.f32 %v2723, %v2737
  %v2741 = vlaneseq
  %v2742 = vshrl.u32 %v2741, 7
  %v2743 = vsub.s32 0, %v2742
  %v2744 = vrot.slane %v2712, %v2743
  %v2746 = vmul.f32 %v2738, %v2744
  %v2747 = vmul.f32 %v2739, %v2744
  %v2749 = vlaneseq
  %v2750 = vshrl.u32 %v2749, 7
  %v2751 = vsub.s32 0, %v2750
  %v2752 = vrot.slane %v2713, %v2751
  %v2754 = vadd.f32 %v2746, %v2752
  %v2755 = vadd.f32 %v2747, %v2752
  %v2756 = vsel %vm135, %v2754, 0.0
  %v2757 = vsel %vm135, %v2755, 0.0
  %2758 = vst [vmem:[%s23] sm:$0xff] %v2756
  %2759 = vst [vmem:[%s23 + $0x8] sm:$0xff] %v2757
  // Predicated region
  $region94: #{transformer_forward.7} parent=0 // pred_check
    _
  $region95: #{transformer_forward.7} parent=0 // pred_check_branch
    %2761 = sbr.rel (0) target = $region97
  $region96: #{transformer_forward.7} parent=0 // pred_region
    _
  $region97: #{transformer_forward.7} parent=0 // pred_fallthru
    _
  // Predicated region
  $region98: #{transformer_forward.7} parent=0 // pred_check
    _
  $region99: #{transformer_forward.7} parent=0 // pred_check_branch
    %2763 = sbr.rel (0) target = $region101
  $region100: #{transformer_forward.7} parent=0 // pred_region
    _
  $region101: #{transformer_forward.7} parent=0 // pred_fallthru
    _

</llo_original>
